<compile_context>
chip_gen: v5e
topology: v5e:2x2
jax: 0.10.0
libtpu: 0.0.40
codegen_flags: <defaults>
</compile_context>

<pallas_src>
import functools

import numpy as np

import jax
import jax.numpy as jnp
from jax.experimental import pallas as pl
from jax.experimental.pallas import tpu as pltpu


# ----------------------------------------------------------------------------
# Per-generation sizing: query physical VMEM once (v5e/v6e: 128 MiB, v7x: 64).
# ----------------------------------------------------------------------------
def _detect_vmem_bytes():
    try:
        info = pltpu.get_tpu_info()
        cap = int(getattr(info, "vmem_capacity_bytes", 0))
        if cap > 0:
            return cap
    except Exception:
        pass
    return 64 * 1024 * 1024          # conservative (v7x-sized) fallback


_PHYS_VMEM = _detect_vmem_bytes()
# 64 MiB scoped limit on 128 MiB parts (v5e / v6e), 32 MiB on v7x.
VMEM_LIMIT_BYTES = min(_PHYS_VMEM // 2, 64 * 1024 * 1024)
# Bigger M-tiles on big-VMEM parts; cap at 1024 on v7x for the K=2048 path.
MAX_TM = 2048 if _PHYS_VMEM >= (96 << 20) else 1024


def _round_up(x, m):
    return (x + m - 1) // m * m


def _choose_tiling(M, row_in_bytes, row_out_bytes, resident_bytes):
    """Pick an M-tile that (a) fits the double-buffered VMEM budget and
    (b) divides M exactly, so no whole-matrix pad / slice round-trip is needed."""
    budget = VMEM_LIMIT_BYTES - resident_bytes - (4 << 20)    # slack for Mosaic scratch
    per_row = 2 * (row_in_bytes + row_out_bytes)              # double-buffered in + out
    cap = max(128, min(MAX_TM, budget // max(per_row, 1)))
    if M <= cap:
        return M, M                                           # one full-extent block
    t = (cap // 16) * 16                                      # 16-row align (bf16 tiles)
    while t >= 16:
        if M % t == 0:
            return t, M
        t -= 16
    t = max(16, (cap // 16) * 16)                             # fallback: pad the tail
    return t, _round_up(M, t)


# ----------------------------------------------------------------------------
# Plain-JAX glue: im2col patch extraction (patch column order = (kh, kw, C)).
# TODO(synk): replace with halo-tiled in-kernel 9-tap accumulation to remove
#             the kh*kw HBM expansion entirely.
# ----------------------------------------------------------------------------
def _im2col(x, kh, kw, stride, pad):
    """x: NHWC -> patches (N, oh, ow, kh*kw*C)."""
    x = jnp.pad(x, ((0, 0), (pad, pad), (pad, pad), (0, 0)))
    N, H, W, C = x.shape
    oh = (H - kh) // stride + 1
    ow = (W - kw) // stride + 1
    cols = []
    for i in range(kh):
        for j in range(kw):
            cols.append(x[:, i:i + stride * oh:stride, j:j + stride * ow:stride, :])
    return jnp.concatenate(cols, axis=-1)


# ----------------------------------------------------------------------------
# Pallas kernel: tiled matmul + bias (+ optional fused ReLU), bf16-in, f32 acc.
# ----------------------------------------------------------------------------
def _matmul_bias_kernel(x_ref, w_ref, b_ref, o_ref, *, relu_out):
    acc = jnp.dot(x_ref[...], w_ref[...], preferred_element_type=jnp.float32)
    acc = acc + b_ref[...]
    if relu_out:
        acc = jnp.maximum(acc, 0.0)
    o_ref[...] = acc.astype(o_ref.dtype)


def matmul_bias(x, w, b, *, relu_out=False, out_dtype=jnp.bfloat16):
    """x: (M, K), w: (K, N) bf16, b: (N,) -> (M, N) in out_dtype.

    Tiled over M ("parallel" axis); weights / bias stay resident in VMEM via a
    grid-invariant index_map.  Inputs bf16, accumulation f32.
    """
    M, K = x.shape
    N = w.shape[1]
    x = x.astype(jnp.bfloat16)
    w = w.astype(jnp.bfloat16)
    b2 = jnp.asarray(b, jnp.float32).reshape(1, N)
    out_bytes = int(np.dtype(out_dtype).itemsize)

    tm, m_pad = _choose_tiling(M, K * 2, N * out_bytes, K * N * 2 + N * 4)
    if m_pad != M:
        x = jnp.pad(x, ((0, m_pad - M), (0, 0)))
    grid = (m_pad // tm,)

    out = pl.pallas_call(
        functools.partial(_matmul_bias_kernel, relu_out=relu_out),
        out_shape=jax.ShapeDtypeStruct((m_pad, N), out_dtype),
        grid_spec=pltpu.PrefetchScalarGridSpec(
            num_scalar_prefetch=0,
            grid=grid,
            in_specs=[
                pl.BlockSpec((tm, K), lambda i: (i, 0)),
                pl.BlockSpec((K, N), lambda i: (0, 0)),   # resident weights
                pl.BlockSpec((1, N), lambda i: (0, 0)),   # resident bias
            ],
            out_specs=pl.BlockSpec((tm, N), lambda i: (i, 0)),
        ),
        compiler_params=pltpu.CompilerParams(
            dimension_semantics=("parallel",),
            vmem_limit_bytes=VMEM_LIMIT_BYTES,
        ),
        cost_estimate=pl.CostEstimate(
            flops=2 * m_pad * K * N,
            transcendentals=0,
            bytes_accessed=m_pad * K * 2 + K * N * 2 + m_pad * N * out_bytes + N * 4,
        ),
    )(x, w, b2)
    return out[:M] if m_pad != M else out


# ----------------------------------------------------------------------------
# Pallas kernel: fused residual block
#   out = x + Conv1x1(ReLU(Conv3x3(ReLU(x)) + b1)) + b2     (all in one call)
# ----------------------------------------------------------------------------
def _resblock_kernel(p_ref, w1_ref, b1_ref, w2_ref, b2_ref, skip_ref, o_ref):
    h = jnp.dot(p_ref[...], w1_ref[...], preferred_element_type=jnp.float32)
    h = jnp.maximum(h + b1_ref[...], 0.0).astype(jnp.bfloat16)
    r = jnp.dot(h, w2_ref[...], preferred_element_type=jnp.float32) + b2_ref[...]
    o_ref[...] = (skip_ref[...].astype(jnp.float32) + r).astype(o_ref.dtype)


def resblock(x, rp):
    N, H, W, C = x.shape
    M = N * H * W
    # ReLU applied ONCE on the un-duplicated tensor (not on kh*kw patch copies).
    relu_x = jnp.maximum(x, 0).astype(jnp.bfloat16)
    patches = _im2col(relu_x, 3, 3, 1, 1).reshape(M, 9 * C)
    skip = x.reshape(M, C).astype(jnp.bfloat16)

    resident = (9 * C * C + C * C) * 2 + 2 * C * 4
    tm, m_pad = _choose_tiling(M, (9 * C + C) * 2, C * 2, resident)
    if m_pad != M:
        patches = jnp.pad(patches, ((0, m_pad - M), (0, 0)))
        skip = jnp.pad(skip, ((0, m_pad - M), (0, 0)))
    grid = (m_pad // tm,)

    out = pl.pallas_call(
        _resblock_kernel,
        out_shape=jax.ShapeDtypeStruct((m_pad, C), jnp.bfloat16),
        grid_spec=pltpu.PrefetchScalarGridSpec(
            num_scalar_prefetch=0,
            grid=grid,
            in_specs=[
                pl.BlockSpec((tm, 9 * C), lambda i: (i, 0)),
                pl.BlockSpec((9 * C, C), lambda i: (0, 0)),
                pl.BlockSpec((1, C), lambda i: (0, 0)),
                pl.BlockSpec((C, C), lambda i: (0, 0)),
                pl.BlockSpec((1, C), lambda i: (0, 0)),
                pl.BlockSpec((tm, C), lambda i: (i, 0)),
            ],
            out_specs=pl.BlockSpec((tm, C), lambda i: (i, 0)),
        ),
        compiler_params=pltpu.CompilerParams(
            dimension_semantics=("parallel",),
            vmem_limit_bytes=VMEM_LIMIT_BYTES,
        ),
        cost_estimate=pl.CostEstimate(
            flops=2 * m_pad * 9 * C * C + 2 * m_pad * C * C,
            transcendentals=0,
            bytes_accessed=m_pad * 9 * C * 2 + 2 * m_pad * C * 2 + resident,
        ),
    )(patches, rp['w1'], rp['b1'], rp['w2'], rp['b2'], skip)
    out = out[:M] if m_pad != M else out
    return out.reshape(N, H, W, C)


# ----------------------------------------------------------------------------
# Pallas kernel: vector quantization ("parallel" grid, codebook resident,
# per-tile usage counts emitted and reduced to perplexity in plain JAX)
# ----------------------------------------------------------------------------
def _vq_kernel(z_ref, cb_ref, cbt_ref, esq_ref, q_ref, idx_ref, cnt_ref, *, tm, m_total):
    z = z_ref[...]                                    # (tm, D) f32
    # ||z - e||^2 argmin == argmin(||e||^2 - 2 z.e); z^2 term is row-constant.
    d = esq_ref[...] - 2.0 * jnp.dot(z, cbt_ref[...],
                                     preferred_element_type=jnp.float32)   # (tm, K)
    K = d.shape[1]
    iota_k = jax.lax.broadcasted_iota(jnp.int32, d.shape, 1)
    min_d = jnp.min(d, axis=1, keepdims=True)
    # first index achieving the minimum (matches torch.argmin tie-breaking)
    idx = jnp.min(jnp.where(d <= min_d, iota_k, K), axis=1, keepdims=True)
    onehot = (iota_k == idx).astype(jnp.float32)      # (tm, K)

    q_ref[...] = jnp.dot(onehot, cb_ref[...], preferred_element_type=jnp.float32)
    idx_ref[...] = idx

    # per-tile codebook usage counts, masking padded rows (if any)
    row = pl.program_id(0) * tm + jax.lax.broadcasted_iota(jnp.int32, (tm, 1), 0)
    valid = (row < m_total).astype(jnp.float32)
    cnt = jnp.sum(onehot * valid, axis=0, keepdims=True)            # (1, K)
    cnt_ref[...] = cnt.reshape(1, 1, K)


def vector_quantize(z_nhwc, cb, cb_t, e_sq):
    N, H, W, D = z_nhwc.shape
    K = cb.shape[0]
    M = N * H * W
    zf = z_nhwc.reshape(M, D).astype(jnp.float32)

    resident = 2 * K * D * 4 + K * 4
    tm, m_pad = _choose_tiling(M, D * 4, D * 4 + 4, resident)
    if m_pad != M:
        zf = jnp.pad(zf, ((0, m_pad - M), (0, 0)))
    grid_m = m_pad // tm

    q, idx, cnt = pl.pallas_call(
        functools.partial(_vq_kernel, tm=tm, m_total=M),
        out_shape=(
            jax.ShapeDtypeStruct((m_pad, D), jnp.float32),
            jax.ShapeDtypeStruct((m_pad, 1), jnp.int32),
            jax.ShapeDtypeStruct((grid_m, 1, K), jnp.float32),
        ),
        grid_spec=pltpu.PrefetchScalarGridSpec(
            num_scalar_prefetch=0,
            grid=(grid_m,),
            in_specs=[
                pl.BlockSpec((tm, D), lambda i: (i, 0)),
                pl.BlockSpec((K, D), lambda i: (0, 0)),   # resident codebook
                pl.BlockSpec((D, K), lambda i: (0, 0)),   # resident codebook^T
                pl.BlockSpec((1, K), lambda i: (0, 0)),   # resident ||e||^2
            ],
            out_specs=[
                pl.BlockSpec((tm, D), lambda i: (i, 0)),
                pl.BlockSpec((tm, 1), lambda i: (i, 0)),
                pl.BlockSpec((1, 1, K), lambda i: (i, 0, 0)),
            ],
        ),
        compiler_params=pltpu.CompilerParams(
            dimension_semantics=("parallel",),          # megacore-friendly (v7x)
            vmem_limit_bytes=VMEM_LIMIT_BYTES,
        ),
        cost_estimate=pl.CostEstimate(
            flops=4 * m_pad * D * K,
            transcendentals=0,
            bytes_accessed=2 * m_pad * D * 4 + m_pad * 4 + grid_m * K * 4 + resident,
        ),
    )(zf, cb, cb_t, e_sq)

    q = q[:M] if m_pad != M else q
    idx = idx[:M] if m_pad != M else idx
    counts = cnt.reshape(grid_m, K).sum(axis=0)                     # exact usage counts
    avg = counts / jnp.float32(M)
    perplexity = jnp.exp(-jnp.sum(avg * jnp.log(avg + 1e-10)))
    return q.reshape(N, H, W, D), idx.reshape(N, H, W), perplexity


# ----------------------------------------------------------------------------
# Convolution wrappers (kernel-ready weights come from prepare_params)
# ----------------------------------------------------------------------------
def conv2d(x, w_mat, b, kh, kw, stride=1, pad=0, relu_out=False, out_dtype=jnp.bfloat16):
    """x: NHWC; w_mat: (kh*kw*Cin, Cout) bf16; b: (Cout,) f32."""
    N, H, W, Cin = x.shape
    Cout = w_mat.shape[1]
    if kh == 1 and kw == 1 and stride == 1 and pad == 0:
        patches = x.reshape(N * H * W, Cin).astype(jnp.bfloat16)
        oh, ow = H, W
    else:
        pt = _im2col(x.astype(jnp.bfloat16), kh, kw, stride, pad)
        _, oh, ow, Kdim = pt.shape
        patches = pt.reshape(N * oh * ow, Kdim)
    out = matmul_bias(patches, w_mat, b, relu_out=relu_out, out_dtype=out_dtype)
    return out.reshape(N, oh, ow, Cout)


def conv_transpose2d(x, w_big, b_big, relu_out=False, out_dtype=jnp.bfloat16):
    """Sub-pixel ConvTranspose2d (k=4, s=2, p=1): one lane-dense (M, 4*Cout)
    3x3-window matmul + a cheap 2x2 interleave carried out in out_dtype."""
    N, H, W, Cin = x.shape
    Cout = w_big.shape[1] // 4
    patches = _im2col(x.astype(jnp.bfloat16), 3, 3, 1, 1).reshape(N * H * W, 9 * Cin)
    out = matmul_bias(patches, w_big, b_big, relu_out=relu_out, out_dtype=out_dtype)
    out = out.reshape(N, H, W, 2, 2, Cout)
    out = jnp.transpose(out, (0, 1, 3, 2, 4, 5)).reshape(N, 2 * H, 2 * W, Cout)
    return out


# Selection tensor for the sub-pixel decomposition of ConvT(k=4, s=2, p=1):
# output sub-row r of a 2x upsample reads 3x3-window row d through kernel tap k.
#   r=0: d=0 -> k=3, d=1 -> k=1 ;  r=1: d=1 -> k=2, d=2 -> k=0
_SUBPIX_SEL = np.zeros((2, 3, 4), np.float32)
_SUBPIX_SEL[0, 0, 3] = 1.0
_SUBPIX_SEL[0, 1, 1] = 1.0
_SUBPIX_SEL[1, 1, 2] = 1.0
_SUBPIX_SEL[1, 2, 0] = 1.0


def _subpixel_weight(w):
    """ConvTranspose2d weight (Cin, Cout, 4, 4) -> (9*Cin, 4*Cout) bf16 (one einsum)."""
    Cin, Cout = w.shape[0], w.shape[1]
    sel = jnp.asarray(_SUBPIX_SEL, w.dtype)
    wbig = jnp.einsum('rdy,cex,ioyx->deirco', sel, sel, w)   # (3,3,Cin,2,2,Cout)
    return wbig.reshape(9 * Cin, 4 * Cout).astype(jnp.bfloat16)


# ----------------------------------------------------------------------------
# Parameters: raw (PyTorch layout) init + one-time kernel-ready preparation
# ----------------------------------------------------------------------------
def init_params(key, img_channels=3, hidden_dim=128, n_resblocks=2,
                codebook_num=128, codebook_dim=64):
    keys = iter(jax.random.split(key, 64))

    def conv_w(cout, cin, kh, kw):
        fan_in = cin * kh * kw
        return jax.random.normal(next(keys), (cout, cin, kh, kw), jnp.float32) / jnp.sqrt(fan_in)

    def convT_w(cin, cout, kh, kw):
        fan_in = cin * kh * kw
        return jax.random.normal(next(keys), (cin, cout, kh, kw), jnp.float32) / jnp.sqrt(fan_in)

    def resblock_p(dim):
        return dict(w1=conv_w(dim, dim, 3, 3), b1=jnp.zeros((dim,), jnp.float32),
                    w2=conv_w(dim, dim, 1, 1), b2=jnp.zeros((dim,), jnp.float32))

    return dict(
        e_conv1_w=conv_w(hidden_dim, img_channels, 4, 4), e_conv1_b=jnp.zeros((hidden_dim,)),
        e_conv2_w=conv_w(hidden_dim, hidden_dim, 4, 4),   e_conv2_b=jnp.zeros((hidden_dim,)),
        e_conv3_w=conv_w(hidden_dim, hidden_dim, 3, 3),   e_conv3_b=jnp.zeros((hidden_dim,)),
        e_res=[resblock_p(hidden_dim) for _ in range(n_resblocks)],
        e_proj_w=conv_w(codebook_dim, hidden_dim, 1, 1),  e_proj_b=jnp.zeros((codebook_dim,)),
        d_convin_w=conv_w(hidden_dim, codebook_dim, 3, 3), d_convin_b=jnp.zeros((hidden_dim,)),
        d_res=[resblock_p(hidden_dim) for _ in range(n_resblocks)],
        d_deconv1_w=convT_w(hidden_dim, hidden_dim, 4, 4), d_deconv1_b=jnp.zeros((hidden_dim,)),
        d_deconv2_w=convT_w(hidden_dim, img_channels, 4, 4), d_deconv2_b=jnp.zeros((img_channels,)),
        codebook=jax.random.uniform(next(keys), (codebook_num, codebook_dim), jnp.float32,
                                    minval=-1.0 / codebook_num, maxval=1.0 / codebook_num),
    )


def prepare_params(p):
    """One-time conversion of PyTorch-layout weights into kernel-ready matrices
    (hoisted out of the per-step forward, per review)."""
    def conv_mat(w):
        cout, cin, kh, kw = w.shape
        return jnp.transpose(w, (2, 3, 1, 0)).reshape(kh * kw * cin, cout).astype(jnp.bfloat16)

    def bias(b):
        return jnp.asarray(b, jnp.float32)

    def res_prep(rp):
        return dict(w1=conv_mat(rp['w1']), b1=bias(rp['b1']).reshape(1, -1),
                    w2=conv_mat(rp['w2']), b2=bias(rp['b2']).reshape(1, -1))

    cb = jnp.asarray(p['codebook'], jnp.float32)
    return dict(
        e_conv1_w=conv_mat(p['e_conv1_w']), e_conv1_b=bias(p['e_conv1_b']),
        e_conv2_w=conv_mat(p['e_conv2_w']), e_conv2_b=bias(p['e_conv2_b']),
        e_conv3_w=conv_mat(p['e_conv3_w']), e_conv3_b=bias(p['e_conv3_b']),
        e_res=[res_prep(rp) for rp in p['e_res']],
        e_proj_w=conv_mat(p['e_proj_w']), e_proj_b=bias(p['e_proj_b']),
        d_convin_w=conv_mat(p['d_convin_w']), d_convin_b=bias(p['d_convin_b']),
        d_res=[res_prep(rp) for rp in p['d_res']],
        d_deconv1_w=_subpixel_weight(p['d_deconv1_w']),
        d_deconv1_b=jnp.tile(bias(p['d_deconv1_b']), 4),
        d_deconv2_w=_subpixel_weight(p['d_deconv2_w']),
        d_deconv2_b=jnp.tile(bias(p['d_deconv2_b']), 4),
        codebook=cb,
        codebook_t=cb.T,
        codebook_sq=jnp.sum(cb * cb, axis=1).reshape(1, -1),
    )


# ----------------------------------------------------------------------------
# VQ-VAE forward (takes prepared params)
# ----------------------------------------------------------------------------
def encode(p, x_nhwc):
    h = conv2d(x_nhwc, p['e_conv1_w'], p['e_conv1_b'], 4, 4, stride=2, pad=1, relu_out=True)
    h = conv2d(h, p['e_conv2_w'], p['e_conv2_b'], 4, 4, stride=2, pad=1, relu_out=True)
    h = conv2d(h, p['e_conv3_w'], p['e_conv3_b'], 3, 3, stride=1, pad=1)
    for rp in p['e_res']:
        h = resblock(h, rp)
    # latent z kept in f32 (feeds VQ / losses)
    z = conv2d(h, p['e_proj_w'], p['e_proj_b'], 1, 1, out_dtype=jnp.float32)
    return z


def decode(p, z_nhwc):
    h = conv2d(z_nhwc, p['d_convin_w'], p['d_convin_b'], 3, 3, stride=1, pad=1)
    for rp in p['d_res']:
        h = resblock(h, rp)
    h = conv_transpose2d(h, p['d_deconv1_w'], p['d_deconv1_b'], relu_out=True)
    x = conv_transpose2d(h, p['d_deconv2_w'], p['d_deconv2_b'], out_dtype=jnp.float32)
    return x


def vqvae_forward(p, x_nchw):
    to_nhwc = lambda a: jnp.transpose(a, (0, 2, 3, 1))
    to_nchw = lambda a: jnp.transpose(a, (0, 3, 1, 2))

    z = encode(p, to_nhwc(x_nchw))                              # (N, H/4, W/4, D) f32
    quantized_z, indices, perplexity = vector_quantize(
        z, p['codebook'], p['codebook_t'], p['codebook_sq'])
    # straight-through estimator (forward values equal quantized_z)
    quantized_z_st = z + jax.lax.stop_gradient(quantized_z - z)
    decx = decode(p, quantized_z_st)

    return dict(
        decx=to_nchw(decx),
        z=to_nchw(z),
        quantized_z=to_nchw(quantized_z),
        quantized_z_st=to_nchw(quantized_z_st),
        indices=indices,
        perplexity=perplexity,
    )
# TODO(synk): codebook EMA update (VectorQuantizerEMA) is a training-time state
#             mutation, not part of the forward pass; not implemented here.


if __name__ == "__main__":
    key = jax.random.PRNGKey(0)
    pkey, xkey = jax.random.split(key)

    params = init_params(pkey, img_channels=3, hidden_dim=128, n_resblocks=2,
                         codebook_num=128, codebook_dim=64)
    prepared = prepare_params(params)        # one-time weight layout conversion
    x = jax.random.normal(xkey, (2, 3, 16, 16), jnp.float32)    # NCHW, like PyTorch

    out = jax.jit(vqvae_forward)(prepared, x)
    jax.block_until_ready(out)

    assert out['decx'].shape == (2, 3, 16, 16)
    assert out['z'].shape == (2, 64, 4, 4)
    assert out['quantized_z'].shape == (2, 64, 4, 4)
    assert out['quantized_z_st'].shape == (2, 64, 4, 4)
    assert out['indices'].shape == (2, 4, 4)
    assert out['perplexity'].shape == ()
    print("KERNEL_OK")
</pallas_src>

<mosaic_0001>
module attributes {stable_mosaic.version = 11 : i64} {
  func.func @_matmul_bias_kernel(%arg0: i32, %arg1: memref<128x48xbf16, #tpu.memory_space<vmem>>, %arg2: memref<48x128xbf16, #tpu.memory_space<vmem>>, %arg3: memref<1x128xf32, #tpu.memory_space<vmem>>, %arg4: memref<128x128xbf16, #tpu.memory_space<vmem>>) attributes {dimension_semantics = [#tpu.dimension_semantics<parallel>], iteration_bounds = array<i64: 1>, scalar_prefetch = 0 : i64, scratch_operands = 0 : i64, tpu.core_type = #tpu.core_type<tc>, window_params = [{transform_indices = @transform_0, window_bounds = array<i64: 128, 48>}, {pipeline_mode = #tpu.pipeline_mode<synchronous>, transform_indices = @transform_1, window_bounds = array<i64: 48, 128>}, {pipeline_mode = #tpu.pipeline_mode<synchronous>, transform_indices = @transform_2, window_bounds = array<i64: 1, 128>}, {transform_indices = @transform_3, window_bounds = array<i64: 128, 128>}]} {
    %c0 = arith.constant 0 : index
    %c0_0 = arith.constant 0 : index
    %0 = vector.load %arg1[%c0, %c0_0] : memref<128x48xbf16, #tpu.memory_space<vmem>>, vector<128x48xbf16>
    %c0_1 = arith.constant 0 : index
    %c0_2 = arith.constant 0 : index
    %1 = vector.load %arg2[%c0_1, %c0_2] : memref<48x128xbf16, #tpu.memory_space<vmem>>, vector<48x128xbf16>
    %cst = arith.constant dense<0.000000e+00> : vector<128x128xf32>
    %2 = tpu.matmul %0, %1, %cst {dimension_numbers = #tpu.dot_dimension_numbers<[1], [0], [0], [1], [0, 0, 1, 1], [], []>} : vector<128x48xbf16>, vector<48x128xbf16>, vector<128x128xf32> -> vector<128x128xf32>
    %c0_3 = arith.constant 0 : index
    %c0_4 = arith.constant 0 : index
    %3 = vector.load %arg3[%c0_3, %c0_4] : memref<1x128xf32, #tpu.memory_space<vmem>>, vector<1x128xf32>
    %4 = vector.broadcast %3 : vector<1x128xf32> to vector<128x128xf32>
    %5 = arith.addf %2, %4 : vector<128x128xf32>
    %cst_5 = arith.constant 0.000000e+00 : f32
    %6 = vector.broadcast %cst_5 : f32 to vector<128x128xf32>
    %7 = arith.maximumf %5, %6 : vector<128x128xf32>
    %8 = arith.truncf %7 : vector<128x128xf32> to vector<128x128xbf16>
    %c0_6 = arith.constant 0 : index
    %c0_7 = arith.constant 0 : index
    %9 = vector.load %arg4[%c0_6, %c0_7] : memref<128x128xbf16, #tpu.memory_space<vmem>>, vector<128x128xbf16>
    tpu.vector_store %arg4[%c0_6, %c0_7], %8 {strides = array<i32>} : memref<128x128xbf16, #tpu.memory_space<vmem>>, vector<128x128xbf16>,
    return
  }
  func.func @transform_0(%arg0: i32) -> (i32, i32) {
    %c0_i32 = arith.constant 0 : i32
    %c0_i32_0 = arith.constant 0 : i32
    return %arg0, %c0_i32 : i32, i32
  }
  func.func @transform_1(%arg0: i32) -> (i32, i32) {
    %c0_i32 = arith.constant 0 : i32
    %c0_i32_0 = arith.constant 0 : i32
    %c0_i32_1 = arith.constant 0 : i32
    return %c0_i32, %c0_i32_0 : i32, i32
  }
  func.func @transform_2(%arg0: i32) -> (i32, i32) {
    %c0_i32 = arith.constant 0 : i32
    %c0_i32_0 = arith.constant 0 : i32
    %c0_i32_1 = arith.constant 0 : i32
    return %c0_i32, %c0_i32_0 : i32, i32
  }
  func.func @transform_3(%arg0: i32) -> (i32, i32) {
    %c0_i32 = arith.constant 0 : i32
    %c0_i32_0 = arith.constant 0 : i32
    return %arg0, %c0_i32 : i32, i32
  }
}

module attributes {stable_mosaic.version = 11 : i64} {
  func.func @_matmul_bias_kernel(%arg0: i32, %arg1: memref<32x2048xbf16, #tpu.memory_space<vmem>>, %arg2: memref<2048x128xbf16, #tpu.memory_space<vmem>>, %arg3: memref<1x128xf32, #tpu.memory_space<vmem>>, %arg4: memref<32x128xbf16, #tpu.memory_space<vmem>>) attributes {dimension_semantics = [#tpu.dimension_semantics<parallel>], iteration_bounds = array<i64: 1>, scalar_prefetch = 0 : i64, scratch_operands = 0 : i64, tpu.core_type = #tpu.core_type<tc>, window_params = [{transform_indices = @transform_0, window_bounds = array<i64: 32, 2048>}, {pipeline_mode = #tpu.pipeline_mode<synchronous>, transform_indices = @transform_1, window_bounds = array<i64: 2048, 128>}, {pipeline_mode = #tpu.pipeline_mode<synchronous>, transform_indices = @transform_2, window_bounds = array<i64: 1, 128>}, {transform_indices = @transform_3, window_bounds = array<i64: 32, 128>}]} {
    %c0 = arith.constant 0 : index
    %c0_0 = arith.constant 0 : index
    %0 = vector.load %arg1[%c0, %c0_0] : memref<32x2048xbf16, #tpu.memory_space<vmem>>, vector<32x2048xbf16>
    %c0_1 = arith.constant 0 : index
    %c0_2 = arith.constant 0 : index
    %1 = vector.load %arg2[%c0_1, %c0_2] : memref<2048x128xbf16, #tpu.memory_space<vmem>>, vector<2048x128xbf16>
    %cst = arith.constant dense<0.000000e+00> : vector<32x128xf32>
    %2 = tpu.matmul %0, %1, %cst {dimension_numbers = #tpu.dot_dimension_numbers<[1], [0], [0], [1], [0, 0, 1, 1], [], []>} : vector<32x2048xbf16>, vector<2048x128xbf16>, vector<32x128xf32> -> vector<32x128xf32>
    %c0_3 = arith.constant 0 : index
    %c0_4 = arith.constant 0 : index
    %3 = vector.load %arg3[%c0_3, %c0_4] : memref<1x128xf32, #tpu.memory_space<vmem>>, vector<1x128xf32>
    %4 = vector.broadcast %3 : vector<1x128xf32> to vector<32x128xf32>
    %5 = arith.addf %2, %4 : vector<32x128xf32>
    %cst_5 = arith.constant 0.000000e+00 : f32
    %6 = vector.broadcast %cst_5 : f32 to vector<32x128xf32>
    %7 = arith.maximumf %5, %6 : vector<32x128xf32>
    %8 = arith.truncf %7 : vector<32x128xf32> to vector<32x128xbf16>
    %c0_6 = arith.constant 0 : index
    %c0_7 = arith.constant 0 : index
    %9 = vector.load %arg4[%c0_6, %c0_7] : memref<32x128xbf16, #tpu.memory_space<vmem>>, vector<32x128xbf16>
    tpu.vector_store %arg4[%c0_6, %c0_7], %8 {strides = array<i32>} : memref<32x128xbf16, #tpu.memory_space<vmem>>, vector<32x128xbf16>,
    return
  }
  func.func @transform_0(%arg0: i32) -> (i32, i32) {
    %c0_i32 = arith.constant 0 : i32
    %c0_i32_0 = arith.constant 0 : i32
    return %arg0, %c0_i32 : i32, i32
  }
  func.func @transform_1(%arg0: i32) -> (i32, i32) {
    %c0_i32 = arith.constant 0 : i32
    %c0_i32_0 = arith.constant 0 : i32
    %c0_i32_1 = arith.constant 0 : i32
    return %c0_i32, %c0_i32_0 : i32, i32
  }
  func.func @transform_2(%arg0: i32) -> (i32, i32) {
    %c0_i32 = arith.constant 0 : i32
    %c0_i32_0 = arith.constant 0 : i32
    %c0_i32_1 = arith.constant 0 : i32
    return %c0_i32, %c0_i32_0 : i32, i32
  }
  func.func @transform_3(%arg0: i32) -> (i32, i32) {
    %c0_i32 = arith.constant 0 : i32
    %c0_i32_0 = arith.constant 0 : i32
    return %arg0, %c0_i32 : i32, i32
  }
}

module attributes {stable_mosaic.version = 11 : i64} {
  func.func @_matmul_bias_kernel(%arg0: i32, %arg1: memref<32x1152xbf16, #tpu.memory_space<vmem>>, %arg2: memref<1152x128xbf16, #tpu.memory_space<vmem>>, %arg3: memref<1x128xf32, #tpu.memory_space<vmem>>, %arg4: memref<32x128xbf16, #tpu.memory_space<vmem>>) attributes {dimension_semantics = [#tpu.dimension_semantics<parallel>], iteration_bounds = array<i64: 1>, scalar_prefetch = 0 : i64, scratch_operands = 0 : i64, tpu.core_type = #tpu.core_type<tc>, window_params = [{transform_indices = @transform_0, window_bounds = array<i64: 32, 1152>}, {pipeline_mode = #tpu.pipeline_mode<synchronous>, transform_indices = @transform_1, window_bounds = array<i64: 1152, 128>}, {pipeline_mode = #tpu.pipeline_mode<synchronous>, transform_indices = @transform_2, window_bounds = array<i64: 1, 128>}, {transform_indices = @transform_3, window_bounds = array<i64: 32, 128>}]} {
    %c0 = arith.constant 0 : index
    %c0_0 = arith.constant 0 : index
    %0 = vector.load %arg1[%c0, %c0_0] : memref<32x1152xbf16, #tpu.memory_space<vmem>>, vector<32x1152xbf16>
    %c0_1 = arith.constant 0 : index
    %c0_2 = arith.constant 0 : index
    %1 = vector.load %arg2[%c0_1, %c0_2] : memref<1152x128xbf16, #tpu.memory_space<vmem>>, vector<1152x128xbf16>
    %cst = arith.constant dense<0.000000e+00> : vector<32x128xf32>
    %2 = tpu.matmul %0, %1, %cst {dimension_numbers = #tpu.dot_dimension_numbers<[1], [0], [0], [1], [0, 0, 1, 1], [], []>} : vector<32x1152xbf16>, vector<1152x128xbf16>, vector<32x128xf32> -> vector<32x128xf32>
    %c0_3 = arith.constant 0 : index
    %c0_4 = arith.constant 0 : index
    %3 = vector.load %arg3[%c0_3, %c0_4] : memref<1x128xf32, #tpu.memory_space<vmem>>, vector<1x128xf32>
    %4 = vector.broadcast %3 : vector<1x128xf32> to vector<32x128xf32>
    %5 = arith.addf %2, %4 : vector<32x128xf32>
    %6 = arith.truncf %5 : vector<32x128xf32> to vector<32x128xbf16>
    %c0_5 = arith.constant 0 : index
    %c0_6 = arith.constant 0 : index
    %7 = vector.load %arg4[%c0_5, %c0_6] : memref<32x128xbf16, #tpu.memory_space<vmem>>, vector<32x128xbf16>
    tpu.vector_store %arg4[%c0_5, %c0_6], %6 {strides = array<i32>} : memref<32x128xbf16, #tpu.memory_space<vmem>>, vector<32x128xbf16>,
    return
  }
  func.func @transform_0(%arg0: i32) -> (i32, i32) {
    %c0_i32 = arith.constant 0 : i32
    %c0_i32_0 = arith.constant 0 : i32
    return %arg0, %c0_i32 : i32, i32
  }
  func.func @transform_1(%arg0: i32) -> (i32, i32) {
    %c0_i32 = arith.constant 0 : i32
    %c0_i32_0 = arith.constant 0 : i32
    %c0_i32_1 = arith.constant 0 : i32
    return %c0_i32, %c0_i32_0 : i32, i32
  }
  func.func @transform_2(%arg0: i32) -> (i32, i32) {
    %c0_i32 = arith.constant 0 : i32
    %c0_i32_0 = arith.constant 0 : i32
    %c0_i32_1 = arith.constant 0 : i32
    return %c0_i32, %c0_i32_0 : i32, i32
  }
  func.func @transform_3(%arg0: i32) -> (i32, i32) {
    %c0_i32 = arith.constant 0 : i32
    %c0_i32_0 = arith.constant 0 : i32
    return %arg0, %c0_i32 : i32, i32
  }
}

module attributes {stable_mosaic.version = 11 : i64} {
  func.func @_resblock_kernel(%arg0: i32, %arg1: memref<32x1152xbf16, #tpu.memory_space<vmem>>, %arg2: memref<1152x128xbf16, #tpu.memory_space<vmem>>, %arg3: memref<1x128xf32, #tpu.memory_space<vmem>>, %arg4: memref<128x128xbf16, #tpu.memory_space<vmem>>, %arg5: memref<1x128xf32, #tpu.memory_space<vmem>>, %arg6: memref<32x128xbf16, #tpu.memory_space<vmem>>, %arg7: memref<32x128xbf16, #tpu.memory_space<vmem>>) attributes {dimension_semantics = [#tpu.dimension_semantics<parallel>], iteration_bounds = array<i64: 1>, scalar_prefetch = 0 : i64, scratch_operands = 0 : i64, tpu.core_type = #tpu.core_type<tc>, window_params = [{transform_indices = @transform_0, window_bounds = array<i64: 32, 1152>}, {pipeline_mode = #tpu.pipeline_mode<synchronous>, transform_indices = @transform_1, window_bounds = array<i64: 1152, 128>}, {pipeline_mode = #tpu.pipeline_mode<synchronous>, transform_indices = @transform_2, window_bounds = array<i64: 1, 128>}, {pipeline_mode = #tpu.pipeline_mode<synchronous>, transform_indices = @transform_3, window_bounds = array<i64: 128, 128>}, {pipeline_mode = #tpu.pipeline_mode<synchronous>, transform_indices = @transform_4, window_bounds = array<i64: 1, 128>}, {transform_indices = @transform_5, window_bounds = array<i64: 32, 128>}, {transform_indices = @transform_6, window_bounds = array<i64: 32, 128>}]} {
    %c0 = arith.constant 0 : index
    %c0_0 = arith.constant 0 : index
    %0 = vector.load %arg1[%c0, %c0_0] : memref<32x1152xbf16, #tpu.memory_space<vmem>>, vector<32x1152xbf16>
    %c0_1 = arith.constant 0 : index
    %c0_2 = arith.constant 0 : index
    %1 = vector.load %arg2[%c0_1, %c0_2] : memref<1152x128xbf16, #tpu.memory_space<vmem>>, vector<1152x128xbf16>
    %cst = arith.constant dense<0.000000e+00> : vector<32x128xf32>
    %2 = tpu.matmul %0, %1, %cst {dimension_numbers = #tpu.dot_dimension_numbers<[1], [0], [0], [1], [0, 0, 1, 1], [], []>} : vector<32x1152xbf16>, vector<1152x128xbf16>, vector<32x128xf32> -> vector<32x128xf32>
    %c0_3 = arith.constant 0 : index
    %c0_4 = arith.constant 0 : index
    %3 = vector.load %arg3[%c0_3, %c0_4] : memref<1x128xf32, #tpu.memory_space<vmem>>, vector<1x128xf32>
    %4 = vector.broadcast %3 : vector<1x128xf32> to vector<32x128xf32>
    %5 = arith.addf %2, %4 : vector<32x128xf32>
    %cst_5 = arith.constant 0.000000e+00 : f32
    %6 = vector.broadcast %cst_5 : f32 to vector<32x128xf32>
    %7 = arith.maximumf %5, %6 : vector<32x128xf32>
    %8 = arith.truncf %7 : vector<32x128xf32> to vector<32x128xbf16>
    %c0_6 = arith.constant 0 : index
    %c0_7 = arith.constant 0 : index
    %9 = vector.load %arg4[%c0_6, %c0_7] : memref<128x128xbf16, #tpu.memory_space<vmem>>, vector<128x128xbf16>
    %cst_8 = arith.constant dense<0.000000e+00> : vector<32x128xf32>
    %10 = tpu.matmul %8, %9, %cst_8 {dimension_numbers = #tpu.dot_dimension_numbers<[1], [0], [0], [1], [0, 0, 1, 1], [], []>} : vector<32x128xbf16>, vector<128x128xbf16>, vector<32x128xf32> -> vector<32x128xf32>
    %c0_9 = arith.constant 0 : index
    %c0_10 = arith.constant 0 : index
    %11 = vector.load %arg5[%c0_9, %c0_10] : memref<1x128xf32, #tpu.memory_space<vmem>>, vector<1x128xf32>
    %12 = vector.broadcast %11 : vector<1x128xf32> to vector<32x128xf32>
    %13 = arith.addf %10, %12 : vector<32x128xf32>
    %c0_11 = arith.constant 0 : index
    %c0_12 = arith.constant 0 : index
    %14 = vector.load %arg6[%c0_11, %c0_12] : memref<32x128xbf16, #tpu.memory_space<vmem>>, vector<32x128xbf16>
    %15 = arith.extf %14 : vector<32x128xbf16> to vector<32x128xf32>
    %16 = arith.addf %15, %13 : vector<32x128xf32>
    %17 = arith.truncf %16 : vector<32x128xf32> to vector<32x128xbf16>
    %c0_13 = arith.constant 0 : index
    %c0_14 = arith.constant 0 : index
    %18 = vector.load %arg7[%c0_13, %c0_14] : memref<32x128xbf16, #tpu.memory_space<vmem>>, vector<32x128xbf16>
    tpu.vector_store %arg7[%c0_13, %c0_14], %17 {strides = array<i32>} : memref<32x128xbf16, #tpu.memory_space<vmem>>, vector<32x128xbf16>,
    return
  }
  func.func @transform_0(%arg0: i32) -> (i32, i32) {
    %c0_i32 = arith.constant 0 : i32
    %c0_i32_0 = arith.constant 0 : i32
    return %arg0, %c0_i32 : i32, i32
  }
  func.func @transform_1(%arg0: i32) -> (i32, i32) {
    %c0_i32 = arith.constant 0 : i32
    %c0_i32_0 = arith.constant 0 : i32
    %c0_i32_1 = arith.constant 0 : i32
    return %c0_i32, %c0_i32_0 : i32, i32
  }
  func.func @transform_2(%arg0: i32) -> (i32, i32) {
    %c0_i32 = arith.constant 0 : i32
    %c0_i32_0 = arith.constant 0 : i32
    %c0_i32_1 = arith.constant 0 : i32
    return %c0_i32, %c0_i32_0 : i32, i32
  }
  func.func @transform_3(%arg0: i32) -> (i32, i32) {
    %c0_i32 = arith.constant 0 : i32
    %c0_i32_0 = arith.constant 0 : i32
    %c0_i32_1 = arith.constant 0 : i32
    return %c0_i32, %c0_i32_0 : i32, i32
  }
  func.func @transform_4(%arg0: i32) -> (i32, i32) {
    %c0_i32 = arith.constant 0 : i32
    %c0_i32_0 = arith.constant 0 : i32
    %c0_i32_1 = arith.constant 0 : i32
    return %c0_i32, %c0_i32_0 : i32, i32
  }
  func.func @transform_5(%arg0: i32) -> (i32, i32) {
    %c0_i32 = arith.constant 0 : i32
    %c0_i32_0 = arith.constant 0 : i32
    return %arg0, %c0_i32 : i32, i32
  }
  func.func @transform_6(%arg0: i32) -> (i32, i32) {
    %c0_i32 = arith.constant 0 : i32
    %c0_i32_0 = arith.constant 0 : i32
    return %arg0, %c0_i32 : i32, i32
  }
}

module attributes {stable_mosaic.version = 11 : i64} {
  func.func @_matmul_bias_kernel(%arg0: i32, %arg1: memref<32x128xbf16, #tpu.memory_space<vmem>>, %arg2: memref<128x64xbf16, #tpu.memory_space<vmem>>, %arg3: memref<1x64xf32, #tpu.memory_space<vmem>>, %arg4: memref<32x64xf32, #tpu.memory_space<vmem>>) attributes {dimension_semantics = [#tpu.dimension_semantics<parallel>], iteration_bounds = array<i64: 1>, scalar_prefetch = 0 : i64, scratch_operands = 0 : i64, tpu.core_type = #tpu.core_type<tc>, window_params = [{transform_indices = @transform_0, window_bounds = array<i64: 32, 128>}, {pipeline_mode = #tpu.pipeline_mode<synchronous>, transform_indices = @transform_1, window_bounds = array<i64: 128, 64>}, {pipeline_mode = #tpu.pipeline_mode<synchronous>, transform_indices = @transform_2, window_bounds = array<i64: 1, 64>}, {transform_indices = @transform_3, window_bounds = array<i64: 32, 64>}]} {
    %c0 = arith.constant 0 : index
    %c0_0 = arith.constant 0 : index
    %0 = vector.load %arg1[%c0, %c0_0] : memref<32x128xbf16, #tpu.memory_space<vmem>>, vector<32x128xbf16>
    %c0_1 = arith.constant 0 : index
    %c0_2 = arith.constant 0 : index
    %1 = vector.load %arg2[%c0_1, %c0_2] : memref<128x64xbf16, #tpu.memory_space<vmem>>, vector<128x64xbf16>
    %cst = arith.constant dense<0.000000e+00> : vector<32x64xf32>
    %2 = tpu.matmul %0, %1, %cst {dimension_numbers = #tpu.dot_dimension_numbers<[1], [0], [0], [1], [0, 0, 1, 1], [], []>} : vector<32x128xbf16>, vector<128x64xbf16>, vector<32x64xf32> -> vector<32x64xf32>
    %c0_3 = arith.constant 0 : index
    %c0_4 = arith.constant 0 : index
    %3 = vector.load %arg3[%c0_3, %c0_4] : memref<1x64xf32, #tpu.memory_space<vmem>>, vector<1x64xf32>
    %4 = vector.broadcast %3 : vector<1x64xf32> to vector<32x64xf32>
    %5 = arith.addf %2, %4 : vector<32x64xf32>
    %c0_5 = arith.constant 0 : index
    %c0_6 = arith.constant 0 : index
    %6 = vector.load %arg4[%c0_5, %c0_6] : memref<32x64xf32, #tpu.memory_space<vmem>>, vector<32x64xf32>
    tpu.vector_store %arg4[%c0_5, %c0_6], %5 {strides = array<i32>} : memref<32x64xf32, #tpu.memory_space<vmem>>, vector<32x64xf32>,
    return
  }
  func.func @transform_0(%arg0: i32) -> (i32, i32) {
    %c0_i32 = arith.constant 0 : i32
    %c0_i32_0 = arith.constant 0 : i32
    return %arg0, %c0_i32 : i32, i32
  }
  func.func @transform_1(%arg0: i32) -> (i32, i32) {
    %c0_i32 = arith.constant 0 : i32
    %c0_i32_0 = arith.constant 0 : i32
    %c0_i32_1 = arith.constant 0 : i32
    return %c0_i32, %c0_i32_0 : i32, i32
  }
  func.func @transform_2(%arg0: i32) -> (i32, i32) {
    %c0_i32 = arith.constant 0 : i32
    %c0_i32_0 = arith.constant 0 : i32
    %c0_i32_1 = arith.constant 0 : i32
    return %c0_i32, %c0_i32_0 : i32, i32
  }
  func.func @transform_3(%arg0: i32) -> (i32, i32) {
    %c0_i32 = arith.constant 0 : i32
    %c0_i32_0 = arith.constant 0 : i32
    return %arg0, %c0_i32 : i32, i32
  }
}

module attributes {stable_mosaic.version = 11 : i64} {
  func.func @_vq_kernel(%arg0: i32, %arg1: memref<32x64xf32, #tpu.memory_space<vmem>>, %arg2: memref<128x64xf32, #tpu.memory_space<vmem>>, %arg3: memref<64x128xf32, #tpu.memory_space<vmem>>, %arg4: memref<1x128xf32, #tpu.memory_space<vmem>>, %arg5: memref<32x64xf32, #tpu.memory_space<vmem>>, %arg6: memref<32x1xi32, #tpu.memory_space<vmem>>, %arg7: memref<1x1x128xf32, #tpu.memory_space<vmem>>) attributes {dimension_semantics = [#tpu.dimension_semantics<parallel>], iteration_bounds = array<i64: 1>, scalar_prefetch = 0 : i64, scratch_operands = 0 : i64, tpu.core_type = #tpu.core_type<tc>, window_params = [{transform_indices = @transform_0, window_bounds = array<i64: 32, 64>}, {pipeline_mode = #tpu.pipeline_mode<synchronous>, transform_indices = @transform_1, window_bounds = array<i64: 128, 64>}, {pipeline_mode = #tpu.pipeline_mode<synchronous>, transform_indices = @transform_2, window_bounds = array<i64: 64, 128>}, {pipeline_mode = #tpu.pipeline_mode<synchronous>, transform_indices = @transform_3, window_bounds = array<i64: 1, 128>}, {transform_indices = @transform_4, window_bounds = array<i64: 32, 64>}, {transform_indices = @transform_5, window_bounds = array<i64: 32, 1>}, {transform_indices = @transform_6, window_bounds = array<i64: 1, 1, 128>}]} {
    %c0 = arith.constant 0 : index
    %c0_0 = arith.constant 0 : index
    %0 = vector.load %arg1[%c0, %c0_0] : memref<32x64xf32, #tpu.memory_space<vmem>>, vector<32x64xf32>
    %c0_1 = arith.constant 0 : index
    %c0_2 = arith.constant 0 : index
    %1 = vector.load %arg4[%c0_1, %c0_2] : memref<1x128xf32, #tpu.memory_space<vmem>>, vector<1x128xf32>
    %c0_3 = arith.constant 0 : index
    %c0_4 = arith.constant 0 : index
    %2 = vector.load %arg3[%c0_3, %c0_4] : memref<64x128xf32, #tpu.memory_space<vmem>>, vector<64x128xf32>
    %cst = arith.constant dense<0.000000e+00> : vector<32x128xf32>
    %3 = tpu.matmul %0, %2, %cst {dimension_numbers = #tpu.dot_dimension_numbers<[1], [0], [0], [1], [0, 0, 1, 1], [], []>} : vector<32x64xf32>, vector<64x128xf32>, vector<32x128xf32> -> vector<32x128xf32>
    %cst_5 = arith.constant 2.000000e+00 : f32
    %4 = vector.broadcast %cst_5 : f32 to vector<32x128xf32>
    %5 = arith.mulf %4, %3 : vector<32x128xf32>
    %6 = vector.broadcast %1 : vector<1x128xf32> to vector<32x128xf32>
    %7 = arith.subf %6, %5 : vector<32x128xf32>
    %8 = tpu.iota {dimensions = array<i32: 1>} : vector<32x128xi32>
    %cst_6 = arith.constant dense<0x7F800000> : vector<32xf32>
    %9 = vector.multi_reduction <minimumf>, %7, %cst_6 [1] : vector<32x128xf32> to vector<32xf32>
    %10 = vector.shape_cast %9 : vector<32xf32> to vector<32x1xf32>
    %11 = vector.broadcast %10 : vector<32x1xf32> to vector<32x128xf32>
    %12 = arith.cmpf ole, %7, %11 : vector<32x128xf32>
    %c128_i32 = arith.constant 128 : i32
    %13 = vector.broadcast %c128_i32 : i32 to vector<32x128xi32>
    %14 = arith.select %12, %8, %13 : vector<32x128xi1>, vector<32x128xi32>
    %cst_7 = arith.constant dense<2147483647> : vector<32xi32>
    %15 = vector.multi_reduction <minsi>, %14, %cst_7 [1] : vector<32x128xi32> to vector<32xi32>
    %16 = vector.shape_cast %15 : vector<32xi32> to vector<32x1xi32>
    %17 = vector.broadcast %16 : vector<32x1xi32> to vector<32x128xi32>
    %18 = arith.cmpi eq, %8, %17 : vector<32x128xi32>
    %19 = arith.extui %18 : vector<32x128xi1> to vector<32x128xi32>
    %20 = arith.sitofp %19 : vector<32x128xi32> to vector<32x128xf32>
    %c0_8 = arith.constant 0 : index
    %c0_9 = arith.constant 0 : index
    %21 = vector.load %arg2[%c0_8, %c0_9] : memref<128x64xf32, #tpu.memory_space<vmem>>, vector<128x64xf32>
    %cst_10 = arith.constant dense<0.000000e+00> : vector<32x64xf32>
    %22 = tpu.matmul %20, %21, %cst_10 {dimension_numbers = #tpu.dot_dimension_numbers<[1], [0], [0], [1], [0, 0, 1, 1], [], []>} : vector<32x128xf32>, vector<128x64xf32>, vector<32x64xf32> -> vector<32x64xf32>
    %c0_11 = arith.constant 0 : index
    %c0_12 = arith.constant 0 : index
    %23 = vector.load %arg5[%c0_11, %c0_12] : memref<32x64xf32, #tpu.memory_space<vmem>>, vector<32x64xf32>
    tpu.vector_store %arg5[%c0_11, %c0_12], %22 {strides = array<i32>} : memref<32x64xf32, #tpu.memory_space<vmem>>, vector<32x64xf32>,
    %c0_13 = arith.constant 0 : index
    %c0_14 = arith.constant 0 : index
    %24 = vector.load %arg6[%c0_13, %c0_14] : memref<32x1xi32, #tpu.memory_space<vmem>>, vector<32x1xi32>
    tpu.vector_store %arg6[%c0_13, %c0_14], %16 {strides = array<i32>} : memref<32x1xi32, #tpu.memory_space<vmem>>, vector<32x1xi32>,
    %c32_i32 = arith.constant 32 : i32
    %25 = arith.muli %arg0, %c32_i32 : i32
    %26 = tpu.iota {dimensions = array<i32: 0>} : vector<32x1xi32>
    %27 = vector.broadcast %25 : i32 to vector<32x1xi32>
    %28 = arith.addi %27, %26 : vector<32x1xi32>
    %c32_i32_15 = arith.constant 32 : i32
    %29 = vector.broadcast %c32_i32_15 : i32 to vector<32x1xi32>
    %30 = arith.cmpi slt, %28, %29 : vector<32x1xi32>
    %31 = arith.extui %30 : vector<32x1xi1> to vector<32x1xi32>
    %32 = arith.sitofp %31 : vector<32x1xi32> to vector<32x1xf32>
    %33 = vector.broadcast %32 : vector<32x1xf32> to vector<32x128xf32>
    %34 = arith.mulf %20, %33 : vector<32x128xf32>
    %cst_16 = arith.constant dense<0.000000e+00> : vector<128xf32>
    %35 = vector.multi_reduction <add>, %34, %cst_16 [0] : vector<32x128xf32> to vector<128xf32>
    %36 = vector.shape_cast %35 : vector<128xf32> to vector<1x128xf32>
    %37 = vector.shape_cast %36 : vector<1x128xf32> to vector<1x1x128xf32>
    %c0_17 = arith.constant 0 : index
    %c0_18 = arith.constant 0 : index
    %c0_19 = arith.constant 0 : index
    %38 = vector.load %arg7[%c0_17, %c0_18, %c0_19] : memref<1x1x128xf32, #tpu.memory_space<vmem>>, vector<1x1x128xf32>
    tpu.vector_store %arg7[%c0_17, %c0_18, %c0_19], %37 {strides = array<i32>} : memref<1x1x128xf32, #tpu.memory_space<vmem>>, vector<1x1x128xf32>,
    return
  }
  func.func @transform_0(%arg0: i32) -> (i32, i32) {
    %c0_i32 = arith.constant 0 : i32
    %c0_i32_0 = arith.constant 0 : i32
    return %arg0, %c0_i32 : i32, i32
  }
  func.func @transform_1(%arg0: i32) -> (i32, i32) {
    %c0_i32 = arith.constant 0 : i32
    %c0_i32_0 = arith.constant 0 : i32
    %c0_i32_1 = arith.constant 0 : i32
    return %c0_i32, %c0_i32_0 : i32, i32
  }
  func.func @transform_2(%arg0: i32) -> (i32, i32) {
    %c0_i32 = arith.constant 0 : i32
    %c0_i32_0 = arith.constant 0 : i32
    %c0_i32_1 = arith.constant 0 : i32
    return %c0_i32, %c0_i32_0 : i32, i32
  }
  func.func @transform_3(%arg0: i32) -> (i32, i32) {
    %c0_i32 = arith.constant 0 : i32
    %c0_i32_0 = arith.constant 0 : i32
    %c0_i32_1 = arith.constant 0 : i32
    return %c0_i32, %c0_i32_0 : i32, i32
  }
  func.func @transform_4(%arg0: i32) -> (i32, i32) {
    %c0_i32 = arith.constant 0 : i32
    %c0_i32_0 = arith.constant 0 : i32
    return %arg0, %c0_i32 : i32, i32
  }
  func.func @transform_5(%arg0: i32) -> (i32, i32) {
    %c0_i32 = arith.constant 0 : i32
    %c0_i32_0 = arith.constant 0 : i32
    return %arg0, %c0_i32 : i32, i32
  }
  func.func @transform_6(%arg0: i32) -> (i32, i32, i32) {
    %c0_i32 = arith.constant 0 : i32
    %c0_i32_0 = arith.constant 0 : i32
    %c0_i32_1 = arith.constant 0 : i32
    return %arg0, %c0_i32, %c0_i32_0 : i32, i32, i32
  }
}

module attributes {stable_mosaic.version = 11 : i64} {
  func.func @_matmul_bias_kernel(%arg0: i32, %arg1: memref<32x576xbf16, #tpu.memory_space<vmem>>, %arg2: memref<576x128xbf16, #tpu.memory_space<vmem>>, %arg3: memref<1x128xf32, #tpu.memory_space<vmem>>, %arg4: memref<32x128xbf16, #tpu.memory_space<vmem>>) attributes {dimension_semantics = [#tpu.dimension_semantics<parallel>], iteration_bounds = array<i64: 1>, scalar_prefetch = 0 : i64, scratch_operands = 0 : i64, tpu.core_type = #tpu.core_type<tc>, window_params = [{transform_indices = @transform_0, window_bounds = array<i64: 32, 576>}, {pipeline_mode = #tpu.pipeline_mode<synchronous>, transform_indices = @transform_1, window_bounds = array<i64: 576, 128>}, {pipeline_mode = #tpu.pipeline_mode<synchronous>, transform_indices = @transform_2, window_bounds = array<i64: 1, 128>}, {transform_indices = @transform_3, window_bounds = array<i64: 32, 128>}]} {
    %c0 = arith.constant 0 : index
    %c0_0 = arith.constant 0 : index
    %0 = vector.load %arg1[%c0, %c0_0] : memref<32x576xbf16, #tpu.memory_space<vmem>>, vector<32x576xbf16>
    %c0_1 = arith.constant 0 : index
    %c0_2 = arith.constant 0 : index
    %1 = vector.load %arg2[%c0_1, %c0_2] : memref<576x128xbf16, #tpu.memory_space<vmem>>, vector<576x128xbf16>
    %cst = arith.constant dense<0.000000e+00> : vector<32x128xf32>
    %2 = tpu.matmul %0, %1, %cst {dimension_numbers = #tpu.dot_dimension_numbers<[1], [0], [0], [1], [0, 0, 1, 1], [], []>} : vector<32x576xbf16>, vector<576x128xbf16>, vector<32x128xf32> -> vector<32x128xf32>
    %c0_3 = arith.constant 0 : index
    %c0_4 = arith.constant 0 : index
    %3 = vector.load %arg3[%c0_3, %c0_4] : memref<1x128xf32, #tpu.memory_space<vmem>>, vector<1x128xf32>
    %4 = vector.broadcast %3 : vector<1x128xf32> to vector<32x128xf32>
    %5 = arith.addf %2, %4 : vector<32x128xf32>
    %6 = arith.truncf %5 : vector<32x128xf32> to vector<32x128xbf16>
    %c0_5 = arith.constant 0 : index
    %c0_6 = arith.constant 0 : index
    %7 = vector.load %arg4[%c0_5, %c0_6] : memref<32x128xbf16, #tpu.memory_space<vmem>>, vector<32x128xbf16>
    tpu.vector_store %arg4[%c0_5, %c0_6], %6 {strides = array<i32>} : memref<32x128xbf16, #tpu.memory_space<vmem>>, vector<32x128xbf16>,
    return
  }
  func.func @transform_0(%arg0: i32) -> (i32, i32) {
    %c0_i32 = arith.constant 0 : i32
    %c0_i32_0 = arith.constant 0 : i32
    return %arg0, %c0_i32 : i32, i32
  }
  func.func @transform_1(%arg0: i32) -> (i32, i32) {
    %c0_i32 = arith.constant 0 : i32
    %c0_i32_0 = arith.constant 0 : i32
    %c0_i32_1 = arith.constant 0 : i32
    return %c0_i32, %c0_i32_0 : i32, i32
  }
  func.func @transform_2(%arg0: i32) -> (i32, i32) {
    %c0_i32 = arith.constant 0 : i32
    %c0_i32_0 = arith.constant 0 : i32
    %c0_i32_1 = arith.constant 0 : i32
    return %c0_i32, %c0_i32_0 : i32, i32
  }
  func.func @transform_3(%arg0: i32) -> (i32, i32) {
    %c0_i32 = arith.constant 0 : i32
    %c0_i32_0 = arith.constant 0 : i32
    return %arg0, %c0_i32 : i32, i32
  }
}

module attributes {stable_mosaic.version = 11 : i64} {
  func.func @_matmul_bias_kernel(%arg0: i32, %arg1: memref<32x1152xbf16, #tpu.memory_space<vmem>>, %arg2: memref<1152x512xbf16, #tpu.memory_space<vmem>>, %arg3: memref<1x512xf32, #tpu.memory_space<vmem>>, %arg4: memref<32x512xbf16, #tpu.memory_space<vmem>>) attributes {dimension_semantics = [#tpu.dimension_semantics<parallel>], iteration_bounds = array<i64: 1>, scalar_prefetch = 0 : i64, scratch_operands = 0 : i64, tpu.core_type = #tpu.core_type<tc>, window_params = [{transform_indices = @transform_0, window_bounds = array<i64: 32, 1152>}, {pipeline_mode = #tpu.pipeline_mode<synchronous>, transform_indices = @transform_1, window_bounds = array<i64: 1152, 512>}, {pipeline_mode = #tpu.pipeline_mode<synchronous>, transform_indices = @transform_2, window_bounds = array<i64: 1, 512>}, {transform_indices = @transform_3, window_bounds = array<i64: 32, 512>}]} {
    %c0 = arith.constant 0 : index
    %c0_0 = arith.constant 0 : index
    %0 = vector.load %arg1[%c0, %c0_0] : memref<32x1152xbf16, #tpu.memory_space<vmem>>, vector<32x1152xbf16>
    %c0_1 = arith.constant 0 : index
    %c0_2 = arith.constant 0 : index
    %1 = vector.load %arg2[%c0_1, %c0_2] : memref<1152x512xbf16, #tpu.memory_space<vmem>>, vector<1152x512xbf16>
    %cst = arith.constant dense<0.000000e+00> : vector<32x512xf32>
    %2 = tpu.matmul %0, %1, %cst {dimension_numbers = #tpu.dot_dimension_numbers<[1], [0], [0], [1], [0, 0, 1, 1], [], []>} : vector<32x1152xbf16>, vector<1152x512xbf16>, vector<32x512xf32> -> vector<32x512xf32>
    %c0_3 = arith.constant 0 : index
    %c0_4 = arith.constant 0 : index
    %3 = vector.load %arg3[%c0_3, %c0_4] : memref<1x512xf32, #tpu.memory_space<vmem>>, vector<1x512xf32>
    %4 = vector.broadcast %3 : vector<1x512xf32> to vector<32x512xf32>
    %5 = arith.addf %2, %4 : vector<32x512xf32>
    %cst_5 = arith.constant 0.000000e+00 : f32
    %6 = vector.broadcast %cst_5 : f32 to vector<32x512xf32>
    %7 = arith.maximumf %5, %6 : vector<32x512xf32>
    %8 = arith.truncf %7 : vector<32x512xf32> to vector<32x512xbf16>
    %c0_6 = arith.constant 0 : index
    %c0_7 = arith.constant 0 : index
    %9 = vector.load %arg4[%c0_6, %c0_7] : memref<32x512xbf16, #tpu.memory_space<vmem>>, vector<32x512xbf16>
    tpu.vector_store %arg4[%c0_6, %c0_7], %8 {strides = array<i32>} : memref<32x512xbf16, #tpu.memory_space<vmem>>, vector<32x512xbf16>,
    return
  }
  func.func @transform_0(%arg0: i32) -> (i32, i32) {
    %c0_i32 = arith.constant 0 : i32
    %c0_i32_0 = arith.constant 0 : i32
    return %arg0, %c0_i32 : i32, i32
  }
  func.func @transform_1(%arg0: i32) -> (i32, i32) {
    %c0_i32 = arith.constant 0 : i32
    %c0_i32_0 = arith.constant 0 : i32
    %c0_i32_1 = arith.constant 0 : i32
    return %c0_i32, %c0_i32_0 : i32, i32
  }
  func.func @transform_2(%arg0: i32) -> (i32, i32) {
    %c0_i32 = arith.constant 0 : i32
    %c0_i32_0 = arith.constant 0 : i32
    %c0_i32_1 = arith.constant 0 : i32
    return %c0_i32, %c0_i32_0 : i32, i32
  }
  func.func @transform_3(%arg0: i32) -> (i32, i32) {
    %c0_i32 = arith.constant 0 : i32
    %c0_i32_0 = arith.constant 0 : i32
    return %arg0, %c0_i32 : i32, i32
  }
}

module attributes {stable_mosaic.version = 11 : i64} {
  func.func @_matmul_bias_kernel(%arg0: i32, %arg1: memref<128x1152xbf16, #tpu.memory_space<vmem>>, %arg2: memref<1152x12xbf16, #tpu.memory_space<vmem>>, %arg3: memref<1x12xf32, #tpu.memory_space<vmem>>, %arg4: memref<128x12xf32, #tpu.memory_space<vmem>>) attributes {dimension_semantics = [#tpu.dimension_semantics<parallel>], iteration_bounds = array<i64: 1>, scalar_prefetch = 0 : i64, scratch_operands = 0 : i64, tpu.core_type = #tpu.core_type<tc>, window_params = [{transform_indices = @transform_0, window_bounds = array<i64: 128, 1152>}, {pipeline_mode = #tpu.pipeline_mode<synchronous>, transform_indices = @transform_1, window_bounds = array<i64: 1152, 12>}, {pipeline_mode = #tpu.pipeline_mode<synchronous>, transform_indices = @transform_2, window_bounds = array<i64: 1, 12>}, {transform_indices = @transform_3, window_bounds = array<i64: 128, 12>}]} {
    %c0 = arith.constant 0 : index
    %c0_0 = arith.constant 0 : index
    %0 = vector.load %arg1[%c0, %c0_0] : memref<128x1152xbf16, #tpu.memory_space<vmem>>, vector<128x1152xbf16>
    %c0_1 = arith.constant 0 : index
    %c0_2 = arith.constant 0 : index
    %1 = vector.load %arg2[%c0_1, %c0_2] : memref<1152x12xbf16, #tpu.memory_space<vmem>>, vector<1152x12xbf16>
    %cst = arith.constant dense<0.000000e+00> : vector<128x12xf32>
    %2 = tpu.matmul %0, %1, %cst {dimension_numbers = #tpu.dot_dimension_numbers<[1], [0], [0], [1], [0, 0, 1, 1], [], []>} : vector<128x1152xbf16>, vector<1152x12xbf16>, vector<128x12xf32> -> vector<128x12xf32>
    %c0_3 = arith.constant 0 : index
    %c0_4 = arith.constant 0 : index
    %3 = vector.load %arg3[%c0_3, %c0_4] : memref<1x12xf32, #tpu.memory_space<vmem>>, vector<1x12xf32>
    %4 = vector.broadcast %3 : vector<1x12xf32> to vector<128x12xf32>
    %5 = arith.addf %2, %4 : vector<128x12xf32>
    %c0_5 = arith.constant 0 : index
    %c0_6 = arith.constant 0 : index
    %6 = vector.load %arg4[%c0_5, %c0_6] : memref<128x12xf32, #tpu.memory_space<vmem>>, vector<128x12xf32>
    tpu.vector_store %arg4[%c0_5, %c0_6], %5 {strides = array<i32>} : memref<128x12xf32, #tpu.memory_space<vmem>>, vector<128x12xf32>,
    return
  }
  func.func @transform_0(%arg0: i32) -> (i32, i32) {
    %c0_i32 = arith.constant 0 : i32
    %c0_i32_0 = arith.constant 0 : i32
    return %arg0, %c0_i32 : i32, i32
  }
  func.func @transform_1(%arg0: i32) -> (i32, i32) {
    %c0_i32 = arith.constant 0 : i32
    %c0_i32_0 = arith.constant 0 : i32
    %c0_i32_1 = arith.constant 0 : i32
    return %c0_i32, %c0_i32_0 : i32, i32
  }
  func.func @transform_2(%arg0: i32) -> (i32, i32) {
    %c0_i32 = arith.constant 0 : i32
    %c0_i32_0 = arith.constant 0 : i32
    %c0_i32_1 = arith.constant 0 : i32
    return %c0_i32, %c0_i32_0 : i32, i32
  }
  func.func @transform_3(%arg0: i32) -> (i32, i32) {
    %c0_i32 = arith.constant 0 : i32
    %c0_i32_0 = arith.constant 0 : i32
    return %arg0, %c0_i32 : i32, i32
  }
}

</mosaic_0001>

<llo_original>
// kernel: vqvae_forward.12
$region0: #{vqvae_forward.12}
  #allocation0 [shape = 'u32[]', space=smem, size = 0x4, offset = 0x4, fixed_abs, tag = 'smem constant byte address 0x4 - core index']
  #allocation1 [shape = 'u32[72,128]{1,0:T(1,128)}', space=vmem, size = 0x9000, scoped, tag = 'internal scratch']
  %s0 = inlined_call_operand.vmem [shape: bf16[128,48], index: 0, kind: input, shape index: {}]
  %s1 = inlined_call_operand.vmem [shape: bf16[48,128], index: 1, kind: input, shape index: {}]
  %s2 = inlined_call_operand.vmem [shape: f32[1,128], index: 2, kind: input, shape index: {}]
  %s3 = inlined_call_operand.vmem [shape: bf16[128,128], index: 3, kind: output, shape index: {}]
  %s4 = sld [smem:[#allocation0]]
  $region22: #{vqvae_forward.12} parent=0
    _
  %s6 = ssub.s32 1, %s4
  %s7 = scalar_select 0, %s6, %s4
  // Predicated region
  $region2: #{vqvae_forward.12} parent=0 // pred_check
    _
  $region3: #{vqvae_forward.12} parent=0 // pred_check_branch
    %9 = sbr.rel (0) target = $region5
  $region4: #{vqvae_forward.12} parent=0 // pred_region
    _
  $region5: #{vqvae_forward.12} parent=0 // pred_fallthru
    _
  // Predicated region
  $region6: #{vqvae_forward.12} parent=0 // pred_check
    _
  $region7: #{vqvae_forward.12} parent=0 // pred_check_branch
    %11 = sbr.rel (0) target = $region9
  $region8: #{vqvae_forward.12} parent=0 // pred_region
    _
  $region9: #{vqvae_forward.12} parent=0 // pred_fallthru
    _
  // Predicated region
  $region10: #{vqvae_forward.12} parent=0 // pred_check
    _
  $region11: #{vqvae_forward.12} parent=0 // pred_check_branch
    %13 = sbr.rel (0) target = $region13
  $region12: #{vqvae_forward.12} parent=0 // pred_region
    _
  $region13: #{vqvae_forward.12} parent=0 // pred_fallthru
    _
  %v15 = vld [vmem:[%s0] sm:$0xf]
  %v16 = vld [vmem:[%s0 + $0x4] sm:$0xf]
  %v17 = vld [vmem:[%s0 + $0x8] sm:$0xf]
  %v18 = vld [vmem:[%s0 + $0xc] sm:$0xf]
  %v19 = vld [vmem:[%s0 + $0x10] sm:$0xf]
  %v20 = vld [vmem:[%s0 + $0x14] sm:$0xf]
  %v21 = vld [vmem:[%s0 + $0x18] sm:$0xf]
  %v22 = vld [vmem:[%s0 + $0x1c] sm:$0xf]
  %v23 = vld [vmem:[%s0 + $0x20] sm:$0xf]
  %v24 = vld [vmem:[%s0 + $0x24] sm:$0xf]
  %v25 = vld [vmem:[%s0 + $0x28] sm:$0xf]
  %v26 = vld [vmem:[%s0 + $0x2c] sm:$0xf]
  %v27 = vld [vmem:[%s0 + $0x30] sm:$0xf]
  %v28 = vld [vmem:[%s0 + $0x34] sm:$0xf]
  %v29 = vld [vmem:[%s0 + $0x38] sm:$0xf]
  %v30 = vld [vmem:[%s0 + $0x3c] sm:$0xf]
  %v31 = vld [vmem:[%s1] sm:$0xf]
  %v32 = vld [vmem:[%s1 + $0x4] sm:$0xf]
  %v33 = vld [vmem:[%s1 + $0x8] sm:$0xf]
  %v34 = vld [vmem:[%s1 + $0xc] sm:$0xf]
  %v35 = vld [vmem:[%s1 + $0x10] sm:$0xf]
  %v36 = vld [vmem:[%s1 + $0x14] sm:$0xf]
  %v37 = vld [vmem:[%s2] sm:$0x1]
  %v39 = vperm.slane %v37, 0
  %v57 = vunpack.c.l.b16 %v15
  %v58 = vunpack.c.l.b16 %v16
  %v59 = vunpack.c.l.b16 %v17
  %v60 = vunpack.c.l.b16 %v18
  %v61 = vunpack.c.l.b16 %v19
  %v62 = vunpack.c.l.b16 %v20
  %v63 = vunpack.c.l.b16 %v21
  %v64 = vunpack.c.l.b16 %v22
  %v65 = vunpack.c.l.b16 %v23
  %v66 = vunpack.c.l.b16 %v24
  %v67 = vunpack.c.l.b16 %v25
  %v68 = vunpack.c.l.b16 %v26
  %v69 = vunpack.c.l.b16 %v27
  %v70 = vunpack.c.l.b16 %v28
  %v71 = vunpack.c.l.b16 %v29
  %v72 = vunpack.c.l.b16 %v30
  %v73 = vpack.c.b16 %v58, %v57
  %v74 = vpack.c.b16 %v60, %v59
  %v75 = vpack.c.b16 %v62, %v61
  %v76 = vpack.c.b16 %v64, %v63
  %v77 = vpack.c.b16 %v66, %v65
  %v78 = vpack.c.b16 %v68, %v67
  %v79 = vpack.c.b16 %v70, %v69
  %v80 = vpack.c.b16 %v72, %v71
  %v87 = vunpack.c.l.b16 %v31
  %v88 = vunpack.c.l.b16 %v32
  %v89 = vunpack.c.l.b16 %v33
  %v90 = vunpack.c.l.b16 %v34
  %v91 = vunpack.c.l.b16 %v35
  %v92 = vunpack.c.l.b16 %v36
  %v93 = vpack.c.b16 %v88, %v87
  %v94 = vpack.c.b16 %v90, %v89
  %v95 = vpack.c.b16 %v92, %v91
  %vm99 = vcmask 392192
  %v101 = vsel %vm99, %v73, 0
  %v104 = vsel %vm99, %v74, 0
  %v107 = vsel %vm99, %v75, 0
  %v110 = vsel %vm99, %v76, 0
  %v113 = vsel %vm99, %v77, 0
  %v116 = vsel %vm99, %v78, 0
  %v119 = vsel %vm99, %v79, 0
  %v122 = vsel %vm99, %v80, 0
  %124 = vmatpush.bf16.msra.mxu0 0
  %125 = vmatpush.bf16.msra.mxu0 0
  %126 = vmatpush.bf16.msra.mxu0 0
  %127 = vmatpush.bf16.msra.mxu0 0
  %128 = vmatpush.bf16.msra.mxu0 0
  %129 = vmatpush.bf16.msra.mxu0 %v95
  %130 = vmatpush.bf16.msra.mxu0 %v94
  %131 = vmatpush.bf16.msra.mxu0 %v93
  %132 = vmatmul.bf16.gmra.mxu0 %v101
  %v133 = vpop.f32.mrf.mxu0
  %v134 = vadd.f32 %v39, %v133
  %v135 = vpop.f32.mrf.mxu0
  %v136 = vadd.f32 %v39, %v135
  %137 = vmatmul.bf16.gmra.mxu0 %v104
  %v138 = vpop.f32.mrf.mxu0
  %v139 = vadd.f32 %v39, %v138
  %v140 = vpop.f32.mrf.mxu0
  %v141 = vadd.f32 %v39, %v140
  %142 = vmatmul.bf16.gmra.mxu0 %v107
  %v143 = vpop.f32.mrf.mxu0
  %v144 = vadd.f32 %v39, %v143
  %v145 = vpop.f32.mrf.mxu0
  %v146 = vadd.f32 %v39, %v145
  %147 = vmatmul.bf16.gmra.mxu0 %v110
  %v148 = vpop.f32.mrf.mxu0
  %v149 = vadd.f32 %v39, %v148
  %v150 = vpop.f32.mrf.mxu0
  %v151 = vadd.f32 %v39, %v150
  %152 = vmatmul.bf16.gmra.mxu0 %v113
  %v153 = vpop.f32.mrf.mxu0
  %v154 = vadd.f32 %v39, %v153
  %v155 = vpop.f32.mrf.mxu0
  %v156 = vadd.f32 %v39, %v155
  %157 = vmatmul.bf16.gmra.mxu0 %v116
  %v158 = vpop.f32.mrf.mxu0
  %v159 = vadd.f32 %v39, %v158
  %v160 = vpop.f32.mrf.mxu0
  %v161 = vadd.f32 %v39, %v160
  %162 = vmatmul.bf16.gmra.mxu0 %v119
  %v163 = vpop.f32.mrf.mxu0
  %v164 = vadd.f32 %v39, %v163
  %v165 = vpop.f32.mrf.mxu0
  %v166 = vadd.f32 %v39, %v165
  %167 = vmatmul.bf16.gmra.mxu0 %v122
  %v168 = vpop.f32.mrf.mxu0
  %v169 = vadd.f32 %v39, %v168
  %v170 = vpop.f32.mrf.mxu0
  %v171 = vadd.f32 %v39, %v170
  %172 = vdwg.mxu0
  %v173 = vmax.f32 %v134, 0.0
  %v174 = vmax.f32 %v136, 0.0
  %v175 = vmax.f32 %v139, 0.0
  %v176 = vmax.f32 %v141, 0.0
  %v177 = vmax.f32 %v144, 0.0
  %v178 = vmax.f32 %v146, 0.0
  %v179 = vmax.f32 %v149, 0.0
  %v180 = vmax.f32 %v151, 0.0
  %v181 = vmax.f32 %v154, 0.0
  %v182 = vmax.f32 %v156, 0.0
  %v183 = vmax.f32 %v159, 0.0
  %v184 = vmax.f32 %v161, 0.0
  %v185 = vmax.f32 %v164, 0.0
  %v186 = vmax.f32 %v166, 0.0
  %v187 = vmax.f32 %v169, 0.0
  %v188 = vmax.f32 %v171, 0.0
  %v189 = vpack.c.bf16 %v173, %v173
  %v190 = vpack.c.bf16 %v174, %v174
  %v191 = vpack.c.bf16 %v175, %v175
  %v192 = vpack.c.bf16 %v176, %v176
  %v193 = vpack.c.bf16 %v177, %v177
  %v194 = vpack.c.bf16 %v178, %v178
  %v195 = vpack.c.bf16 %v179, %v179
  %v196 = vpack.c.bf16 %v180, %v180
  %v197 = vpack.c.bf16 %v181, %v181
  %v198 = vpack.c.bf16 %v182, %v182
  %v199 = vpack.c.bf16 %v183, %v183
  %v200 = vpack.c.bf16 %v184, %v184
  %v201 = vpack.c.bf16 %v185, %v185
  %v202 = vpack.c.bf16 %v186, %v186
  %v203 = vpack.c.bf16 %v187, %v187
  %v204 = vpack.c.bf16 %v188, %v188
  %205 = vst [vmem:[%s3] sm:$0xf] %v189
  %206 = vst [vmem:[%s3 + $0x4] sm:$0xf] %v190
  %207 = vst [vmem:[%s3 + $0x8] sm:$0xf] %v191
  %208 = vst [vmem:[%s3 + $0xc] sm:$0xf] %v192
  %209 = vst [vmem:[%s3 + $0x10] sm:$0xf] %v193
  %210 = vst [vmem:[%s3 + $0x14] sm:$0xf] %v194
  %211 = vst [vmem:[%s3 + $0x18] sm:$0xf] %v195
  %212 = vst [vmem:[%s3 + $0x1c] sm:$0xf] %v196
  %213 = vst [vmem:[%s3 + $0x20] sm:$0xf] %v197
  %214 = vst [vmem:[%s3 + $0x24] sm:$0xf] %v198
  %215 = vst [vmem:[%s3 + $0x28] sm:$0xf] %v199
  %216 = vst [vmem:[%s3 + $0x2c] sm:$0xf] %v200
  %217 = vst [vmem:[%s3 + $0x30] sm:$0xf] %v201
  %218 = vst [vmem:[%s3 + $0x34] sm:$0xf] %v202
  %219 = vst [vmem:[%s3 + $0x38] sm:$0xf] %v203
  %220 = vst [vmem:[%s3 + $0x3c] sm:$0xf] %v204
  // Predicated region
  $region14: #{vqvae_forward.12} parent=0 // pred_check
    _
  $region15: #{vqvae_forward.12} parent=0 // pred_check_branch
    %222 = sbr.rel (0) target = $region17
  $region16: #{vqvae_forward.12} parent=0 // pred_region
    _
  $region17: #{vqvae_forward.12} parent=0 // pred_fallthru
    _
  // Predicated region
  $region18: #{vqvae_forward.12} parent=0 // pred_check
    _
  $region19: #{vqvae_forward.12} parent=0 // pred_check_branch
    %224 = sbr.rel (0) target = $region21
  $region20: #{vqvae_forward.12} parent=0 // pred_region
    _
  $region21: #{vqvae_forward.12} parent=0 // pred_fallthru
    _

// kernel: vqvae_forward.14
$region0: #{vqvae_forward.14}
  #allocation0 [shape = 'u32[]', space=smem, size = 0x4, offset = 0x4, fixed_abs, tag = 'smem constant byte address 0x4 - core index']
  #allocation1 [shape = 'u32[72,128]{1,0:T(1,128)}', space=vmem, size = 0x9000, scoped, tag = 'internal scratch']
  %s0 = inlined_call_operand.vmem [shape: bf16[32,1152], index: 0, kind: input, shape index: {}]
  %s1 = inlined_call_operand.vmem [shape: bf16[1152,128], index: 1, kind: input, shape index: {}]
  %s2 = inlined_call_operand.vmem [shape: f32[1,128], index: 2, kind: input, shape index: {}]
  %s3 = inlined_call_operand.vmem [shape: bf16[32,128], index: 3, kind: output, shape index: {}]
  %s4 = sld [smem:[#allocation0]]
  $region22: #{vqvae_forward.14} parent=0
    _
  %s6 = ssub.s32 1, %s4
  %s7 = scalar_select 0, %s6, %s4
  // Predicated region
  $region2: #{vqvae_forward.14} parent=0 // pred_check
    _
  $region3: #{vqvae_forward.14} parent=0 // pred_check_branch
    %9 = sbr.rel (0) target = $region5
  $region4: #{vqvae_forward.14} parent=0 // pred_region
    _
  $region5: #{vqvae_forward.14} parent=0 // pred_fallthru
    _
  // Predicated region
  $region6: #{vqvae_forward.14} parent=0 // pred_check
    _
  $region7: #{vqvae_forward.14} parent=0 // pred_check_branch
    %11 = sbr.rel (0) target = $region9
  $region8: #{vqvae_forward.14} parent=0 // pred_region
    _
  $region9: #{vqvae_forward.14} parent=0 // pred_fallthru
    _
  // Predicated region
  $region10: #{vqvae_forward.14} parent=0 // pred_check
    _
  $region11: #{vqvae_forward.14} parent=0 // pred_check_branch
    %13 = sbr.rel (0) target = $region13
  $region12: #{vqvae_forward.14} parent=0 // pred_region
    _
  $region13: #{vqvae_forward.14} parent=0 // pred_fallthru
    _
  %v14 = vld [vmem:[%s0] sm:$0xff]
  %v15 = vld [vmem:[%s0 + $0x8] sm:$0xff]
  %v16 = vld [vmem:[%s0 + $0x10] sm:$0xff]
  %v17 = vld [vmem:[%s0 + $0x18] sm:$0xff]
  %v18 = vld [vmem:[%s0 + $0x20] sm:$0xf]
  %v19 = vld [vmem:[%s0 + $0x24] sm:$0xff]
  %v20 = vld [vmem:[%s0 + $0x2c] sm:$0xff]
  %v21 = vld [vmem:[%s0 + $0x34] sm:$0xff]
  %v22 = vld [vmem:[%s0 + $0x3c] sm:$0xff]
  %v23 = vld [vmem:[%s0 + $0x44] sm:$0xf]
  %v24 = vld [vmem:[%s0 + $0x48] sm:$0xff]
  %v25 = vld [vmem:[%s0 + $0x50] sm:$0xff]
  %v26 = vld [vmem:[%s0 + $0x58] sm:$0xff]
  %v27 = vld [vmem:[%s0 + $0x60] sm:$0xff]
  %v28 = vld [vmem:[%s0 + $0x68] sm:$0xf]
  %v29 = vld [vmem:[%s0 + $0x6c] sm:$0xff]
  %v30 = vld [vmem:[%s0 + $0x74] sm:$0xff]
  %v31 = vld [vmem:[%s0 + $0x7c] sm:$0xff]
  %v32 = vld [vmem:[%s0 + $0x84] sm:$0xff]
  %v33 = vld [vmem:[%s0 + $0x8c] sm:$0xf]
  %v34 = vld [vmem:[%s1] sm:$0xf]
  %v35 = vld [vmem:[%s1 + $0x4] sm:$0xf]
  %v36 = vld [vmem:[%s1 + $0x8] sm:$0xf]
  %v37 = vld [vmem:[%s1 + $0xc] sm:$0xf]
  %v38 = vld [vmem:[%s1 + $0x10] sm:$0xf]
  %v39 = vld [vmem:[%s1 + $0x14] sm:$0xf]
  %v40 = vld [vmem:[%s1 + $0x18] sm:$0xf]
  %v41 = vld [vmem:[%s1 + $0x1c] sm:$0xf]
  %v42 = vld [vmem:[%s1 + $0x20] sm:$0xf]
  %v43 = vld [vmem:[%s1 + $0x24] sm:$0xf]
  %v44 = vld [vmem:[%s1 + $0x28] sm:$0xf]
  %v45 = vld [vmem:[%s1 + $0x2c] sm:$0xf]
  %v46 = vld [vmem:[%s1 + $0x30] sm:$0xf]
  %v47 = vld [vmem:[%s1 + $0x34] sm:$0xf]
  %v48 = vld [vmem:[%s1 + $0x38] sm:$0xf]
  %v49 = vld [vmem:[%s1 + $0x3c] sm:$0xf]
  %v50 = vld [vmem:[%s1 + $0x40] sm:$0xf]
  %v51 = vld [vmem:[%s1 + $0x44] sm:$0xf]
  %v52 = vld [vmem:[%s1 + $0x48] sm:$0xf]
  %v53 = vld [vmem:[%s1 + $0x4c] sm:$0xf]
  %v54 = vld [vmem:[%s1 + $0x50] sm:$0xf]
  %v55 = vld [vmem:[%s1 + $0x54] sm:$0xf]
  %v56 = vld [vmem:[%s1 + $0x58] sm:$0xf]
  %v57 = vld [vmem:[%s1 + $0x5c] sm:$0xf]
  %v58 = vld [vmem:[%s1 + $0x60] sm:$0xf]
  %v59 = vld [vmem:[%s1 + $0x64] sm:$0xf]
  %v60 = vld [vmem:[%s1 + $0x68] sm:$0xf]
  %v61 = vld [vmem:[%s1 + $0x6c] sm:$0xf]
  %v62 = vld [vmem:[%s1 + $0x70] sm:$0xf]
  %v63 = vld [vmem:[%s1 + $0x74] sm:$0xf]
  %v64 = vld [vmem:[%s1 + $0x78] sm:$0xf]
  %v65 = vld [vmem:[%s1 + $0x7c] sm:$0xf]
  %v66 = vld [vmem:[%s1 + $0x80] sm:$0xf]
  %v67 = vld [vmem:[%s1 + $0x84] sm:$0xf]
  %v68 = vld [vmem:[%s1 + $0x88] sm:$0xf]
  %v69 = vld [vmem:[%s1 + $0x8c] sm:$0xf]
  %v70 = vld [vmem:[%s1 + $0x90] sm:$0xf]
  %v71 = vld [vmem:[%s1 + $0x94] sm:$0xf]
  %v72 = vld [vmem:[%s1 + $0x98] sm:$0xf]
  %v73 = vld [vmem:[%s1 + $0x9c] sm:$0xf]
  %v74 = vld [vmem:[%s1 + $0xa0] sm:$0xf]
  %v75 = vld [vmem:[%s1 + $0xa4] sm:$0xf]
  %v76 = vld [vmem:[%s1 + $0xa8] sm:$0xf]
  %v77 = vld [vmem:[%s1 + $0xac] sm:$0xf]
  %v78 = vld [vmem:[%s1 + $0xb0] sm:$0xf]
  %v79 = vld [vmem:[%s1 + $0xb4] sm:$0xf]
  %v80 = vld [vmem:[%s1 + $0xb8] sm:$0xf]
  %v81 = vld [vmem:[%s1 + $0xbc] sm:$0xf]
  %v82 = vld [vmem:[%s1 + $0xc0] sm:$0xf]
  %v83 = vld [vmem:[%s1 + $0xc4] sm:$0xf]
  %v84 = vld [vmem:[%s1 + $0xc8] sm:$0xf]
  %v85 = vld [vmem:[%s1 + $0xcc] sm:$0xf]
  %v86 = vld [vmem:[%s1 + $0xd0] sm:$0xf]
  %v87 = vld [vmem:[%s1 + $0xd4] sm:$0xf]
  %v88 = vld [vmem:[%s1 + $0xd8] sm:$0xf]
  %v89 = vld [vmem:[%s1 + $0xdc] sm:$0xf]
  %v90 = vld [vmem:[%s1 + $0xe0] sm:$0xf]
  %v91 = vld [vmem:[%s1 + $0xe4] sm:$0xf]
  %v92 = vld [vmem:[%s1 + $0xe8] sm:$0xf]
  %v93 = vld [vmem:[%s1 + $0xec] sm:$0xf]
  %v94 = vld [vmem:[%s1 + $0xf0] sm:$0xf]
  %v95 = vld [vmem:[%s1 + $0xf4] sm:$0xf]
  %v96 = vld [vmem:[%s1 + $0xf8] sm:$0xf]
  %v97 = vld [vmem:[%s1 + $0xfc] sm:$0xf]
  %v98 = vld [vmem:[%s1 + $0x100] sm:$0xf]
  %v99 = vld [vmem:[%s1 + $0x104] sm:$0xf]
  %v100 = vld [vmem:[%s1 + $0x108] sm:$0xf]
  %v101 = vld [vmem:[%s1 + $0x10c] sm:$0xf]
  %v102 = vld [vmem:[%s1 + $0x110] sm:$0xf]
  %v103 = vld [vmem:[%s1 + $0x114] sm:$0xf]
  %v104 = vld [vmem:[%s1 + $0x118] sm:$0xf]
  %v105 = vld [vmem:[%s1 + $0x11c] sm:$0xf]
  %v106 = vld [vmem:[%s1 + $0x120] sm:$0xf]
  %v107 = vld [vmem:[%s1 + $0x124] sm:$0xf]
  %v108 = vld [vmem:[%s1 + $0x128] sm:$0xf]
  %v109 = vld [vmem:[%s1 + $0x12c] sm:$0xf]
  %v110 = vld [vmem:[%s1 + $0x130] sm:$0xf]
  %v111 = vld [vmem:[%s1 + $0x134] sm:$0xf]
  %v112 = vld [vmem:[%s1 + $0x138] sm:$0xf]
  %v113 = vld [vmem:[%s1 + $0x13c] sm:$0xf]
  %v114 = vld [vmem:[%s1 + $0x140] sm:$0xf]
  %v115 = vld [vmem:[%s1 + $0x144] sm:$0xf]
  %v116 = vld [vmem:[%s1 + $0x148] sm:$0xf]
  %v117 = vld [vmem:[%s1 + $0x14c] sm:$0xf]
  %v118 = vld [vmem:[%s1 + $0x150] sm:$0xf]
  %v119 = vld [vmem:[%s1 + $0x154] sm:$0xf]
  %v120 = vld [vmem:[%s1 + $0x158] sm:$0xf]
  %v121 = vld [vmem:[%s1 + $0x15c] sm:$0xf]
  %v122 = vld [vmem:[%s1 + $0x160] sm:$0xf]
  %v123 = vld [vmem:[%s1 + $0x164] sm:$0xf]
  %v124 = vld [vmem:[%s1 + $0x168] sm:$0xf]
  %v125 = vld [vmem:[%s1 + $0x16c] sm:$0xf]
  %v126 = vld [vmem:[%s1 + $0x170] sm:$0xf]
  %v127 = vld [vmem:[%s1 + $0x174] sm:$0xf]
  %v128 = vld [vmem:[%s1 + $0x178] sm:$0xf]
  %v129 = vld [vmem:[%s1 + $0x17c] sm:$0xf]
  %v130 = vld [vmem:[%s1 + $0x180] sm:$0xf]
  %v131 = vld [vmem:[%s1 + $0x184] sm:$0xf]
  %v132 = vld [vmem:[%s1 + $0x188] sm:$0xf]
  %v133 = vld [vmem:[%s1 + $0x18c] sm:$0xf]
  %v134 = vld [vmem:[%s1 + $0x190] sm:$0xf]
  %v135 = vld [vmem:[%s1 + $0x194] sm:$0xf]
  %v136 = vld [vmem:[%s1 + $0x198] sm:$0xf]
  %v137 = vld [vmem:[%s1 + $0x19c] sm:$0xf]
  %v138 = vld [vmem:[%s1 + $0x1a0] sm:$0xf]
  %v139 = vld [vmem:[%s1 + $0x1a4] sm:$0xf]
  %v140 = vld [vmem:[%s1 + $0x1a8] sm:$0xf]
  %v141 = vld [vmem:[%s1 + $0x1ac] sm:$0xf]
  %v142 = vld [vmem:[%s1 + $0x1b0] sm:$0xf]
  %v143 = vld [vmem:[%s1 + $0x1b4] sm:$0xf]
  %v144 = vld [vmem:[%s1 + $0x1b8] sm:$0xf]
  %v145 = vld [vmem:[%s1 + $0x1bc] sm:$0xf]
  %v146 = vld [vmem:[%s1 + $0x1c0] sm:$0xf]
  %v147 = vld [vmem:[%s1 + $0x1c4] sm:$0xf]
  %v148 = vld [vmem:[%s1 + $0x1c8] sm:$0xf]
  %v149 = vld [vmem:[%s1 + $0x1cc] sm:$0xf]
  %v150 = vld [vmem:[%s1 + $0x1d0] sm:$0xf]
  %v151 = vld [vmem:[%s1 + $0x1d4] sm:$0xf]
  %v152 = vld [vmem:[%s1 + $0x1d8] sm:$0xf]
  %v153 = vld [vmem:[%s1 + $0x1dc] sm:$0xf]
  %v154 = vld [vmem:[%s1 + $0x1e0] sm:$0xf]
  %v155 = vld [vmem:[%s1 + $0x1e4] sm:$0xf]
  %v156 = vld [vmem:[%s1 + $0x1e8] sm:$0xf]
  %v157 = vld [vmem:[%s1 + $0x1ec] sm:$0xf]
  %v158 = vld [vmem:[%s1 + $0x1f0] sm:$0xf]
  %v159 = vld [vmem:[%s1 + $0x1f4] sm:$0xf]
  %v160 = vld [vmem:[%s1 + $0x1f8] sm:$0xf]
  %v161 = vld [vmem:[%s1 + $0x1fc] sm:$0xf]
  %v162 = vld [vmem:[%s1 + $0x200] sm:$0xf]
  %v163 = vld [vmem:[%s1 + $0x204] sm:$0xf]
  %v164 = vld [vmem:[%s1 + $0x208] sm:$0xf]
  %v165 = vld [vmem:[%s1 + $0x20c] sm:$0xf]
  %v166 = vld [vmem:[%s1 + $0x210] sm:$0xf]
  %v167 = vld [vmem:[%s1 + $0x214] sm:$0xf]
  %v168 = vld [vmem:[%s1 + $0x218] sm:$0xf]
  %v169 = vld [vmem:[%s1 + $0x21c] sm:$0xf]
  %v170 = vld [vmem:[%s1 + $0x220] sm:$0xf]
  %v171 = vld [vmem:[%s1 + $0x224] sm:$0xf]
  %v172 = vld [vmem:[%s1 + $0x228] sm:$0xf]
  %v173 = vld [vmem:[%s1 + $0x22c] sm:$0xf]
  %v174 = vld [vmem:[%s1 + $0x230] sm:$0xf]
  %v175 = vld [vmem:[%s1 + $0x234] sm:$0xf]
  %v176 = vld [vmem:[%s1 + $0x238] sm:$0xf]
  %v177 = vld [vmem:[%s1 + $0x23c] sm:$0xf]
  %v178 = vld [vmem:[%s2] sm:$0x1]
  %v180 = vperm.slane %v178, 0
  %v202 = vunpack.c.l.b16 %v14
  %v203 = vunpack.c.h.b16 %v14
  %v204 = vunpack.c.l.b16 %v15
  %v205 = vunpack.c.h.b16 %v15
  %v206 = vunpack.c.l.b16 %v16
  %v207 = vunpack.c.h.b16 %v16
  %v208 = vunpack.c.l.b16 %v17
  %v209 = vunpack.c.h.b16 %v17
  %v210 = vunpack.c.l.b16 %v18
  %v211 = vunpack.c.l.b16 %v19
  %v212 = vunpack.c.h.b16 %v19
  %v213 = vunpack.c.l.b16 %v20
  %v214 = vunpack.c.h.b16 %v20
  %v215 = vunpack.c.l.b16 %v21
  %v216 = vunpack.c.h.b16 %v21
  %v217 = vunpack.c.l.b16 %v22
  %v218 = vunpack.c.h.b16 %v22
  %v219 = vunpack.c.l.b16 %v23
  %v220 = vunpack.c.l.b16 %v24
  %v221 = vunpack.c.h.b16 %v24
  %v222 = vunpack.c.l.b16 %v25
  %v223 = vunpack.c.h.b16 %v25
  %v224 = vunpack.c.l.b16 %v26
  %v225 = vunpack.c.h.b16 %v26
  %v226 = vunpack.c.l.b16 %v27
  %v227 = vunpack.c.h.b16 %v27
  %v228 = vunpack.c.l.b16 %v28
  %v229 = vunpack.c.l.b16 %v29
  %v230 = vunpack.c.h.b16 %v29
  %v231 = vunpack.c.l.b16 %v30
  %v232 = vunpack.c.h.b16 %v30
  %v233 = vunpack.c.l.b16 %v31
  %v234 = vunpack.c.h.b16 %v31
  %v235 = vunpack.c.l.b16 %v32
  %v236 = vunpack.c.h.b16 %v32
  %v237 = vunpack.c.l.b16 %v33
  %v238 = vpack.c.b16 %v211, %v202
  %v239 = vpack.c.b16 %v212, %v203
  %v240 = vpack.c.b16 %v213, %v204
  %v241 = vpack.c.b16 %v214, %v205
  %v242 = vpack.c.b16 %v215, %v206
  %v243 = vpack.c.b16 %v216, %v207
  %v244 = vpack.c.b16 %v217, %v208
  %v245 = vpack.c.b16 %v218, %v209
  %v246 = vpack.c.b16 %v219, %v210
  %v247 = vpack.c.b16 %v229, %v220
  %v248 = vpack.c.b16 %v230, %v221
  %v249 = vpack.c.b16 %v231, %v222
  %v250 = vpack.c.b16 %v232, %v223
  %v251 = vpack.c.b16 %v233, %v224
  %v252 = vpack.c.b16 %v234, %v225
  %v253 = vpack.c.b16 %v235, %v226
  %v254 = vpack.c.b16 %v236, %v227
  %v255 = vpack.c.b16 %v237, %v228
  %v418 = vunpack.c.l.b16 %v34
  %v419 = vunpack.c.l.b16 %v35
  %v420 = vunpack.c.l.b16 %v36
  %v421 = vunpack.c.l.b16 %v37
  %v422 = vunpack.c.l.b16 %v38
  %v423 = vunpack.c.l.b16 %v39
  %v424 = vunpack.c.l.b16 %v40
  %v425 = vunpack.c.l.b16 %v41
  %v426 = vunpack.c.l.b16 %v42
  %v427 = vunpack.c.l.b16 %v43
  %v428 = vunpack.c.l.b16 %v44
  %v429 = vunpack.c.l.b16 %v45
  %v430 = vunpack.c.l.b16 %v46
  %v431 = vunpack.c.l.b16 %v47
  %v432 = vunpack.c.l.b16 %v48
  %v433 = vunpack.c.l.b16 %v49
  %v434 = vunpack.c.l.b16 %v50
  %v435 = vunpack.c.l.b16 %v51
  %v436 = vunpack.c.l.b16 %v52
  %v437 = vunpack.c.l.b16 %v53
  %v438 = vunpack.c.l.b16 %v54
  %v439 = vunpack.c.l.b16 %v55
  %v440 = vunpack.c.l.b16 %v56
  %v441 = vunpack.c.l.b16 %v57
  %v442 = vunpack.c.l.b16 %v58
  %v443 = vunpack.c.l.b16 %v59
  %v444 = vunpack.c.l.b16 %v60
  %v445 = vunpack.c.l.b16 %v61
  %v446 = vunpack.c.l.b16 %v62
  %v447 = vunpack.c.l.b16 %v63
  %v448 = vunpack.c.l.b16 %v64
  %v449 = vunpack.c.l.b16 %v65
  %v450 = vunpack.c.l.b16 %v66
  %v451 = vunpack.c.l.b16 %v67
  %v452 = vunpack.c.l.b16 %v68
  %v453 = vunpack.c.l.b16 %v69
  %v454 = vunpack.c.l.b16 %v70
  %v455 = vunpack.c.l.b16 %v71
  %v456 = vunpack.c.l.b16 %v72
  %v457 = vunpack.c.l.b16 %v73
  %v458 = vunpack.c.l.b16 %v74
  %v459 = vunpack.c.l.b16 %v75
  %v460 = vunpack.c.l.b16 %v76
  %v461 = vunpack.c.l.b16 %v77
  %v462 = vunpack.c.l.b16 %v78
  %v463 = vunpack.c.l.b16 %v79
  %v464 = vunpack.c.l.b16 %v80
  %v465 = vunpack.c.l.b16 %v81
  %v466 = vunpack.c.l.b16 %v82
  %v467 = vunpack.c.l.b16 %v83
  %v468 = vunpack.c.l.b16 %v84
  %v469 = vunpack.c.l.b16 %v85
  %v470 = vunpack.c.l.b16 %v86
  %v471 = vunpack.c.l.b16 %v87
  %v472 = vunpack.c.l.b16 %v88
  %v473 = vunpack.c.l.b16 %v89
  %v474 = vunpack.c.l.b16 %v90
  %v475 = vunpack.c.l.b16 %v91
  %v476 = vunpack.c.l.b16 %v92
  %v477 = vunpack.c.l.b16 %v93
  %v478 = vunpack.c.l.b16 %v94
  %v479 = vunpack.c.l.b16 %v95
  %v480 = vunpack.c.l.b16 %v96
  %v481 = vunpack.c.l.b16 %v97
  %v482 = vunpack.c.l.b16 %v98
  %v483 = vunpack.c.l.b16 %v99
  %v484 = vunpack.c.l.b16 %v100
  %v485 = vunpack.c.l.b16 %v101
  %v486 = vunpack.c.l.b16 %v102
  %v487 = vunpack.c.l.b16 %v103
  %v488 = vunpack.c.l.b16 %v104
  %v489 = vunpack.c.l.b16 %v105
  %v490 = vunpack.c.l.b16 %v106
  %v491 = vunpack.c.l.b16 %v107
  %v492 = vunpack.c.l.b16 %v108
  %v493 = vunpack.c.l.b16 %v109
  %v494 = vunpack.c.l.b16 %v110
  %v495 = vunpack.c.l.b16 %v111
  %v496 = vunpack.c.l.b16 %v112
  %v497 = vunpack.c.l.b16 %v113
  %v498 = vunpack.c.l.b16 %v114
  %v499 = vunpack.c.l.b16 %v115
  %v500 = vunpack.c.l.b16 %v116
  %v501 = vunpack.c.l.b16 %v117
  %v502 = vunpack.c.l.b16 %v118
  %v503 = vunpack.c.l.b16 %v119
  %v504 = vunpack.c.l.b16 %v120
  %v505 = vunpack.c.l.b16 %v121
  %v506 = vunpack.c.l.b16 %v122
  %v507 = vunpack.c.l.b16 %v123
  %v508 = vunpack.c.l.b16 %v124
  %v509 = vunpack.c.l.b16 %v125
  %v510 = vunpack.c.l.b16 %v126
  %v511 = vunpack.c.l.b16 %v127
  %v512 = vunpack.c.l.b16 %v128
  %v513 = vunpack.c.l.b16 %v129
  %v514 = vunpack.c.l.b16 %v130
  %v515 = vunpack.c.l.b16 %v131
  %v516 = vunpack.c.l.b16 %v132
  %v517 = vunpack.c.l.b16 %v133
  %v518 = vunpack.c.l.b16 %v134
  %v519 = vunpack.c.l.b16 %v135
  %v520 = vunpack.c.l.b16 %v136
  %v521 = vunpack.c.l.b16 %v137
  %v522 = vunpack.c.l.b16 %v138
  %v523 = vunpack.c.l.b16 %v139
  %v524 = vunpack.c.l.b16 %v140
  %v525 = vunpack.c.l.b16 %v141
  %v526 = vunpack.c.l.b16 %v142
  %v527 = vunpack.c.l.b16 %v143
  %v528 = vunpack.c.l.b16 %v144
  %v529 = vunpack.c.l.b16 %v145
  %v530 = vunpack.c.l.b16 %v146
  %v531 = vunpack.c.l.b16 %v147
  %v532 = vunpack.c.l.b16 %v148
  %v533 = vunpack.c.l.b16 %v149
  %v534 = vunpack.c.l.b16 %v150
  %v535 = vunpack.c.l.b16 %v151
  %v536 = vunpack.c.l.b16 %v152
  %v537 = vunpack.c.l.b16 %v153
  %v538 = vunpack.c.l.b16 %v154
  %v539 = vunpack.c.l.b16 %v155
  %v540 = vunpack.c.l.b16 %v156
  %v541 = vunpack.c.l.b16 %v157
  %v542 = vunpack.c.l.b16 %v158
  %v543 = vunpack.c.l.b16 %v159
  %v544 = vunpack.c.l.b16 %v160
  %v545 = vunpack.c.l.b16 %v161
  %v546 = vunpack.c.l.b16 %v162
  %v547 = vunpack.c.l.b16 %v163
  %v548 = vunpack.c.l.b16 %v164
  %v549 = vunpack.c.l.b16 %v165
  %v550 = vunpack.c.l.b16 %v166
  %v551 = vunpack.c.l.b16 %v167
  %v552 = vunpack.c.l.b16 %v168
  %v553 = vunpack.c.l.b16 %v169
  %v554 = vunpack.c.l.b16 %v170
  %v555 = vunpack.c.l.b16 %v171
  %v556 = vunpack.c.l.b16 %v172
  %v557 = vunpack.c.l.b16 %v173
  %v558 = vunpack.c.l.b16 %v174
  %v559 = vunpack.c.l.b16 %v175
  %v560 = vunpack.c.l.b16 %v176
  %v561 = vunpack.c.l.b16 %v177
  %v562 = vpack.c.b16 %v419, %v418
  %v563 = vpack.c.b16 %v421, %v420
  %v564 = vpack.c.b16 %v423, %v422
  %v565 = vpack.c.b16 %v425, %v424
  %v566 = vpack.c.b16 %v427, %v426
  %v567 = vpack.c.b16 %v429, %v428
  %v568 = vpack.c.b16 %v431, %v430
  %v569 = vpack.c.b16 %v433, %v432
  %v570 = vpack.c.b16 %v435, %v434
  %v571 = vpack.c.b16 %v437, %v436
  %v572 = vpack.c.b16 %v439, %v438
  %v573 = vpack.c.b16 %v441, %v440
  %v574 = vpack.c.b16 %v443, %v442
  %v575 = vpack.c.b16 %v445, %v444
  %v576 = vpack.c.b16 %v447, %v446
  %v577 = vpack.c.b16 %v449, %v448
  %v578 = vpack.c.b16 %v451, %v450
  %v579 = vpack.c.b16 %v453, %v452
  %v580 = vpack.c.b16 %v455, %v454
  %v581 = vpack.c.b16 %v457, %v456
  %v582 = vpack.c.b16 %v459, %v458
  %v583 = vpack.c.b16 %v461, %v460
  %v584 = vpack.c.b16 %v463, %v462
  %v585 = vpack.c.b16 %v465, %v464
  %v586 = vpack.c.b16 %v467, %v466
  %v587 = vpack.c.b16 %v469, %v468
  %v588 = vpack.c.b16 %v471, %v470
  %v589 = vpack.c.b16 %v473, %v472
  %v590 = vpack.c.b16 %v475, %v474
  %v591 = vpack.c.b16 %v477, %v476
  %v592 = vpack.c.b16 %v479, %v478
  %v593 = vpack.c.b16 %v481, %v480
  %v594 = vpack.c.b16 %v483, %v482
  %v595 = vpack.c.b16 %v485, %v484
  %v596 = vpack.c.b16 %v487, %v486
  %v597 = vpack.c.b16 %v489, %v488
  %v598 = vpack.c.b16 %v491, %v490
  %v599 = vpack.c.b16 %v493, %v492
  %v600 = vpack.c.b16 %v495, %v494
  %v601 = vpack.c.b16 %v497, %v496
  %v602 = vpack.c.b16 %v499, %v498
  %v603 = vpack.c.b16 %v501, %v500
  %v604 = vpack.c.b16 %v503, %v502
  %v605 = vpack.c.b16 %v505, %v504
  %v606 = vpack.c.b16 %v507, %v506
  %v607 = vpack.c.b16 %v509, %v508
  %v608 = vpack.c.b16 %v511, %v510
  %v609 = vpack.c.b16 %v513, %v512
  %v610 = vpack.c.b16 %v515, %v514
  %v611 = vpack.c.b16 %v517, %v516
  %v612 = vpack.c.b16 %v519, %v518
  %v613 = vpack.c.b16 %v521, %v520
  %v614 = vpack.c.b16 %v523, %v522
  %v615 = vpack.c.b16 %v525, %v524
  %v616 = vpack.c.b16 %v527, %v526
  %v617 = vpack.c.b16 %v529, %v528
  %v618 = vpack.c.b16 %v531, %v530
  %v619 = vpack.c.b16 %v533, %v532
  %v620 = vpack.c.b16 %v535, %v534
  %v621 = vpack.c.b16 %v537, %v536
  %v622 = vpack.c.b16 %v539, %v538
  %v623 = vpack.c.b16 %v541, %v540
  %v624 = vpack.c.b16 %v543, %v542
  %v625 = vpack.c.b16 %v545, %v544
  %v626 = vpack.c.b16 %v547, %v546
  %v627 = vpack.c.b16 %v549, %v548
  %v628 = vpack.c.b16 %v551, %v550
  %v629 = vpack.c.b16 %v553, %v552
  %v630 = vpack.c.b16 %v555, %v554
  %v631 = vpack.c.b16 %v557, %v556
  %v632 = vpack.c.b16 %v559, %v558
  %v633 = vpack.c.b16 %v561, %v560
  %706 = vmatpush.bf16.msra.mxu0 %v569
  %707 = vmatpush.bf16.msra.mxu0 %v568
  %708 = vmatpush.bf16.msra.mxu0 %v567
  %709 = vmatpush.bf16.msra.mxu0 %v566
  %710 = vmatpush.bf16.msra.mxu0 %v565
  %711 = vmatpush.bf16.msra.mxu0 %v564
  %712 = vmatpush.bf16.msra.mxu0 %v563
  %713 = vmatpush.bf16.msra.mxu0 %v562
  %714 = vmatmul.bf16.gmra.mxu0 %v238
  %v715 = vpop.f32.mrf.mxu0
  %v716 = vadd.f32 %v180, %v715
  %v717 = vpop.f32.mrf.mxu0
  %v718 = vadd.f32 %v180, %v717
  %719 = vmatmul.bf16.gmra.mxu0 %v247
  %v720 = vpop.f32.mrf.mxu0
  %v721 = vadd.f32 %v180, %v720
  %v722 = vpop.f32.mrf.mxu0
  %v723 = vadd.f32 %v180, %v722
  %724 = vdwg.mxu0
  %725 = vmatpush.bf16.msra.mxu0 %v577
  %726 = vmatpush.bf16.msra.mxu0 %v576
  %727 = vmatpush.bf16.msra.mxu0 %v575
  %728 = vmatpush.bf16.msra.mxu0 %v574
  %729 = vmatpush.bf16.msra.mxu0 %v573
  %730 = vmatpush.bf16.msra.mxu0 %v572
  %731 = vmatpush.bf16.msra.mxu0 %v571
  %732 = vmatpush.bf16.msra.mxu0 %v570
  %733 = vmatmul.bf16.gmra.mxu0 %v239
  %v734 = vpop.f32.mrf.mxu0
  %v735 = vadd.f32 %v716, %v734
  %v736 = vpop.f32.mrf.mxu0
  %v737 = vadd.f32 %v718, %v736
  %738 = vmatmul.bf16.gmra.mxu0 %v248
  %v739 = vpop.f32.mrf.mxu0
  %v740 = vadd.f32 %v721, %v739
  %v741 = vpop.f32.mrf.mxu0
  %v742 = vadd.f32 %v723, %v741
  %743 = vdwg.mxu0
  %744 = vmatpush.bf16.msra.mxu0 %v585
  %745 = vmatpush.bf16.msra.mxu0 %v584
  %746 = vmatpush.bf16.msra.mxu0 %v583
  %747 = vmatpush.bf16.msra.mxu0 %v582
  %748 = vmatpush.bf16.msra.mxu0 %v581
  %749 = vmatpush.bf16.msra.mxu0 %v580
  %750 = vmatpush.bf16.msra.mxu0 %v579
  %751 = vmatpush.bf16.msra.mxu0 %v578
  %752 = vmatmul.bf16.gmra.mxu0 %v240
  %v753 = vpop.f32.mrf.mxu0
  %v754 = vadd.f32 %v735, %v753
  %v755 = vpop.f32.mrf.mxu0
  %v756 = vadd.f32 %v737, %v755
  %757 = vmatmul.bf16.gmra.mxu0 %v249
  %v758 = vpop.f32.mrf.mxu0
  %v759 = vadd.f32 %v740, %v758
  %v760 = vpop.f32.mrf.mxu0
  %v761 = vadd.f32 %v742, %v760
  %762 = vdwg.mxu0
  %763 = vmatpush.bf16.msra.mxu0 %v593
  %764 = vmatpush.bf16.msra.mxu0 %v592
  %765 = vmatpush.bf16.msra.mxu0 %v591
  %766 = vmatpush.bf16.msra.mxu0 %v590
  %767 = vmatpush.bf16.msra.mxu0 %v589
  %768 = vmatpush.bf16.msra.mxu0 %v588
  %769 = vmatpush.bf16.msra.mxu0 %v587
  %770 = vmatpush.bf16.msra.mxu0 %v586
  %771 = vmatmul.bf16.gmra.mxu0 %v241
  %v772 = vpop.f32.mrf.mxu0
  %v773 = vadd.f32 %v754, %v772
  %v774 = vpop.f32.mrf.mxu0
  %v775 = vadd.f32 %v756, %v774
  %776 = vmatmul.bf16.gmra.mxu0 %v250
  %v777 = vpop.f32.mrf.mxu0
  %v778 = vadd.f32 %v759, %v777
  %v779 = vpop.f32.mrf.mxu0
  %v780 = vadd.f32 %v761, %v779
  %781 = vdwg.mxu0
  %782 = vmatpush.bf16.msra.mxu0 %v601
  %783 = vmatpush.bf16.msra.mxu0 %v600
  %784 = vmatpush.bf16.msra.mxu0 %v599
  %785 = vmatpush.bf16.msra.mxu0 %v598
  %786 = vmatpush.bf16.msra.mxu0 %v597
  %787 = vmatpush.bf16.msra.mxu0 %v596
  %788 = vmatpush.bf16.msra.mxu0 %v595
  %789 = vmatpush.bf16.msra.mxu0 %v594
  %790 = vmatmul.bf16.gmra.mxu0 %v242
  %v791 = vpop.f32.mrf.mxu0
  %v792 = vadd.f32 %v773, %v791
  %v793 = vpop.f32.mrf.mxu0
  %v794 = vadd.f32 %v775, %v793
  %795 = vmatmul.bf16.gmra.mxu0 %v251
  %v796 = vpop.f32.mrf.mxu0
  %v797 = vadd.f32 %v778, %v796
  %v798 = vpop.f32.mrf.mxu0
  %v799 = vadd.f32 %v780, %v798
  %800 = vdwg.mxu0
  %801 = vmatpush.bf16.msra.mxu0 %v609
  %802 = vmatpush.bf16.msra.mxu0 %v608
  %803 = vmatpush.bf16.msra.mxu0 %v607
  %804 = vmatpush.bf16.msra.mxu0 %v606
  %805 = vmatpush.bf16.msra.mxu0 %v605
  %806 = vmatpush.bf16.msra.mxu0 %v604
  %807 = vmatpush.bf16.msra.mxu0 %v603
  %808 = vmatpush.bf16.msra.mxu0 %v602
  %809 = vmatmul.bf16.gmra.mxu0 %v243
  %v810 = vpop.f32.mrf.mxu0
  %v811 = vadd.f32 %v792, %v810
  %v812 = vpop.f32.mrf.mxu0
  %v813 = vadd.f32 %v794, %v812
  %814 = vmatmul.bf16.gmra.mxu0 %v252
  %v815 = vpop.f32.mrf.mxu0
  %v816 = vadd.f32 %v797, %v815
  %v817 = vpop.f32.mrf.mxu0
  %v818 = vadd.f32 %v799, %v817
  %819 = vdwg.mxu0
  %820 = vmatpush.bf16.msra.mxu0 %v617
  %821 = vmatpush.bf16.msra.mxu0 %v616
  %822 = vmatpush.bf16.msra.mxu0 %v615
  %823 = vmatpush.bf16.msra.mxu0 %v614
  %824 = vmatpush.bf16.msra.mxu0 %v613
  %825 = vmatpush.bf16.msra.mxu0 %v612
  %826 = vmatpush.bf16.msra.mxu0 %v611
  %827 = vmatpush.bf16.msra.mxu0 %v610
  %828 = vmatmul.bf16.gmra.mxu0 %v244
  %v829 = vpop.f32.mrf.mxu0
  %v830 = vadd.f32 %v811, %v829
  %v831 = vpop.f32.mrf.mxu0
  %v832 = vadd.f32 %v813, %v831
  %833 = vmatmul.bf16.gmra.mxu0 %v253
  %v834 = vpop.f32.mrf.mxu0
  %v835 = vadd.f32 %v816, %v834
  %v836 = vpop.f32.mrf.mxu0
  %v837 = vadd.f32 %v818, %v836
  %838 = vdwg.mxu0
  %839 = vmatpush.bf16.msra.mxu0 %v625
  %840 = vmatpush.bf16.msra.mxu0 %v624
  %841 = vmatpush.bf16.msra.mxu0 %v623
  %842 = vmatpush.bf16.msra.mxu0 %v622
  %843 = vmatpush.bf16.msra.mxu0 %v621
  %844 = vmatpush.bf16.msra.mxu0 %v620
  %845 = vmatpush.bf16.msra.mxu0 %v619
  %846 = vmatpush.bf16.msra.mxu0 %v618
  %847 = vmatmul.bf16.gmra.mxu0 %v245
  %v848 = vpop.f32.mrf.mxu0
  %v849 = vadd.f32 %v830, %v848
  %v850 = vpop.f32.mrf.mxu0
  %v851 = vadd.f32 %v832, %v850
  %852 = vmatmul.bf16.gmra.mxu0 %v254
  %v853 = vpop.f32.mrf.mxu0
  %v854 = vadd.f32 %v835, %v853
  %v855 = vpop.f32.mrf.mxu0
  %v856 = vadd.f32 %v837, %v855
  %857 = vdwg.mxu0
  %858 = vmatpush.bf16.msra.mxu0 %v633
  %859 = vmatpush.bf16.msra.mxu0 %v632
  %860 = vmatpush.bf16.msra.mxu0 %v631
  %861 = vmatpush.bf16.msra.mxu0 %v630
  %862 = vmatpush.bf16.msra.mxu0 %v629
  %863 = vmatpush.bf16.msra.mxu0 %v628
  %864 = vmatpush.bf16.msra.mxu0 %v627
  %865 = vmatpush.bf16.msra.mxu0 %v626
  %866 = vmatmul.bf16.gmra.mxu0 %v246
  %v867 = vpop.f32.mrf.mxu0
  %v868 = vadd.f32 %v849, %v867
  %v869 = vpop.f32.mrf.mxu0
  %v870 = vadd.f32 %v851, %v869
  %871 = vmatmul.bf16.gmra.mxu0 %v255
  %v872 = vpop.f32.mrf.mxu0
  %v873 = vadd.f32 %v854, %v872
  %v874 = vpop.f32.mrf.mxu0
  %v875 = vadd.f32 %v856, %v874
  %876 = vdwg.mxu0
  %v877 = vpack.c.bf16 %v868, %v868
  %v878 = vpack.c.bf16 %v870, %v870
  %v879 = vpack.c.bf16 %v873, %v873
  %v880 = vpack.c.bf16 %v875, %v875
  %881 = vst [vmem:[%s3] sm:$0xf] %v877
  %882 = vst [vmem:[%s3 + $0x4] sm:$0xf] %v878
  %883 = vst [vmem:[%s3 + $0x8] sm:$0xf] %v879
  %884 = vst [vmem:[%s3 + $0xc] sm:$0xf] %v880
  // Predicated region
  $region14: #{vqvae_forward.14} parent=0 // pred_check
    _
  $region15: #{vqvae_forward.14} parent=0 // pred_check_branch
    %886 = sbr.rel (0) target = $region17
  $region16: #{vqvae_forward.14} parent=0 // pred_region
    _
  $region17: #{vqvae_forward.14} parent=0 // pred_fallthru
    _
  // Predicated region
  $region18: #{vqvae_forward.14} parent=0 // pred_check
    _
  $region19: #{vqvae_forward.14} parent=0 // pred_check_branch
    %888 = sbr.rel (0) target = $region21
  $region20: #{vqvae_forward.14} parent=0 // pred_region
    _
  $region21: #{vqvae_forward.14} parent=0 // pred_fallthru
    _

// kernel: vqvae_forward.13
$region0: #{vqvae_forward.13}
  #allocation0 [shape = 'u32[]', space=smem, size = 0x4, offset = 0x4, fixed_abs, tag = 'smem constant byte address 0x4 - core index']
  #allocation1 [shape = 'u32[72,128]{1,0:T(1,128)}', space=vmem, size = 0x9000, scoped, tag = 'internal scratch']
  %s0 = inlined_call_operand.vmem [shape: bf16[32,2048], index: 0, kind: input, shape index: {}]
  %s1 = inlined_call_operand.vmem [shape: bf16[2048,128], index: 1, kind: input, shape index: {}]
  %s2 = inlined_call_operand.vmem [shape: f32[1,128], index: 2, kind: input, shape index: {}]
  %s3 = inlined_call_operand.vmem [shape: bf16[32,128], index: 3, kind: output, shape index: {}]
  %s4 = sld [smem:[#allocation0]]
  $region22: #{vqvae_forward.13} parent=0
    _
  %s6 = ssub.s32 1, %s4
  %s7 = scalar_select 0, %s6, %s4
  // Predicated region
  $region2: #{vqvae_forward.13} parent=0 // pred_check
    _
  $region3: #{vqvae_forward.13} parent=0 // pred_check_branch
    %9 = sbr.rel (0) target = $region5
  $region4: #{vqvae_forward.13} parent=0 // pred_region
    _
  $region5: #{vqvae_forward.13} parent=0 // pred_fallthru
    _
  // Predicated region
  $region6: #{vqvae_forward.13} parent=0 // pred_check
    _
  $region7: #{vqvae_forward.13} parent=0 // pred_check_branch
    %11 = sbr.rel (0) target = $region9
  $region8: #{vqvae_forward.13} parent=0 // pred_region
    _
  $region9: #{vqvae_forward.13} parent=0 // pred_fallthru
    _
  // Predicated region
  $region10: #{vqvae_forward.13} parent=0 // pred_check
    _
  $region11: #{vqvae_forward.13} parent=0 // pred_check_branch
    %13 = sbr.rel (0) target = $region13
  $region12: #{vqvae_forward.13} parent=0 // pred_region
    _
  $region13: #{vqvae_forward.13} parent=0 // pred_fallthru
    _
  %v14 = vld [vmem:[%s0] sm:$0xff]
  %v15 = vld [vmem:[%s0 + $0x8] sm:$0xff]
  %v16 = vld [vmem:[%s0 + $0x10] sm:$0xff]
  %v17 = vld [vmem:[%s0 + $0x18] sm:$0xff]
  %v18 = vld [vmem:[%s0 + $0x20] sm:$0xff]
  %v19 = vld [vmem:[%s0 + $0x28] sm:$0xff]
  %v20 = vld [vmem:[%s0 + $0x30] sm:$0xff]
  %v21 = vld [vmem:[%s0 + $0x38] sm:$0xff]
  %v22 = vld [vmem:[%s0 + $0x40] sm:$0xff]
  %v23 = vld [vmem:[%s0 + $0x48] sm:$0xff]
  %v24 = vld [vmem:[%s0 + $0x50] sm:$0xff]
  %v25 = vld [vmem:[%s0 + $0x58] sm:$0xff]
  %v26 = vld [vmem:[%s0 + $0x60] sm:$0xff]
  %v27 = vld [vmem:[%s0 + $0x68] sm:$0xff]
  %v28 = vld [vmem:[%s0 + $0x70] sm:$0xff]
  %v29 = vld [vmem:[%s0 + $0x78] sm:$0xff]
  %v30 = vld [vmem:[%s0 + $0x80] sm:$0xff]
  %v31 = vld [vmem:[%s0 + $0x88] sm:$0xff]
  %v32 = vld [vmem:[%s0 + $0x90] sm:$0xff]
  %v33 = vld [vmem:[%s0 + $0x98] sm:$0xff]
  %v34 = vld [vmem:[%s0 + $0xa0] sm:$0xff]
  %v35 = vld [vmem:[%s0 + $0xa8] sm:$0xff]
  %v36 = vld [vmem:[%s0 + $0xb0] sm:$0xff]
  %v37 = vld [vmem:[%s0 + $0xb8] sm:$0xff]
  %v38 = vld [vmem:[%s0 + $0xc0] sm:$0xff]
  %v39 = vld [vmem:[%s0 + $0xc8] sm:$0xff]
  %v40 = vld [vmem:[%s0 + $0xd0] sm:$0xff]
  %v41 = vld [vmem:[%s0 + $0xd8] sm:$0xff]
  %v42 = vld [vmem:[%s0 + $0xe0] sm:$0xff]
  %v43 = vld [vmem:[%s0 + $0xe8] sm:$0xff]
  %v44 = vld [vmem:[%s0 + $0xf0] sm:$0xff]
  %v45 = vld [vmem:[%s0 + $0xf8] sm:$0xff]
  %v46 = vld [vmem:[%s1] sm:$0xf]
  %v47 = vld [vmem:[%s1 + $0x4] sm:$0xf]
  %v48 = vld [vmem:[%s1 + $0x8] sm:$0xf]
  %v49 = vld [vmem:[%s1 + $0xc] sm:$0xf]
  %v50 = vld [vmem:[%s1 + $0x10] sm:$0xf]
  %v51 = vld [vmem:[%s1 + $0x14] sm:$0xf]
  %v52 = vld [vmem:[%s1 + $0x18] sm:$0xf]
  %v53 = vld [vmem:[%s1 + $0x1c] sm:$0xf]
  %v54 = vld [vmem:[%s1 + $0x20] sm:$0xf]
  %v55 = vld [vmem:[%s1 + $0x24] sm:$0xf]
  %v56 = vld [vmem:[%s1 + $0x28] sm:$0xf]
  %v57 = vld [vmem:[%s1 + $0x2c] sm:$0xf]
  %v58 = vld [vmem:[%s1 + $0x30] sm:$0xf]
  %v59 = vld [vmem:[%s1 + $0x34] sm:$0xf]
  %v60 = vld [vmem:[%s1 + $0x38] sm:$0xf]
  %v61 = vld [vmem:[%s1 + $0x3c] sm:$0xf]
  %v62 = vld [vmem:[%s1 + $0x40] sm:$0xf]
  %v63 = vld [vmem:[%s1 + $0x44] sm:$0xf]
  %v64 = vld [vmem:[%s1 + $0x48] sm:$0xf]
  %v65 = vld [vmem:[%s1 + $0x4c] sm:$0xf]
  %v66 = vld [vmem:[%s1 + $0x50] sm:$0xf]
  %v67 = vld [vmem:[%s1 + $0x54] sm:$0xf]
  %v68 = vld [vmem:[%s1 + $0x58] sm:$0xf]
  %v69 = vld [vmem:[%s1 + $0x5c] sm:$0xf]
  %v70 = vld [vmem:[%s1 + $0x60] sm:$0xf]
  %v71 = vld [vmem:[%s1 + $0x64] sm:$0xf]
  %v72 = vld [vmem:[%s1 + $0x68] sm:$0xf]
  %v73 = vld [vmem:[%s1 + $0x6c] sm:$0xf]
  %v74 = vld [vmem:[%s1 + $0x70] sm:$0xf]
  %v75 = vld [vmem:[%s1 + $0x74] sm:$0xf]
  %v76 = vld [vmem:[%s1 + $0x78] sm:$0xf]
  %v77 = vld [vmem:[%s1 + $0x7c] sm:$0xf]
  %v78 = vld [vmem:[%s1 + $0x80] sm:$0xf]
  %v79 = vld [vmem:[%s1 + $0x84] sm:$0xf]
  %v80 = vld [vmem:[%s1 + $0x88] sm:$0xf]
  %v81 = vld [vmem:[%s1 + $0x8c] sm:$0xf]
  %v82 = vld [vmem:[%s1 + $0x90] sm:$0xf]
  %v83 = vld [vmem:[%s1 + $0x94] sm:$0xf]
  %v84 = vld [vmem:[%s1 + $0x98] sm:$0xf]
  %v85 = vld [vmem:[%s1 + $0x9c] sm:$0xf]
  %v86 = vld [vmem:[%s1 + $0xa0] sm:$0xf]
  %v87 = vld [vmem:[%s1 + $0xa4] sm:$0xf]
  %v88 = vld [vmem:[%s1 + $0xa8] sm:$0xf]
  %v89 = vld [vmem:[%s1 + $0xac] sm:$0xf]
  %v90 = vld [vmem:[%s1 + $0xb0] sm:$0xf]
  %v91 = vld [vmem:[%s1 + $0xb4] sm:$0xf]
  %v92 = vld [vmem:[%s1 + $0xb8] sm:$0xf]
  %v93 = vld [vmem:[%s1 + $0xbc] sm:$0xf]
  %v94 = vld [vmem:[%s1 + $0xc0] sm:$0xf]
  %v95 = vld [vmem:[%s1 + $0xc4] sm:$0xf]
  %v96 = vld [vmem:[%s1 + $0xc8] sm:$0xf]
  %v97 = vld [vmem:[%s1 + $0xcc] sm:$0xf]
  %v98 = vld [vmem:[%s1 + $0xd0] sm:$0xf]
  %v99 = vld [vmem:[%s1 + $0xd4] sm:$0xf]
  %v100 = vld [vmem:[%s1 + $0xd8] sm:$0xf]
  %v101 = vld [vmem:[%s1 + $0xdc] sm:$0xf]
  %v102 = vld [vmem:[%s1 + $0xe0] sm:$0xf]
  %v103 = vld [vmem:[%s1 + $0xe4] sm:$0xf]
  %v104 = vld [vmem:[%s1 + $0xe8] sm:$0xf]
  %v105 = vld [vmem:[%s1 + $0xec] sm:$0xf]
  %v106 = vld [vmem:[%s1 + $0xf0] sm:$0xf]
  %v107 = vld [vmem:[%s1 + $0xf4] sm:$0xf]
  %v108 = vld [vmem:[%s1 + $0xf8] sm:$0xf]
  %v109 = vld [vmem:[%s1 + $0xfc] sm:$0xf]
  %v110 = vld [vmem:[%s1 + $0x100] sm:$0xf]
  %v111 = vld [vmem:[%s1 + $0x104] sm:$0xf]
  %v112 = vld [vmem:[%s1 + $0x108] sm:$0xf]
  %v113 = vld [vmem:[%s1 + $0x10c] sm:$0xf]
  %v114 = vld [vmem:[%s1 + $0x110] sm:$0xf]
  %v115 = vld [vmem:[%s1 + $0x114] sm:$0xf]
  %v116 = vld [vmem:[%s1 + $0x118] sm:$0xf]
  %v117 = vld [vmem:[%s1 + $0x11c] sm:$0xf]
  %v118 = vld [vmem:[%s1 + $0x120] sm:$0xf]
  %v119 = vld [vmem:[%s1 + $0x124] sm:$0xf]
  %v120 = vld [vmem:[%s1 + $0x128] sm:$0xf]
  %v121 = vld [vmem:[%s1 + $0x12c] sm:$0xf]
  %v122 = vld [vmem:[%s1 + $0x130] sm:$0xf]
  %v123 = vld [vmem:[%s1 + $0x134] sm:$0xf]
  %v124 = vld [vmem:[%s1 + $0x138] sm:$0xf]
  %v125 = vld [vmem:[%s1 + $0x13c] sm:$0xf]
  %v126 = vld [vmem:[%s1 + $0x140] sm:$0xf]
  %v127 = vld [vmem:[%s1 + $0x144] sm:$0xf]
  %v128 = vld [vmem:[%s1 + $0x148] sm:$0xf]
  %v129 = vld [vmem:[%s1 + $0x14c] sm:$0xf]
  %v130 = vld [vmem:[%s1 + $0x150] sm:$0xf]
  %v131 = vld [vmem:[%s1 + $0x154] sm:$0xf]
  %v132 = vld [vmem:[%s1 + $0x158] sm:$0xf]
  %v133 = vld [vmem:[%s1 + $0x15c] sm:$0xf]
  %v134 = vld [vmem:[%s1 + $0x160] sm:$0xf]
  %v135 = vld [vmem:[%s1 + $0x164] sm:$0xf]
  %v136 = vld [vmem:[%s1 + $0x168] sm:$0xf]
  %v137 = vld [vmem:[%s1 + $0x16c] sm:$0xf]
  %v138 = vld [vmem:[%s1 + $0x170] sm:$0xf]
  %v139 = vld [vmem:[%s1 + $0x174] sm:$0xf]
  %v140 = vld [vmem:[%s1 + $0x178] sm:$0xf]
  %v141 = vld [vmem:[%s1 + $0x17c] sm:$0xf]
  %v142 = vld [vmem:[%s1 + $0x180] sm:$0xf]
  %v143 = vld [vmem:[%s1 + $0x184] sm:$0xf]
  %v144 = vld [vmem:[%s1 + $0x188] sm:$0xf]
  %v145 = vld [vmem:[%s1 + $0x18c] sm:$0xf]
  %v146 = vld [vmem:[%s1 + $0x190] sm:$0xf]
  %v147 = vld [vmem:[%s1 + $0x194] sm:$0xf]
  %v148 = vld [vmem:[%s1 + $0x198] sm:$0xf]
  %v149 = vld [vmem:[%s1 + $0x19c] sm:$0xf]
  %v150 = vld [vmem:[%s1 + $0x1a0] sm:$0xf]
  %v151 = vld [vmem:[%s1 + $0x1a4] sm:$0xf]
  %v152 = vld [vmem:[%s1 + $0x1a8] sm:$0xf]
  %v153 = vld [vmem:[%s1 + $0x1ac] sm:$0xf]
  %v154 = vld [vmem:[%s1 + $0x1b0] sm:$0xf]
  %v155 = vld [vmem:[%s1 + $0x1b4] sm:$0xf]
  %v156 = vld [vmem:[%s1 + $0x1b8] sm:$0xf]
  %v157 = vld [vmem:[%s1 + $0x1bc] sm:$0xf]
  %v158 = vld [vmem:[%s1 + $0x1c0] sm:$0xf]
  %v159 = vld [vmem:[%s1 + $0x1c4] sm:$0xf]
  %v160 = vld [vmem:[%s1 + $0x1c8] sm:$0xf]
  %v161 = vld [vmem:[%s1 + $0x1cc] sm:$0xf]
  %v162 = vld [vmem:[%s1 + $0x1d0] sm:$0xf]
  %v163 = vld [vmem:[%s1 + $0x1d4] sm:$0xf]
  %v164 = vld [vmem:[%s1 + $0x1d8] sm:$0xf]
  %v165 = vld [vmem:[%s1 + $0x1dc] sm:$0xf]
  %v166 = vld [vmem:[%s1 + $0x1e0] sm:$0xf]
  %v167 = vld [vmem:[%s1 + $0x1e4] sm:$0xf]
  %v168 = vld [vmem:[%s1 + $0x1e8] sm:$0xf]
  %v169 = vld [vmem:[%s1 + $0x1ec] sm:$0xf]
  %v170 = vld [vmem:[%s1 + $0x1f0] sm:$0xf]
  %v171 = vld [vmem:[%s1 + $0x1f4] sm:$0xf]
  %v172 = vld [vmem:[%s1 + $0x1f8] sm:$0xf]
  %v173 = vld [vmem:[%s1 + $0x1fc] sm:$0xf]
  %v174 = vld [vmem:[%s1 + $0x200] sm:$0xf]
  %v175 = vld [vmem:[%s1 + $0x204] sm:$0xf]
  %v176 = vld [vmem:[%s1 + $0x208] sm:$0xf]
  %v177 = vld [vmem:[%s1 + $0x20c] sm:$0xf]
  %v178 = vld [vmem:[%s1 + $0x210] sm:$0xf]
  %v179 = vld [vmem:[%s1 + $0x214] sm:$0xf]
  %v180 = vld [vmem:[%s1 + $0x218] sm:$0xf]
  %v181 = vld [vmem:[%s1 + $0x21c] sm:$0xf]
  %v182 = vld [vmem:[%s1 + $0x220] sm:$0xf]
  %v183 = vld [vmem:[%s1 + $0x224] sm:$0xf]
  %v184 = vld [vmem:[%s1 + $0x228] sm:$0xf]
  %v185 = vld [vmem:[%s1 + $0x22c] sm:$0xf]
  %v186 = vld [vmem:[%s1 + $0x230] sm:$0xf]
  %v187 = vld [vmem:[%s1 + $0x234] sm:$0xf]
  %v188 = vld [vmem:[%s1 + $0x238] sm:$0xf]
  %v189 = vld [vmem:[%s1 + $0x23c] sm:$0xf]
  %v190 = vld [vmem:[%s1 + $0x240] sm:$0xf]
  %v191 = vld [vmem:[%s1 + $0x244] sm:$0xf]
  %v192 = vld [vmem:[%s1 + $0x248] sm:$0xf]
  %v193 = vld [vmem:[%s1 + $0x24c] sm:$0xf]
  %v194 = vld [vmem:[%s1 + $0x250] sm:$0xf]
  %v195 = vld [vmem:[%s1 + $0x254] sm:$0xf]
  %v196 = vld [vmem:[%s1 + $0x258] sm:$0xf]
  %v197 = vld [vmem:[%s1 + $0x25c] sm:$0xf]
  %v198 = vld [vmem:[%s1 + $0x260] sm:$0xf]
  %v199 = vld [vmem:[%s1 + $0x264] sm:$0xf]
  %v200 = vld [vmem:[%s1 + $0x268] sm:$0xf]
  %v201 = vld [vmem:[%s1 + $0x26c] sm:$0xf]
  %v202 = vld [vmem:[%s1 + $0x270] sm:$0xf]
  %v203 = vld [vmem:[%s1 + $0x274] sm:$0xf]
  %v204 = vld [vmem:[%s1 + $0x278] sm:$0xf]
  %v205 = vld [vmem:[%s1 + $0x27c] sm:$0xf]
  %v206 = vld [vmem:[%s1 + $0x280] sm:$0xf]
  %v207 = vld [vmem:[%s1 + $0x284] sm:$0xf]
  %v208 = vld [vmem:[%s1 + $0x288] sm:$0xf]
  %v209 = vld [vmem:[%s1 + $0x28c] sm:$0xf]
  %v210 = vld [vmem:[%s1 + $0x290] sm:$0xf]
  %v211 = vld [vmem:[%s1 + $0x294] sm:$0xf]
  %v212 = vld [vmem:[%s1 + $0x298] sm:$0xf]
  %v213 = vld [vmem:[%s1 + $0x29c] sm:$0xf]
  %v214 = vld [vmem:[%s1 + $0x2a0] sm:$0xf]
  %v215 = vld [vmem:[%s1 + $0x2a4] sm:$0xf]
  %v216 = vld [vmem:[%s1 + $0x2a8] sm:$0xf]
  %v217 = vld [vmem:[%s1 + $0x2ac] sm:$0xf]
  %v218 = vld [vmem:[%s1 + $0x2b0] sm:$0xf]
  %v219 = vld [vmem:[%s1 + $0x2b4] sm:$0xf]
  %v220 = vld [vmem:[%s1 + $0x2b8] sm:$0xf]
  %v221 = vld [vmem:[%s1 + $0x2bc] sm:$0xf]
  %v222 = vld [vmem:[%s1 + $0x2c0] sm:$0xf]
  %v223 = vld [vmem:[%s1 + $0x2c4] sm:$0xf]
  %v224 = vld [vmem:[%s1 + $0x2c8] sm:$0xf]
  %v225 = vld [vmem:[%s1 + $0x2cc] sm:$0xf]
  %v226 = vld [vmem:[%s1 + $0x2d0] sm:$0xf]
  %v227 = vld [vmem:[%s1 + $0x2d4] sm:$0xf]
  %v228 = vld [vmem:[%s1 + $0x2d8] sm:$0xf]
  %v229 = vld [vmem:[%s1 + $0x2dc] sm:$0xf]
  %v230 = vld [vmem:[%s1 + $0x2e0] sm:$0xf]
  %v231 = vld [vmem:[%s1 + $0x2e4] sm:$0xf]
  %v232 = vld [vmem:[%s1 + $0x2e8] sm:$0xf]
  %v233 = vld [vmem:[%s1 + $0x2ec] sm:$0xf]
  %v234 = vld [vmem:[%s1 + $0x2f0] sm:$0xf]
  %v235 = vld [vmem:[%s1 + $0x2f4] sm:$0xf]
  %v236 = vld [vmem:[%s1 + $0x2f8] sm:$0xf]
  %v237 = vld [vmem:[%s1 + $0x2fc] sm:$0xf]
  %v238 = vld [vmem:[%s1 + $0x300] sm:$0xf]
  %v239 = vld [vmem:[%s1 + $0x304] sm:$0xf]
  %v240 = vld [vmem:[%s1 + $0x308] sm:$0xf]
  %v241 = vld [vmem:[%s1 + $0x30c] sm:$0xf]
  %v242 = vld [vmem:[%s1 + $0x310] sm:$0xf]
  %v243 = vld [vmem:[%s1 + $0x314] sm:$0xf]
  %v244 = vld [vmem:[%s1 + $0x318] sm:$0xf]
  %v245 = vld [vmem:[%s1 + $0x31c] sm:$0xf]
  %v246 = vld [vmem:[%s1 + $0x320] sm:$0xf]
  %v247 = vld [vmem:[%s1 + $0x324] sm:$0xf]
  %v248 = vld [vmem:[%s1 + $0x328] sm:$0xf]
  %v249 = vld [vmem:[%s1 + $0x32c] sm:$0xf]
  %v250 = vld [vmem:[%s1 + $0x330] sm:$0xf]
  %v251 = vld [vmem:[%s1 + $0x334] sm:$0xf]
  %v252 = vld [vmem:[%s1 + $0x338] sm:$0xf]
  %v253 = vld [vmem:[%s1 + $0x33c] sm:$0xf]
  %v254 = vld [vmem:[%s1 + $0x340] sm:$0xf]
  %v255 = vld [vmem:[%s1 + $0x344] sm:$0xf]
  %v256 = vld [vmem:[%s1 + $0x348] sm:$0xf]
  %v257 = vld [vmem:[%s1 + $0x34c] sm:$0xf]
  %v258 = vld [vmem:[%s1 + $0x350] sm:$0xf]
  %v259 = vld [vmem:[%s1 + $0x354] sm:$0xf]
  %v260 = vld [vmem:[%s1 + $0x358] sm:$0xf]
  %v261 = vld [vmem:[%s1 + $0x35c] sm:$0xf]
  %v262 = vld [vmem:[%s1 + $0x360] sm:$0xf]
  %v263 = vld [vmem:[%s1 + $0x364] sm:$0xf]
  %v264 = vld [vmem:[%s1 + $0x368] sm:$0xf]
  %v265 = vld [vmem:[%s1 + $0x36c] sm:$0xf]
  %v266 = vld [vmem:[%s1 + $0x370] sm:$0xf]
  %v267 = vld [vmem:[%s1 + $0x374] sm:$0xf]
  %v268 = vld [vmem:[%s1 + $0x378] sm:$0xf]
  %v269 = vld [vmem:[%s1 + $0x37c] sm:$0xf]
  %v270 = vld [vmem:[%s1 + $0x380] sm:$0xf]
  %v271 = vld [vmem:[%s1 + $0x384] sm:$0xf]
  %v272 = vld [vmem:[%s1 + $0x388] sm:$0xf]
  %v273 = vld [vmem:[%s1 + $0x38c] sm:$0xf]
  %v274 = vld [vmem:[%s1 + $0x390] sm:$0xf]
  %v275 = vld [vmem:[%s1 + $0x394] sm:$0xf]
  %v276 = vld [vmem:[%s1 + $0x398] sm:$0xf]
  %v277 = vld [vmem:[%s1 + $0x39c] sm:$0xf]
  %v278 = vld [vmem:[%s1 + $0x3a0] sm:$0xf]
  %v279 = vld [vmem:[%s1 + $0x3a4] sm:$0xf]
  %v280 = vld [vmem:[%s1 + $0x3a8] sm:$0xf]
  %v281 = vld [vmem:[%s1 + $0x3ac] sm:$0xf]
  %v282 = vld [vmem:[%s1 + $0x3b0] sm:$0xf]
  %v283 = vld [vmem:[%s1 + $0x3b4] sm:$0xf]
  %v284 = vld [vmem:[%s1 + $0x3b8] sm:$0xf]
  %v285 = vld [vmem:[%s1 + $0x3bc] sm:$0xf]
  %v286 = vld [vmem:[%s1 + $0x3c0] sm:$0xf]
  %v287 = vld [vmem:[%s1 + $0x3c4] sm:$0xf]
  %v288 = vld [vmem:[%s1 + $0x3c8] sm:$0xf]
  %v289 = vld [vmem:[%s1 + $0x3cc] sm:$0xf]
  %v290 = vld [vmem:[%s1 + $0x3d0] sm:$0xf]
  %v291 = vld [vmem:[%s1 + $0x3d4] sm:$0xf]
  %v292 = vld [vmem:[%s1 + $0x3d8] sm:$0xf]
  %v293 = vld [vmem:[%s1 + $0x3dc] sm:$0xf]
  %v294 = vld [vmem:[%s1 + $0x3e0] sm:$0xf]
  %v295 = vld [vmem:[%s1 + $0x3e4] sm:$0xf]
  %v296 = vld [vmem:[%s1 + $0x3e8] sm:$0xf]
  %v297 = vld [vmem:[%s1 + $0x3ec] sm:$0xf]
  %v298 = vld [vmem:[%s1 + $0x3f0] sm:$0xf]
  %v299 = vld [vmem:[%s1 + $0x3f4] sm:$0xf]
  %v300 = vld [vmem:[%s1 + $0x3f8] sm:$0xf]
  %v301 = vld [vmem:[%s1 + $0x3fc] sm:$0xf]
  %v302 = vld [vmem:[%s2] sm:$0x1]
  %v304 = vperm.slane %v302, 0
  %v338 = vunpack.c.l.b16 %v14
  %v339 = vunpack.c.h.b16 %v14
  %v340 = vunpack.c.l.b16 %v15
  %v341 = vunpack.c.h.b16 %v15
  %v342 = vunpack.c.l.b16 %v16
  %v343 = vunpack.c.h.b16 %v16
  %v344 = vunpack.c.l.b16 %v17
  %v345 = vunpack.c.h.b16 %v17
  %v346 = vunpack.c.l.b16 %v18
  %v347 = vunpack.c.h.b16 %v18
  %v348 = vunpack.c.l.b16 %v19
  %v349 = vunpack.c.h.b16 %v19
  %v350 = vunpack.c.l.b16 %v20
  %v351 = vunpack.c.h.b16 %v20
  %v352 = vunpack.c.l.b16 %v21
  %v353 = vunpack.c.h.b16 %v21
  %v354 = vunpack.c.l.b16 %v22
  %v355 = vunpack.c.h.b16 %v22
  %v356 = vunpack.c.l.b16 %v23
  %v357 = vunpack.c.h.b16 %v23
  %v358 = vunpack.c.l.b16 %v24
  %v359 = vunpack.c.h.b16 %v24
  %v360 = vunpack.c.l.b16 %v25
  %v361 = vunpack.c.h.b16 %v25
  %v362 = vunpack.c.l.b16 %v26
  %v363 = vunpack.c.h.b16 %v26
  %v364 = vunpack.c.l.b16 %v27
  %v365 = vunpack.c.h.b16 %v27
  %v366 = vunpack.c.l.b16 %v28
  %v367 = vunpack.c.h.b16 %v28
  %v368 = vunpack.c.l.b16 %v29
  %v369 = vunpack.c.h.b16 %v29
  %v370 = vunpack.c.l.b16 %v30
  %v371 = vunpack.c.h.b16 %v30
  %v372 = vunpack.c.l.b16 %v31
  %v373 = vunpack.c.h.b16 %v31
  %v374 = vunpack.c.l.b16 %v32
  %v375 = vunpack.c.h.b16 %v32
  %v376 = vunpack.c.l.b16 %v33
  %v377 = vunpack.c.h.b16 %v33
  %v378 = vunpack.c.l.b16 %v34
  %v379 = vunpack.c.h.b16 %v34
  %v380 = vunpack.c.l.b16 %v35
  %v381 = vunpack.c.h.b16 %v35
  %v382 = vunpack.c.l.b16 %v36
  %v383 = vunpack.c.h.b16 %v36
  %v384 = vunpack.c.l.b16 %v37
  %v385 = vunpack.c.h.b16 %v37
  %v386 = vunpack.c.l.b16 %v38
  %v387 = vunpack.c.h.b16 %v38
  %v388 = vunpack.c.l.b16 %v39
  %v389 = vunpack.c.h.b16 %v39
  %v390 = vunpack.c.l.b16 %v40
  %v391 = vunpack.c.h.b16 %v40
  %v392 = vunpack.c.l.b16 %v41
  %v393 = vunpack.c.h.b16 %v41
  %v394 = vunpack.c.l.b16 %v42
  %v395 = vunpack.c.h.b16 %v42
  %v396 = vunpack.c.l.b16 %v43
  %v397 = vunpack.c.h.b16 %v43
  %v398 = vunpack.c.l.b16 %v44
  %v399 = vunpack.c.h.b16 %v44
  %v400 = vunpack.c.l.b16 %v45
  %v401 = vunpack.c.h.b16 %v45
  %v402 = vpack.c.b16 %v354, %v338
  %v403 = vpack.c.b16 %v355, %v339
  %v404 = vpack.c.b16 %v356, %v340
  %v405 = vpack.c.b16 %v357, %v341
  %v406 = vpack.c.b16 %v358, %v342
  %v407 = vpack.c.b16 %v359, %v343
  %v408 = vpack.c.b16 %v360, %v344
  %v409 = vpack.c.b16 %v361, %v345
  %v410 = vpack.c.b16 %v362, %v346
  %v411 = vpack.c.b16 %v363, %v347
  %v412 = vpack.c.b16 %v364, %v348
  %v413 = vpack.c.b16 %v365, %v349
  %v414 = vpack.c.b16 %v366, %v350
  %v415 = vpack.c.b16 %v367, %v351
  %v416 = vpack.c.b16 %v368, %v352
  %v417 = vpack.c.b16 %v369, %v353
  %v418 = vpack.c.b16 %v386, %v370
  %v419 = vpack.c.b16 %v387, %v371
  %v420 = vpack.c.b16 %v388, %v372
  %v421 = vpack.c.b16 %v389, %v373
  %v422 = vpack.c.b16 %v390, %v374
  %v423 = vpack.c.b16 %v391, %v375
  %v424 = vpack.c.b16 %v392, %v376
  %v425 = vpack.c.b16 %v393, %v377
  %v426 = vpack.c.b16 %v394, %v378
  %v427 = vpack.c.b16 %v395, %v379
  %v428 = vpack.c.b16 %v396, %v380
  %v429 = vpack.c.b16 %v397, %v381
  %v430 = vpack.c.b16 %v398, %v382
  %v431 = vpack.c.b16 %v399, %v383
  %v432 = vpack.c.b16 %v400, %v384
  %v433 = vpack.c.b16 %v401, %v385
  %v722 = vunpack.c.l.b16 %v46
  %v723 = vunpack.c.l.b16 %v47
  %v724 = vunpack.c.l.b16 %v48
  %v725 = vunpack.c.l.b16 %v49
  %v726 = vunpack.c.l.b16 %v50
  %v727 = vunpack.c.l.b16 %v51
  %v728 = vunpack.c.l.b16 %v52
  %v729 = vunpack.c.l.b16 %v53
  %v730 = vunpack.c.l.b16 %v54
  %v731 = vunpack.c.l.b16 %v55
  %v732 = vunpack.c.l.b16 %v56
  %v733 = vunpack.c.l.b16 %v57
  %v734 = vunpack.c.l.b16 %v58
  %v735 = vunpack.c.l.b16 %v59
  %v736 = vunpack.c.l.b16 %v60
  %v737 = vunpack.c.l.b16 %v61
  %v738 = vunpack.c.l.b16 %v62
  %v739 = vunpack.c.l.b16 %v63
  %v740 = vunpack.c.l.b16 %v64
  %v741 = vunpack.c.l.b16 %v65
  %v742 = vunpack.c.l.b16 %v66
  %v743 = vunpack.c.l.b16 %v67
  %v744 = vunpack.c.l.b16 %v68
  %v745 = vunpack.c.l.b16 %v69
  %v746 = vunpack.c.l.b16 %v70
  %v747 = vunpack.c.l.b16 %v71
  %v748 = vunpack.c.l.b16 %v72
  %v749 = vunpack.c.l.b16 %v73
  %v750 = vunpack.c.l.b16 %v74
  %v751 = vunpack.c.l.b16 %v75
  %v752 = vunpack.c.l.b16 %v76
  %v753 = vunpack.c.l.b16 %v77
  %v754 = vunpack.c.l.b16 %v78
  %v755 = vunpack.c.l.b16 %v79
  %v756 = vunpack.c.l.b16 %v80
  %v757 = vunpack.c.l.b16 %v81
  %v758 = vunpack.c.l.b16 %v82
  %v759 = vunpack.c.l.b16 %v83
  %v760 = vunpack.c.l.b16 %v84
  %v761 = vunpack.c.l.b16 %v85
  %v762 = vunpack.c.l.b16 %v86
  %v763 = vunpack.c.l.b16 %v87
  %v764 = vunpack.c.l.b16 %v88
  %v765 = vunpack.c.l.b16 %v89
  %v766 = vunpack.c.l.b16 %v90
  %v767 = vunpack.c.l.b16 %v91
  %v768 = vunpack.c.l.b16 %v92
  %v769 = vunpack.c.l.b16 %v93
  %v770 = vunpack.c.l.b16 %v94
  %v771 = vunpack.c.l.b16 %v95
  %v772 = vunpack.c.l.b16 %v96
  %v773 = vunpack.c.l.b16 %v97
  %v774 = vunpack.c.l.b16 %v98
  %v775 = vunpack.c.l.b16 %v99
  %v776 = vunpack.c.l.b16 %v100
  %v777 = vunpack.c.l.b16 %v101
  %v778 = vunpack.c.l.b16 %v102
  %v779 = vunpack.c.l.b16 %v103
  %v780 = vunpack.c.l.b16 %v104
  %v781 = vunpack.c.l.b16 %v105
  %v782 = vunpack.c.l.b16 %v106
  %v783 = vunpack.c.l.b16 %v107
  %v784 = vunpack.c.l.b16 %v108
  %v785 = vunpack.c.l.b16 %v109
  %v786 = vunpack.c.l.b16 %v110
  %v787 = vunpack.c.l.b16 %v111
  %v788 = vunpack.c.l.b16 %v112
  %v789 = vunpack.c.l.b16 %v113
  %v790 = vunpack.c.l.b16 %v114
  %v791 = vunpack.c.l.b16 %v115
  %v792 = vunpack.c.l.b16 %v116
  %v793 = vunpack.c.l.b16 %v117
  %v794 = vunpack.c.l.b16 %v118
  %v795 = vunpack.c.l.b16 %v119
  %v796 = vunpack.c.l.b16 %v120
  %v797 = vunpack.c.l.b16 %v121
  %v798 = vunpack.c.l.b16 %v122
  %v799 = vunpack.c.l.b16 %v123
  %v800 = vunpack.c.l.b16 %v124
  %v801 = vunpack.c.l.b16 %v125
  %v802 = vunpack.c.l.b16 %v126
  %v803 = vunpack.c.l.b16 %v127
  %v804 = vunpack.c.l.b16 %v128
  %v805 = vunpack.c.l.b16 %v129
  %v806 = vunpack.c.l.b16 %v130
  %v807 = vunpack.c.l.b16 %v131
  %v808 = vunpack.c.l.b16 %v132
  %v809 = vunpack.c.l.b16 %v133
  %v810 = vunpack.c.l.b16 %v134
  %v811 = vunpack.c.l.b16 %v135
  %v812 = vunpack.c.l.b16 %v136
  %v813 = vunpack.c.l.b16 %v137
  %v814 = vunpack.c.l.b16 %v138
  %v815 = vunpack.c.l.b16 %v139
  %v816 = vunpack.c.l.b16 %v140
  %v817 = vunpack.c.l.b16 %v141
  %v818 = vunpack.c.l.b16 %v142
  %v819 = vunpack.c.l.b16 %v143
  %v820 = vunpack.c.l.b16 %v144
  %v821 = vunpack.c.l.b16 %v145
  %v822 = vunpack.c.l.b16 %v146
  %v823 = vunpack.c.l.b16 %v147
  %v824 = vunpack.c.l.b16 %v148
  %v825 = vunpack.c.l.b16 %v149
  %v826 = vunpack.c.l.b16 %v150
  %v827 = vunpack.c.l.b16 %v151
  %v828 = vunpack.c.l.b16 %v152
  %v829 = vunpack.c.l.b16 %v153
  %v830 = vunpack.c.l.b16 %v154
  %v831 = vunpack.c.l.b16 %v155
  %v832 = vunpack.c.l.b16 %v156
  %v833 = vunpack.c.l.b16 %v157
  %v834 = vunpack.c.l.b16 %v158
  %v835 = vunpack.c.l.b16 %v159
  %v836 = vunpack.c.l.b16 %v160
  %v837 = vunpack.c.l.b16 %v161
  %v838 = vunpack.c.l.b16 %v162
  %v839 = vunpack.c.l.b16 %v163
  %v840 = vunpack.c.l.b16 %v164
  %v841 = vunpack.c.l.b16 %v165
  %v842 = vunpack.c.l.b16 %v166
  %v843 = vunpack.c.l.b16 %v167
  %v844 = vunpack.c.l.b16 %v168
  %v845 = vunpack.c.l.b16 %v169
  %v846 = vunpack.c.l.b16 %v170
  %v847 = vunpack.c.l.b16 %v171
  %v848 = vunpack.c.l.b16 %v172
  %v849 = vunpack.c.l.b16 %v173
  %v850 = vunpack.c.l.b16 %v174
  %v851 = vunpack.c.l.b16 %v175
  %v852 = vunpack.c.l.b16 %v176
  %v853 = vunpack.c.l.b16 %v177
  %v854 = vunpack.c.l.b16 %v178
  %v855 = vunpack.c.l.b16 %v179
  %v856 = vunpack.c.l.b16 %v180
  %v857 = vunpack.c.l.b16 %v181
  %v858 = vunpack.c.l.b16 %v182
  %v859 = vunpack.c.l.b16 %v183
  %v860 = vunpack.c.l.b16 %v184
  %v861 = vunpack.c.l.b16 %v185
  %v862 = vunpack.c.l.b16 %v186
  %v863 = vunpack.c.l.b16 %v187
  %v864 = vunpack.c.l.b16 %v188
  %v865 = vunpack.c.l.b16 %v189
  %v866 = vunpack.c.l.b16 %v190
  %v867 = vunpack.c.l.b16 %v191
  %v868 = vunpack.c.l.b16 %v192
  %v869 = vunpack.c.l.b16 %v193
  %v870 = vunpack.c.l.b16 %v194
  %v871 = vunpack.c.l.b16 %v195
  %v872 = vunpack.c.l.b16 %v196
  %v873 = vunpack.c.l.b16 %v197
  %v874 = vunpack.c.l.b16 %v198
  %v875 = vunpack.c.l.b16 %v199
  %v876 = vunpack.c.l.b16 %v200
  %v877 = vunpack.c.l.b16 %v201
  %v878 = vunpack.c.l.b16 %v202
  %v879 = vunpack.c.l.b16 %v203
  %v880 = vunpack.c.l.b16 %v204
  %v881 = vunpack.c.l.b16 %v205
  %v882 = vunpack.c.l.b16 %v206
  %v883 = vunpack.c.l.b16 %v207
  %v884 = vunpack.c.l.b16 %v208
  %v885 = vunpack.c.l.b16 %v209
  %v886 = vunpack.c.l.b16 %v210
  %v887 = vunpack.c.l.b16 %v211
  %v888 = vunpack.c.l.b16 %v212
  %v889 = vunpack.c.l.b16 %v213
  %v890 = vunpack.c.l.b16 %v214
  %v891 = vunpack.c.l.b16 %v215
  %v892 = vunpack.c.l.b16 %v216
  %v893 = vunpack.c.l.b16 %v217
  %v894 = vunpack.c.l.b16 %v218
  %v895 = vunpack.c.l.b16 %v219
  %v896 = vunpack.c.l.b16 %v220
  %v897 = vunpack.c.l.b16 %v221
  %v898 = vunpack.c.l.b16 %v222
  %v899 = vunpack.c.l.b16 %v223
  %v900 = vunpack.c.l.b16 %v224
  %v901 = vunpack.c.l.b16 %v225
  %v902 = vunpack.c.l.b16 %v226
  %v903 = vunpack.c.l.b16 %v227
  %v904 = vunpack.c.l.b16 %v228
  %v905 = vunpack.c.l.b16 %v229
  %v906 = vunpack.c.l.b16 %v230
  %v907 = vunpack.c.l.b16 %v231
  %v908 = vunpack.c.l.b16 %v232
  %v909 = vunpack.c.l.b16 %v233
  %v910 = vunpack.c.l.b16 %v234
  %v911 = vunpack.c.l.b16 %v235
  %v912 = vunpack.c.l.b16 %v236
  %v913 = vunpack.c.l.b16 %v237
  %v914 = vunpack.c.l.b16 %v238
  %v915 = vunpack.c.l.b16 %v239
  %v916 = vunpack.c.l.b16 %v240
  %v917 = vunpack.c.l.b16 %v241
  %v918 = vunpack.c.l.b16 %v242
  %v919 = vunpack.c.l.b16 %v243
  %v920 = vunpack.c.l.b16 %v244
  %v921 = vunpack.c.l.b16 %v245
  %v922 = vunpack.c.l.b16 %v246
  %v923 = vunpack.c.l.b16 %v247
  %v924 = vunpack.c.l.b16 %v248
  %v925 = vunpack.c.l.b16 %v249
  %v926 = vunpack.c.l.b16 %v250
  %v927 = vunpack.c.l.b16 %v251
  %v928 = vunpack.c.l.b16 %v252
  %v929 = vunpack.c.l.b16 %v253
  %v930 = vunpack.c.l.b16 %v254
  %v931 = vunpack.c.l.b16 %v255
  %v932 = vunpack.c.l.b16 %v256
  %v933 = vunpack.c.l.b16 %v257
  %v934 = vunpack.c.l.b16 %v258
  %v935 = vunpack.c.l.b16 %v259
  %v936 = vunpack.c.l.b16 %v260
  %v937 = vunpack.c.l.b16 %v261
  %v938 = vunpack.c.l.b16 %v262
  %v939 = vunpack.c.l.b16 %v263
  %v940 = vunpack.c.l.b16 %v264
  %v941 = vunpack.c.l.b16 %v265
  %v942 = vunpack.c.l.b16 %v266
  %v943 = vunpack.c.l.b16 %v267
  %v944 = vunpack.c.l.b16 %v268
  %v945 = vunpack.c.l.b16 %v269
  %v946 = vunpack.c.l.b16 %v270
  %v947 = vunpack.c.l.b16 %v271
  %v948 = vunpack.c.l.b16 %v272
  %v949 = vunpack.c.l.b16 %v273
  %v950 = vunpack.c.l.b16 %v274
  %v951 = vunpack.c.l.b16 %v275
  %v952 = vunpack.c.l.b16 %v276
  %v953 = vunpack.c.l.b16 %v277
  %v954 = vunpack.c.l.b16 %v278
  %v955 = vunpack.c.l.b16 %v279
  %v956 = vunpack.c.l.b16 %v280
  %v957 = vunpack.c.l.b16 %v281
  %v958 = vunpack.c.l.b16 %v282
  %v959 = vunpack.c.l.b16 %v283
  %v960 = vunpack.c.l.b16 %v284
  %v961 = vunpack.c.l.b16 %v285
  %v962 = vunpack.c.l.b16 %v286
  %v963 = vunpack.c.l.b16 %v287
  %v964 = vunpack.c.l.b16 %v288
  %v965 = vunpack.c.l.b16 %v289
  %v966 = vunpack.c.l.b16 %v290
  %v967 = vunpack.c.l.b16 %v291
  %v968 = vunpack.c.l.b16 %v292
  %v969 = vunpack.c.l.b16 %v293
  %v970 = vunpack.c.l.b16 %v294
  %v971 = vunpack.c.l.b16 %v295
  %v972 = vunpack.c.l.b16 %v296
  %v973 = vunpack.c.l.b16 %v297
  %v974 = vunpack.c.l.b16 %v298
  %v975 = vunpack.c.l.b16 %v299
  %v976 = vunpack.c.l.b16 %v300
  %v977 = vunpack.c.l.b16 %v301
  %v978 = vpack.c.b16 %v723, %v722
  %v979 = vpack.c.b16 %v725, %v724
  %v980 = vpack.c.b16 %v727, %v726
  %v981 = vpack.c.b16 %v729, %v728
  %v982 = vpack.c.b16 %v731, %v730
  %v983 = vpack.c.b16 %v733, %v732
  %v984 = vpack.c.b16 %v735, %v734
  %v985 = vpack.c.b16 %v737, %v736
  %v986 = vpack.c.b16 %v739, %v738
  %v987 = vpack.c.b16 %v741, %v740
  %v988 = vpack.c.b16 %v743, %v742
  %v989 = vpack.c.b16 %v745, %v744
  %v990 = vpack.c.b16 %v747, %v746
  %v991 = vpack.c.b16 %v749, %v748
  %v992 = vpack.c.b16 %v751, %v750
  %v993 = vpack.c.b16 %v753, %v752
  %v994 = vpack.c.b16 %v755, %v754
  %v995 = vpack.c.b16 %v757, %v756
  %v996 = vpack.c.b16 %v759, %v758
  %v997 = vpack.c.b16 %v761, %v760
  %v998 = vpack.c.b16 %v763, %v762
  %v999 = vpack.c.b16 %v765, %v764
  %v1000 = vpack.c.b16 %v767, %v766
  %v1001 = vpack.c.b16 %v769, %v768
  %v1002 = vpack.c.b16 %v771, %v770
  %v1003 = vpack.c.b16 %v773, %v772
  %v1004 = vpack.c.b16 %v775, %v774
  %v1005 = vpack.c.b16 %v777, %v776
  %v1006 = vpack.c.b16 %v779, %v778
  %v1007 = vpack.c.b16 %v781, %v780
  %v1008 = vpack.c.b16 %v783, %v782
  %v1009 = vpack.c.b16 %v785, %v784
  %v1010 = vpack.c.b16 %v787, %v786
  %v1011 = vpack.c.b16 %v789, %v788
  %v1012 = vpack.c.b16 %v791, %v790
  %v1013 = vpack.c.b16 %v793, %v792
  %v1014 = vpack.c.b16 %v795, %v794
  %v1015 = vpack.c.b16 %v797, %v796
  %v1016 = vpack.c.b16 %v799, %v798
  %v1017 = vpack.c.b16 %v801, %v800
  %v1018 = vpack.c.b16 %v803, %v802
  %v1019 = vpack.c.b16 %v805, %v804
  %v1020 = vpack.c.b16 %v807, %v806
  %v1021 = vpack.c.b16 %v809, %v808
  %v1022 = vpack.c.b16 %v811, %v810
  %v1023 = vpack.c.b16 %v813, %v812
  %v1024 = vpack.c.b16 %v815, %v814
  %v1025 = vpack.c.b16 %v817, %v816
  %v1026 = vpack.c.b16 %v819, %v818
  %v1027 = vpack.c.b16 %v821, %v820
  %v1028 = vpack.c.b16 %v823, %v822
  %v1029 = vpack.c.b16 %v825, %v824
  %v1030 = vpack.c.b16 %v827, %v826
  %v1031 = vpack.c.b16 %v829, %v828
  %v1032 = vpack.c.b16 %v831, %v830
  %v1033 = vpack.c.b16 %v833, %v832
  %v1034 = vpack.c.b16 %v835, %v834
  %v1035 = vpack.c.b16 %v837, %v836
  %v1036 = vpack.c.b16 %v839, %v838
  %v1037 = vpack.c.b16 %v841, %v840
  %v1038 = vpack.c.b16 %v843, %v842
  %v1039 = vpack.c.b16 %v845, %v844
  %v1040 = vpack.c.b16 %v847, %v846
  %v1041 = vpack.c.b16 %v849, %v848
  %v1042 = vpack.c.b16 %v851, %v850
  %v1043 = vpack.c.b16 %v853, %v852
  %v1044 = vpack.c.b16 %v855, %v854
  %v1045 = vpack.c.b16 %v857, %v856
  %v1046 = vpack.c.b16 %v859, %v858
  %v1047 = vpack.c.b16 %v861, %v860
  %v1048 = vpack.c.b16 %v863, %v862
  %v1049 = vpack.c.b16 %v865, %v864
  %v1050 = vpack.c.b16 %v867, %v866
  %v1051 = vpack.c.b16 %v869, %v868
  %v1052 = vpack.c.b16 %v871, %v870
  %v1053 = vpack.c.b16 %v873, %v872
  %v1054 = vpack.c.b16 %v875, %v874
  %v1055 = vpack.c.b16 %v877, %v876
  %v1056 = vpack.c.b16 %v879, %v878
  %v1057 = vpack.c.b16 %v881, %v880
  %v1058 = vpack.c.b16 %v883, %v882
  %v1059 = vpack.c.b16 %v885, %v884
  %v1060 = vpack.c.b16 %v887, %v886
  %v1061 = vpack.c.b16 %v889, %v888
  %v1062 = vpack.c.b16 %v891, %v890
  %v1063 = vpack.c.b16 %v893, %v892
  %v1064 = vpack.c.b16 %v895, %v894
  %v1065 = vpack.c.b16 %v897, %v896
  %v1066 = vpack.c.b16 %v899, %v898
  %v1067 = vpack.c.b16 %v901, %v900
  %v1068 = vpack.c.b16 %v903, %v902
  %v1069 = vpack.c.b16 %v905, %v904
  %v1070 = vpack.c.b16 %v907, %v906
  %v1071 = vpack.c.b16 %v909, %v908
  %v1072 = vpack.c.b16 %v911, %v910
  %v1073 = vpack.c.b16 %v913, %v912
  %v1074 = vpack.c.b16 %v915, %v914
  %v1075 = vpack.c.b16 %v917, %v916
  %v1076 = vpack.c.b16 %v919, %v918
  %v1077 = vpack.c.b16 %v921, %v920
  %v1078 = vpack.c.b16 %v923, %v922
  %v1079 = vpack.c.b16 %v925, %v924
  %v1080 = vpack.c.b16 %v927, %v926
  %v1081 = vpack.c.b16 %v929, %v928
  %v1082 = vpack.c.b16 %v931, %v930
  %v1083 = vpack.c.b16 %v933, %v932
  %v1084 = vpack.c.b16 %v935, %v934
  %v1085 = vpack.c.b16 %v937, %v936
  %v1086 = vpack.c.b16 %v939, %v938
  %v1087 = vpack.c.b16 %v941, %v940
  %v1088 = vpack.c.b16 %v943, %v942
  %v1089 = vpack.c.b16 %v945, %v944
  %v1090 = vpack.c.b16 %v947, %v946
  %v1091 = vpack.c.b16 %v949, %v948
  %v1092 = vpack.c.b16 %v951, %v950
  %v1093 = vpack.c.b16 %v953, %v952
  %v1094 = vpack.c.b16 %v955, %v954
  %v1095 = vpack.c.b16 %v957, %v956
  %v1096 = vpack.c.b16 %v959, %v958
  %v1097 = vpack.c.b16 %v961, %v960
  %v1098 = vpack.c.b16 %v963, %v962
  %v1099 = vpack.c.b16 %v965, %v964
  %v1100 = vpack.c.b16 %v967, %v966
  %v1101 = vpack.c.b16 %v969, %v968
  %v1102 = vpack.c.b16 %v971, %v970
  %v1103 = vpack.c.b16 %v973, %v972
  %v1104 = vpack.c.b16 %v975, %v974
  %v1105 = vpack.c.b16 %v977, %v976
  %1234 = vmatpush.bf16.msra.mxu0 %v985
  %1235 = vmatpush.bf16.msra.mxu0 %v984
  %1236 = vmatpush.bf16.msra.mxu0 %v983
  %1237 = vmatpush.bf16.msra.mxu0 %v982
  %1238 = vmatpush.bf16.msra.mxu0 %v981
  %1239 = vmatpush.bf16.msra.mxu0 %v980
  %1240 = vmatpush.bf16.msra.mxu0 %v979
  %1241 = vmatpush.bf16.msra.mxu0 %v978
  %1242 = vmatmul.bf16.gmra.mxu0 %v402
  %v1243 = vpop.f32.mrf.mxu0
  %v1244 = vadd.f32 %v304, %v1243
  %v1245 = vpop.f32.mrf.mxu0
  %v1246 = vadd.f32 %v304, %v1245
  %1247 = vmatmul.bf16.gmra.mxu0 %v418
  %v1248 = vpop.f32.mrf.mxu0
  %v1249 = vadd.f32 %v304, %v1248
  %v1250 = vpop.f32.mrf.mxu0
  %v1251 = vadd.f32 %v304, %v1250
  %1252 = vdwg.mxu0
  %1253 = vmatpush.bf16.msra.mxu0 %v993
  %1254 = vmatpush.bf16.msra.mxu0 %v992
  %1255 = vmatpush.bf16.msra.mxu0 %v991
  %1256 = vmatpush.bf16.msra.mxu0 %v990
  %1257 = vmatpush.bf16.msra.mxu0 %v989
  %1258 = vmatpush.bf16.msra.mxu0 %v988
  %1259 = vmatpush.bf16.msra.mxu0 %v987
  %1260 = vmatpush.bf16.msra.mxu0 %v986
  %1261 = vmatmul.bf16.gmra.mxu0 %v403
  %v1262 = vpop.f32.mrf.mxu0
  %v1263 = vadd.f32 %v1244, %v1262
  %v1264 = vpop.f32.mrf.mxu0
  %v1265 = vadd.f32 %v1246, %v1264
  %1266 = vmatmul.bf16.gmra.mxu0 %v419
  %v1267 = vpop.f32.mrf.mxu0
  %v1268 = vadd.f32 %v1249, %v1267
  %v1269 = vpop.f32.mrf.mxu0
  %v1270 = vadd.f32 %v1251, %v1269
  %1271 = vdwg.mxu0
  %1272 = vmatpush.bf16.msra.mxu0 %v1001
  %1273 = vmatpush.bf16.msra.mxu0 %v1000
  %1274 = vmatpush.bf16.msra.mxu0 %v999
  %1275 = vmatpush.bf16.msra.mxu0 %v998
  %1276 = vmatpush.bf16.msra.mxu0 %v997
  %1277 = vmatpush.bf16.msra.mxu0 %v996
  %1278 = vmatpush.bf16.msra.mxu0 %v995
  %1279 = vmatpush.bf16.msra.mxu0 %v994
  %1280 = vmatmul.bf16.gmra.mxu0 %v404
  %v1281 = vpop.f32.mrf.mxu0
  %v1282 = vadd.f32 %v1263, %v1281
  %v1283 = vpop.f32.mrf.mxu0
  %v1284 = vadd.f32 %v1265, %v1283
  %1285 = vmatmul.bf16.gmra.mxu0 %v420
  %v1286 = vpop.f32.mrf.mxu0
  %v1287 = vadd.f32 %v1268, %v1286
  %v1288 = vpop.f32.mrf.mxu0
  %v1289 = vadd.f32 %v1270, %v1288
  %1290 = vdwg.mxu0
  %1291 = vmatpush.bf16.msra.mxu0 %v1009
  %1292 = vmatpush.bf16.msra.mxu0 %v1008
  %1293 = vmatpush.bf16.msra.mxu0 %v1007
  %1294 = vmatpush.bf16.msra.mxu0 %v1006
  %1295 = vmatpush.bf16.msra.mxu0 %v1005
  %1296 = vmatpush.bf16.msra.mxu0 %v1004
  %1297 = vmatpush.bf16.msra.mxu0 %v1003
  %1298 = vmatpush.bf16.msra.mxu0 %v1002
  %1299 = vmatmul.bf16.gmra.mxu0 %v405
  %v1300 = vpop.f32.mrf.mxu0
  %v1301 = vadd.f32 %v1282, %v1300
  %v1302 = vpop.f32.mrf.mxu0
  %v1303 = vadd.f32 %v1284, %v1302
  %1304 = vmatmul.bf16.gmra.mxu0 %v421
  %v1305 = vpop.f32.mrf.mxu0
  %v1306 = vadd.f32 %v1287, %v1305
  %v1307 = vpop.f32.mrf.mxu0
  %v1308 = vadd.f32 %v1289, %v1307
  %1309 = vdwg.mxu0
  %1310 = vmatpush.bf16.msra.mxu0 %v1017
  %1311 = vmatpush.bf16.msra.mxu0 %v1016
  %1312 = vmatpush.bf16.msra.mxu0 %v1015
  %1313 = vmatpush.bf16.msra.mxu0 %v1014
  %1314 = vmatpush.bf16.msra.mxu0 %v1013
  %1315 = vmatpush.bf16.msra.mxu0 %v1012
  %1316 = vmatpush.bf16.msra.mxu0 %v1011
  %1317 = vmatpush.bf16.msra.mxu0 %v1010
  %1318 = vmatmul.bf16.gmra.mxu0 %v406
  %v1319 = vpop.f32.mrf.mxu0
  %v1320 = vadd.f32 %v1301, %v1319
  %v1321 = vpop.f32.mrf.mxu0
  %v1322 = vadd.f32 %v1303, %v1321
  %1323 = vmatmul.bf16.gmra.mxu0 %v422
  %v1324 = vpop.f32.mrf.mxu0
  %v1325 = vadd.f32 %v1306, %v1324
  %v1326 = vpop.f32.mrf.mxu0
  %v1327 = vadd.f32 %v1308, %v1326
  %1328 = vdwg.mxu0
  %1329 = vmatpush.bf16.msra.mxu0 %v1025
  %1330 = vmatpush.bf16.msra.mxu0 %v1024
  %1331 = vmatpush.bf16.msra.mxu0 %v1023
  %1332 = vmatpush.bf16.msra.mxu0 %v1022
  %1333 = vmatpush.bf16.msra.mxu0 %v1021
  %1334 = vmatpush.bf16.msra.mxu0 %v1020
  %1335 = vmatpush.bf16.msra.mxu0 %v1019
  %1336 = vmatpush.bf16.msra.mxu0 %v1018
  %1337 = vmatmul.bf16.gmra.mxu0 %v407
  %v1338 = vpop.f32.mrf.mxu0
  %v1339 = vadd.f32 %v1320, %v1338
  %v1340 = vpop.f32.mrf.mxu0
  %v1341 = vadd.f32 %v1322, %v1340
  %1342 = vmatmul.bf16.gmra.mxu0 %v423
  %v1343 = vpop.f32.mrf.mxu0
  %v1344 = vadd.f32 %v1325, %v1343
  %v1345 = vpop.f32.mrf.mxu0
  %v1346 = vadd.f32 %v1327, %v1345
  %1347 = vdwg.mxu0
  %1348 = vmatpush.bf16.msra.mxu0 %v1033
  %1349 = vmatpush.bf16.msra.mxu0 %v1032
  %1350 = vmatpush.bf16.msra.mxu0 %v1031
  %1351 = vmatpush.bf16.msra.mxu0 %v1030
  %1352 = vmatpush.bf16.msra.mxu0 %v1029
  %1353 = vmatpush.bf16.msra.mxu0 %v1028
  %1354 = vmatpush.bf16.msra.mxu0 %v1027
  %1355 = vmatpush.bf16.msra.mxu0 %v1026
  %1356 = vmatmul.bf16.gmra.mxu0 %v408
  %v1357 = vpop.f32.mrf.mxu0
  %v1358 = vadd.f32 %v1339, %v1357
  %v1359 = vpop.f32.mrf.mxu0
  %v1360 = vadd.f32 %v1341, %v1359
  %1361 = vmatmul.bf16.gmra.mxu0 %v424
  %v1362 = vpop.f32.mrf.mxu0
  %v1363 = vadd.f32 %v1344, %v1362
  %v1364 = vpop.f32.mrf.mxu0
  %v1365 = vadd.f32 %v1346, %v1364
  %1366 = vdwg.mxu0
  %1367 = vmatpush.bf16.msra.mxu0 %v1041
  %1368 = vmatpush.bf16.msra.mxu0 %v1040
  %1369 = vmatpush.bf16.msra.mxu0 %v1039
  %1370 = vmatpush.bf16.msra.mxu0 %v1038
  %1371 = vmatpush.bf16.msra.mxu0 %v1037
  %1372 = vmatpush.bf16.msra.mxu0 %v1036
  %1373 = vmatpush.bf16.msra.mxu0 %v1035
  %1374 = vmatpush.bf16.msra.mxu0 %v1034
  %1375 = vmatmul.bf16.gmra.mxu0 %v409
  %v1376 = vpop.f32.mrf.mxu0
  %v1377 = vadd.f32 %v1358, %v1376
  %v1378 = vpop.f32.mrf.mxu0
  %v1379 = vadd.f32 %v1360, %v1378
  %1380 = vmatmul.bf16.gmra.mxu0 %v425
  %v1381 = vpop.f32.mrf.mxu0
  %v1382 = vadd.f32 %v1363, %v1381
  %v1383 = vpop.f32.mrf.mxu0
  %v1384 = vadd.f32 %v1365, %v1383
  %1385 = vdwg.mxu0
  %1386 = vmatpush.bf16.msra.mxu0 %v1049
  %1387 = vmatpush.bf16.msra.mxu0 %v1048
  %1388 = vmatpush.bf16.msra.mxu0 %v1047
  %1389 = vmatpush.bf16.msra.mxu0 %v1046
  %1390 = vmatpush.bf16.msra.mxu0 %v1045
  %1391 = vmatpush.bf16.msra.mxu0 %v1044
  %1392 = vmatpush.bf16.msra.mxu0 %v1043
  %1393 = vmatpush.bf16.msra.mxu0 %v1042
  %1394 = vmatmul.bf16.gmra.mxu0 %v410
  %v1395 = vpop.f32.mrf.mxu0
  %v1396 = vadd.f32 %v1377, %v1395
  %v1397 = vpop.f32.mrf.mxu0
  %v1398 = vadd.f32 %v1379, %v1397
  %1399 = vmatmul.bf16.gmra.mxu0 %v426
  %v1400 = vpop.f32.mrf.mxu0
  %v1401 = vadd.f32 %v1382, %v1400
  %v1402 = vpop.f32.mrf.mxu0
  %v1403 = vadd.f32 %v1384, %v1402
  %1404 = vdwg.mxu0
  %1405 = vmatpush.bf16.msra.mxu0 %v1057
  %1406 = vmatpush.bf16.msra.mxu0 %v1056
  %1407 = vmatpush.bf16.msra.mxu0 %v1055
  %1408 = vmatpush.bf16.msra.mxu0 %v1054
  %1409 = vmatpush.bf16.msra.mxu0 %v1053
  %1410 = vmatpush.bf16.msra.mxu0 %v1052
  %1411 = vmatpush.bf16.msra.mxu0 %v1051
  %1412 = vmatpush.bf16.msra.mxu0 %v1050
  %1413 = vmatmul.bf16.gmra.mxu0 %v411
  %v1414 = vpop.f32.mrf.mxu0
  %v1415 = vadd.f32 %v1396, %v1414
  %v1416 = vpop.f32.mrf.mxu0
  %v1417 = vadd.f32 %v1398, %v1416
  %1418 = vmatmul.bf16.gmra.mxu0 %v427
  %v1419 = vpop.f32.mrf.mxu0
  %v1420 = vadd.f32 %v1401, %v1419
  %v1421 = vpop.f32.mrf.mxu0
  %v1422 = vadd.f32 %v1403, %v1421
  %1423 = vdwg.mxu0
  %1424 = vmatpush.bf16.msra.mxu0 %v1065
  %1425 = vmatpush.bf16.msra.mxu0 %v1064
  %1426 = vmatpush.bf16.msra.mxu0 %v1063
  %1427 = vmatpush.bf16.msra.mxu0 %v1062
  %1428 = vmatpush.bf16.msra.mxu0 %v1061
  %1429 = vmatpush.bf16.msra.mxu0 %v1060
  %1430 = vmatpush.bf16.msra.mxu0 %v1059
  %1431 = vmatpush.bf16.msra.mxu0 %v1058
  %1432 = vmatmul.bf16.gmra.mxu0 %v412
  %v1433 = vpop.f32.mrf.mxu0
  %v1434 = vadd.f32 %v1415, %v1433
  %v1435 = vpop.f32.mrf.mxu0
  %v1436 = vadd.f32 %v1417, %v1435
  %1437 = vmatmul.bf16.gmra.mxu0 %v428
  %v1438 = vpop.f32.mrf.mxu0
  %v1439 = vadd.f32 %v1420, %v1438
  %v1440 = vpop.f32.mrf.mxu0
  %v1441 = vadd.f32 %v1422, %v1440
  %1442 = vdwg.mxu0
  %1443 = vmatpush.bf16.msra.mxu0 %v1073
  %1444 = vmatpush.bf16.msra.mxu0 %v1072
  %1445 = vmatpush.bf16.msra.mxu0 %v1071
  %1446 = vmatpush.bf16.msra.mxu0 %v1070
  %1447 = vmatpush.bf16.msra.mxu0 %v1069
  %1448 = vmatpush.bf16.msra.mxu0 %v1068
  %1449 = vmatpush.bf16.msra.mxu0 %v1067
  %1450 = vmatpush.bf16.msra.mxu0 %v1066
  %1451 = vmatmul.bf16.gmra.mxu0 %v413
  %v1452 = vpop.f32.mrf.mxu0
  %v1453 = vadd.f32 %v1434, %v1452
  %v1454 = vpop.f32.mrf.mxu0
  %v1455 = vadd.f32 %v1436, %v1454
  %1456 = vmatmul.bf16.gmra.mxu0 %v429
  %v1457 = vpop.f32.mrf.mxu0
  %v1458 = vadd.f32 %v1439, %v1457
  %v1459 = vpop.f32.mrf.mxu0
  %v1460 = vadd.f32 %v1441, %v1459
  %1461 = vdwg.mxu0
  %1462 = vmatpush.bf16.msra.mxu0 %v1081
  %1463 = vmatpush.bf16.msra.mxu0 %v1080
  %1464 = vmatpush.bf16.msra.mxu0 %v1079
  %1465 = vmatpush.bf16.msra.mxu0 %v1078
  %1466 = vmatpush.bf16.msra.mxu0 %v1077
  %1467 = vmatpush.bf16.msra.mxu0 %v1076
  %1468 = vmatpush.bf16.msra.mxu0 %v1075
  %1469 = vmatpush.bf16.msra.mxu0 %v1074
  %1470 = vmatmul.bf16.gmra.mxu0 %v414
  %v1471 = vpop.f32.mrf.mxu0
  %v1472 = vadd.f32 %v1453, %v1471
  %v1473 = vpop.f32.mrf.mxu0
  %v1474 = vadd.f32 %v1455, %v1473
  %1475 = vmatmul.bf16.gmra.mxu0 %v430
  %v1476 = vpop.f32.mrf.mxu0
  %v1477 = vadd.f32 %v1458, %v1476
  %v1478 = vpop.f32.mrf.mxu0
  %v1479 = vadd.f32 %v1460, %v1478
  %1480 = vdwg.mxu0
  %1481 = vmatpush.bf16.msra.mxu0 %v1089
  %1482 = vmatpush.bf16.msra.mxu0 %v1088
  %1483 = vmatpush.bf16.msra.mxu0 %v1087
  %1484 = vmatpush.bf16.msra.mxu0 %v1086
  %1485 = vmatpush.bf16.msra.mxu0 %v1085
  %1486 = vmatpush.bf16.msra.mxu0 %v1084
  %1487 = vmatpush.bf16.msra.mxu0 %v1083
  %1488 = vmatpush.bf16.msra.mxu0 %v1082
  %1489 = vmatmul.bf16.gmra.mxu0 %v415
  %v1490 = vpop.f32.mrf.mxu0
  %v1491 = vadd.f32 %v1472, %v1490
  %v1492 = vpop.f32.mrf.mxu0
  %v1493 = vadd.f32 %v1474, %v1492
  %1494 = vmatmul.bf16.gmra.mxu0 %v431
  %v1495 = vpop.f32.mrf.mxu0
  %v1496 = vadd.f32 %v1477, %v1495
  %v1497 = vpop.f32.mrf.mxu0
  %v1498 = vadd.f32 %v1479, %v1497
  %1499 = vdwg.mxu0
  %1500 = vmatpush.bf16.msra.mxu0 %v1097
  %1501 = vmatpush.bf16.msra.mxu0 %v1096
  %1502 = vmatpush.bf16.msra.mxu0 %v1095
  %1503 = vmatpush.bf16.msra.mxu0 %v1094
  %1504 = vmatpush.bf16.msra.mxu0 %v1093
  %1505 = vmatpush.bf16.msra.mxu0 %v1092
  %1506 = vmatpush.bf16.msra.mxu0 %v1091
  %1507 = vmatpush.bf16.msra.mxu0 %v1090
  %1508 = vmatmul.bf16.gmra.mxu0 %v416
  %v1509 = vpop.f32.mrf.mxu0
  %v1510 = vadd.f32 %v1491, %v1509
  %v1511 = vpop.f32.mrf.mxu0
  %v1512 = vadd.f32 %v1493, %v1511
  %1513 = vmatmul.bf16.gmra.mxu0 %v432
  %v1514 = vpop.f32.mrf.mxu0
  %v1515 = vadd.f32 %v1496, %v1514
  %v1516 = vpop.f32.mrf.mxu0
  %v1517 = vadd.f32 %v1498, %v1516
  %1518 = vdwg.mxu0
  %1519 = vmatpush.bf16.msra.mxu0 %v1105
  %1520 = vmatpush.bf16.msra.mxu0 %v1104
  %1521 = vmatpush.bf16.msra.mxu0 %v1103
  %1522 = vmatpush.bf16.msra.mxu0 %v1102
  %1523 = vmatpush.bf16.msra.mxu0 %v1101
  %1524 = vmatpush.bf16.msra.mxu0 %v1100
  %1525 = vmatpush.bf16.msra.mxu0 %v1099
  %1526 = vmatpush.bf16.msra.mxu0 %v1098
  %1527 = vmatmul.bf16.gmra.mxu0 %v417
  %v1528 = vpop.f32.mrf.mxu0
  %v1529 = vadd.f32 %v1510, %v1528
  %v1530 = vpop.f32.mrf.mxu0
  %v1531 = vadd.f32 %v1512, %v1530
  %1532 = vmatmul.bf16.gmra.mxu0 %v433
  %v1533 = vpop.f32.mrf.mxu0
  %v1534 = vadd.f32 %v1515, %v1533
  %v1535 = vpop.f32.mrf.mxu0
  %v1536 = vadd.f32 %v1517, %v1535
  %1537 = vdwg.mxu0
  %v1538 = vmax.f32 %v1529, 0.0
  %v1539 = vmax.f32 %v1531, 0.0
  %v1540 = vmax.f32 %v1534, 0.0
  %v1541 = vmax.f32 %v1536, 0.0
  %v1542 = vpack.c.bf16 %v1538, %v1538
  %v1543 = vpack.c.bf16 %v1539, %v1539
  %v1544 = vpack.c.bf16 %v1540, %v1540
  %v1545 = vpack.c.bf16 %v1541, %v1541
  %1546 = vst [vmem:[%s3] sm:$0xf] %v1542
  %1547 = vst [vmem:[%s3 + $0x4] sm:$0xf] %v1543
  %1548 = vst [vmem:[%s3 + $0x8] sm:$0xf] %v1544
  %1549 = vst [vmem:[%s3 + $0xc] sm:$0xf] %v1545
  // Predicated region
  $region14: #{vqvae_forward.13} parent=0 // pred_check
    _
  $region15: #{vqvae_forward.13} parent=0 // pred_check_branch
    %1551 = sbr.rel (0) target = $region17
  $region16: #{vqvae_forward.13} parent=0 // pred_region
    _
  $region17: #{vqvae_forward.13} parent=0 // pred_fallthru
    _
  // Predicated region
  $region18: #{vqvae_forward.13} parent=0 // pred_check
    _
  $region19: #{vqvae_forward.13} parent=0 // pred_check_branch
    %1553 = sbr.rel (0) target = $region21
  $region20: #{vqvae_forward.13} parent=0 // pred_region
    _
  $region21: #{vqvae_forward.13} parent=0 // pred_fallthru
    _

// kernel: vqvae_forward.17
$region0: #{vqvae_forward.17}
  #allocation0 [shape = 'u32[]', space=smem, size = 0x4, offset = 0x4, fixed_abs, tag = 'smem constant byte address 0x4 - core index']
  #allocation1 [shape = 'u32[72,128]{1,0:T(1,128)}', space=vmem, size = 0x9000, scoped, tag = 'internal scratch']
  %s0 = inlined_call_operand.vmem [shape: bf16[32,128], index: 0, kind: input, shape index: {}]
  %s1 = inlined_call_operand.vmem [shape: bf16[128,64], index: 1, kind: input, shape index: {}]
  %s2 = inlined_call_operand.vmem [shape: f32[1,64], index: 2, kind: input, shape index: {}]
  %s3 = inlined_call_operand.vmem [shape: f32[32,64], index: 3, kind: output, shape index: {}]
  %s4 = sld [smem:[#allocation0]]
  $region22: #{vqvae_forward.17} parent=0
    _
  %s6 = ssub.s32 1, %s4
  %s7 = scalar_select 0, %s6, %s4
  // Predicated region
  $region2: #{vqvae_forward.17} parent=0 // pred_check
    _
  $region3: #{vqvae_forward.17} parent=0 // pred_check_branch
    %9 = sbr.rel (0) target = $region5
  $region4: #{vqvae_forward.17} parent=0 // pred_region
    _
  $region5: #{vqvae_forward.17} parent=0 // pred_fallthru
    _
  // Predicated region
  $region6: #{vqvae_forward.17} parent=0 // pred_check
    _
  $region7: #{vqvae_forward.17} parent=0 // pred_check_branch
    %11 = sbr.rel (0) target = $region9
  $region8: #{vqvae_forward.17} parent=0 // pred_region
    _
  $region9: #{vqvae_forward.17} parent=0 // pred_fallthru
    _
  // Predicated region
  $region10: #{vqvae_forward.17} parent=0 // pred_check
    _
  $region11: #{vqvae_forward.17} parent=0 // pred_check_branch
    %13 = sbr.rel (0) target = $region13
  $region12: #{vqvae_forward.17} parent=0 // pred_region
    _
  $region13: #{vqvae_forward.17} parent=0 // pred_fallthru
    _
  %v14 = vld [vmem:[%s0] sm:$0xf]
  %v15 = vld [vmem:[%s0 + $0x4] sm:$0xf]
  %v16 = vld [vmem:[%s0 + $0x8] sm:$0xf]
  %v17 = vld [vmem:[%s0 + $0xc] sm:$0xf]
  %v18 = vld [vmem:[%s1] sm:$0xf]
  %v19 = vld [vmem:[%s1 + $0x4] sm:$0xf]
  %v20 = vld [vmem:[%s1 + $0x8] sm:$0xf]
  %v21 = vld [vmem:[%s1 + $0xc] sm:$0xf]
  %v22 = vld [vmem:[%s1 + $0x10] sm:$0xf]
  %v23 = vld [vmem:[%s1 + $0x14] sm:$0xf]
  %v24 = vld [vmem:[%s1 + $0x18] sm:$0xf]
  %v25 = vld [vmem:[%s1 + $0x1c] sm:$0xf]
  %v26 = vld [vmem:[%s1 + $0x20] sm:$0xf]
  %v27 = vld [vmem:[%s1 + $0x24] sm:$0xf]
  %v28 = vld [vmem:[%s1 + $0x28] sm:$0xf]
  %v29 = vld [vmem:[%s1 + $0x2c] sm:$0xf]
  %v30 = vld [vmem:[%s1 + $0x30] sm:$0xf]
  %v31 = vld [vmem:[%s1 + $0x34] sm:$0xf]
  %v32 = vld [vmem:[%s1 + $0x38] sm:$0xf]
  %v33 = vld [vmem:[%s1 + $0x3c] sm:$0xf]
  %v34 = vld [vmem:[%s2] sm:$0x1]
  %v36 = vperm.slane %v34, 0
  %v42 = vunpack.c.l.b16 %v14
  %v43 = vunpack.c.l.b16 %v15
  %v44 = vunpack.c.l.b16 %v16
  %v45 = vunpack.c.l.b16 %v17
  %v46 = vpack.c.b16 %v43, %v42
  %v47 = vpack.c.b16 %v45, %v44
  %v66 = vunpack.c.l.b16 %v18
  %v67 = vunpack.c.l.b16 %v19
  %v68 = vunpack.c.l.b16 %v20
  %v69 = vunpack.c.l.b16 %v21
  %v70 = vunpack.c.l.b16 %v22
  %v71 = vunpack.c.l.b16 %v23
  %v72 = vunpack.c.l.b16 %v24
  %v73 = vunpack.c.l.b16 %v25
  %v74 = vunpack.c.l.b16 %v26
  %v75 = vunpack.c.l.b16 %v27
  %v76 = vunpack.c.l.b16 %v28
  %v77 = vunpack.c.l.b16 %v29
  %v78 = vunpack.c.l.b16 %v30
  %v79 = vunpack.c.l.b16 %v31
  %v80 = vunpack.c.l.b16 %v32
  %v81 = vunpack.c.l.b16 %v33
  %v82 = vpack.c.b16 %v67, %v66
  %v83 = vpack.c.b16 %v69, %v68
  %v84 = vpack.c.b16 %v71, %v70
  %v85 = vpack.c.b16 %v73, %v72
  %v86 = vpack.c.b16 %v75, %v74
  %v87 = vpack.c.b16 %v77, %v76
  %v88 = vpack.c.b16 %v79, %v78
  %v89 = vpack.c.b16 %v81, %v80
  %98 = vmatpush.bf16.msra.mxu0 %v89
  %99 = vmatpush.bf16.msra.mxu0 %v88
  %100 = vmatpush.bf16.msra.mxu0 %v87
  %101 = vmatpush.bf16.msra.mxu0 %v86
  %102 = vmatpush.bf16.msra.mxu0 %v85
  %103 = vmatpush.bf16.msra.mxu0 %v84
  %104 = vmatpush.bf16.msra.mxu0 %v83
  %105 = vmatpush.bf16.msra.mxu0 %v82
  %106 = vmatmul.bf16.gmra.mxu0 %v46
  %v107 = vpop.f32.mrf.mxu0
  %v108 = vadd.f32 %v36, %v107
  %v109 = vpop.f32.mrf.mxu0
  %v110 = vadd.f32 %v36, %v109
  %111 = vmatmul.bf16.gmra.mxu0 %v47
  %v112 = vpop.f32.mrf.mxu0
  %v113 = vadd.f32 %v36, %v112
  %v114 = vpop.f32.mrf.mxu0
  %v115 = vadd.f32 %v36, %v114
  %116 = vdwg.mxu0
  %vm117 = vcmask 523264
  %118 = vst.msk [vmem:[%s3] sm:$0xff] %vm117, %v108
  %119 = vst.msk [vmem:[%s3 + $0x8] sm:$0xff] %vm117, %v110
  %120 = vst.msk [vmem:[%s3 + $0x10] sm:$0xff] %vm117, %v113
  %121 = vst.msk [vmem:[%s3 + $0x18] sm:$0xff] %vm117, %v115
  // Predicated region
  $region14: #{vqvae_forward.17} parent=0 // pred_check
    _
  $region15: #{vqvae_forward.17} parent=0 // pred_check_branch
    %123 = sbr.rel (0) target = $region17
  $region16: #{vqvae_forward.17} parent=0 // pred_region
    _
  $region17: #{vqvae_forward.17} parent=0 // pred_fallthru
    _
  // Predicated region
  $region18: #{vqvae_forward.17} parent=0 // pred_check
    _
  $region19: #{vqvae_forward.17} parent=0 // pred_check_branch
    %125 = sbr.rel (0) target = $region21
  $region20: #{vqvae_forward.17} parent=0 // pred_region
    _
  $region21: #{vqvae_forward.17} parent=0 // pred_fallthru
    _

// kernel: vqvae_forward.15
$region0: #{vqvae_forward.15}
  #allocation0 [shape = 'u32[]', space=smem, size = 0x4, offset = 0x4, fixed_abs, tag = 'smem constant byte address 0x4 - core index']
  #allocation1 [shape = 'u32[72,128]{1,0:T(1,128)}', space=vmem, size = 0x9000, scoped, tag = 'internal scratch']
  %s0 = inlined_call_operand.vmem [shape: bf16[32,1152], index: 0, kind: input, shape index: {}]
  %s1 = inlined_call_operand.vmem [shape: bf16[1152,128], index: 1, kind: input, shape index: {}]
  %s2 = inlined_call_operand.vmem [shape: f32[1,128], index: 2, kind: input, shape index: {}]
  %s3 = inlined_call_operand.vmem [shape: bf16[128,128], index: 3, kind: input, shape index: {}]
  %s4 = inlined_call_operand.vmem [shape: f32[1,128], index: 4, kind: input, shape index: {}]
  %s5 = inlined_call_operand.vmem [shape: bf16[32,128], index: 5, kind: input, shape index: {}]
  %s6 = inlined_call_operand.vmem [shape: bf16[32,128], index: 6, kind: output, shape index: {}]
  %s7 = sld [smem:[#allocation0]]
  $region34: #{vqvae_forward.15} parent=0
    _
  %s9 = ssub.s32 1, %s7
  %s10 = scalar_select 0, %s9, %s7
  // Predicated region
  $region2: #{vqvae_forward.15} parent=0 // pred_check
    _
  $region3: #{vqvae_forward.15} parent=0 // pred_check_branch
    %12 = sbr.rel (0) target = $region5
  $region4: #{vqvae_forward.15} parent=0 // pred_region
    _
  $region5: #{vqvae_forward.15} parent=0 // pred_fallthru
    _
  // Predicated region
  $region6: #{vqvae_forward.15} parent=0 // pred_check
    _
  $region7: #{vqvae_forward.15} parent=0 // pred_check_branch
    %14 = sbr.rel (0) target = $region9
  $region8: #{vqvae_forward.15} parent=0 // pred_region
    _
  $region9: #{vqvae_forward.15} parent=0 // pred_fallthru
    _
  // Predicated region
  $region10: #{vqvae_forward.15} parent=0 // pred_check
    _
  $region11: #{vqvae_forward.15} parent=0 // pred_check_branch
    %16 = sbr.rel (0) target = $region13
  $region12: #{vqvae_forward.15} parent=0 // pred_region
    _
  $region13: #{vqvae_forward.15} parent=0 // pred_fallthru
    _
  // Predicated region
  $region14: #{vqvae_forward.15} parent=0 // pred_check
    _
  $region15: #{vqvae_forward.15} parent=0 // pred_check_branch
    %18 = sbr.rel (0) target = $region17
  $region16: #{vqvae_forward.15} parent=0 // pred_region
    _
  $region17: #{vqvae_forward.15} parent=0 // pred_fallthru
    _
  // Predicated region
  $region18: #{vqvae_forward.15} parent=0 // pred_check
    _
  $region19: #{vqvae_forward.15} parent=0 // pred_check_branch
    %20 = sbr.rel (0) target = $region21
  $region20: #{vqvae_forward.15} parent=0 // pred_region
    _
  $region21: #{vqvae_forward.15} parent=0 // pred_fallthru
    _
  // Predicated region
  $region22: #{vqvae_forward.15} parent=0 // pred_check
    _
  $region23: #{vqvae_forward.15} parent=0 // pred_check_branch
    %22 = sbr.rel (0) target = $region25
  $region24: #{vqvae_forward.15} parent=0 // pred_region
    _
  $region25: #{vqvae_forward.15} parent=0 // pred_fallthru
    _
  %v23 = vld [vmem:[%s0] sm:$0xff]
  %v24 = vld [vmem:[%s0 + $0x8] sm:$0xff]
  %v25 = vld [vmem:[%s0 + $0x10] sm:$0xff]
  %v26 = vld [vmem:[%s0 + $0x18] sm:$0xff]
  %v27 = vld [vmem:[%s0 + $0x20] sm:$0xf]
  %v28 = vld [vmem:[%s0 + $0x24] sm:$0xff]
  %v29 = vld [vmem:[%s0 + $0x2c] sm:$0xff]
  %v30 = vld [vmem:[%s0 + $0x34] sm:$0xff]
  %v31 = vld [vmem:[%s0 + $0x3c] sm:$0xff]
  %v32 = vld [vmem:[%s0 + $0x44] sm:$0xf]
  %v33 = vld [vmem:[%s0 + $0x48] sm:$0xff]
  %v34 = vld [vmem:[%s0 + $0x50] sm:$0xff]
  %v35 = vld [vmem:[%s0 + $0x58] sm:$0xff]
  %v36 = vld [vmem:[%s0 + $0x60] sm:$0xff]
  %v37 = vld [vmem:[%s0 + $0x68] sm:$0xf]
  %v38 = vld [vmem:[%s0 + $0x6c] sm:$0xff]
  %v39 = vld [vmem:[%s0 + $0x74] sm:$0xff]
  %v40 = vld [vmem:[%s0 + $0x7c] sm:$0xff]
  %v41 = vld [vmem:[%s0 + $0x84] sm:$0xff]
  %v42 = vld [vmem:[%s0 + $0x8c] sm:$0xf]
  %v43 = vld [vmem:[%s1] sm:$0xf]
  %v44 = vld [vmem:[%s1 + $0x4] sm:$0xf]
  %v45 = vld [vmem:[%s1 + $0x8] sm:$0xf]
  %v46 = vld [vmem:[%s1 + $0xc] sm:$0xf]
  %v47 = vld [vmem:[%s1 + $0x10] sm:$0xf]
  %v48 = vld [vmem:[%s1 + $0x14] sm:$0xf]
  %v49 = vld [vmem:[%s1 + $0x18] sm:$0xf]
  %v50 = vld [vmem:[%s1 + $0x1c] sm:$0xf]
  %v51 = vld [vmem:[%s1 + $0x20] sm:$0xf]
  %v52 = vld [vmem:[%s1 + $0x24] sm:$0xf]
  %v53 = vld [vmem:[%s1 + $0x28] sm:$0xf]
  %v54 = vld [vmem:[%s1 + $0x2c] sm:$0xf]
  %v55 = vld [vmem:[%s1 + $0x30] sm:$0xf]
  %v56 = vld [vmem:[%s1 + $0x34] sm:$0xf]
  %v57 = vld [vmem:[%s1 + $0x38] sm:$0xf]
  %v58 = vld [vmem:[%s1 + $0x3c] sm:$0xf]
  %v59 = vld [vmem:[%s1 + $0x40] sm:$0xf]
  %v60 = vld [vmem:[%s1 + $0x44] sm:$0xf]
  %v61 = vld [vmem:[%s1 + $0x48] sm:$0xf]
  %v62 = vld [vmem:[%s1 + $0x4c] sm:$0xf]
  %v63 = vld [vmem:[%s1 + $0x50] sm:$0xf]
  %v64 = vld [vmem:[%s1 + $0x54] sm:$0xf]
  %v65 = vld [vmem:[%s1 + $0x58] sm:$0xf]
  %v66 = vld [vmem:[%s1 + $0x5c] sm:$0xf]
  %v67 = vld [vmem:[%s1 + $0x60] sm:$0xf]
  %v68 = vld [vmem:[%s1 + $0x64] sm:$0xf]
  %v69 = vld [vmem:[%s1 + $0x68] sm:$0xf]
  %v70 = vld [vmem:[%s1 + $0x6c] sm:$0xf]
  %v71 = vld [vmem:[%s1 + $0x70] sm:$0xf]
  %v72 = vld [vmem:[%s1 + $0x74] sm:$0xf]
  %v73 = vld [vmem:[%s1 + $0x78] sm:$0xf]
  %v74 = vld [vmem:[%s1 + $0x7c] sm:$0xf]
  %v75 = vld [vmem:[%s1 + $0x80] sm:$0xf]
  %v76 = vld [vmem:[%s1 + $0x84] sm:$0xf]
  %v77 = vld [vmem:[%s1 + $0x88] sm:$0xf]
  %v78 = vld [vmem:[%s1 + $0x8c] sm:$0xf]
  %v79 = vld [vmem:[%s1 + $0x90] sm:$0xf]
  %v80 = vld [vmem:[%s1 + $0x94] sm:$0xf]
  %v81 = vld [vmem:[%s1 + $0x98] sm:$0xf]
  %v82 = vld [vmem:[%s1 + $0x9c] sm:$0xf]
  %v83 = vld [vmem:[%s1 + $0xa0] sm:$0xf]
  %v84 = vld [vmem:[%s1 + $0xa4] sm:$0xf]
  %v85 = vld [vmem:[%s1 + $0xa8] sm:$0xf]
  %v86 = vld [vmem:[%s1 + $0xac] sm:$0xf]
  %v87 = vld [vmem:[%s1 + $0xb0] sm:$0xf]
  %v88 = vld [vmem:[%s1 + $0xb4] sm:$0xf]
  %v89 = vld [vmem:[%s1 + $0xb8] sm:$0xf]
  %v90 = vld [vmem:[%s1 + $0xbc] sm:$0xf]
  %v91 = vld [vmem:[%s1 + $0xc0] sm:$0xf]
  %v92 = vld [vmem:[%s1 + $0xc4] sm:$0xf]
  %v93 = vld [vmem:[%s1 + $0xc8] sm:$0xf]
  %v94 = vld [vmem:[%s1 + $0xcc] sm:$0xf]
  %v95 = vld [vmem:[%s1 + $0xd0] sm:$0xf]
  %v96 = vld [vmem:[%s1 + $0xd4] sm:$0xf]
  %v97 = vld [vmem:[%s1 + $0xd8] sm:$0xf]
  %v98 = vld [vmem:[%s1 + $0xdc] sm:$0xf]
  %v99 = vld [vmem:[%s1 + $0xe0] sm:$0xf]
  %v100 = vld [vmem:[%s1 + $0xe4] sm:$0xf]
  %v101 = vld [vmem:[%s1 + $0xe8] sm:$0xf]
  %v102 = vld [vmem:[%s1 + $0xec] sm:$0xf]
  %v103 = vld [vmem:[%s1 + $0xf0] sm:$0xf]
  %v104 = vld [vmem:[%s1 + $0xf4] sm:$0xf]
  %v105 = vld [vmem:[%s1 + $0xf8] sm:$0xf]
  %v106 = vld [vmem:[%s1 + $0xfc] sm:$0xf]
  %v107 = vld [vmem:[%s1 + $0x100] sm:$0xf]
  %v108 = vld [vmem:[%s1 + $0x104] sm:$0xf]
  %v109 = vld [vmem:[%s1 + $0x108] sm:$0xf]
  %v110 = vld [vmem:[%s1 + $0x10c] sm:$0xf]
  %v111 = vld [vmem:[%s1 + $0x110] sm:$0xf]
  %v112 = vld [vmem:[%s1 + $0x114] sm:$0xf]
  %v113 = vld [vmem:[%s1 + $0x118] sm:$0xf]
  %v114 = vld [vmem:[%s1 + $0x11c] sm:$0xf]
  %v115 = vld [vmem:[%s1 + $0x120] sm:$0xf]
  %v116 = vld [vmem:[%s1 + $0x124] sm:$0xf]
  %v117 = vld [vmem:[%s1 + $0x128] sm:$0xf]
  %v118 = vld [vmem:[%s1 + $0x12c] sm:$0xf]
  %v119 = vld [vmem:[%s1 + $0x130] sm:$0xf]
  %v120 = vld [vmem:[%s1 + $0x134] sm:$0xf]
  %v121 = vld [vmem:[%s1 + $0x138] sm:$0xf]
  %v122 = vld [vmem:[%s1 + $0x13c] sm:$0xf]
  %v123 = vld [vmem:[%s1 + $0x140] sm:$0xf]
  %v124 = vld [vmem:[%s1 + $0x144] sm:$0xf]
  %v125 = vld [vmem:[%s1 + $0x148] sm:$0xf]
  %v126 = vld [vmem:[%s1 + $0x14c] sm:$0xf]
  %v127 = vld [vmem:[%s1 + $0x150] sm:$0xf]
  %v128 = vld [vmem:[%s1 + $0x154] sm:$0xf]
  %v129 = vld [vmem:[%s1 + $0x158] sm:$0xf]
  %v130 = vld [vmem:[%s1 + $0x15c] sm:$0xf]
  %v131 = vld [vmem:[%s1 + $0x160] sm:$0xf]
  %v132 = vld [vmem:[%s1 + $0x164] sm:$0xf]
  %v133 = vld [vmem:[%s1 + $0x168] sm:$0xf]
  %v134 = vld [vmem:[%s1 + $0x16c] sm:$0xf]
  %v135 = vld [vmem:[%s1 + $0x170] sm:$0xf]
  %v136 = vld [vmem:[%s1 + $0x174] sm:$0xf]
  %v137 = vld [vmem:[%s1 + $0x178] sm:$0xf]
  %v138 = vld [vmem:[%s1 + $0x17c] sm:$0xf]
  %v139 = vld [vmem:[%s1 + $0x180] sm:$0xf]
  %v140 = vld [vmem:[%s1 + $0x184] sm:$0xf]
  %v141 = vld [vmem:[%s1 + $0x188] sm:$0xf]
  %v142 = vld [vmem:[%s1 + $0x18c] sm:$0xf]
  %v143 = vld [vmem:[%s1 + $0x190] sm:$0xf]
  %v144 = vld [vmem:[%s1 + $0x194] sm:$0xf]
  %v145 = vld [vmem:[%s1 + $0x198] sm:$0xf]
  %v146 = vld [vmem:[%s1 + $0x19c] sm:$0xf]
  %v147 = vld [vmem:[%s1 + $0x1a0] sm:$0xf]
  %v148 = vld [vmem:[%s1 + $0x1a4] sm:$0xf]
  %v149 = vld [vmem:[%s1 + $0x1a8] sm:$0xf]
  %v150 = vld [vmem:[%s1 + $0x1ac] sm:$0xf]
  %v151 = vld [vmem:[%s1 + $0x1b0] sm:$0xf]
  %v152 = vld [vmem:[%s1 + $0x1b4] sm:$0xf]
  %v153 = vld [vmem:[%s1 + $0x1b8] sm:$0xf]
  %v154 = vld [vmem:[%s1 + $0x1bc] sm:$0xf]
  %v155 = vld [vmem:[%s1 + $0x1c0] sm:$0xf]
  %v156 = vld [vmem:[%s1 + $0x1c4] sm:$0xf]
  %v157 = vld [vmem:[%s1 + $0x1c8] sm:$0xf]
  %v158 = vld [vmem:[%s1 + $0x1cc] sm:$0xf]
  %v159 = vld [vmem:[%s1 + $0x1d0] sm:$0xf]
  %v160 = vld [vmem:[%s1 + $0x1d4] sm:$0xf]
  %v161 = vld [vmem:[%s1 + $0x1d8] sm:$0xf]
  %v162 = vld [vmem:[%s1 + $0x1dc] sm:$0xf]
  %v163 = vld [vmem:[%s1 + $0x1e0] sm:$0xf]
  %v164 = vld [vmem:[%s1 + $0x1e4] sm:$0xf]
  %v165 = vld [vmem:[%s1 + $0x1e8] sm:$0xf]
  %v166 = vld [vmem:[%s1 + $0x1ec] sm:$0xf]
  %v167 = vld [vmem:[%s1 + $0x1f0] sm:$0xf]
  %v168 = vld [vmem:[%s1 + $0x1f4] sm:$0xf]
  %v169 = vld [vmem:[%s1 + $0x1f8] sm:$0xf]
  %v170 = vld [vmem:[%s1 + $0x1fc] sm:$0xf]
  %v171 = vld [vmem:[%s1 + $0x200] sm:$0xf]
  %v172 = vld [vmem:[%s1 + $0x204] sm:$0xf]
  %v173 = vld [vmem:[%s1 + $0x208] sm:$0xf]
  %v174 = vld [vmem:[%s1 + $0x20c] sm:$0xf]
  %v175 = vld [vmem:[%s1 + $0x210] sm:$0xf]
  %v176 = vld [vmem:[%s1 + $0x214] sm:$0xf]
  %v177 = vld [vmem:[%s1 + $0x218] sm:$0xf]
  %v178 = vld [vmem:[%s1 + $0x21c] sm:$0xf]
  %v179 = vld [vmem:[%s1 + $0x220] sm:$0xf]
  %v180 = vld [vmem:[%s1 + $0x224] sm:$0xf]
  %v181 = vld [vmem:[%s1 + $0x228] sm:$0xf]
  %v182 = vld [vmem:[%s1 + $0x22c] sm:$0xf]
  %v183 = vld [vmem:[%s1 + $0x230] sm:$0xf]
  %v184 = vld [vmem:[%s1 + $0x234] sm:$0xf]
  %v185 = vld [vmem:[%s1 + $0x238] sm:$0xf]
  %v186 = vld [vmem:[%s1 + $0x23c] sm:$0xf]
  %v187 = vld [vmem:[%s2] sm:$0x1]
  %v189 = vperm.slane %v187, 0
  %v211 = vunpack.c.l.b16 %v23
  %v212 = vunpack.c.h.b16 %v23
  %v213 = vunpack.c.l.b16 %v24
  %v214 = vunpack.c.h.b16 %v24
  %v215 = vunpack.c.l.b16 %v25
  %v216 = vunpack.c.h.b16 %v25
  %v217 = vunpack.c.l.b16 %v26
  %v218 = vunpack.c.h.b16 %v26
  %v219 = vunpack.c.l.b16 %v27
  %v220 = vunpack.c.l.b16 %v28
  %v221 = vunpack.c.h.b16 %v28
  %v222 = vunpack.c.l.b16 %v29
  %v223 = vunpack.c.h.b16 %v29
  %v224 = vunpack.c.l.b16 %v30
  %v225 = vunpack.c.h.b16 %v30
  %v226 = vunpack.c.l.b16 %v31
  %v227 = vunpack.c.h.b16 %v31
  %v228 = vunpack.c.l.b16 %v32
  %v229 = vunpack.c.l.b16 %v33
  %v230 = vunpack.c.h.b16 %v33
  %v231 = vunpack.c.l.b16 %v34
  %v232 = vunpack.c.h.b16 %v34
  %v233 = vunpack.c.l.b16 %v35
  %v234 = vunpack.c.h.b16 %v35
  %v235 = vunpack.c.l.b16 %v36
  %v236 = vunpack.c.h.b16 %v36
  %v237 = vunpack.c.l.b16 %v37
  %v238 = vunpack.c.l.b16 %v38
  %v239 = vunpack.c.h.b16 %v38
  %v240 = vunpack.c.l.b16 %v39
  %v241 = vunpack.c.h.b16 %v39
  %v242 = vunpack.c.l.b16 %v40
  %v243 = vunpack.c.h.b16 %v40
  %v244 = vunpack.c.l.b16 %v41
  %v245 = vunpack.c.h.b16 %v41
  %v246 = vunpack.c.l.b16 %v42
  %v247 = vpack.c.b16 %v220, %v211
  %v248 = vpack.c.b16 %v221, %v212
  %v249 = vpack.c.b16 %v222, %v213
  %v250 = vpack.c.b16 %v223, %v214
  %v251 = vpack.c.b16 %v224, %v215
  %v252 = vpack.c.b16 %v225, %v216
  %v253 = vpack.c.b16 %v226, %v217
  %v254 = vpack.c.b16 %v227, %v218
  %v255 = vpack.c.b16 %v228, %v219
  %v256 = vpack.c.b16 %v238, %v229
  %v257 = vpack.c.b16 %v239, %v230
  %v258 = vpack.c.b16 %v240, %v231
  %v259 = vpack.c.b16 %v241, %v232
  %v260 = vpack.c.b16 %v242, %v233
  %v261 = vpack.c.b16 %v243, %v234
  %v262 = vpack.c.b16 %v244, %v235
  %v263 = vpack.c.b16 %v245, %v236
  %v264 = vpack.c.b16 %v246, %v237
  %v427 = vunpack.c.l.b16 %v43
  %v428 = vunpack.c.l.b16 %v44
  %v429 = vunpack.c.l.b16 %v45
  %v430 = vunpack.c.l.b16 %v46
  %v431 = vunpack.c.l.b16 %v47
  %v432 = vunpack.c.l.b16 %v48
  %v433 = vunpack.c.l.b16 %v49
  %v434 = vunpack.c.l.b16 %v50
  %v435 = vunpack.c.l.b16 %v51
  %v436 = vunpack.c.l.b16 %v52
  %v437 = vunpack.c.l.b16 %v53
  %v438 = vunpack.c.l.b16 %v54
  %v439 = vunpack.c.l.b16 %v55
  %v440 = vunpack.c.l.b16 %v56
  %v441 = vunpack.c.l.b16 %v57
  %v442 = vunpack.c.l.b16 %v58
  %v443 = vunpack.c.l.b16 %v59
  %v444 = vunpack.c.l.b16 %v60
  %v445 = vunpack.c.l.b16 %v61
  %v446 = vunpack.c.l.b16 %v62
  %v447 = vunpack.c.l.b16 %v63
  %v448 = vunpack.c.l.b16 %v64
  %v449 = vunpack.c.l.b16 %v65
  %v450 = vunpack.c.l.b16 %v66
  %v451 = vunpack.c.l.b16 %v67
  %v452 = vunpack.c.l.b16 %v68
  %v453 = vunpack.c.l.b16 %v69
  %v454 = vunpack.c.l.b16 %v70
  %v455 = vunpack.c.l.b16 %v71
  %v456 = vunpack.c.l.b16 %v72
  %v457 = vunpack.c.l.b16 %v73
  %v458 = vunpack.c.l.b16 %v74
  %v459 = vunpack.c.l.b16 %v75
  %v460 = vunpack.c.l.b16 %v76
  %v461 = vunpack.c.l.b16 %v77
  %v462 = vunpack.c.l.b16 %v78
  %v463 = vunpack.c.l.b16 %v79
  %v464 = vunpack.c.l.b16 %v80
  %v465 = vunpack.c.l.b16 %v81
  %v466 = vunpack.c.l.b16 %v82
  %v467 = vunpack.c.l.b16 %v83
  %v468 = vunpack.c.l.b16 %v84
  %v469 = vunpack.c.l.b16 %v85
  %v470 = vunpack.c.l.b16 %v86
  %v471 = vunpack.c.l.b16 %v87
  %v472 = vunpack.c.l.b16 %v88
  %v473 = vunpack.c.l.b16 %v89
  %v474 = vunpack.c.l.b16 %v90
  %v475 = vunpack.c.l.b16 %v91
  %v476 = vunpack.c.l.b16 %v92
  %v477 = vunpack.c.l.b16 %v93
  %v478 = vunpack.c.l.b16 %v94
  %v479 = vunpack.c.l.b16 %v95
  %v480 = vunpack.c.l.b16 %v96
  %v481 = vunpack.c.l.b16 %v97
  %v482 = vunpack.c.l.b16 %v98
  %v483 = vunpack.c.l.b16 %v99
  %v484 = vunpack.c.l.b16 %v100
  %v485 = vunpack.c.l.b16 %v101
  %v486 = vunpack.c.l.b16 %v102
  %v487 = vunpack.c.l.b16 %v103
  %v488 = vunpack.c.l.b16 %v104
  %v489 = vunpack.c.l.b16 %v105
  %v490 = vunpack.c.l.b16 %v106
  %v491 = vunpack.c.l.b16 %v107
  %v492 = vunpack.c.l.b16 %v108
  %v493 = vunpack.c.l.b16 %v109
  %v494 = vunpack.c.l.b16 %v110
  %v495 = vunpack.c.l.b16 %v111
  %v496 = vunpack.c.l.b16 %v112
  %v497 = vunpack.c.l.b16 %v113
  %v498 = vunpack.c.l.b16 %v114
  %v499 = vunpack.c.l.b16 %v115
  %v500 = vunpack.c.l.b16 %v116
  %v501 = vunpack.c.l.b16 %v117
  %v502 = vunpack.c.l.b16 %v118
  %v503 = vunpack.c.l.b16 %v119
  %v504 = vunpack.c.l.b16 %v120
  %v505 = vunpack.c.l.b16 %v121
  %v506 = vunpack.c.l.b16 %v122
  %v507 = vunpack.c.l.b16 %v123
  %v508 = vunpack.c.l.b16 %v124
  %v509 = vunpack.c.l.b16 %v125
  %v510 = vunpack.c.l.b16 %v126
  %v511 = vunpack.c.l.b16 %v127
  %v512 = vunpack.c.l.b16 %v128
  %v513 = vunpack.c.l.b16 %v129
  %v514 = vunpack.c.l.b16 %v130
  %v515 = vunpack.c.l.b16 %v131
  %v516 = vunpack.c.l.b16 %v132
  %v517 = vunpack.c.l.b16 %v133
  %v518 = vunpack.c.l.b16 %v134
  %v519 = vunpack.c.l.b16 %v135
  %v520 = vunpack.c.l.b16 %v136
  %v521 = vunpack.c.l.b16 %v137
  %v522 = vunpack.c.l.b16 %v138
  %v523 = vunpack.c.l.b16 %v139
  %v524 = vunpack.c.l.b16 %v140
  %v525 = vunpack.c.l.b16 %v141
  %v526 = vunpack.c.l.b16 %v142
  %v527 = vunpack.c.l.b16 %v143
  %v528 = vunpack.c.l.b16 %v144
  %v529 = vunpack.c.l.b16 %v145
  %v530 = vunpack.c.l.b16 %v146
  %v531 = vunpack.c.l.b16 %v147
  %v532 = vunpack.c.l.b16 %v148
  %v533 = vunpack.c.l.b16 %v149
  %v534 = vunpack.c.l.b16 %v150
  %v535 = vunpack.c.l.b16 %v151
  %v536 = vunpack.c.l.b16 %v152
  %v537 = vunpack.c.l.b16 %v153
  %v538 = vunpack.c.l.b16 %v154
  %v539 = vunpack.c.l.b16 %v155
  %v540 = vunpack.c.l.b16 %v156
  %v541 = vunpack.c.l.b16 %v157
  %v542 = vunpack.c.l.b16 %v158
  %v543 = vunpack.c.l.b16 %v159
  %v544 = vunpack.c.l.b16 %v160
  %v545 = vunpack.c.l.b16 %v161
  %v546 = vunpack.c.l.b16 %v162
  %v547 = vunpack.c.l.b16 %v163
  %v548 = vunpack.c.l.b16 %v164
  %v549 = vunpack.c.l.b16 %v165
  %v550 = vunpack.c.l.b16 %v166
  %v551 = vunpack.c.l.b16 %v167
  %v552 = vunpack.c.l.b16 %v168
  %v553 = vunpack.c.l.b16 %v169
  %v554 = vunpack.c.l.b16 %v170
  %v555 = vunpack.c.l.b16 %v171
  %v556 = vunpack.c.l.b16 %v172
  %v557 = vunpack.c.l.b16 %v173
  %v558 = vunpack.c.l.b16 %v174
  %v559 = vunpack.c.l.b16 %v175
  %v560 = vunpack.c.l.b16 %v176
  %v561 = vunpack.c.l.b16 %v177
  %v562 = vunpack.c.l.b16 %v178
  %v563 = vunpack.c.l.b16 %v179
  %v564 = vunpack.c.l.b16 %v180
  %v565 = vunpack.c.l.b16 %v181
  %v566 = vunpack.c.l.b16 %v182
  %v567 = vunpack.c.l.b16 %v183
  %v568 = vunpack.c.l.b16 %v184
  %v569 = vunpack.c.l.b16 %v185
  %v570 = vunpack.c.l.b16 %v186
  %v571 = vpack.c.b16 %v428, %v427
  %v572 = vpack.c.b16 %v430, %v429
  %v573 = vpack.c.b16 %v432, %v431
  %v574 = vpack.c.b16 %v434, %v433
  %v575 = vpack.c.b16 %v436, %v435
  %v576 = vpack.c.b16 %v438, %v437
  %v577 = vpack.c.b16 %v440, %v439
  %v578 = vpack.c.b16 %v442, %v441
  %v579 = vpack.c.b16 %v444, %v443
  %v580 = vpack.c.b16 %v446, %v445
  %v581 = vpack.c.b16 %v448, %v447
  %v582 = vpack.c.b16 %v450, %v449
  %v583 = vpack.c.b16 %v452, %v451
  %v584 = vpack.c.b16 %v454, %v453
  %v585 = vpack.c.b16 %v456, %v455
  %v586 = vpack.c.b16 %v458, %v457
  %v587 = vpack.c.b16 %v460, %v459
  %v588 = vpack.c.b16 %v462, %v461
  %v589 = vpack.c.b16 %v464, %v463
  %v590 = vpack.c.b16 %v466, %v465
  %v591 = vpack.c.b16 %v468, %v467
  %v592 = vpack.c.b16 %v470, %v469
  %v593 = vpack.c.b16 %v472, %v471
  %v594 = vpack.c.b16 %v474, %v473
  %v595 = vpack.c.b16 %v476, %v475
  %v596 = vpack.c.b16 %v478, %v477
  %v597 = vpack.c.b16 %v480, %v479
  %v598 = vpack.c.b16 %v482, %v481
  %v599 = vpack.c.b16 %v484, %v483
  %v600 = vpack.c.b16 %v486, %v485
  %v601 = vpack.c.b16 %v488, %v487
  %v602 = vpack.c.b16 %v490, %v489
  %v603 = vpack.c.b16 %v492, %v491
  %v604 = vpack.c.b16 %v494, %v493
  %v605 = vpack.c.b16 %v496, %v495
  %v606 = vpack.c.b16 %v498, %v497
  %v607 = vpack.c.b16 %v500, %v499
  %v608 = vpack.c.b16 %v502, %v501
  %v609 = vpack.c.b16 %v504, %v503
  %v610 = vpack.c.b16 %v506, %v505
  %v611 = vpack.c.b16 %v508, %v507
  %v612 = vpack.c.b16 %v510, %v509
  %v613 = vpack.c.b16 %v512, %v511
  %v614 = vpack.c.b16 %v514, %v513
  %v615 = vpack.c.b16 %v516, %v515
  %v616 = vpack.c.b16 %v518, %v517
  %v617 = vpack.c.b16 %v520, %v519
  %v618 = vpack.c.b16 %v522, %v521
  %v619 = vpack.c.b16 %v524, %v523
  %v620 = vpack.c.b16 %v526, %v525
  %v621 = vpack.c.b16 %v528, %v527
  %v622 = vpack.c.b16 %v530, %v529
  %v623 = vpack.c.b16 %v532, %v531
  %v624 = vpack.c.b16 %v534, %v533
  %v625 = vpack.c.b16 %v536, %v535
  %v626 = vpack.c.b16 %v538, %v537
  %v627 = vpack.c.b16 %v540, %v539
  %v628 = vpack.c.b16 %v542, %v541
  %v629 = vpack.c.b16 %v544, %v543
  %v630 = vpack.c.b16 %v546, %v545
  %v631 = vpack.c.b16 %v548, %v547
  %v632 = vpack.c.b16 %v550, %v549
  %v633 = vpack.c.b16 %v552, %v551
  %v634 = vpack.c.b16 %v554, %v553
  %v635 = vpack.c.b16 %v556, %v555
  %v636 = vpack.c.b16 %v558, %v557
  %v637 = vpack.c.b16 %v560, %v559
  %v638 = vpack.c.b16 %v562, %v561
  %v639 = vpack.c.b16 %v564, %v563
  %v640 = vpack.c.b16 %v566, %v565
  %v641 = vpack.c.b16 %v568, %v567
  %v642 = vpack.c.b16 %v570, %v569
  %715 = vmatpush.bf16.msra.mxu0 %v578
  %716 = vmatpush.bf16.msra.mxu0 %v577
  %717 = vmatpush.bf16.msra.mxu0 %v576
  %718 = vmatpush.bf16.msra.mxu0 %v575
  %719 = vmatpush.bf16.msra.mxu0 %v574
  %720 = vmatpush.bf16.msra.mxu0 %v573
  %721 = vmatpush.bf16.msra.mxu0 %v572
  %722 = vmatpush.bf16.msra.mxu0 %v571
  %723 = vmatmul.bf16.gmra.mxu0 %v247
  %v724 = vpop.f32.mrf.mxu0
  %v725 = vadd.f32 %v189, %v724
  %v726 = vpop.f32.mrf.mxu0
  %v727 = vadd.f32 %v189, %v726
  %728 = vmatmul.bf16.gmra.mxu0 %v256
  %v729 = vpop.f32.mrf.mxu0
  %v730 = vadd.f32 %v189, %v729
  %v731 = vpop.f32.mrf.mxu0
  %v732 = vadd.f32 %v189, %v731
  %733 = vdwg.mxu0
  %734 = vmatpush.bf16.msra.mxu0 %v586
  %735 = vmatpush.bf16.msra.mxu0 %v585
  %736 = vmatpush.bf16.msra.mxu0 %v584
  %737 = vmatpush.bf16.msra.mxu0 %v583
  %738 = vmatpush.bf16.msra.mxu0 %v582
  %739 = vmatpush.bf16.msra.mxu0 %v581
  %740 = vmatpush.bf16.msra.mxu0 %v580
  %741 = vmatpush.bf16.msra.mxu0 %v579
  %742 = vmatmul.bf16.gmra.mxu0 %v248
  %v743 = vpop.f32.mrf.mxu0
  %v744 = vadd.f32 %v725, %v743
  %v745 = vpop.f32.mrf.mxu0
  %v746 = vadd.f32 %v727, %v745
  %747 = vmatmul.bf16.gmra.mxu0 %v257
  %v748 = vpop.f32.mrf.mxu0
  %v749 = vadd.f32 %v730, %v748
  %v750 = vpop.f32.mrf.mxu0
  %v751 = vadd.f32 %v732, %v750
  %752 = vdwg.mxu0
  %753 = vmatpush.bf16.msra.mxu0 %v594
  %754 = vmatpush.bf16.msra.mxu0 %v593
  %755 = vmatpush.bf16.msra.mxu0 %v592
  %756 = vmatpush.bf16.msra.mxu0 %v591
  %757 = vmatpush.bf16.msra.mxu0 %v590
  %758 = vmatpush.bf16.msra.mxu0 %v589
  %759 = vmatpush.bf16.msra.mxu0 %v588
  %760 = vmatpush.bf16.msra.mxu0 %v587
  %761 = vmatmul.bf16.gmra.mxu0 %v249
  %v762 = vpop.f32.mrf.mxu0
  %v763 = vadd.f32 %v744, %v762
  %v764 = vpop.f32.mrf.mxu0
  %v765 = vadd.f32 %v746, %v764
  %766 = vmatmul.bf16.gmra.mxu0 %v258
  %v767 = vpop.f32.mrf.mxu0
  %v768 = vadd.f32 %v749, %v767
  %v769 = vpop.f32.mrf.mxu0
  %v770 = vadd.f32 %v751, %v769
  %771 = vdwg.mxu0
  %772 = vmatpush.bf16.msra.mxu0 %v602
  %773 = vmatpush.bf16.msra.mxu0 %v601
  %774 = vmatpush.bf16.msra.mxu0 %v600
  %775 = vmatpush.bf16.msra.mxu0 %v599
  %776 = vmatpush.bf16.msra.mxu0 %v598
  %777 = vmatpush.bf16.msra.mxu0 %v597
  %778 = vmatpush.bf16.msra.mxu0 %v596
  %779 = vmatpush.bf16.msra.mxu0 %v595
  %780 = vmatmul.bf16.gmra.mxu0 %v250
  %v781 = vpop.f32.mrf.mxu0
  %v782 = vadd.f32 %v763, %v781
  %v783 = vpop.f32.mrf.mxu0
  %v784 = vadd.f32 %v765, %v783
  %785 = vmatmul.bf16.gmra.mxu0 %v259
  %v786 = vpop.f32.mrf.mxu0
  %v787 = vadd.f32 %v768, %v786
  %v788 = vpop.f32.mrf.mxu0
  %v789 = vadd.f32 %v770, %v788
  %790 = vdwg.mxu0
  %791 = vmatpush.bf16.msra.mxu0 %v610
  %792 = vmatpush.bf16.msra.mxu0 %v609
  %793 = vmatpush.bf16.msra.mxu0 %v608
  %794 = vmatpush.bf16.msra.mxu0 %v607
  %795 = vmatpush.bf16.msra.mxu0 %v606
  %796 = vmatpush.bf16.msra.mxu0 %v605
  %797 = vmatpush.bf16.msra.mxu0 %v604
  %798 = vmatpush.bf16.msra.mxu0 %v603
  %799 = vmatmul.bf16.gmra.mxu0 %v251
  %v800 = vpop.f32.mrf.mxu0
  %v801 = vadd.f32 %v782, %v800
  %v802 = vpop.f32.mrf.mxu0
  %v803 = vadd.f32 %v784, %v802
  %804 = vmatmul.bf16.gmra.mxu0 %v260
  %v805 = vpop.f32.mrf.mxu0
  %v806 = vadd.f32 %v787, %v805
  %v807 = vpop.f32.mrf.mxu0
  %v808 = vadd.f32 %v789, %v807
  %809 = vdwg.mxu0
  %810 = vmatpush.bf16.msra.mxu0 %v618
  %811 = vmatpush.bf16.msra.mxu0 %v617
  %812 = vmatpush.bf16.msra.mxu0 %v616
  %813 = vmatpush.bf16.msra.mxu0 %v615
  %814 = vmatpush.bf16.msra.mxu0 %v614
  %815 = vmatpush.bf16.msra.mxu0 %v613
  %816 = vmatpush.bf16.msra.mxu0 %v612
  %817 = vmatpush.bf16.msra.mxu0 %v611
  %818 = vmatmul.bf16.gmra.mxu0 %v252
  %v819 = vpop.f32.mrf.mxu0
  %v820 = vadd.f32 %v801, %v819
  %v821 = vpop.f32.mrf.mxu0
  %v822 = vadd.f32 %v803, %v821
  %823 = vmatmul.bf16.gmra.mxu0 %v261
  %v824 = vpop.f32.mrf.mxu0
  %v825 = vadd.f32 %v806, %v824
  %v826 = vpop.f32.mrf.mxu0
  %v827 = vadd.f32 %v808, %v826
  %828 = vdwg.mxu0
  %829 = vmatpush.bf16.msra.mxu0 %v626
  %830 = vmatpush.bf16.msra.mxu0 %v625
  %831 = vmatpush.bf16.msra.mxu0 %v624
  %832 = vmatpush.bf16.msra.mxu0 %v623
  %833 = vmatpush.bf16.msra.mxu0 %v622
  %834 = vmatpush.bf16.msra.mxu0 %v621
  %835 = vmatpush.bf16.msra.mxu0 %v620
  %836 = vmatpush.bf16.msra.mxu0 %v619
  %837 = vmatmul.bf16.gmra.mxu0 %v253
  %v838 = vpop.f32.mrf.mxu0
  %v839 = vadd.f32 %v820, %v838
  %v840 = vpop.f32.mrf.mxu0
  %v841 = vadd.f32 %v822, %v840
  %842 = vmatmul.bf16.gmra.mxu0 %v262
  %v843 = vpop.f32.mrf.mxu0
  %v844 = vadd.f32 %v825, %v843
  %v845 = vpop.f32.mrf.mxu0
  %v846 = vadd.f32 %v827, %v845
  %847 = vdwg.mxu0
  %848 = vmatpush.bf16.msra.mxu0 %v634
  %849 = vmatpush.bf16.msra.mxu0 %v633
  %850 = vmatpush.bf16.msra.mxu0 %v632
  %851 = vmatpush.bf16.msra.mxu0 %v631
  %852 = vmatpush.bf16.msra.mxu0 %v630
  %853 = vmatpush.bf16.msra.mxu0 %v629
  %854 = vmatpush.bf16.msra.mxu0 %v628
  %855 = vmatpush.bf16.msra.mxu0 %v627
  %856 = vmatmul.bf16.gmra.mxu0 %v254
  %v857 = vpop.f32.mrf.mxu0
  %v858 = vadd.f32 %v839, %v857
  %v859 = vpop.f32.mrf.mxu0
  %v860 = vadd.f32 %v841, %v859
  %861 = vmatmul.bf16.gmra.mxu0 %v263
  %v862 = vpop.f32.mrf.mxu0
  %v863 = vadd.f32 %v844, %v862
  %v864 = vpop.f32.mrf.mxu0
  %v865 = vadd.f32 %v846, %v864
  %866 = vdwg.mxu0
  %867 = vmatpush.bf16.msra.mxu0 %v642
  %868 = vmatpush.bf16.msra.mxu0 %v641
  %869 = vmatpush.bf16.msra.mxu0 %v640
  %870 = vmatpush.bf16.msra.mxu0 %v639
  %871 = vmatpush.bf16.msra.mxu0 %v638
  %872 = vmatpush.bf16.msra.mxu0 %v637
  %873 = vmatpush.bf16.msra.mxu0 %v636
  %874 = vmatpush.bf16.msra.mxu0 %v635
  %875 = vmatmul.bf16.gmra.mxu0 %v255
  %v876 = vpop.f32.mrf.mxu0
  %v877 = vadd.f32 %v858, %v876
  %v878 = vpop.f32.mrf.mxu0
  %v879 = vadd.f32 %v860, %v878
  %880 = vmatmul.bf16.gmra.mxu0 %v264
  %v881 = vpop.f32.mrf.mxu0
  %v882 = vadd.f32 %v863, %v881
  %v883 = vpop.f32.mrf.mxu0
  %v884 = vadd.f32 %v865, %v883
  %885 = vdwg.mxu0
  %v886 = vmax.f32 %v877, 0.0
  %v887 = vmax.f32 %v879, 0.0
  %v888 = vmax.f32 %v882, 0.0
  %v889 = vmax.f32 %v884, 0.0
  %v890 = vpack.c.bf16 %v887, %v886
  %v891 = vpack.c.bf16 %v889, %v888
  %v892 = vld [vmem:[%s3] sm:$0xf]
  %v893 = vld [vmem:[%s3 + $0x4] sm:$0xf]
  %v894 = vld [vmem:[%s3 + $0x8] sm:$0xf]
  %v895 = vld [vmem:[%s3 + $0xc] sm:$0xf]
  %v896 = vld [vmem:[%s3 + $0x10] sm:$0xf]
  %v897 = vld [vmem:[%s3 + $0x14] sm:$0xf]
  %v898 = vld [vmem:[%s3 + $0x18] sm:$0xf]
  %v899 = vld [vmem:[%s3 + $0x1c] sm:$0xf]
  %v900 = vld [vmem:[%s3 + $0x20] sm:$0xf]
  %v901 = vld [vmem:[%s3 + $0x24] sm:$0xf]
  %v902 = vld [vmem:[%s3 + $0x28] sm:$0xf]
  %v903 = vld [vmem:[%s3 + $0x2c] sm:$0xf]
  %v904 = vld [vmem:[%s3 + $0x30] sm:$0xf]
  %v905 = vld [vmem:[%s3 + $0x34] sm:$0xf]
  %v906 = vld [vmem:[%s3 + $0x38] sm:$0xf]
  %v907 = vld [vmem:[%s3 + $0x3c] sm:$0xf]
  %v908 = vld [vmem:[%s4] sm:$0x1]
  %v910 = vperm.slane %v908, 0
  %v928 = vunpack.c.l.b16 %v892
  %v929 = vunpack.c.l.b16 %v893
  %v930 = vunpack.c.l.b16 %v894
  %v931 = vunpack.c.l.b16 %v895
  %v932 = vunpack.c.l.b16 %v896
  %v933 = vunpack.c.l.b16 %v897
  %v934 = vunpack.c.l.b16 %v898
  %v935 = vunpack.c.l.b16 %v899
  %v936 = vunpack.c.l.b16 %v900
  %v937 = vunpack.c.l.b16 %v901
  %v938 = vunpack.c.l.b16 %v902
  %v939 = vunpack.c.l.b16 %v903
  %v940 = vunpack.c.l.b16 %v904
  %v941 = vunpack.c.l.b16 %v905
  %v942 = vunpack.c.l.b16 %v906
  %v943 = vunpack.c.l.b16 %v907
  %v944 = vpack.c.b16 %v929, %v928
  %v945 = vpack.c.b16 %v931, %v930
  %v946 = vpack.c.b16 %v933, %v932
  %v947 = vpack.c.b16 %v935, %v934
  %v948 = vpack.c.b16 %v937, %v936
  %v949 = vpack.c.b16 %v939, %v938
  %v950 = vpack.c.b16 %v941, %v940
  %v951 = vpack.c.b16 %v943, %v942
  %960 = vmatpush.bf16.msra.mxu0 %v951
  %961 = vmatpush.bf16.msra.mxu0 %v950
  %962 = vmatpush.bf16.msra.mxu0 %v949
  %963 = vmatpush.bf16.msra.mxu0 %v948
  %964 = vmatpush.bf16.msra.mxu0 %v947
  %965 = vmatpush.bf16.msra.mxu0 %v946
  %966 = vmatpush.bf16.msra.mxu0 %v945
  %967 = vmatpush.bf16.msra.mxu0 %v944
  %968 = vmatmul.bf16.gmra.mxu0 %v890
  %v969 = vpop.f32.mrf.mxu0
  %v970 = vadd.f32 %v910, %v969
  %v971 = vpop.f32.mrf.mxu0
  %v972 = vadd.f32 %v910, %v971
  %973 = vmatmul.bf16.gmra.mxu0 %v891
  %v974 = vpop.f32.mrf.mxu0
  %v975 = vadd.f32 %v910, %v974
  %v976 = vpop.f32.mrf.mxu0
  %v977 = vadd.f32 %v910, %v976
  %978 = vdwg.mxu0
  %v979 = vld [vmem:[%s5] sm:$0xf]
  %v980 = vld [vmem:[%s5 + $0x4] sm:$0xf]
  %v981 = vld [vmem:[%s5 + $0x8] sm:$0xf]
  %v982 = vld [vmem:[%s5 + $0xc] sm:$0xf]
  %v983 = vunpack.c.l.bf16 %v979
  %v984 = vunpack.c.l.bf16 %v980
  %v985 = vunpack.c.l.bf16 %v981
  %v986 = vunpack.c.l.bf16 %v982
  %v987 = vadd.f32 %v983, %v970
  %v988 = vadd.f32 %v984, %v972
  %v989 = vadd.f32 %v985, %v975
  %v990 = vadd.f32 %v986, %v977
  %v991 = vpack.c.bf16 %v987, %v987
  %v992 = vpack.c.bf16 %v988, %v988
  %v993 = vpack.c.bf16 %v989, %v989
  %v994 = vpack.c.bf16 %v990, %v990
  %995 = vst [vmem:[%s6] sm:$0xf] %v991
  %996 = vst [vmem:[%s6 + $0x4] sm:$0xf] %v992
  %997 = vst [vmem:[%s6 + $0x8] sm:$0xf] %v993
  %998 = vst [vmem:[%s6 + $0xc] sm:$0xf] %v994
  // Predicated region
  $region26: #{vqvae_forward.15} parent=0 // pred_check
    _
  $region27: #{vqvae_forward.15} parent=0 // pred_check_branch
    %1000 = sbr.rel (0) target = $region29
  $region28: #{vqvae_forward.15} parent=0 // pred_region
    _
  $region29: #{vqvae_forward.15} parent=0 // pred_fallthru
    _
  // Predicated region
  $region30: #{vqvae_forward.15} parent=0 // pred_check
    _
  $region31: #{vqvae_forward.15} parent=0 // pred_check_branch
    %1002 = sbr.rel (0) target = $region33
  $region32: #{vqvae_forward.15} parent=0 // pred_region
    _
  $region33: #{vqvae_forward.15} parent=0 // pred_fallthru
    _

// kernel: vqvae_forward.18
$region0: #{vqvae_forward.18}
  #allocation0 [shape = 'u32[]', space=smem, size = 0x4, offset = 0x4, fixed_abs, tag = 'smem constant byte address 0x4 - core index']
  #allocation1 [shape = 'u32[72,128]{1,0:T(1,128)}', space=vmem, size = 0x9000, scoped, tag = 'internal scratch']
  %s0 = inlined_call_operand.vmem [shape: f32[32,64], index: 0, kind: input, shape index: {}]
  %s1 = inlined_call_operand.vmem [shape: f32[128,64], index: 1, kind: input, shape index: {}]
  %s2 = inlined_call_operand.vmem [shape: f32[64,128], index: 2, kind: input, shape index: {}]
  %s3 = inlined_call_operand.vmem [shape: f32[1,128], index: 3, kind: input, shape index: {}]
  %s4 = inlined_call_operand.vmem [shape: f32[32,64], index: 4, kind: output, shape index: {0}]
  %s5 = inlined_call_operand.vmem [shape: s32[32,1], index: 5, kind: output, shape index: {1}]
  %s6 = inlined_call_operand.vmem [shape: f32[1,1,128], index: 6, kind: output, shape index: {2}]
  %7 = xla_tuple %s4, %s5, %s6
  %s8 = sld [smem:[#allocation0]]
  $region42: #{vqvae_forward.18} parent=0
    _
  %s10 = ssub.s32 1, %s8
  %s11 = scalar_select 0, %s10, %s8
  // Predicated region
  $region2: #{vqvae_forward.18} parent=0 // pred_check
    _
  $region3: #{vqvae_forward.18} parent=0 // pred_check_branch
    %13 = sbr.rel (0) target = $region5
  $region4: #{vqvae_forward.18} parent=0 // pred_region
    _
  $region5: #{vqvae_forward.18} parent=0 // pred_fallthru
    _
  // Predicated region
  $region6: #{vqvae_forward.18} parent=0 // pred_check
    _
  $region7: #{vqvae_forward.18} parent=0 // pred_check_branch
    %15 = sbr.rel (0) target = $region9
  $region8: #{vqvae_forward.18} parent=0 // pred_region
    _
  $region9: #{vqvae_forward.18} parent=0 // pred_fallthru
    _
  // Predicated region
  $region10: #{vqvae_forward.18} parent=0 // pred_check
    _
  $region11: #{vqvae_forward.18} parent=0 // pred_check_branch
    %17 = sbr.rel (0) target = $region13
  $region12: #{vqvae_forward.18} parent=0 // pred_region
    _
  $region13: #{vqvae_forward.18} parent=0 // pred_fallthru
    _
  // Predicated region
  $region14: #{vqvae_forward.18} parent=0 // pred_check
    _
  $region15: #{vqvae_forward.18} parent=0 // pred_check_branch
    %19 = sbr.rel (0) target = $region17
  $region16: #{vqvae_forward.18} parent=0 // pred_region
    _
  $region17: #{vqvae_forward.18} parent=0 // pred_fallthru
    _
  %v20 = vld [vmem:[%s0] sm:$0xff]
  %v21 = vld [vmem:[%s0 + $0x8] sm:$0xff]
  %v22 = vld [vmem:[%s0 + $0x10] sm:$0xff]
  %v23 = vld [vmem:[%s0 + $0x18] sm:$0xff]
  %v24 = vld [vmem:[%s3] sm:$0x1]
  %v25 = vld [vmem:[%s2] sm:$0xff]
  %v26 = vld [vmem:[%s2 + $0x8] sm:$0xff]
  %v27 = vld [vmem:[%s2 + $0x10] sm:$0xff]
  %v28 = vld [vmem:[%s2 + $0x18] sm:$0xff]
  %v29 = vld [vmem:[%s2 + $0x20] sm:$0xff]
  %v30 = vld [vmem:[%s2 + $0x28] sm:$0xff]
  %v31 = vld [vmem:[%s2 + $0x30] sm:$0xff]
  %v32 = vld [vmem:[%s2 + $0x38] sm:$0xff]
  %vm33 = vcmask 523264
  %v35 = vsel %vm33, %v20, 0
  %v38 = vsel %vm33, %v21, 0
  %v41 = vsel %vm33, %v22, 0
  %v44 = vsel %vm33, %v23, 0
  %46 = vmatpush.msra.mxu0 0.0
  %47 = vmatpush.msra.mxu0 0.0
  %48 = vmatpush.msra.mxu0 0.0
  %49 = vmatpush.msra.mxu0 0.0
  %50 = vmatpush.msra.mxu0 0.0
  %51 = vmatpush.msra.mxu0 0.0
  %52 = vmatpush.msra.mxu0 0.0
  %53 = vmatpush.msra.mxu0 0.0
  %54 = vmatpush.msra.mxu0 %v32
  %55 = vmatpush.msra.mxu0 %v31
  %56 = vmatpush.msra.mxu0 %v30
  %57 = vmatpush.msra.mxu0 %v29
  %58 = vmatpush.msra.mxu0 %v28
  %59 = vmatpush.msra.mxu0 %v27
  %60 = vmatpush.msra.mxu0 %v26
  %61 = vmatpush.msra.mxu0 %v25
  %62 = vmatmul.f32.gmra.mxu0 %v35
  %v63 = vpop.f32.mrf.mxu0
  %v64 = vadd.f32 0.0, %v63
  %65 = vmatmul.f32.gmra.mxu0 %v38
  %v66 = vpop.f32.mrf.mxu0
  %v67 = vadd.f32 0.0, %v66
  %68 = vmatmul.f32.gmra.mxu0 %v41
  %v69 = vpop.f32.mrf.mxu0
  %v70 = vadd.f32 0.0, %v69
  %71 = vmatmul.f32.gmra.mxu0 %v44
  %v72 = vpop.f32.mrf.mxu0
  %v73 = vadd.f32 0.0, %v72
  %74 = vdwg.mxu0
  %v75 = vmul.f32 %v64, 2.0
  %v76 = vmul.f32 %v67, 2.0
  %v77 = vmul.f32 %v70, 2.0
  %v78 = vmul.f32 %v73, 2.0
  %v80 = vperm.slane %v24, 0
  %v82 = vsub.f32 %v80, %v75
  %v83 = vsub.f32 %v80, %v76
  %v84 = vsub.f32 %v80, %v77
  %v85 = vsub.f32 %v80, %v78
  %v86 = vlaneseq
  %v87 = vand.u32 %v86, 127
  %88 = vmin.xlane.f32.xlu0 %v82
  %v89 = vpop.xlane.xlu0 %88
  %90 = vmin.xlane.f32.xlu0 %v83
  %v91 = vpop.xlane.xlu0 %90
  %92 = vmin.xlane.f32.xlu0 %v84
  %v93 = vpop.xlane.xlu0 %92
  %94 = vmin.xlane.f32.xlu0 %v85
  %v95 = vpop.xlane.xlu0 %94
  %vm96 = vcmp.le.f32.partialorder %v82, %v89
  %vm97 = vcmp.le.f32.partialorder %v83, %v91
  %vm98 = vcmp.le.f32.partialorder %v84, %v93
  %vm99 = vcmp.le.f32.partialorder %v85, %v95
  %v100 = vsel %vm96, %v87, 128
  %v101 = vsel %vm97, %v87, 128
  %v102 = vsel %vm98, %v87, 128
  %v103 = vsel %vm99, %v87, 128
  %v104 = vand.u32 %v100, 65535
  %v105 = vshra.s32 %v100, 16
  %v106 = vcvt.s32.f32 %v104
  %v107 = vcvt.s32.f32 %v105
  %108 = vmin.xlane.f32.xlu0 %v107
  %v109 = vpop.xlane.xlu0 %108
  %vm110 = vcmp.eq.f32.partialorder %v107, %v109
  %v111 = vsel %vm110, %v106, inf
  %112 = vmin.xlane.f32.xlu0 %v111
  %v113 = vpop.xlane.xlu0 %112
  %v114 = vcvt.f32.s32 %v113
  %v115 = vcvt.f32.s32 %v109
  %v116 = vshll.u32 %v115, 16
  %v117 = vadd.s32 %v116, %v114
  %v118 = vand.u32 %v101, 65535
  %v119 = vshra.s32 %v101, 16
  %v120 = vcvt.s32.f32 %v118
  %v121 = vcvt.s32.f32 %v119
  %122 = vmin.xlane.f32.xlu0 %v121
  %v123 = vpop.xlane.xlu0 %122
  %vm124 = vcmp.eq.f32.partialorder %v121, %v123
  %v125 = vsel %vm124, %v120, inf
  %126 = vmin.xlane.f32.xlu0 %v125
  %v127 = vpop.xlane.xlu0 %126
  %v128 = vcvt.f32.s32 %v127
  %v129 = vcvt.f32.s32 %v123
  %v130 = vshll.u32 %v129, 16
  %v131 = vadd.s32 %v130, %v128
  %v132 = vand.u32 %v102, 65535
  %v133 = vshra.s32 %v102, 16
  %v134 = vcvt.s32.f32 %v132
  %v135 = vcvt.s32.f32 %v133
  %136 = vmin.xlane.f32.xlu0 %v135
  %v137 = vpop.xlane.xlu0 %136
  %vm138 = vcmp.eq.f32.partialorder %v135, %v137
  %v139 = vsel %vm138, %v134, inf
  %140 = vmin.xlane.f32.xlu0 %v139
  %v141 = vpop.xlane.xlu0 %140
  %v142 = vcvt.f32.s32 %v141
  %v143 = vcvt.f32.s32 %v137
  %v144 = vshll.u32 %v143, 16
  %v145 = vadd.s32 %v144, %v142
  %v146 = vand.u32 %v103, 65535
  %v147 = vshra.s32 %v103, 16
  %v148 = vcvt.s32.f32 %v146
  %v149 = vcvt.s32.f32 %v147
  %150 = vmin.xlane.f32.xlu0 %v149
  %v151 = vpop.xlane.xlu0 %150
  %vm152 = vcmp.eq.f32.partialorder %v149, %v151
  %v153 = vsel %vm152, %v148, inf
  %154 = vmin.xlane.f32.xlu0 %v153
  %v155 = vpop.xlane.xlu0 %154
  %v156 = vcvt.f32.s32 %v155
  %v157 = vcvt.f32.s32 %v151
  %v158 = vshll.u32 %v157, 16
  %v159 = vadd.s32 %v158, %v156
  %vm160 = vcmp.eq.s32.totalorder %v87, %v117
  %vm161 = vcmp.eq.s32.totalorder %v87, %v131
  %vm162 = vcmp.eq.s32.totalorder %v87, %v145
  %vm163 = vcmp.eq.s32.totalorder %v87, %v159
  %v164 = vsel %vm160, 1, 0
  %v165 = vsel %vm161, 1, 0
  %v166 = vsel %vm162, 1, 0
  %v167 = vsel %vm163, 1, 0
  %v168 = vcvt.s32.f32 %v164
  %v169 = vcvt.s32.f32 %v165
  %v170 = vcvt.s32.f32 %v166
  %v171 = vcvt.s32.f32 %v167
  %v172 = vld [vmem:[%s1] sm:$0xff]
  %v173 = vld [vmem:[%s1 + $0x8] sm:$0xff]
  %v174 = vld [vmem:[%s1 + $0x10] sm:$0xff]
  %v175 = vld [vmem:[%s1 + $0x18] sm:$0xff]
  %v176 = vld [vmem:[%s1 + $0x20] sm:$0xff]
  %v177 = vld [vmem:[%s1 + $0x28] sm:$0xff]
  %v178 = vld [vmem:[%s1 + $0x30] sm:$0xff]
  %v179 = vld [vmem:[%s1 + $0x38] sm:$0xff]
  %v180 = vld [vmem:[%s1 + $0x40] sm:$0xff]
  %v181 = vld [vmem:[%s1 + $0x48] sm:$0xff]
  %v182 = vld [vmem:[%s1 + $0x50] sm:$0xff]
  %v183 = vld [vmem:[%s1 + $0x58] sm:$0xff]
  %v184 = vld [vmem:[%s1 + $0x60] sm:$0xff]
  %v185 = vld [vmem:[%s1 + $0x68] sm:$0xff]
  %v186 = vld [vmem:[%s1 + $0x70] sm:$0xff]
  %v187 = vld [vmem:[%s1 + $0x78] sm:$0xff]
  %188 = vmatpush.msra.mxu0 %v187
  %189 = vmatpush.msra.mxu0 %v186
  %190 = vmatpush.msra.mxu0 %v185
  %191 = vmatpush.msra.mxu0 %v184
  %192 = vmatpush.msra.mxu0 %v183
  %193 = vmatpush.msra.mxu0 %v182
  %194 = vmatpush.msra.mxu0 %v181
  %195 = vmatpush.msra.mxu0 %v180
  %196 = vmatpush.msra.mxu0 %v179
  %197 = vmatpush.msra.mxu0 %v178
  %198 = vmatpush.msra.mxu0 %v177
  %199 = vmatpush.msra.mxu0 %v176
  %200 = vmatpush.msra.mxu0 %v175
  %201 = vmatpush.msra.mxu0 %v174
  %202 = vmatpush.msra.mxu0 %v173
  %203 = vmatpush.msra.mxu0 %v172
  %204 = vmatmul.f32.gmra.mxu0 %v168
  %v205 = vpop.f32.mrf.mxu0
  %v206 = vadd.f32 0.0, %v205
  %207 = vmatmul.f32.gmra.mxu0 %v169
  %v208 = vpop.f32.mrf.mxu0
  %v209 = vadd.f32 0.0, %v208
  %210 = vmatmul.f32.gmra.mxu0 %v170
  %v211 = vpop.f32.mrf.mxu0
  %v212 = vadd.f32 0.0, %v211
  %213 = vmatmul.f32.gmra.mxu0 %v171
  %v214 = vpop.f32.mrf.mxu0
  %v215 = vadd.f32 0.0, %v214
  %216 = vdwg.mxu0
  %217 = vst.msk [vmem:[%s4] sm:$0xff] %vm33, %v206
  %218 = vst.msk [vmem:[%s4 + $0x8] sm:$0xff] %vm33, %v209
  %219 = vst.msk [vmem:[%s4 + $0x10] sm:$0xff] %vm33, %v212
  %220 = vst.msk [vmem:[%s4 + $0x18] sm:$0xff] %vm33, %v215
  %vm221 = vcmask 7168
  %222 = vst.msk [vmem:[%s5] sm:$0xff] %vm221, %v117
  %223 = vst.msk [vmem:[%s5 + $0x8] sm:$0xff] %vm221, %v131
  %224 = vst.msk [vmem:[%s5 + $0x10] sm:$0xff] %vm221, %v145
  %225 = vst.msk [vmem:[%s5 + $0x18] sm:$0xff] %vm221, %v159
  %s226 = smul.u32 0, 32
  %v227 = vlaneseq
  %v228 = vshrl.u32 %v227, 7
  %v229 = vadd.s32 %v228, 8
  %v230 = vadd.s32 %v228, 16
  %v231 = vadd.s32 %v228, 24
  %v232 = vstv %s226
  %v233 = vadd.s32 %v232, %v228
  %v234 = vadd.s32 %v232, %v229
  %v235 = vadd.s32 %v232, %v230
  %v236 = vadd.s32 %v232, %v231
  %vm237 = vcmp.lt.s32.totalorder %v233, 32
  %vm238 = vcmp.lt.s32.totalorder %v234, 32
  %vm239 = vcmp.lt.s32.totalorder %v235, 32
  %vm240 = vcmp.lt.s32.totalorder %v236, 32
  %v241 = vsel %vm237, 1, 0
  %v242 = vsel %vm238, 1, 0
  %v243 = vsel %vm239, 1, 0
  %v244 = vsel %vm240, 1, 0
  %v245 = vcvt.s32.f32 %v241
  %v246 = vcvt.s32.f32 %v242
  %v247 = vcvt.s32.f32 %v243
  %v248 = vcvt.s32.f32 %v244
  %v249 = vmul.f32 %v168, %v245
  %v250 = vmul.f32 %v169, %v246
  %v251 = vmul.f32 %v170, %v247
  %v252 = vmul.f32 %v171, %v248
  %v253 = vadd.f32 %v249, %v250
  %v254 = vadd.f32 %v253, %v251
  %v255 = vadd.f32 %v254, %v252
  %v256 = vrot.slane %v255, 4
  %v257 = vadd.f32 %v255, %v256
  %v258 = vrot.slane %v257, 2
  %v259 = vadd.f32 %v257, %v258
  %v260 = vrot.slane %v259, 1
  %v261 = vadd.f32 %v259, %v260
  %262 = vst [vmem:[%s6] sm:$0x1] %v261
  // Predicated region
  $region18: #{vqvae_forward.18} parent=0 // pred_check
    _
  $region19: #{vqvae_forward.18} parent=0 // pred_check_branch
    %264 = sbr.rel (0) target = $region21
  $region20: #{vqvae_forward.18} parent=0 // pred_region
    _
  $region21: #{vqvae_forward.18} parent=0 // pred_fallthru
    _
  // Predicated region
  $region22: #{vqvae_forward.18} parent=0 // pred_check
    _
  $region23: #{vqvae_forward.18} parent=0 // pred_check_branch
    %266 = sbr.rel (0) target = $region25
  $region24: #{vqvae_forward.18} parent=0 // pred_region
    _
  $region25: #{vqvae_forward.18} parent=0 // pred_fallthru
    _
  // Predicated region
  $region26: #{vqvae_forward.18} parent=0 // pred_check
    _
  $region27: #{vqvae_forward.18} parent=0 // pred_check_branch
    %268 = sbr.rel (0) target = $region29
  $region28: #{vqvae_forward.18} parent=0 // pred_region
    _
  $region29: #{vqvae_forward.18} parent=0 // pred_fallthru
    _
  // Predicated region
  $region30: #{vqvae_forward.18} parent=0 // pred_check
    _
  $region31: #{vqvae_forward.18} parent=0 // pred_check_branch
    %270 = sbr.rel (0) target = $region33
  $region32: #{vqvae_forward.18} parent=0 // pred_region
    _
  $region33: #{vqvae_forward.18} parent=0 // pred_fallthru
    _
  // Predicated region
  $region34: #{vqvae_forward.18} parent=0 // pred_check
    _
  $region35: #{vqvae_forward.18} parent=0 // pred_check_branch
    %272 = sbr.rel (0) target = $region37
  $region36: #{vqvae_forward.18} parent=0 // pred_region
    _
  $region37: #{vqvae_forward.18} parent=0 // pred_fallthru
    _
  // Predicated region
  $region38: #{vqvae_forward.18} parent=0 // pred_check
    _
  $region39: #{vqvae_forward.18} parent=0 // pred_check_branch
    %274 = sbr.rel (0) target = $region41
  $region40: #{vqvae_forward.18} parent=0 // pred_region
    _
  $region41: #{vqvae_forward.18} parent=0 // pred_fallthru
    _

// kernel: vqvae_forward.19
$region0: #{vqvae_forward.19}
  #allocation0 [shape = 'u32[]', space=smem, size = 0x4, offset = 0x4, fixed_abs, tag = 'smem constant byte address 0x4 - core index']
  #allocation1 [shape = 'u32[72,128]{1,0:T(1,128)}', space=vmem, size = 0x9000, scoped, tag = 'internal scratch']
  %s0 = inlined_call_operand.vmem [shape: bf16[32,576], index: 0, kind: input, shape index: {}]
  %s1 = inlined_call_operand.vmem [shape: bf16[576,128], index: 1, kind: input, shape index: {}]
  %s2 = inlined_call_operand.vmem [shape: f32[1,128], index: 2, kind: input, shape index: {}]
  %s3 = inlined_call_operand.vmem [shape: bf16[32,128], index: 3, kind: output, shape index: {}]
  %s4 = sld [smem:[#allocation0]]
  $region22: #{vqvae_forward.19} parent=0
    _
  %s6 = ssub.s32 1, %s4
  %s7 = scalar_select 0, %s6, %s4
  // Predicated region
  $region2: #{vqvae_forward.19} parent=0 // pred_check
    _
  $region3: #{vqvae_forward.19} parent=0 // pred_check_branch
    %9 = sbr.rel (0) target = $region5
  $region4: #{vqvae_forward.19} parent=0 // pred_region
    _
  $region5: #{vqvae_forward.19} parent=0 // pred_fallthru
    _
  // Predicated region
  $region6: #{vqvae_forward.19} parent=0 // pred_check
    _
  $region7: #{vqvae_forward.19} parent=0 // pred_check_branch
    %11 = sbr.rel (0) target = $region9
  $region8: #{vqvae_forward.19} parent=0 // pred_region
    _
  $region9: #{vqvae_forward.19} parent=0 // pred_fallthru
    _
  // Predicated region
  $region10: #{vqvae_forward.19} parent=0 // pred_check
    _
  $region11: #{vqvae_forward.19} parent=0 // pred_check_branch
    %13 = sbr.rel (0) target = $region13
  $region12: #{vqvae_forward.19} parent=0 // pred_region
    _
  $region13: #{vqvae_forward.19} parent=0 // pred_fallthru
    _
  %v15 = vld [vmem:[%s0] sm:$0xff]
  %v16 = vld [vmem:[%s0 + $0x8] sm:$0xff]
  %v17 = vld [vmem:[%s0 + $0x10] sm:$0xf]
  %v18 = vld [vmem:[%s0 + $0x14] sm:$0xff]
  %v19 = vld [vmem:[%s0 + $0x1c] sm:$0xff]
  %v20 = vld [vmem:[%s0 + $0x24] sm:$0xf]
  %v21 = vld [vmem:[%s0 + $0x28] sm:$0xff]
  %v22 = vld [vmem:[%s0 + $0x30] sm:$0xff]
  %v23 = vld [vmem:[%s0 + $0x38] sm:$0xf]
  %v24 = vld [vmem:[%s0 + $0x3c] sm:$0xff]
  %v25 = vld [vmem:[%s0 + $0x44] sm:$0xff]
  %v26 = vld [vmem:[%s0 + $0x4c] sm:$0xf]
  %v27 = vld [vmem:[%s1] sm:$0xf]
  %v28 = vld [vmem:[%s1 + $0x4] sm:$0xf]
  %v29 = vld [vmem:[%s1 + $0x8] sm:$0xf]
  %v30 = vld [vmem:[%s1 + $0xc] sm:$0xf]
  %v31 = vld [vmem:[%s1 + $0x10] sm:$0xf]
  %v32 = vld [vmem:[%s1 + $0x14] sm:$0xf]
  %v33 = vld [vmem:[%s1 + $0x18] sm:$0xf]
  %v34 = vld [vmem:[%s1 + $0x1c] sm:$0xf]
  %v35 = vld [vmem:[%s1 + $0x20] sm:$0xf]
  %v36 = vld [vmem:[%s1 + $0x24] sm:$0xf]
  %v37 = vld [vmem:[%s1 + $0x28] sm:$0xf]
  %v38 = vld [vmem:[%s1 + $0x2c] sm:$0xf]
  %v39 = vld [vmem:[%s1 + $0x30] sm:$0xf]
  %v40 = vld [vmem:[%s1 + $0x34] sm:$0xf]
  %v41 = vld [vmem:[%s1 + $0x38] sm:$0xf]
  %v42 = vld [vmem:[%s1 + $0x3c] sm:$0xf]
  %v43 = vld [vmem:[%s1 + $0x40] sm:$0xf]
  %v44 = vld [vmem:[%s1 + $0x44] sm:$0xf]
  %v45 = vld [vmem:[%s1 + $0x48] sm:$0xf]
  %v46 = vld [vmem:[%s1 + $0x4c] sm:$0xf]
  %v47 = vld [vmem:[%s1 + $0x50] sm:$0xf]
  %v48 = vld [vmem:[%s1 + $0x54] sm:$0xf]
  %v49 = vld [vmem:[%s1 + $0x58] sm:$0xf]
  %v50 = vld [vmem:[%s1 + $0x5c] sm:$0xf]
  %v51 = vld [vmem:[%s1 + $0x60] sm:$0xf]
  %v52 = vld [vmem:[%s1 + $0x64] sm:$0xf]
  %v53 = vld [vmem:[%s1 + $0x68] sm:$0xf]
  %v54 = vld [vmem:[%s1 + $0x6c] sm:$0xf]
  %v55 = vld [vmem:[%s1 + $0x70] sm:$0xf]
  %v56 = vld [vmem:[%s1 + $0x74] sm:$0xf]
  %v57 = vld [vmem:[%s1 + $0x78] sm:$0xf]
  %v58 = vld [vmem:[%s1 + $0x7c] sm:$0xf]
  %v59 = vld [vmem:[%s1 + $0x80] sm:$0xf]
  %v60 = vld [vmem:[%s1 + $0x84] sm:$0xf]
  %v61 = vld [vmem:[%s1 + $0x88] sm:$0xf]
  %v62 = vld [vmem:[%s1 + $0x8c] sm:$0xf]
  %v63 = vld [vmem:[%s1 + $0x90] sm:$0xf]
  %v64 = vld [vmem:[%s1 + $0x94] sm:$0xf]
  %v65 = vld [vmem:[%s1 + $0x98] sm:$0xf]
  %v66 = vld [vmem:[%s1 + $0x9c] sm:$0xf]
  %v67 = vld [vmem:[%s1 + $0xa0] sm:$0xf]
  %v68 = vld [vmem:[%s1 + $0xa4] sm:$0xf]
  %v69 = vld [vmem:[%s1 + $0xa8] sm:$0xf]
  %v70 = vld [vmem:[%s1 + $0xac] sm:$0xf]
  %v71 = vld [vmem:[%s1 + $0xb0] sm:$0xf]
  %v72 = vld [vmem:[%s1 + $0xb4] sm:$0xf]
  %v73 = vld [vmem:[%s1 + $0xb8] sm:$0xf]
  %v74 = vld [vmem:[%s1 + $0xbc] sm:$0xf]
  %v75 = vld [vmem:[%s1 + $0xc0] sm:$0xf]
  %v76 = vld [vmem:[%s1 + $0xc4] sm:$0xf]
  %v77 = vld [vmem:[%s1 + $0xc8] sm:$0xf]
  %v78 = vld [vmem:[%s1 + $0xcc] sm:$0xf]
  %v79 = vld [vmem:[%s1 + $0xd0] sm:$0xf]
  %v80 = vld [vmem:[%s1 + $0xd4] sm:$0xf]
  %v81 = vld [vmem:[%s1 + $0xd8] sm:$0xf]
  %v82 = vld [vmem:[%s1 + $0xdc] sm:$0xf]
  %v83 = vld [vmem:[%s1 + $0xe0] sm:$0xf]
  %v84 = vld [vmem:[%s1 + $0xe4] sm:$0xf]
  %v85 = vld [vmem:[%s1 + $0xe8] sm:$0xf]
  %v86 = vld [vmem:[%s1 + $0xec] sm:$0xf]
  %v87 = vld [vmem:[%s1 + $0xf0] sm:$0xf]
  %v88 = vld [vmem:[%s1 + $0xf4] sm:$0xf]
  %v89 = vld [vmem:[%s1 + $0xf8] sm:$0xf]
  %v90 = vld [vmem:[%s1 + $0xfc] sm:$0xf]
  %v91 = vld [vmem:[%s1 + $0x100] sm:$0xf]
  %v92 = vld [vmem:[%s1 + $0x104] sm:$0xf]
  %v93 = vld [vmem:[%s1 + $0x108] sm:$0xf]
  %v94 = vld [vmem:[%s1 + $0x10c] sm:$0xf]
  %v95 = vld [vmem:[%s1 + $0x110] sm:$0xf]
  %v96 = vld [vmem:[%s1 + $0x114] sm:$0xf]
  %v97 = vld [vmem:[%s1 + $0x118] sm:$0xf]
  %v98 = vld [vmem:[%s1 + $0x11c] sm:$0xf]
  %v99 = vld [vmem:[%s2] sm:$0x1]
  %v101 = vperm.slane %v99, 0
  %v115 = vunpack.c.l.b16 %v15
  %v116 = vunpack.c.h.b16 %v15
  %v117 = vunpack.c.l.b16 %v16
  %v118 = vunpack.c.h.b16 %v16
  %v119 = vunpack.c.l.b16 %v17
  %v120 = vunpack.c.l.b16 %v18
  %v121 = vunpack.c.h.b16 %v18
  %v122 = vunpack.c.l.b16 %v19
  %v123 = vunpack.c.h.b16 %v19
  %v124 = vunpack.c.l.b16 %v20
  %v125 = vunpack.c.l.b16 %v21
  %v126 = vunpack.c.h.b16 %v21
  %v127 = vunpack.c.l.b16 %v22
  %v128 = vunpack.c.h.b16 %v22
  %v129 = vunpack.c.l.b16 %v23
  %v130 = vunpack.c.l.b16 %v24
  %v131 = vunpack.c.h.b16 %v24
  %v132 = vunpack.c.l.b16 %v25
  %v133 = vunpack.c.h.b16 %v25
  %v134 = vunpack.c.l.b16 %v26
  %v135 = vpack.c.b16 %v120, %v115
  %v136 = vpack.c.b16 %v121, %v116
  %v137 = vpack.c.b16 %v122, %v117
  %v138 = vpack.c.b16 %v123, %v118
  %v139 = vpack.c.b16 %v124, %v119
  %v140 = vpack.c.b16 %v130, %v125
  %v141 = vpack.c.b16 %v131, %v126
  %v142 = vpack.c.b16 %v132, %v127
  %v143 = vpack.c.b16 %v133, %v128
  %v144 = vpack.c.b16 %v134, %v129
  %v225 = vunpack.c.l.b16 %v27
  %v226 = vunpack.c.l.b16 %v28
  %v227 = vunpack.c.l.b16 %v29
  %v228 = vunpack.c.l.b16 %v30
  %v229 = vunpack.c.l.b16 %v31
  %v230 = vunpack.c.l.b16 %v32
  %v231 = vunpack.c.l.b16 %v33
  %v232 = vunpack.c.l.b16 %v34
  %v233 = vunpack.c.l.b16 %v35
  %v234 = vunpack.c.l.b16 %v36
  %v235 = vunpack.c.l.b16 %v37
  %v236 = vunpack.c.l.b16 %v38
  %v237 = vunpack.c.l.b16 %v39
  %v238 = vunpack.c.l.b16 %v40
  %v239 = vunpack.c.l.b16 %v41
  %v240 = vunpack.c.l.b16 %v42
  %v241 = vunpack.c.l.b16 %v43
  %v242 = vunpack.c.l.b16 %v44
  %v243 = vunpack.c.l.b16 %v45
  %v244 = vunpack.c.l.b16 %v46
  %v245 = vunpack.c.l.b16 %v47
  %v246 = vunpack.c.l.b16 %v48
  %v247 = vunpack.c.l.b16 %v49
  %v248 = vunpack.c.l.b16 %v50
  %v249 = vunpack.c.l.b16 %v51
  %v250 = vunpack.c.l.b16 %v52
  %v251 = vunpack.c.l.b16 %v53
  %v252 = vunpack.c.l.b16 %v54
  %v253 = vunpack.c.l.b16 %v55
  %v254 = vunpack.c.l.b16 %v56
  %v255 = vunpack.c.l.b16 %v57
  %v256 = vunpack.c.l.b16 %v58
  %v257 = vunpack.c.l.b16 %v59
  %v258 = vunpack.c.l.b16 %v60
  %v259 = vunpack.c.l.b16 %v61
  %v260 = vunpack.c.l.b16 %v62
  %v261 = vunpack.c.l.b16 %v63
  %v262 = vunpack.c.l.b16 %v64
  %v263 = vunpack.c.l.b16 %v65
  %v264 = vunpack.c.l.b16 %v66
  %v265 = vunpack.c.l.b16 %v67
  %v266 = vunpack.c.l.b16 %v68
  %v267 = vunpack.c.l.b16 %v69
  %v268 = vunpack.c.l.b16 %v70
  %v269 = vunpack.c.l.b16 %v71
  %v270 = vunpack.c.l.b16 %v72
  %v271 = vunpack.c.l.b16 %v73
  %v272 = vunpack.c.l.b16 %v74
  %v273 = vunpack.c.l.b16 %v75
  %v274 = vunpack.c.l.b16 %v76
  %v275 = vunpack.c.l.b16 %v77
  %v276 = vunpack.c.l.b16 %v78
  %v277 = vunpack.c.l.b16 %v79
  %v278 = vunpack.c.l.b16 %v80
  %v279 = vunpack.c.l.b16 %v81
  %v280 = vunpack.c.l.b16 %v82
  %v281 = vunpack.c.l.b16 %v83
  %v282 = vunpack.c.l.b16 %v84
  %v283 = vunpack.c.l.b16 %v85
  %v284 = vunpack.c.l.b16 %v86
  %v285 = vunpack.c.l.b16 %v87
  %v286 = vunpack.c.l.b16 %v88
  %v287 = vunpack.c.l.b16 %v89
  %v288 = vunpack.c.l.b16 %v90
  %v289 = vunpack.c.l.b16 %v91
  %v290 = vunpack.c.l.b16 %v92
  %v291 = vunpack.c.l.b16 %v93
  %v292 = vunpack.c.l.b16 %v94
  %v293 = vunpack.c.l.b16 %v95
  %v294 = vunpack.c.l.b16 %v96
  %v295 = vunpack.c.l.b16 %v97
  %v296 = vunpack.c.l.b16 %v98
  %v297 = vpack.c.b16 %v226, %v225
  %v298 = vpack.c.b16 %v228, %v227
  %v299 = vpack.c.b16 %v230, %v229
  %v300 = vpack.c.b16 %v232, %v231
  %v301 = vpack.c.b16 %v234, %v233
  %v302 = vpack.c.b16 %v236, %v235
  %v303 = vpack.c.b16 %v238, %v237
  %v304 = vpack.c.b16 %v240, %v239
  %v305 = vpack.c.b16 %v242, %v241
  %v306 = vpack.c.b16 %v244, %v243
  %v307 = vpack.c.b16 %v246, %v245
  %v308 = vpack.c.b16 %v248, %v247
  %v309 = vpack.c.b16 %v250, %v249
  %v310 = vpack.c.b16 %v252, %v251
  %v311 = vpack.c.b16 %v254, %v253
  %v312 = vpack.c.b16 %v256, %v255
  %v313 = vpack.c.b16 %v258, %v257
  %v314 = vpack.c.b16 %v260, %v259
  %v315 = vpack.c.b16 %v262, %v261
  %v316 = vpack.c.b16 %v264, %v263
  %v317 = vpack.c.b16 %v266, %v265
  %v318 = vpack.c.b16 %v268, %v267
  %v319 = vpack.c.b16 %v270, %v269
  %v320 = vpack.c.b16 %v272, %v271
  %v321 = vpack.c.b16 %v274, %v273
  %v322 = vpack.c.b16 %v276, %v275
  %v323 = vpack.c.b16 %v278, %v277
  %v324 = vpack.c.b16 %v280, %v279
  %v325 = vpack.c.b16 %v282, %v281
  %v326 = vpack.c.b16 %v284, %v283
  %v327 = vpack.c.b16 %v286, %v285
  %v328 = vpack.c.b16 %v288, %v287
  %v329 = vpack.c.b16 %v290, %v289
  %v330 = vpack.c.b16 %v292, %v291
  %v331 = vpack.c.b16 %v294, %v293
  %v332 = vpack.c.b16 %v296, %v295
  %vm369 = vcmask 523264
  %v371 = vsel %vm369, %v139, 0
  %v374 = vsel %vm369, %v144, 0
  %376 = vmatpush.bf16.msra.mxu0 %v304
  %377 = vmatpush.bf16.msra.mxu0 %v303
  %378 = vmatpush.bf16.msra.mxu0 %v302
  %379 = vmatpush.bf16.msra.mxu0 %v301
  %380 = vmatpush.bf16.msra.mxu0 %v300
  %381 = vmatpush.bf16.msra.mxu0 %v299
  %382 = vmatpush.bf16.msra.mxu0 %v298
  %383 = vmatpush.bf16.msra.mxu0 %v297
  %384 = vmatmul.bf16.gmra.mxu0 %v135
  %v385 = vpop.f32.mrf.mxu0
  %v386 = vadd.f32 %v101, %v385
  %v387 = vpop.f32.mrf.mxu0
  %v388 = vadd.f32 %v101, %v387
  %389 = vmatmul.bf16.gmra.mxu0 %v140
  %v390 = vpop.f32.mrf.mxu0
  %v391 = vadd.f32 %v101, %v390
  %v392 = vpop.f32.mrf.mxu0
  %v393 = vadd.f32 %v101, %v392
  %394 = vdwg.mxu0
  %395 = vmatpush.bf16.msra.mxu0 %v312
  %396 = vmatpush.bf16.msra.mxu0 %v311
  %397 = vmatpush.bf16.msra.mxu0 %v310
  %398 = vmatpush.bf16.msra.mxu0 %v309
  %399 = vmatpush.bf16.msra.mxu0 %v308
  %400 = vmatpush.bf16.msra.mxu0 %v307
  %401 = vmatpush.bf16.msra.mxu0 %v306
  %402 = vmatpush.bf16.msra.mxu0 %v305
  %403 = vmatmul.bf16.gmra.mxu0 %v136
  %v404 = vpop.f32.mrf.mxu0
  %v405 = vadd.f32 %v386, %v404
  %v406 = vpop.f32.mrf.mxu0
  %v407 = vadd.f32 %v388, %v406
  %408 = vmatmul.bf16.gmra.mxu0 %v141
  %v409 = vpop.f32.mrf.mxu0
  %v410 = vadd.f32 %v391, %v409
  %v411 = vpop.f32.mrf.mxu0
  %v412 = vadd.f32 %v393, %v411
  %413 = vdwg.mxu0
  %414 = vmatpush.bf16.msra.mxu0 %v320
  %415 = vmatpush.bf16.msra.mxu0 %v319
  %416 = vmatpush.bf16.msra.mxu0 %v318
  %417 = vmatpush.bf16.msra.mxu0 %v317
  %418 = vmatpush.bf16.msra.mxu0 %v316
  %419 = vmatpush.bf16.msra.mxu0 %v315
  %420 = vmatpush.bf16.msra.mxu0 %v314
  %421 = vmatpush.bf16.msra.mxu0 %v313
  %422 = vmatmul.bf16.gmra.mxu0 %v137
  %v423 = vpop.f32.mrf.mxu0
  %v424 = vadd.f32 %v405, %v423
  %v425 = vpop.f32.mrf.mxu0
  %v426 = vadd.f32 %v407, %v425
  %427 = vmatmul.bf16.gmra.mxu0 %v142
  %v428 = vpop.f32.mrf.mxu0
  %v429 = vadd.f32 %v410, %v428
  %v430 = vpop.f32.mrf.mxu0
  %v431 = vadd.f32 %v412, %v430
  %432 = vdwg.mxu0
  %433 = vmatpush.bf16.msra.mxu0 %v328
  %434 = vmatpush.bf16.msra.mxu0 %v327
  %435 = vmatpush.bf16.msra.mxu0 %v326
  %436 = vmatpush.bf16.msra.mxu0 %v325
  %437 = vmatpush.bf16.msra.mxu0 %v324
  %438 = vmatpush.bf16.msra.mxu0 %v323
  %439 = vmatpush.bf16.msra.mxu0 %v322
  %440 = vmatpush.bf16.msra.mxu0 %v321
  %441 = vmatmul.bf16.gmra.mxu0 %v138
  %v442 = vpop.f32.mrf.mxu0
  %v443 = vadd.f32 %v424, %v442
  %v444 = vpop.f32.mrf.mxu0
  %v445 = vadd.f32 %v426, %v444
  %446 = vmatmul.bf16.gmra.mxu0 %v143
  %v447 = vpop.f32.mrf.mxu0
  %v448 = vadd.f32 %v429, %v447
  %v449 = vpop.f32.mrf.mxu0
  %v450 = vadd.f32 %v431, %v449
  %451 = vdwg.mxu0
  %452 = vmatpush.bf16.msra.mxu0 0
  %453 = vmatpush.bf16.msra.mxu0 0
  %454 = vmatpush.bf16.msra.mxu0 0
  %455 = vmatpush.bf16.msra.mxu0 0
  %456 = vmatpush.bf16.msra.mxu0 %v332
  %457 = vmatpush.bf16.msra.mxu0 %v331
  %458 = vmatpush.bf16.msra.mxu0 %v330
  %459 = vmatpush.bf16.msra.mxu0 %v329
  %460 = vmatmul.bf16.gmra.mxu0 %v371
  %v461 = vpop.f32.mrf.mxu0
  %v462 = vadd.f32 %v443, %v461
  %v463 = vpop.f32.mrf.mxu0
  %v464 = vadd.f32 %v445, %v463
  %465 = vmatmul.bf16.gmra.mxu0 %v374
  %v466 = vpop.f32.mrf.mxu0
  %v467 = vadd.f32 %v448, %v466
  %v468 = vpop.f32.mrf.mxu0
  %v469 = vadd.f32 %v450, %v468
  %470 = vdwg.mxu0
  %v471 = vpack.c.bf16 %v462, %v462
  %v472 = vpack.c.bf16 %v464, %v464
  %v473 = vpack.c.bf16 %v467, %v467
  %v474 = vpack.c.bf16 %v469, %v469
  %475 = vst [vmem:[%s3] sm:$0xf] %v471
  %476 = vst [vmem:[%s3 + $0x4] sm:$0xf] %v472
  %477 = vst [vmem:[%s3 + $0x8] sm:$0xf] %v473
  %478 = vst [vmem:[%s3 + $0xc] sm:$0xf] %v474
  // Predicated region
  $region14: #{vqvae_forward.19} parent=0 // pred_check
    _
  $region15: #{vqvae_forward.19} parent=0 // pred_check_branch
    %480 = sbr.rel (0) target = $region17
  $region16: #{vqvae_forward.19} parent=0 // pred_region
    _
  $region17: #{vqvae_forward.19} parent=0 // pred_fallthru
    _
  // Predicated region
  $region18: #{vqvae_forward.19} parent=0 // pred_check
    _
  $region19: #{vqvae_forward.19} parent=0 // pred_check_branch
    %482 = sbr.rel (0) target = $region21
  $region20: #{vqvae_forward.19} parent=0 // pred_region
    _
  $region21: #{vqvae_forward.19} parent=0 // pred_fallthru
    _

// kernel: vqvae_forward.22
$region0: #{vqvae_forward.22}
  #allocation0 [shape = 'u32[]', space=smem, size = 0x4, offset = 0x4, fixed_abs, tag = 'smem constant byte address 0x4 - core index']
  #allocation1 [shape = 'u32[72,128]{1,0:T(1,128)}', space=vmem, size = 0x9000, scoped, tag = 'internal scratch']
  %s0 = inlined_call_operand.vmem [shape: bf16[32,1152], index: 0, kind: input, shape index: {}]
  %s1 = inlined_call_operand.vmem [shape: bf16[1152,512], index: 1, kind: input, shape index: {}]
  %s2 = inlined_call_operand.vmem [shape: f32[1,512], index: 2, kind: input, shape index: {}]
  %s3 = inlined_call_operand.vmem [shape: bf16[32,512], index: 3, kind: output, shape index: {}]
  %s4 = sld [smem:[#allocation0]]
  $region22: #{vqvae_forward.22} parent=0
    _
  %s6 = ssub.s32 1, %s4
  %s7 = scalar_select 0, %s6, %s4
  // Predicated region
  $region2: #{vqvae_forward.22} parent=0 // pred_check
    _
  $region3: #{vqvae_forward.22} parent=0 // pred_check_branch
    %9 = sbr.rel (0) target = $region5
  $region4: #{vqvae_forward.22} parent=0 // pred_region
    _
  $region5: #{vqvae_forward.22} parent=0 // pred_fallthru
    _
  // Predicated region
  $region6: #{vqvae_forward.22} parent=0 // pred_check
    _
  $region7: #{vqvae_forward.22} parent=0 // pred_check_branch
    %11 = sbr.rel (0) target = $region9
  $region8: #{vqvae_forward.22} parent=0 // pred_region
    _
  $region9: #{vqvae_forward.22} parent=0 // pred_fallthru
    _
  // Predicated region
  $region10: #{vqvae_forward.22} parent=0 // pred_check
    _
  $region11: #{vqvae_forward.22} parent=0 // pred_check_branch
    %13 = sbr.rel (0) target = $region13
  $region12: #{vqvae_forward.22} parent=0 // pred_region
    _
  $region13: #{vqvae_forward.22} parent=0 // pred_fallthru
    _
  %v14 = vld [vmem:[%s0] sm:$0xff]
  %v15 = vld [vmem:[%s0 + $0x8] sm:$0xff]
  %v16 = vld [vmem:[%s0 + $0x10] sm:$0xff]
  %v17 = vld [vmem:[%s0 + $0x18] sm:$0xff]
  %v18 = vld [vmem:[%s0 + $0x20] sm:$0xf]
  %v19 = vld [vmem:[%s0 + $0x24] sm:$0xff]
  %v20 = vld [vmem:[%s0 + $0x2c] sm:$0xff]
  %v21 = vld [vmem:[%s0 + $0x34] sm:$0xff]
  %v22 = vld [vmem:[%s0 + $0x3c] sm:$0xff]
  %v23 = vld [vmem:[%s0 + $0x44] sm:$0xf]
  %v24 = vld [vmem:[%s0 + $0x48] sm:$0xff]
  %v25 = vld [vmem:[%s0 + $0x50] sm:$0xff]
  %v26 = vld [vmem:[%s0 + $0x58] sm:$0xff]
  %v27 = vld [vmem:[%s0 + $0x60] sm:$0xff]
  %v28 = vld [vmem:[%s0 + $0x68] sm:$0xf]
  %v29 = vld [vmem:[%s0 + $0x6c] sm:$0xff]
  %v30 = vld [vmem:[%s0 + $0x74] sm:$0xff]
  %v31 = vld [vmem:[%s0 + $0x7c] sm:$0xff]
  %v32 = vld [vmem:[%s0 + $0x84] sm:$0xff]
  %v33 = vld [vmem:[%s0 + $0x8c] sm:$0xf]
  %v34 = vld [vmem:[%s1] sm:$0xff]
  %v35 = vld [vmem:[%s1 + $0x8] sm:$0xff]
  %v36 = vld [vmem:[%s1 + $0x10] sm:$0xff]
  %v37 = vld [vmem:[%s1 + $0x18] sm:$0xff]
  %v38 = vld [vmem:[%s1 + $0x20] sm:$0xff]
  %v39 = vld [vmem:[%s1 + $0x28] sm:$0xff]
  %v40 = vld [vmem:[%s1 + $0x30] sm:$0xff]
  %v41 = vld [vmem:[%s1 + $0x38] sm:$0xff]
  %v42 = vld [vmem:[%s1 + $0x40] sm:$0xff]
  %v43 = vld [vmem:[%s1 + $0x48] sm:$0xff]
  %v44 = vld [vmem:[%s1 + $0x50] sm:$0xff]
  %v45 = vld [vmem:[%s1 + $0x58] sm:$0xff]
  %v46 = vld [vmem:[%s1 + $0x60] sm:$0xff]
  %v47 = vld [vmem:[%s1 + $0x68] sm:$0xff]
  %v48 = vld [vmem:[%s1 + $0x70] sm:$0xff]
  %v49 = vld [vmem:[%s1 + $0x78] sm:$0xff]
  %v50 = vld [vmem:[%s1 + $0x80] sm:$0xff]
  %v51 = vld [vmem:[%s1 + $0x88] sm:$0xff]
  %v52 = vld [vmem:[%s1 + $0x90] sm:$0xff]
  %v53 = vld [vmem:[%s1 + $0x98] sm:$0xff]
  %v54 = vld [vmem:[%s1 + $0xa0] sm:$0xff]
  %v55 = vld [vmem:[%s1 + $0xa8] sm:$0xff]
  %v56 = vld [vmem:[%s1 + $0xb0] sm:$0xff]
  %v57 = vld [vmem:[%s1 + $0xb8] sm:$0xff]
  %v58 = vld [vmem:[%s1 + $0xc0] sm:$0xff]
  %v59 = vld [vmem:[%s1 + $0xc8] sm:$0xff]
  %v60 = vld [vmem:[%s1 + $0xd0] sm:$0xff]
  %v61 = vld [vmem:[%s1 + $0xd8] sm:$0xff]
  %v62 = vld [vmem:[%s1 + $0xe0] sm:$0xff]
  %v63 = vld [vmem:[%s1 + $0xe8] sm:$0xff]
  %v64 = vld [vmem:[%s1 + $0xf0] sm:$0xff]
  %v65 = vld [vmem:[%s1 + $0xf8] sm:$0xff]
  %v66 = vld [vmem:[%s1 + $0x100] sm:$0xff]
  %v67 = vld [vmem:[%s1 + $0x108] sm:$0xff]
  %v68 = vld [vmem:[%s1 + $0x110] sm:$0xff]
  %v69 = vld [vmem:[%s1 + $0x118] sm:$0xff]
  %v70 = vld [vmem:[%s1 + $0x120] sm:$0xff]
  %v71 = vld [vmem:[%s1 + $0x128] sm:$0xff]
  %v72 = vld [vmem:[%s1 + $0x130] sm:$0xff]
  %v73 = vld [vmem:[%s1 + $0x138] sm:$0xff]
  %v74 = vld [vmem:[%s1 + $0x140] sm:$0xff]
  %v75 = vld [vmem:[%s1 + $0x148] sm:$0xff]
  %v76 = vld [vmem:[%s1 + $0x150] sm:$0xff]
  %v77 = vld [vmem:[%s1 + $0x158] sm:$0xff]
  %v78 = vld [vmem:[%s1 + $0x160] sm:$0xff]
  %v79 = vld [vmem:[%s1 + $0x168] sm:$0xff]
  %v80 = vld [vmem:[%s1 + $0x170] sm:$0xff]
  %v81 = vld [vmem:[%s1 + $0x178] sm:$0xff]
  %v82 = vld [vmem:[%s1 + $0x180] sm:$0xff]
  %v83 = vld [vmem:[%s1 + $0x188] sm:$0xff]
  %v84 = vld [vmem:[%s1 + $0x190] sm:$0xff]
  %v85 = vld [vmem:[%s1 + $0x198] sm:$0xff]
  %v86 = vld [vmem:[%s1 + $0x1a0] sm:$0xff]
  %v87 = vld [vmem:[%s1 + $0x1a8] sm:$0xff]
  %v88 = vld [vmem:[%s1 + $0x1b0] sm:$0xff]
  %v89 = vld [vmem:[%s1 + $0x1b8] sm:$0xff]
  %v90 = vld [vmem:[%s1 + $0x1c0] sm:$0xff]
  %v91 = vld [vmem:[%s1 + $0x1c8] sm:$0xff]
  %v92 = vld [vmem:[%s1 + $0x1d0] sm:$0xff]
  %v93 = vld [vmem:[%s1 + $0x1d8] sm:$0xff]
  %v94 = vld [vmem:[%s1 + $0x1e0] sm:$0xff]
  %v95 = vld [vmem:[%s1 + $0x1e8] sm:$0xff]
  %v96 = vld [vmem:[%s1 + $0x1f0] sm:$0xff]
  %v97 = vld [vmem:[%s1 + $0x1f8] sm:$0xff]
  %v98 = vld [vmem:[%s1 + $0x200] sm:$0xff]
  %v99 = vld [vmem:[%s1 + $0x208] sm:$0xff]
  %v100 = vld [vmem:[%s1 + $0x210] sm:$0xff]
  %v101 = vld [vmem:[%s1 + $0x218] sm:$0xff]
  %v102 = vld [vmem:[%s1 + $0x220] sm:$0xff]
  %v103 = vld [vmem:[%s1 + $0x228] sm:$0xff]
  %v104 = vld [vmem:[%s1 + $0x230] sm:$0xff]
  %v105 = vld [vmem:[%s1 + $0x238] sm:$0xff]
  %v106 = vld [vmem:[%s1 + $0x240] sm:$0xff]
  %v107 = vld [vmem:[%s1 + $0x248] sm:$0xff]
  %v108 = vld [vmem:[%s1 + $0x250] sm:$0xff]
  %v109 = vld [vmem:[%s1 + $0x258] sm:$0xff]
  %v110 = vld [vmem:[%s1 + $0x260] sm:$0xff]
  %v111 = vld [vmem:[%s1 + $0x268] sm:$0xff]
  %v112 = vld [vmem:[%s1 + $0x270] sm:$0xff]
  %v113 = vld [vmem:[%s1 + $0x278] sm:$0xff]
  %v114 = vld [vmem:[%s1 + $0x280] sm:$0xff]
  %v115 = vld [vmem:[%s1 + $0x288] sm:$0xff]
  %v116 = vld [vmem:[%s1 + $0x290] sm:$0xff]
  %v117 = vld [vmem:[%s1 + $0x298] sm:$0xff]
  %v118 = vld [vmem:[%s1 + $0x2a0] sm:$0xff]
  %v119 = vld [vmem:[%s1 + $0x2a8] sm:$0xff]
  %v120 = vld [vmem:[%s1 + $0x2b0] sm:$0xff]
  %v121 = vld [vmem:[%s1 + $0x2b8] sm:$0xff]
  %v122 = vld [vmem:[%s1 + $0x2c0] sm:$0xff]
  %v123 = vld [vmem:[%s1 + $0x2c8] sm:$0xff]
  %v124 = vld [vmem:[%s1 + $0x2d0] sm:$0xff]
  %v125 = vld [vmem:[%s1 + $0x2d8] sm:$0xff]
  %v126 = vld [vmem:[%s1 + $0x2e0] sm:$0xff]
  %v127 = vld [vmem:[%s1 + $0x2e8] sm:$0xff]
  %v128 = vld [vmem:[%s1 + $0x2f0] sm:$0xff]
  %v129 = vld [vmem:[%s1 + $0x2f8] sm:$0xff]
  %v130 = vld [vmem:[%s1 + $0x300] sm:$0xff]
  %v131 = vld [vmem:[%s1 + $0x308] sm:$0xff]
  %v132 = vld [vmem:[%s1 + $0x310] sm:$0xff]
  %v133 = vld [vmem:[%s1 + $0x318] sm:$0xff]
  %v134 = vld [vmem:[%s1 + $0x320] sm:$0xff]
  %v135 = vld [vmem:[%s1 + $0x328] sm:$0xff]
  %v136 = vld [vmem:[%s1 + $0x330] sm:$0xff]
  %v137 = vld [vmem:[%s1 + $0x338] sm:$0xff]
  %v138 = vld [vmem:[%s1 + $0x340] sm:$0xff]
  %v139 = vld [vmem:[%s1 + $0x348] sm:$0xff]
  %v140 = vld [vmem:[%s1 + $0x350] sm:$0xff]
  %v141 = vld [vmem:[%s1 + $0x358] sm:$0xff]
  %v142 = vld [vmem:[%s1 + $0x360] sm:$0xff]
  %v143 = vld [vmem:[%s1 + $0x368] sm:$0xff]
  %v144 = vld [vmem:[%s1 + $0x370] sm:$0xff]
  %v145 = vld [vmem:[%s1 + $0x378] sm:$0xff]
  %v146 = vld [vmem:[%s1 + $0x380] sm:$0xff]
  %v147 = vld [vmem:[%s1 + $0x388] sm:$0xff]
  %v148 = vld [vmem:[%s1 + $0x390] sm:$0xff]
  %v149 = vld [vmem:[%s1 + $0x398] sm:$0xff]
  %v150 = vld [vmem:[%s1 + $0x3a0] sm:$0xff]
  %v151 = vld [vmem:[%s1 + $0x3a8] sm:$0xff]
  %v152 = vld [vmem:[%s1 + $0x3b0] sm:$0xff]
  %v153 = vld [vmem:[%s1 + $0x3b8] sm:$0xff]
  %v154 = vld [vmem:[%s1 + $0x3c0] sm:$0xff]
  %v155 = vld [vmem:[%s1 + $0x3c8] sm:$0xff]
  %v156 = vld [vmem:[%s1 + $0x3d0] sm:$0xff]
  %v157 = vld [vmem:[%s1 + $0x3d8] sm:$0xff]
  %v158 = vld [vmem:[%s1 + $0x3e0] sm:$0xff]
  %v159 = vld [vmem:[%s1 + $0x3e8] sm:$0xff]
  %v160 = vld [vmem:[%s1 + $0x3f0] sm:$0xff]
  %v161 = vld [vmem:[%s1 + $0x3f8] sm:$0xff]
  %v162 = vld [vmem:[%s1 + $0x400] sm:$0xff]
  %v163 = vld [vmem:[%s1 + $0x408] sm:$0xff]
  %v164 = vld [vmem:[%s1 + $0x410] sm:$0xff]
  %v165 = vld [vmem:[%s1 + $0x418] sm:$0xff]
  %v166 = vld [vmem:[%s1 + $0x420] sm:$0xff]
  %v167 = vld [vmem:[%s1 + $0x428] sm:$0xff]
  %v168 = vld [vmem:[%s1 + $0x430] sm:$0xff]
  %v169 = vld [vmem:[%s1 + $0x438] sm:$0xff]
  %v170 = vld [vmem:[%s1 + $0x440] sm:$0xff]
  %v171 = vld [vmem:[%s1 + $0x448] sm:$0xff]
  %v172 = vld [vmem:[%s1 + $0x450] sm:$0xff]
  %v173 = vld [vmem:[%s1 + $0x458] sm:$0xff]
  %v174 = vld [vmem:[%s1 + $0x460] sm:$0xff]
  %v175 = vld [vmem:[%s1 + $0x468] sm:$0xff]
  %v176 = vld [vmem:[%s1 + $0x470] sm:$0xff]
  %v177 = vld [vmem:[%s1 + $0x478] sm:$0xff]
  %v178 = vld [vmem:[%s1 + $0x480] sm:$0xff]
  %v179 = vld [vmem:[%s1 + $0x488] sm:$0xff]
  %v180 = vld [vmem:[%s1 + $0x490] sm:$0xff]
  %v181 = vld [vmem:[%s1 + $0x498] sm:$0xff]
  %v182 = vld [vmem:[%s1 + $0x4a0] sm:$0xff]
  %v183 = vld [vmem:[%s1 + $0x4a8] sm:$0xff]
  %v184 = vld [vmem:[%s1 + $0x4b0] sm:$0xff]
  %v185 = vld [vmem:[%s1 + $0x4b8] sm:$0xff]
  %v186 = vld [vmem:[%s1 + $0x4c0] sm:$0xff]
  %v187 = vld [vmem:[%s1 + $0x4c8] sm:$0xff]
  %v188 = vld [vmem:[%s1 + $0x4d0] sm:$0xff]
  %v189 = vld [vmem:[%s1 + $0x4d8] sm:$0xff]
  %v190 = vld [vmem:[%s1 + $0x4e0] sm:$0xff]
  %v191 = vld [vmem:[%s1 + $0x4e8] sm:$0xff]
  %v192 = vld [vmem:[%s1 + $0x4f0] sm:$0xff]
  %v193 = vld [vmem:[%s1 + $0x4f8] sm:$0xff]
  %v194 = vld [vmem:[%s1 + $0x500] sm:$0xff]
  %v195 = vld [vmem:[%s1 + $0x508] sm:$0xff]
  %v196 = vld [vmem:[%s1 + $0x510] sm:$0xff]
  %v197 = vld [vmem:[%s1 + $0x518] sm:$0xff]
  %v198 = vld [vmem:[%s1 + $0x520] sm:$0xff]
  %v199 = vld [vmem:[%s1 + $0x528] sm:$0xff]
  %v200 = vld [vmem:[%s1 + $0x530] sm:$0xff]
  %v201 = vld [vmem:[%s1 + $0x538] sm:$0xff]
  %v202 = vld [vmem:[%s1 + $0x540] sm:$0xff]
  %v203 = vld [vmem:[%s1 + $0x548] sm:$0xff]
  %v204 = vld [vmem:[%s1 + $0x550] sm:$0xff]
  %v205 = vld [vmem:[%s1 + $0x558] sm:$0xff]
  %v206 = vld [vmem:[%s1 + $0x560] sm:$0xff]
  %v207 = vld [vmem:[%s1 + $0x568] sm:$0xff]
  %v208 = vld [vmem:[%s1 + $0x570] sm:$0xff]
  %v209 = vld [vmem:[%s1 + $0x578] sm:$0xff]
  %v210 = vld [vmem:[%s1 + $0x580] sm:$0xff]
  %v211 = vld [vmem:[%s1 + $0x588] sm:$0xff]
  %v212 = vld [vmem:[%s1 + $0x590] sm:$0xff]
  %v213 = vld [vmem:[%s1 + $0x598] sm:$0xff]
  %v214 = vld [vmem:[%s1 + $0x5a0] sm:$0xff]
  %v215 = vld [vmem:[%s1 + $0x5a8] sm:$0xff]
  %v216 = vld [vmem:[%s1 + $0x5b0] sm:$0xff]
  %v217 = vld [vmem:[%s1 + $0x5b8] sm:$0xff]
  %v218 = vld [vmem:[%s1 + $0x5c0] sm:$0xff]
  %v219 = vld [vmem:[%s1 + $0x5c8] sm:$0xff]
  %v220 = vld [vmem:[%s1 + $0x5d0] sm:$0xff]
  %v221 = vld [vmem:[%s1 + $0x5d8] sm:$0xff]
  %v222 = vld [vmem:[%s1 + $0x5e0] sm:$0xff]
  %v223 = vld [vmem:[%s1 + $0x5e8] sm:$0xff]
  %v224 = vld [vmem:[%s1 + $0x5f0] sm:$0xff]
  %v225 = vld [vmem:[%s1 + $0x5f8] sm:$0xff]
  %v226 = vld [vmem:[%s1 + $0x600] sm:$0xff]
  %v227 = vld [vmem:[%s1 + $0x608] sm:$0xff]
  %v228 = vld [vmem:[%s1 + $0x610] sm:$0xff]
  %v229 = vld [vmem:[%s1 + $0x618] sm:$0xff]
  %v230 = vld [vmem:[%s1 + $0x620] sm:$0xff]
  %v231 = vld [vmem:[%s1 + $0x628] sm:$0xff]
  %v232 = vld [vmem:[%s1 + $0x630] sm:$0xff]
  %v233 = vld [vmem:[%s1 + $0x638] sm:$0xff]
  %v234 = vld [vmem:[%s1 + $0x640] sm:$0xff]
  %v235 = vld [vmem:[%s1 + $0x648] sm:$0xff]
  %v236 = vld [vmem:[%s1 + $0x650] sm:$0xff]
  %v237 = vld [vmem:[%s1 + $0x658] sm:$0xff]
  %v238 = vld [vmem:[%s1 + $0x660] sm:$0xff]
  %v239 = vld [vmem:[%s1 + $0x668] sm:$0xff]
  %v240 = vld [vmem:[%s1 + $0x670] sm:$0xff]
  %v241 = vld [vmem:[%s1 + $0x678] sm:$0xff]
  %v242 = vld [vmem:[%s1 + $0x680] sm:$0xff]
  %v243 = vld [vmem:[%s1 + $0x688] sm:$0xff]
  %v244 = vld [vmem:[%s1 + $0x690] sm:$0xff]
  %v245 = vld [vmem:[%s1 + $0x698] sm:$0xff]
  %v246 = vld [vmem:[%s1 + $0x6a0] sm:$0xff]
  %v247 = vld [vmem:[%s1 + $0x6a8] sm:$0xff]
  %v248 = vld [vmem:[%s1 + $0x6b0] sm:$0xff]
  %v249 = vld [vmem:[%s1 + $0x6b8] sm:$0xff]
  %v250 = vld [vmem:[%s1 + $0x6c0] sm:$0xff]
  %v251 = vld [vmem:[%s1 + $0x6c8] sm:$0xff]
  %v252 = vld [vmem:[%s1 + $0x6d0] sm:$0xff]
  %v253 = vld [vmem:[%s1 + $0x6d8] sm:$0xff]
  %v254 = vld [vmem:[%s1 + $0x6e0] sm:$0xff]
  %v255 = vld [vmem:[%s1 + $0x6e8] sm:$0xff]
  %v256 = vld [vmem:[%s1 + $0x6f0] sm:$0xff]
  %v257 = vld [vmem:[%s1 + $0x6f8] sm:$0xff]
  %v258 = vld [vmem:[%s1 + $0x700] sm:$0xff]
  %v259 = vld [vmem:[%s1 + $0x708] sm:$0xff]
  %v260 = vld [vmem:[%s1 + $0x710] sm:$0xff]
  %v261 = vld [vmem:[%s1 + $0x718] sm:$0xff]
  %v262 = vld [vmem:[%s1 + $0x720] sm:$0xff]
  %v263 = vld [vmem:[%s1 + $0x728] sm:$0xff]
  %v264 = vld [vmem:[%s1 + $0x730] sm:$0xff]
  %v265 = vld [vmem:[%s1 + $0x738] sm:$0xff]
  %v266 = vld [vmem:[%s1 + $0x740] sm:$0xff]
  %v267 = vld [vmem:[%s1 + $0x748] sm:$0xff]
  %v268 = vld [vmem:[%s1 + $0x750] sm:$0xff]
  %v269 = vld [vmem:[%s1 + $0x758] sm:$0xff]
  %v270 = vld [vmem:[%s1 + $0x760] sm:$0xff]
  %v271 = vld [vmem:[%s1 + $0x768] sm:$0xff]
  %v272 = vld [vmem:[%s1 + $0x770] sm:$0xff]
  %v273 = vld [vmem:[%s1 + $0x778] sm:$0xff]
  %v274 = vld [vmem:[%s1 + $0x780] sm:$0xff]
  %v275 = vld [vmem:[%s1 + $0x788] sm:$0xff]
  %v276 = vld [vmem:[%s1 + $0x790] sm:$0xff]
  %v277 = vld [vmem:[%s1 + $0x798] sm:$0xff]
  %v278 = vld [vmem:[%s1 + $0x7a0] sm:$0xff]
  %v279 = vld [vmem:[%s1 + $0x7a8] sm:$0xff]
  %v280 = vld [vmem:[%s1 + $0x7b0] sm:$0xff]
  %v281 = vld [vmem:[%s1 + $0x7b8] sm:$0xff]
  %v282 = vld [vmem:[%s1 + $0x7c0] sm:$0xff]
  %v283 = vld [vmem:[%s1 + $0x7c8] sm:$0xff]
  %v284 = vld [vmem:[%s1 + $0x7d0] sm:$0xff]
  %v285 = vld [vmem:[%s1 + $0x7d8] sm:$0xff]
  %v286 = vld [vmem:[%s1 + $0x7e0] sm:$0xff]
  %v287 = vld [vmem:[%s1 + $0x7e8] sm:$0xff]
  %v288 = vld [vmem:[%s1 + $0x7f0] sm:$0xff]
  %v289 = vld [vmem:[%s1 + $0x7f8] sm:$0xff]
  %v290 = vld [vmem:[%s1 + $0x800] sm:$0xff]
  %v291 = vld [vmem:[%s1 + $0x808] sm:$0xff]
  %v292 = vld [vmem:[%s1 + $0x810] sm:$0xff]
  %v293 = vld [vmem:[%s1 + $0x818] sm:$0xff]
  %v294 = vld [vmem:[%s1 + $0x820] sm:$0xff]
  %v295 = vld [vmem:[%s1 + $0x828] sm:$0xff]
  %v296 = vld [vmem:[%s1 + $0x830] sm:$0xff]
  %v297 = vld [vmem:[%s1 + $0x838] sm:$0xff]
  %v298 = vld [vmem:[%s1 + $0x840] sm:$0xff]
  %v299 = vld [vmem:[%s1 + $0x848] sm:$0xff]
  %v300 = vld [vmem:[%s1 + $0x850] sm:$0xff]
  %v301 = vld [vmem:[%s1 + $0x858] sm:$0xff]
  %v302 = vld [vmem:[%s1 + $0x860] sm:$0xff]
  %v303 = vld [vmem:[%s1 + $0x868] sm:$0xff]
  %v304 = vld [vmem:[%s1 + $0x870] sm:$0xff]
  %v305 = vld [vmem:[%s1 + $0x878] sm:$0xff]
  %v306 = vld [vmem:[%s1 + $0x880] sm:$0xff]
  %v307 = vld [vmem:[%s1 + $0x888] sm:$0xff]
  %v308 = vld [vmem:[%s1 + $0x890] sm:$0xff]
  %v309 = vld [vmem:[%s1 + $0x898] sm:$0xff]
  %v310 = vld [vmem:[%s1 + $0x8a0] sm:$0xff]
  %v311 = vld [vmem:[%s1 + $0x8a8] sm:$0xff]
  %v312 = vld [vmem:[%s1 + $0x8b0] sm:$0xff]
  %v313 = vld [vmem:[%s1 + $0x8b8] sm:$0xff]
  %v314 = vld [vmem:[%s1 + $0x8c0] sm:$0xff]
  %v315 = vld [vmem:[%s1 + $0x8c8] sm:$0xff]
  %v316 = vld [vmem:[%s1 + $0x8d0] sm:$0xff]
  %v317 = vld [vmem:[%s1 + $0x8d8] sm:$0xff]
  %v318 = vld [vmem:[%s1 + $0x8e0] sm:$0xff]
  %v319 = vld [vmem:[%s1 + $0x8e8] sm:$0xff]
  %v320 = vld [vmem:[%s1 + $0x8f0] sm:$0xff]
  %v321 = vld [vmem:[%s1 + $0x8f8] sm:$0xff]
  %v322 = vld [vmem:[%s2] sm:$0xf]
  %v324 = vperm.slane %v322, 0
  %v325 = vperm.slane %v322, 1
  %v326 = vperm.slane %v322, 2
  %v327 = vperm.slane %v322, 3
  %v352 = vunpack.c.l.b16 %v14
  %v353 = vunpack.c.h.b16 %v14
  %v354 = vunpack.c.l.b16 %v15
  %v355 = vunpack.c.h.b16 %v15
  %v356 = vunpack.c.l.b16 %v16
  %v357 = vunpack.c.h.b16 %v16
  %v358 = vunpack.c.l.b16 %v17
  %v359 = vunpack.c.h.b16 %v17
  %v360 = vunpack.c.l.b16 %v18
  %v361 = vunpack.c.l.b16 %v19
  %v362 = vunpack.c.h.b16 %v19
  %v363 = vunpack.c.l.b16 %v20
  %v364 = vunpack.c.h.b16 %v20
  %v365 = vunpack.c.l.b16 %v21
  %v366 = vunpack.c.h.b16 %v21
  %v367 = vunpack.c.l.b16 %v22
  %v368 = vunpack.c.h.b16 %v22
  %v369 = vunpack.c.l.b16 %v23
  %v370 = vunpack.c.l.b16 %v24
  %v371 = vunpack.c.h.b16 %v24
  %v372 = vunpack.c.l.b16 %v25
  %v373 = vunpack.c.h.b16 %v25
  %v374 = vunpack.c.l.b16 %v26
  %v375 = vunpack.c.h.b16 %v26
  %v376 = vunpack.c.l.b16 %v27
  %v377 = vunpack.c.h.b16 %v27
  %v378 = vunpack.c.l.b16 %v28
  %v379 = vunpack.c.l.b16 %v29
  %v380 = vunpack.c.h.b16 %v29
  %v381 = vunpack.c.l.b16 %v30
  %v382 = vunpack.c.h.b16 %v30
  %v383 = vunpack.c.l.b16 %v31
  %v384 = vunpack.c.h.b16 %v31
  %v385 = vunpack.c.l.b16 %v32
  %v386 = vunpack.c.h.b16 %v32
  %v387 = vunpack.c.l.b16 %v33
  %v388 = vpack.c.b16 %v361, %v352
  %v389 = vpack.c.b16 %v362, %v353
  %v390 = vpack.c.b16 %v363, %v354
  %v391 = vpack.c.b16 %v364, %v355
  %v392 = vpack.c.b16 %v365, %v356
  %v393 = vpack.c.b16 %v366, %v357
  %v394 = vpack.c.b16 %v367, %v358
  %v395 = vpack.c.b16 %v368, %v359
  %v396 = vpack.c.b16 %v369, %v360
  %v397 = vpack.c.b16 %v379, %v370
  %v398 = vpack.c.b16 %v380, %v371
  %v399 = vpack.c.b16 %v381, %v372
  %v400 = vpack.c.b16 %v382, %v373
  %v401 = vpack.c.b16 %v383, %v374
  %v402 = vpack.c.b16 %v384, %v375
  %v403 = vpack.c.b16 %v385, %v376
  %v404 = vpack.c.b16 %v386, %v377
  %v405 = vpack.c.b16 %v387, %v378
  %v712 = vunpack.c.l.b16 %v34
  %v713 = vunpack.c.h.b16 %v34
  %v714 = vunpack.c.l.b16 %v35
  %v715 = vunpack.c.h.b16 %v35
  %v716 = vunpack.c.l.b16 %v36
  %v717 = vunpack.c.h.b16 %v36
  %v718 = vunpack.c.l.b16 %v37
  %v719 = vunpack.c.h.b16 %v37
  %v720 = vunpack.c.l.b16 %v38
  %v721 = vunpack.c.h.b16 %v38
  %v722 = vunpack.c.l.b16 %v39
  %v723 = vunpack.c.h.b16 %v39
  %v724 = vunpack.c.l.b16 %v40
  %v725 = vunpack.c.h.b16 %v40
  %v726 = vunpack.c.l.b16 %v41
  %v727 = vunpack.c.h.b16 %v41
  %v728 = vunpack.c.l.b16 %v42
  %v729 = vunpack.c.h.b16 %v42
  %v730 = vunpack.c.l.b16 %v43
  %v731 = vunpack.c.h.b16 %v43
  %v732 = vunpack.c.l.b16 %v44
  %v733 = vunpack.c.h.b16 %v44
  %v734 = vunpack.c.l.b16 %v45
  %v735 = vunpack.c.h.b16 %v45
  %v736 = vunpack.c.l.b16 %v46
  %v737 = vunpack.c.h.b16 %v46
  %v738 = vunpack.c.l.b16 %v47
  %v739 = vunpack.c.h.b16 %v47
  %v740 = vunpack.c.l.b16 %v48
  %v741 = vunpack.c.h.b16 %v48
  %v742 = vunpack.c.l.b16 %v49
  %v743 = vunpack.c.h.b16 %v49
  %v744 = vunpack.c.l.b16 %v50
  %v745 = vunpack.c.h.b16 %v50
  %v746 = vunpack.c.l.b16 %v51
  %v747 = vunpack.c.h.b16 %v51
  %v748 = vunpack.c.l.b16 %v52
  %v749 = vunpack.c.h.b16 %v52
  %v750 = vunpack.c.l.b16 %v53
  %v751 = vunpack.c.h.b16 %v53
  %v752 = vunpack.c.l.b16 %v54
  %v753 = vunpack.c.h.b16 %v54
  %v754 = vunpack.c.l.b16 %v55
  %v755 = vunpack.c.h.b16 %v55
  %v756 = vunpack.c.l.b16 %v56
  %v757 = vunpack.c.h.b16 %v56
  %v758 = vunpack.c.l.b16 %v57
  %v759 = vunpack.c.h.b16 %v57
  %v760 = vunpack.c.l.b16 %v58
  %v761 = vunpack.c.h.b16 %v58
  %v762 = vunpack.c.l.b16 %v59
  %v763 = vunpack.c.h.b16 %v59
  %v764 = vunpack.c.l.b16 %v60
  %v765 = vunpack.c.h.b16 %v60
  %v766 = vunpack.c.l.b16 %v61
  %v767 = vunpack.c.h.b16 %v61
  %v768 = vunpack.c.l.b16 %v62
  %v769 = vunpack.c.h.b16 %v62
  %v770 = vunpack.c.l.b16 %v63
  %v771 = vunpack.c.h.b16 %v63
  %v772 = vunpack.c.l.b16 %v64
  %v773 = vunpack.c.h.b16 %v64
  %v774 = vunpack.c.l.b16 %v65
  %v775 = vunpack.c.h.b16 %v65
  %v776 = vunpack.c.l.b16 %v66
  %v777 = vunpack.c.h.b16 %v66
  %v778 = vunpack.c.l.b16 %v67
  %v779 = vunpack.c.h.b16 %v67
  %v780 = vunpack.c.l.b16 %v68
  %v781 = vunpack.c.h.b16 %v68
  %v782 = vunpack.c.l.b16 %v69
  %v783 = vunpack.c.h.b16 %v69
  %v784 = vunpack.c.l.b16 %v70
  %v785 = vunpack.c.h.b16 %v70
  %v786 = vunpack.c.l.b16 %v71
  %v787 = vunpack.c.h.b16 %v71
  %v788 = vunpack.c.l.b16 %v72
  %v789 = vunpack.c.h.b16 %v72
  %v790 = vunpack.c.l.b16 %v73
  %v791 = vunpack.c.h.b16 %v73
  %v792 = vunpack.c.l.b16 %v74
  %v793 = vunpack.c.h.b16 %v74
  %v794 = vunpack.c.l.b16 %v75
  %v795 = vunpack.c.h.b16 %v75
  %v796 = vunpack.c.l.b16 %v76
  %v797 = vunpack.c.h.b16 %v76
  %v798 = vunpack.c.l.b16 %v77
  %v799 = vunpack.c.h.b16 %v77
  %v800 = vunpack.c.l.b16 %v78
  %v801 = vunpack.c.h.b16 %v78
  %v802 = vunpack.c.l.b16 %v79
  %v803 = vunpack.c.h.b16 %v79
  %v804 = vunpack.c.l.b16 %v80
  %v805 = vunpack.c.h.b16 %v80
  %v806 = vunpack.c.l.b16 %v81
  %v807 = vunpack.c.h.b16 %v81
  %v808 = vunpack.c.l.b16 %v82
  %v809 = vunpack.c.h.b16 %v82
  %v810 = vunpack.c.l.b16 %v83
  %v811 = vunpack.c.h.b16 %v83
  %v812 = vunpack.c.l.b16 %v84
  %v813 = vunpack.c.h.b16 %v84
  %v814 = vunpack.c.l.b16 %v85
  %v815 = vunpack.c.h.b16 %v85
  %v816 = vunpack.c.l.b16 %v86
  %v817 = vunpack.c.h.b16 %v86
  %v818 = vunpack.c.l.b16 %v87
  %v819 = vunpack.c.h.b16 %v87
  %v820 = vunpack.c.l.b16 %v88
  %v821 = vunpack.c.h.b16 %v88
  %v822 = vunpack.c.l.b16 %v89
  %v823 = vunpack.c.h.b16 %v89
  %v824 = vunpack.c.l.b16 %v90
  %v825 = vunpack.c.h.b16 %v90
  %v826 = vunpack.c.l.b16 %v91
  %v827 = vunpack.c.h.b16 %v91
  %v828 = vunpack.c.l.b16 %v92
  %v829 = vunpack.c.h.b16 %v92
  %v830 = vunpack.c.l.b16 %v93
  %v831 = vunpack.c.h.b16 %v93
  %v832 = vunpack.c.l.b16 %v94
  %v833 = vunpack.c.h.b16 %v94
  %v834 = vunpack.c.l.b16 %v95
  %v835 = vunpack.c.h.b16 %v95
  %v836 = vunpack.c.l.b16 %v96
  %v837 = vunpack.c.h.b16 %v96
  %v838 = vunpack.c.l.b16 %v97
  %v839 = vunpack.c.h.b16 %v97
  %v840 = vunpack.c.l.b16 %v98
  %v841 = vunpack.c.h.b16 %v98
  %v842 = vunpack.c.l.b16 %v99
  %v843 = vunpack.c.h.b16 %v99
  %v844 = vunpack.c.l.b16 %v100
  %v845 = vunpack.c.h.b16 %v100
  %v846 = vunpack.c.l.b16 %v101
  %v847 = vunpack.c.h.b16 %v101
  %v848 = vunpack.c.l.b16 %v102
  %v849 = vunpack.c.h.b16 %v102
  %v850 = vunpack.c.l.b16 %v103
  %v851 = vunpack.c.h.b16 %v103
  %v852 = vunpack.c.l.b16 %v104
  %v853 = vunpack.c.h.b16 %v104
  %v854 = vunpack.c.l.b16 %v105
  %v855 = vunpack.c.h.b16 %v105
  %v856 = vunpack.c.l.b16 %v106
  %v857 = vunpack.c.h.b16 %v106
  %v858 = vunpack.c.l.b16 %v107
  %v859 = vunpack.c.h.b16 %v107
  %v860 = vunpack.c.l.b16 %v108
  %v861 = vunpack.c.h.b16 %v108
  %v862 = vunpack.c.l.b16 %v109
  %v863 = vunpack.c.h.b16 %v109
  %v864 = vunpack.c.l.b16 %v110
  %v865 = vunpack.c.h.b16 %v110
  %v866 = vunpack.c.l.b16 %v111
  %v867 = vunpack.c.h.b16 %v111
  %v868 = vunpack.c.l.b16 %v112
  %v869 = vunpack.c.h.b16 %v112
  %v870 = vunpack.c.l.b16 %v113
  %v871 = vunpack.c.h.b16 %v113
  %v872 = vunpack.c.l.b16 %v114
  %v873 = vunpack.c.h.b16 %v114
  %v874 = vunpack.c.l.b16 %v115
  %v875 = vunpack.c.h.b16 %v115
  %v876 = vunpack.c.l.b16 %v116
  %v877 = vunpack.c.h.b16 %v116
  %v878 = vunpack.c.l.b16 %v117
  %v879 = vunpack.c.h.b16 %v117
  %v880 = vunpack.c.l.b16 %v118
  %v881 = vunpack.c.h.b16 %v118
  %v882 = vunpack.c.l.b16 %v119
  %v883 = vunpack.c.h.b16 %v119
  %v884 = vunpack.c.l.b16 %v120
  %v885 = vunpack.c.h.b16 %v120
  %v886 = vunpack.c.l.b16 %v121
  %v887 = vunpack.c.h.b16 %v121
  %v888 = vunpack.c.l.b16 %v122
  %v889 = vunpack.c.h.b16 %v122
  %v890 = vunpack.c.l.b16 %v123
  %v891 = vunpack.c.h.b16 %v123
  %v892 = vunpack.c.l.b16 %v124
  %v893 = vunpack.c.h.b16 %v124
  %v894 = vunpack.c.l.b16 %v125
  %v895 = vunpack.c.h.b16 %v125
  %v896 = vunpack.c.l.b16 %v126
  %v897 = vunpack.c.h.b16 %v126
  %v898 = vunpack.c.l.b16 %v127
  %v899 = vunpack.c.h.b16 %v127
  %v900 = vunpack.c.l.b16 %v128
  %v901 = vunpack.c.h.b16 %v128
  %v902 = vunpack.c.l.b16 %v129
  %v903 = vunpack.c.h.b16 %v129
  %v904 = vunpack.c.l.b16 %v130
  %v905 = vunpack.c.h.b16 %v130
  %v906 = vunpack.c.l.b16 %v131
  %v907 = vunpack.c.h.b16 %v131
  %v908 = vunpack.c.l.b16 %v132
  %v909 = vunpack.c.h.b16 %v132
  %v910 = vunpack.c.l.b16 %v133
  %v911 = vunpack.c.h.b16 %v133
  %v912 = vunpack.c.l.b16 %v134
  %v913 = vunpack.c.h.b16 %v134
  %v914 = vunpack.c.l.b16 %v135
  %v915 = vunpack.c.h.b16 %v135
  %v916 = vunpack.c.l.b16 %v136
  %v917 = vunpack.c.h.b16 %v136
  %v918 = vunpack.c.l.b16 %v137
  %v919 = vunpack.c.h.b16 %v137
  %v920 = vunpack.c.l.b16 %v138
  %v921 = vunpack.c.h.b16 %v138
  %v922 = vunpack.c.l.b16 %v139
  %v923 = vunpack.c.h.b16 %v139
  %v924 = vunpack.c.l.b16 %v140
  %v925 = vunpack.c.h.b16 %v140
  %v926 = vunpack.c.l.b16 %v141
  %v927 = vunpack.c.h.b16 %v141
  %v928 = vunpack.c.l.b16 %v142
  %v929 = vunpack.c.h.b16 %v142
  %v930 = vunpack.c.l.b16 %v143
  %v931 = vunpack.c.h.b16 %v143
  %v932 = vunpack.c.l.b16 %v144
  %v933 = vunpack.c.h.b16 %v144
  %v934 = vunpack.c.l.b16 %v145
  %v935 = vunpack.c.h.b16 %v145
  %v936 = vunpack.c.l.b16 %v146
  %v937 = vunpack.c.h.b16 %v146
  %v938 = vunpack.c.l.b16 %v147
  %v939 = vunpack.c.h.b16 %v147
  %v940 = vunpack.c.l.b16 %v148
  %v941 = vunpack.c.h.b16 %v148
  %v942 = vunpack.c.l.b16 %v149
  %v943 = vunpack.c.h.b16 %v149
  %v944 = vunpack.c.l.b16 %v150
  %v945 = vunpack.c.h.b16 %v150
  %v946 = vunpack.c.l.b16 %v151
  %v947 = vunpack.c.h.b16 %v151
  %v948 = vunpack.c.l.b16 %v152
  %v949 = vunpack.c.h.b16 %v152
  %v950 = vunpack.c.l.b16 %v153
  %v951 = vunpack.c.h.b16 %v153
  %v952 = vunpack.c.l.b16 %v154
  %v953 = vunpack.c.h.b16 %v154
  %v954 = vunpack.c.l.b16 %v155
  %v955 = vunpack.c.h.b16 %v155
  %v956 = vunpack.c.l.b16 %v156
  %v957 = vunpack.c.h.b16 %v156
  %v958 = vunpack.c.l.b16 %v157
  %v959 = vunpack.c.h.b16 %v157
  %v960 = vunpack.c.l.b16 %v158
  %v961 = vunpack.c.h.b16 %v158
  %v962 = vunpack.c.l.b16 %v159
  %v963 = vunpack.c.h.b16 %v159
  %v964 = vunpack.c.l.b16 %v160
  %v965 = vunpack.c.h.b16 %v160
  %v966 = vunpack.c.l.b16 %v161
  %v967 = vunpack.c.h.b16 %v161
  %v968 = vunpack.c.l.b16 %v162
  %v969 = vunpack.c.h.b16 %v162
  %v970 = vunpack.c.l.b16 %v163
  %v971 = vunpack.c.h.b16 %v163
  %v972 = vunpack.c.l.b16 %v164
  %v973 = vunpack.c.h.b16 %v164
  %v974 = vunpack.c.l.b16 %v165
  %v975 = vunpack.c.h.b16 %v165
  %v976 = vunpack.c.l.b16 %v166
  %v977 = vunpack.c.h.b16 %v166
  %v978 = vunpack.c.l.b16 %v167
  %v979 = vunpack.c.h.b16 %v167
  %v980 = vunpack.c.l.b16 %v168
  %v981 = vunpack.c.h.b16 %v168
  %v982 = vunpack.c.l.b16 %v169
  %v983 = vunpack.c.h.b16 %v169
  %v984 = vunpack.c.l.b16 %v170
  %v985 = vunpack.c.h.b16 %v170
  %v986 = vunpack.c.l.b16 %v171
  %v987 = vunpack.c.h.b16 %v171
  %v988 = vunpack.c.l.b16 %v172
  %v989 = vunpack.c.h.b16 %v172
  %v990 = vunpack.c.l.b16 %v173
  %v991 = vunpack.c.h.b16 %v173
  %v992 = vunpack.c.l.b16 %v174
  %v993 = vunpack.c.h.b16 %v174
  %v994 = vunpack.c.l.b16 %v175
  %v995 = vunpack.c.h.b16 %v175
  %v996 = vunpack.c.l.b16 %v176
  %v997 = vunpack.c.h.b16 %v176
  %v998 = vunpack.c.l.b16 %v177
  %v999 = vunpack.c.h.b16 %v177
  %v1000 = vunpack.c.l.b16 %v178
  %v1001 = vunpack.c.h.b16 %v178
  %v1002 = vunpack.c.l.b16 %v179
  %v1003 = vunpack.c.h.b16 %v179
  %v1004 = vunpack.c.l.b16 %v180
  %v1005 = vunpack.c.h.b16 %v180
  %v1006 = vunpack.c.l.b16 %v181
  %v1007 = vunpack.c.h.b16 %v181
  %v1008 = vunpack.c.l.b16 %v182
  %v1009 = vunpack.c.h.b16 %v182
  %v1010 = vunpack.c.l.b16 %v183
  %v1011 = vunpack.c.h.b16 %v183
  %v1012 = vunpack.c.l.b16 %v184
  %v1013 = vunpack.c.h.b16 %v184
  %v1014 = vunpack.c.l.b16 %v185
  %v1015 = vunpack.c.h.b16 %v185
  %v1016 = vunpack.c.l.b16 %v186
  %v1017 = vunpack.c.h.b16 %v186
  %v1018 = vunpack.c.l.b16 %v187
  %v1019 = vunpack.c.h.b16 %v187
  %v1020 = vunpack.c.l.b16 %v188
  %v1021 = vunpack.c.h.b16 %v188
  %v1022 = vunpack.c.l.b16 %v189
  %v1023 = vunpack.c.h.b16 %v189
  %v1024 = vunpack.c.l.b16 %v190
  %v1025 = vunpack.c.h.b16 %v190
  %v1026 = vunpack.c.l.b16 %v191
  %v1027 = vunpack.c.h.b16 %v191
  %v1028 = vunpack.c.l.b16 %v192
  %v1029 = vunpack.c.h.b16 %v192
  %v1030 = vunpack.c.l.b16 %v193
  %v1031 = vunpack.c.h.b16 %v193
  %v1032 = vunpack.c.l.b16 %v194
  %v1033 = vunpack.c.h.b16 %v194
  %v1034 = vunpack.c.l.b16 %v195
  %v1035 = vunpack.c.h.b16 %v195
  %v1036 = vunpack.c.l.b16 %v196
  %v1037 = vunpack.c.h.b16 %v196
  %v1038 = vunpack.c.l.b16 %v197
  %v1039 = vunpack.c.h.b16 %v197
  %v1040 = vunpack.c.l.b16 %v198
  %v1041 = vunpack.c.h.b16 %v198
  %v1042 = vunpack.c.l.b16 %v199
  %v1043 = vunpack.c.h.b16 %v199
  %v1044 = vunpack.c.l.b16 %v200
  %v1045 = vunpack.c.h.b16 %v200
  %v1046 = vunpack.c.l.b16 %v201
  %v1047 = vunpack.c.h.b16 %v201
  %v1048 = vunpack.c.l.b16 %v202
  %v1049 = vunpack.c.h.b16 %v202
  %v1050 = vunpack.c.l.b16 %v203
  %v1051 = vunpack.c.h.b16 %v203
  %v1052 = vunpack.c.l.b16 %v204
  %v1053 = vunpack.c.h.b16 %v204
  %v1054 = vunpack.c.l.b16 %v205
  %v1055 = vunpack.c.h.b16 %v205
  %v1056 = vunpack.c.l.b16 %v206
  %v1057 = vunpack.c.h.b16 %v206
  %v1058 = vunpack.c.l.b16 %v207
  %v1059 = vunpack.c.h.b16 %v207
  %v1060 = vunpack.c.l.b16 %v208
  %v1061 = vunpack.c.h.b16 %v208
  %v1062 = vunpack.c.l.b16 %v209
  %v1063 = vunpack.c.h.b16 %v209
  %v1064 = vunpack.c.l.b16 %v210
  %v1065 = vunpack.c.h.b16 %v210
  %v1066 = vunpack.c.l.b16 %v211
  %v1067 = vunpack.c.h.b16 %v211
  %v1068 = vunpack.c.l.b16 %v212
  %v1069 = vunpack.c.h.b16 %v212
  %v1070 = vunpack.c.l.b16 %v213
  %v1071 = vunpack.c.h.b16 %v213
  %v1072 = vunpack.c.l.b16 %v214
  %v1073 = vunpack.c.h.b16 %v214
  %v1074 = vunpack.c.l.b16 %v215
  %v1075 = vunpack.c.h.b16 %v215
  %v1076 = vunpack.c.l.b16 %v216
  %v1077 = vunpack.c.h.b16 %v216
  %v1078 = vunpack.c.l.b16 %v217
  %v1079 = vunpack.c.h.b16 %v217
  %v1080 = vunpack.c.l.b16 %v218
  %v1081 = vunpack.c.h.b16 %v218
  %v1082 = vunpack.c.l.b16 %v219
  %v1083 = vunpack.c.h.b16 %v219
  %v1084 = vunpack.c.l.b16 %v220
  %v1085 = vunpack.c.h.b16 %v220
  %v1086 = vunpack.c.l.b16 %v221
  %v1087 = vunpack.c.h.b16 %v221
  %v1088 = vunpack.c.l.b16 %v222
  %v1089 = vunpack.c.h.b16 %v222
  %v1090 = vunpack.c.l.b16 %v223
  %v1091 = vunpack.c.h.b16 %v223
  %v1092 = vunpack.c.l.b16 %v224
  %v1093 = vunpack.c.h.b16 %v224
  %v1094 = vunpack.c.l.b16 %v225
  %v1095 = vunpack.c.h.b16 %v225
  %v1096 = vunpack.c.l.b16 %v226
  %v1097 = vunpack.c.h.b16 %v226
  %v1098 = vunpack.c.l.b16 %v227
  %v1099 = vunpack.c.h.b16 %v227
  %v1100 = vunpack.c.l.b16 %v228
  %v1101 = vunpack.c.h.b16 %v228
  %v1102 = vunpack.c.l.b16 %v229
  %v1103 = vunpack.c.h.b16 %v229
  %v1104 = vunpack.c.l.b16 %v230
  %v1105 = vunpack.c.h.b16 %v230
  %v1106 = vunpack.c.l.b16 %v231
  %v1107 = vunpack.c.h.b16 %v231
  %v1108 = vunpack.c.l.b16 %v232
  %v1109 = vunpack.c.h.b16 %v232
  %v1110 = vunpack.c.l.b16 %v233
  %v1111 = vunpack.c.h.b16 %v233
  %v1112 = vunpack.c.l.b16 %v234
  %v1113 = vunpack.c.h.b16 %v234
  %v1114 = vunpack.c.l.b16 %v235
  %v1115 = vunpack.c.h.b16 %v235
  %v1116 = vunpack.c.l.b16 %v236
  %v1117 = vunpack.c.h.b16 %v236
  %v1118 = vunpack.c.l.b16 %v237
  %v1119 = vunpack.c.h.b16 %v237
  %v1120 = vunpack.c.l.b16 %v238
  %v1121 = vunpack.c.h.b16 %v238
  %v1122 = vunpack.c.l.b16 %v239
  %v1123 = vunpack.c.h.b16 %v239
  %v1124 = vunpack.c.l.b16 %v240
  %v1125 = vunpack.c.h.b16 %v240
  %v1126 = vunpack.c.l.b16 %v241
  %v1127 = vunpack.c.h.b16 %v241
  %v1128 = vunpack.c.l.b16 %v242
  %v1129 = vunpack.c.h.b16 %v242
  %v1130 = vunpack.c.l.b16 %v243
  %v1131 = vunpack.c.h.b16 %v243
  %v1132 = vunpack.c.l.b16 %v244
  %v1133 = vunpack.c.h.b16 %v244
  %v1134 = vunpack.c.l.b16 %v245
  %v1135 = vunpack.c.h.b16 %v245
  %v1136 = vunpack.c.l.b16 %v246
  %v1137 = vunpack.c.h.b16 %v246
  %v1138 = vunpack.c.l.b16 %v247
  %v1139 = vunpack.c.h.b16 %v247
  %v1140 = vunpack.c.l.b16 %v248
  %v1141 = vunpack.c.h.b16 %v248
  %v1142 = vunpack.c.l.b16 %v249
  %v1143 = vunpack.c.h.b16 %v249
  %v1144 = vunpack.c.l.b16 %v250
  %v1145 = vunpack.c.h.b16 %v250
  %v1146 = vunpack.c.l.b16 %v251
  %v1147 = vunpack.c.h.b16 %v251
  %v1148 = vunpack.c.l.b16 %v252
  %v1149 = vunpack.c.h.b16 %v252
  %v1150 = vunpack.c.l.b16 %v253
  %v1151 = vunpack.c.h.b16 %v253
  %v1152 = vunpack.c.l.b16 %v254
  %v1153 = vunpack.c.h.b16 %v254
  %v1154 = vunpack.c.l.b16 %v255
  %v1155 = vunpack.c.h.b16 %v255
  %v1156 = vunpack.c.l.b16 %v256
  %v1157 = vunpack.c.h.b16 %v256
  %v1158 = vunpack.c.l.b16 %v257
  %v1159 = vunpack.c.h.b16 %v257
  %v1160 = vunpack.c.l.b16 %v258
  %v1161 = vunpack.c.h.b16 %v258
  %v1162 = vunpack.c.l.b16 %v259
  %v1163 = vunpack.c.h.b16 %v259
  %v1164 = vunpack.c.l.b16 %v260
  %v1165 = vunpack.c.h.b16 %v260
  %v1166 = vunpack.c.l.b16 %v261
  %v1167 = vunpack.c.h.b16 %v261
  %v1168 = vunpack.c.l.b16 %v262
  %v1169 = vunpack.c.h.b16 %v262
  %v1170 = vunpack.c.l.b16 %v263
  %v1171 = vunpack.c.h.b16 %v263
  %v1172 = vunpack.c.l.b16 %v264
  %v1173 = vunpack.c.h.b16 %v264
  %v1174 = vunpack.c.l.b16 %v265
  %v1175 = vunpack.c.h.b16 %v265
  %v1176 = vunpack.c.l.b16 %v266
  %v1177 = vunpack.c.h.b16 %v266
  %v1178 = vunpack.c.l.b16 %v267
  %v1179 = vunpack.c.h.b16 %v267
  %v1180 = vunpack.c.l.b16 %v268
  %v1181 = vunpack.c.h.b16 %v268
  %v1182 = vunpack.c.l.b16 %v269
  %v1183 = vunpack.c.h.b16 %v269
  %v1184 = vunpack.c.l.b16 %v270
  %v1185 = vunpack.c.h.b16 %v270
  %v1186 = vunpack.c.l.b16 %v271
  %v1187 = vunpack.c.h.b16 %v271
  %v1188 = vunpack.c.l.b16 %v272
  %v1189 = vunpack.c.h.b16 %v272
  %v1190 = vunpack.c.l.b16 %v273
  %v1191 = vunpack.c.h.b16 %v273
  %v1192 = vunpack.c.l.b16 %v274
  %v1193 = vunpack.c.h.b16 %v274
  %v1194 = vunpack.c.l.b16 %v275
  %v1195 = vunpack.c.h.b16 %v275
  %v1196 = vunpack.c.l.b16 %v276
  %v1197 = vunpack.c.h.b16 %v276
  %v1198 = vunpack.c.l.b16 %v277
  %v1199 = vunpack.c.h.b16 %v277
  %v1200 = vunpack.c.l.b16 %v278
  %v1201 = vunpack.c.h.b16 %v278
  %v1202 = vunpack.c.l.b16 %v279
  %v1203 = vunpack.c.h.b16 %v279
  %v1204 = vunpack.c.l.b16 %v280
  %v1205 = vunpack.c.h.b16 %v280
  %v1206 = vunpack.c.l.b16 %v281
  %v1207 = vunpack.c.h.b16 %v281
  %v1208 = vunpack.c.l.b16 %v282
  %v1209 = vunpack.c.h.b16 %v282
  %v1210 = vunpack.c.l.b16 %v283
  %v1211 = vunpack.c.h.b16 %v283
  %v1212 = vunpack.c.l.b16 %v284
  %v1213 = vunpack.c.h.b16 %v284
  %v1214 = vunpack.c.l.b16 %v285
  %v1215 = vunpack.c.h.b16 %v285
  %v1216 = vunpack.c.l.b16 %v286
  %v1217 = vunpack.c.h.b16 %v286
  %v1218 = vunpack.c.l.b16 %v287
  %v1219 = vunpack.c.h.b16 %v287
  %v1220 = vunpack.c.l.b16 %v288
  %v1221 = vunpack.c.h.b16 %v288
  %v1222 = vunpack.c.l.b16 %v289
  %v1223 = vunpack.c.h.b16 %v289
  %v1224 = vunpack.c.l.b16 %v290
  %v1225 = vunpack.c.h.b16 %v290
  %v1226 = vunpack.c.l.b16 %v291
  %v1227 = vunpack.c.h.b16 %v291
  %v1228 = vunpack.c.l.b16 %v292
  %v1229 = vunpack.c.h.b16 %v292
  %v1230 = vunpack.c.l.b16 %v293
  %v1231 = vunpack.c.h.b16 %v293
  %v1232 = vunpack.c.l.b16 %v294
  %v1233 = vunpack.c.h.b16 %v294
  %v1234 = vunpack.c.l.b16 %v295
  %v1235 = vunpack.c.h.b16 %v295
  %v1236 = vunpack.c.l.b16 %v296
  %v1237 = vunpack.c.h.b16 %v296
  %v1238 = vunpack.c.l.b16 %v297
  %v1239 = vunpack.c.h.b16 %v297
  %v1240 = vunpack.c.l.b16 %v298
  %v1241 = vunpack.c.h.b16 %v298
  %v1242 = vunpack.c.l.b16 %v299
  %v1243 = vunpack.c.h.b16 %v299
  %v1244 = vunpack.c.l.b16 %v300
  %v1245 = vunpack.c.h.b16 %v300
  %v1246 = vunpack.c.l.b16 %v301
  %v1247 = vunpack.c.h.b16 %v301
  %v1248 = vunpack.c.l.b16 %v302
  %v1249 = vunpack.c.h.b16 %v302
  %v1250 = vunpack.c.l.b16 %v303
  %v1251 = vunpack.c.h.b16 %v303
  %v1252 = vunpack.c.l.b16 %v304
  %v1253 = vunpack.c.h.b16 %v304
  %v1254 = vunpack.c.l.b16 %v305
  %v1255 = vunpack.c.h.b16 %v305
  %v1256 = vunpack.c.l.b16 %v306
  %v1257 = vunpack.c.h.b16 %v306
  %v1258 = vunpack.c.l.b16 %v307
  %v1259 = vunpack.c.h.b16 %v307
  %v1260 = vunpack.c.l.b16 %v308
  %v1261 = vunpack.c.h.b16 %v308
  %v1262 = vunpack.c.l.b16 %v309
  %v1263 = vunpack.c.h.b16 %v309
  %v1264 = vunpack.c.l.b16 %v310
  %v1265 = vunpack.c.h.b16 %v310
  %v1266 = vunpack.c.l.b16 %v311
  %v1267 = vunpack.c.h.b16 %v311
  %v1268 = vunpack.c.l.b16 %v312
  %v1269 = vunpack.c.h.b16 %v312
  %v1270 = vunpack.c.l.b16 %v313
  %v1271 = vunpack.c.h.b16 %v313
  %v1272 = vunpack.c.l.b16 %v314
  %v1273 = vunpack.c.h.b16 %v314
  %v1274 = vunpack.c.l.b16 %v315
  %v1275 = vunpack.c.h.b16 %v315
  %v1276 = vunpack.c.l.b16 %v316
  %v1277 = vunpack.c.h.b16 %v316
  %v1278 = vunpack.c.l.b16 %v317
  %v1279 = vunpack.c.h.b16 %v317
  %v1280 = vunpack.c.l.b16 %v318
  %v1281 = vunpack.c.h.b16 %v318
  %v1282 = vunpack.c.l.b16 %v319
  %v1283 = vunpack.c.h.b16 %v319
  %v1284 = vunpack.c.l.b16 %v320
  %v1285 = vunpack.c.h.b16 %v320
  %v1286 = vunpack.c.l.b16 %v321
  %v1287 = vunpack.c.h.b16 %v321
  %v1288 = vpack.c.b16 %v716, %v712
  %v1289 = vpack.c.b16 %v717, %v713
  %v1290 = vpack.c.b16 %v718, %v714
  %v1291 = vpack.c.b16 %v719, %v715
  %v1292 = vpack.c.b16 %v724, %v720
  %v1293 = vpack.c.b16 %v725, %v721
  %v1294 = vpack.c.b16 %v726, %v722
  %v1295 = vpack.c.b16 %v727, %v723
  %v1296 = vpack.c.b16 %v732, %v728
  %v1297 = vpack.c.b16 %v733, %v729
  %v1298 = vpack.c.b16 %v734, %v730
  %v1299 = vpack.c.b16 %v735, %v731
  %v1300 = vpack.c.b16 %v740, %v736
  %v1301 = vpack.c.b16 %v741, %v737
  %v1302 = vpack.c.b16 %v742, %v738
  %v1303 = vpack.c.b16 %v743, %v739
  %v1304 = vpack.c.b16 %v748, %v744
  %v1305 = vpack.c.b16 %v749, %v745
  %v1306 = vpack.c.b16 %v750, %v746
  %v1307 = vpack.c.b16 %v751, %v747
  %v1308 = vpack.c.b16 %v756, %v752
  %v1309 = vpack.c.b16 %v757, %v753
  %v1310 = vpack.c.b16 %v758, %v754
  %v1311 = vpack.c.b16 %v759, %v755
  %v1312 = vpack.c.b16 %v764, %v760
  %v1313 = vpack.c.b16 %v765, %v761
  %v1314 = vpack.c.b16 %v766, %v762
  %v1315 = vpack.c.b16 %v767, %v763
  %v1316 = vpack.c.b16 %v772, %v768
  %v1317 = vpack.c.b16 %v773, %v769
  %v1318 = vpack.c.b16 %v774, %v770
  %v1319 = vpack.c.b16 %v775, %v771
  %v1320 = vpack.c.b16 %v780, %v776
  %v1321 = vpack.c.b16 %v781, %v777
  %v1322 = vpack.c.b16 %v782, %v778
  %v1323 = vpack.c.b16 %v783, %v779
  %v1324 = vpack.c.b16 %v788, %v784
  %v1325 = vpack.c.b16 %v789, %v785
  %v1326 = vpack.c.b16 %v790, %v786
  %v1327 = vpack.c.b16 %v791, %v787
  %v1328 = vpack.c.b16 %v796, %v792
  %v1329 = vpack.c.b16 %v797, %v793
  %v1330 = vpack.c.b16 %v798, %v794
  %v1331 = vpack.c.b16 %v799, %v795
  %v1332 = vpack.c.b16 %v804, %v800
  %v1333 = vpack.c.b16 %v805, %v801
  %v1334 = vpack.c.b16 %v806, %v802
  %v1335 = vpack.c.b16 %v807, %v803
  %v1336 = vpack.c.b16 %v812, %v808
  %v1337 = vpack.c.b16 %v813, %v809
  %v1338 = vpack.c.b16 %v814, %v810
  %v1339 = vpack.c.b16 %v815, %v811
  %v1340 = vpack.c.b16 %v820, %v816
  %v1341 = vpack.c.b16 %v821, %v817
  %v1342 = vpack.c.b16 %v822, %v818
  %v1343 = vpack.c.b16 %v823, %v819
  %v1344 = vpack.c.b16 %v828, %v824
  %v1345 = vpack.c.b16 %v829, %v825
  %v1346 = vpack.c.b16 %v830, %v826
  %v1347 = vpack.c.b16 %v831, %v827
  %v1348 = vpack.c.b16 %v836, %v832
  %v1349 = vpack.c.b16 %v837, %v833
  %v1350 = vpack.c.b16 %v838, %v834
  %v1351 = vpack.c.b16 %v839, %v835
  %v1352 = vpack.c.b16 %v844, %v840
  %v1353 = vpack.c.b16 %v845, %v841
  %v1354 = vpack.c.b16 %v846, %v842
  %v1355 = vpack.c.b16 %v847, %v843
  %v1356 = vpack.c.b16 %v852, %v848
  %v1357 = vpack.c.b16 %v853, %v849
  %v1358 = vpack.c.b16 %v854, %v850
  %v1359 = vpack.c.b16 %v855, %v851
  %v1360 = vpack.c.b16 %v860, %v856
  %v1361 = vpack.c.b16 %v861, %v857
  %v1362 = vpack.c.b16 %v862, %v858
  %v1363 = vpack.c.b16 %v863, %v859
  %v1364 = vpack.c.b16 %v868, %v864
  %v1365 = vpack.c.b16 %v869, %v865
  %v1366 = vpack.c.b16 %v870, %v866
  %v1367 = vpack.c.b16 %v871, %v867
  %v1368 = vpack.c.b16 %v876, %v872
  %v1369 = vpack.c.b16 %v877, %v873
  %v1370 = vpack.c.b16 %v878, %v874
  %v1371 = vpack.c.b16 %v879, %v875
  %v1372 = vpack.c.b16 %v884, %v880
  %v1373 = vpack.c.b16 %v885, %v881
  %v1374 = vpack.c.b16 %v886, %v882
  %v1375 = vpack.c.b16 %v887, %v883
  %v1376 = vpack.c.b16 %v892, %v888
  %v1377 = vpack.c.b16 %v893, %v889
  %v1378 = vpack.c.b16 %v894, %v890
  %v1379 = vpack.c.b16 %v895, %v891
  %v1380 = vpack.c.b16 %v900, %v896
  %v1381 = vpack.c.b16 %v901, %v897
  %v1382 = vpack.c.b16 %v902, %v898
  %v1383 = vpack.c.b16 %v903, %v899
  %v1384 = vpack.c.b16 %v908, %v904
  %v1385 = vpack.c.b16 %v909, %v905
  %v1386 = vpack.c.b16 %v910, %v906
  %v1387 = vpack.c.b16 %v911, %v907
  %v1388 = vpack.c.b16 %v916, %v912
  %v1389 = vpack.c.b16 %v917, %v913
  %v1390 = vpack.c.b16 %v918, %v914
  %v1391 = vpack.c.b16 %v919, %v915
  %v1392 = vpack.c.b16 %v924, %v920
  %v1393 = vpack.c.b16 %v925, %v921
  %v1394 = vpack.c.b16 %v926, %v922
  %v1395 = vpack.c.b16 %v927, %v923
  %v1396 = vpack.c.b16 %v932, %v928
  %v1397 = vpack.c.b16 %v933, %v929
  %v1398 = vpack.c.b16 %v934, %v930
  %v1399 = vpack.c.b16 %v935, %v931
  %v1400 = vpack.c.b16 %v940, %v936
  %v1401 = vpack.c.b16 %v941, %v937
  %v1402 = vpack.c.b16 %v942, %v938
  %v1403 = vpack.c.b16 %v943, %v939
  %v1404 = vpack.c.b16 %v948, %v944
  %v1405 = vpack.c.b16 %v949, %v945
  %v1406 = vpack.c.b16 %v950, %v946
  %v1407 = vpack.c.b16 %v951, %v947
  %v1408 = vpack.c.b16 %v956, %v952
  %v1409 = vpack.c.b16 %v957, %v953
  %v1410 = vpack.c.b16 %v958, %v954
  %v1411 = vpack.c.b16 %v959, %v955
  %v1412 = vpack.c.b16 %v964, %v960
  %v1413 = vpack.c.b16 %v965, %v961
  %v1414 = vpack.c.b16 %v966, %v962
  %v1415 = vpack.c.b16 %v967, %v963
  %v1416 = vpack.c.b16 %v972, %v968
  %v1417 = vpack.c.b16 %v973, %v969
  %v1418 = vpack.c.b16 %v974, %v970
  %v1419 = vpack.c.b16 %v975, %v971
  %v1420 = vpack.c.b16 %v980, %v976
  %v1421 = vpack.c.b16 %v981, %v977
  %v1422 = vpack.c.b16 %v982, %v978
  %v1423 = vpack.c.b16 %v983, %v979
  %v1424 = vpack.c.b16 %v988, %v984
  %v1425 = vpack.c.b16 %v989, %v985
  %v1426 = vpack.c.b16 %v990, %v986
  %v1427 = vpack.c.b16 %v991, %v987
  %v1428 = vpack.c.b16 %v996, %v992
  %v1429 = vpack.c.b16 %v997, %v993
  %v1430 = vpack.c.b16 %v998, %v994
  %v1431 = vpack.c.b16 %v999, %v995
  %v1432 = vpack.c.b16 %v1004, %v1000
  %v1433 = vpack.c.b16 %v1005, %v1001
  %v1434 = vpack.c.b16 %v1006, %v1002
  %v1435 = vpack.c.b16 %v1007, %v1003
  %v1436 = vpack.c.b16 %v1012, %v1008
  %v1437 = vpack.c.b16 %v1013, %v1009
  %v1438 = vpack.c.b16 %v1014, %v1010
  %v1439 = vpack.c.b16 %v1015, %v1011
  %v1440 = vpack.c.b16 %v1020, %v1016
  %v1441 = vpack.c.b16 %v1021, %v1017
  %v1442 = vpack.c.b16 %v1022, %v1018
  %v1443 = vpack.c.b16 %v1023, %v1019
  %v1444 = vpack.c.b16 %v1028, %v1024
  %v1445 = vpack.c.b16 %v1029, %v1025
  %v1446 = vpack.c.b16 %v1030, %v1026
  %v1447 = vpack.c.b16 %v1031, %v1027
  %v1448 = vpack.c.b16 %v1036, %v1032
  %v1449 = vpack.c.b16 %v1037, %v1033
  %v1450 = vpack.c.b16 %v1038, %v1034
  %v1451 = vpack.c.b16 %v1039, %v1035
  %v1452 = vpack.c.b16 %v1044, %v1040
  %v1453 = vpack.c.b16 %v1045, %v1041
  %v1454 = vpack.c.b16 %v1046, %v1042
  %v1455 = vpack.c.b16 %v1047, %v1043
  %v1456 = vpack.c.b16 %v1052, %v1048
  %v1457 = vpack.c.b16 %v1053, %v1049
  %v1458 = vpack.c.b16 %v1054, %v1050
  %v1459 = vpack.c.b16 %v1055, %v1051
  %v1460 = vpack.c.b16 %v1060, %v1056
  %v1461 = vpack.c.b16 %v1061, %v1057
  %v1462 = vpack.c.b16 %v1062, %v1058
  %v1463 = vpack.c.b16 %v1063, %v1059
  %v1464 = vpack.c.b16 %v1068, %v1064
  %v1465 = vpack.c.b16 %v1069, %v1065
  %v1466 = vpack.c.b16 %v1070, %v1066
  %v1467 = vpack.c.b16 %v1071, %v1067
  %v1468 = vpack.c.b16 %v1076, %v1072
  %v1469 = vpack.c.b16 %v1077, %v1073
  %v1470 = vpack.c.b16 %v1078, %v1074
  %v1471 = vpack.c.b16 %v1079, %v1075
  %v1472 = vpack.c.b16 %v1084, %v1080
  %v1473 = vpack.c.b16 %v1085, %v1081
  %v1474 = vpack.c.b16 %v1086, %v1082
  %v1475 = vpack.c.b16 %v1087, %v1083
  %v1476 = vpack.c.b16 %v1092, %v1088
  %v1477 = vpack.c.b16 %v1093, %v1089
  %v1478 = vpack.c.b16 %v1094, %v1090
  %v1479 = vpack.c.b16 %v1095, %v1091
  %v1480 = vpack.c.b16 %v1100, %v1096
  %v1481 = vpack.c.b16 %v1101, %v1097
  %v1482 = vpack.c.b16 %v1102, %v1098
  %v1483 = vpack.c.b16 %v1103, %v1099
  %v1484 = vpack.c.b16 %v1108, %v1104
  %v1485 = vpack.c.b16 %v1109, %v1105
  %v1486 = vpack.c.b16 %v1110, %v1106
  %v1487 = vpack.c.b16 %v1111, %v1107
  %v1488 = vpack.c.b16 %v1116, %v1112
  %v1489 = vpack.c.b16 %v1117, %v1113
  %v1490 = vpack.c.b16 %v1118, %v1114
  %v1491 = vpack.c.b16 %v1119, %v1115
  %v1492 = vpack.c.b16 %v1124, %v1120
  %v1493 = vpack.c.b16 %v1125, %v1121
  %v1494 = vpack.c.b16 %v1126, %v1122
  %v1495 = vpack.c.b16 %v1127, %v1123
  %v1496 = vpack.c.b16 %v1132, %v1128
  %v1497 = vpack.c.b16 %v1133, %v1129
  %v1498 = vpack.c.b16 %v1134, %v1130
  %v1499 = vpack.c.b16 %v1135, %v1131
  %v1500 = vpack.c.b16 %v1140, %v1136
  %v1501 = vpack.c.b16 %v1141, %v1137
  %v1502 = vpack.c.b16 %v1142, %v1138
  %v1503 = vpack.c.b16 %v1143, %v1139
  %v1504 = vpack.c.b16 %v1148, %v1144
  %v1505 = vpack.c.b16 %v1149, %v1145
  %v1506 = vpack.c.b16 %v1150, %v1146
  %v1507 = vpack.c.b16 %v1151, %v1147
  %v1508 = vpack.c.b16 %v1156, %v1152
  %v1509 = vpack.c.b16 %v1157, %v1153
  %v1510 = vpack.c.b16 %v1158, %v1154
  %v1511 = vpack.c.b16 %v1159, %v1155
  %v1512 = vpack.c.b16 %v1164, %v1160
  %v1513 = vpack.c.b16 %v1165, %v1161
  %v1514 = vpack.c.b16 %v1166, %v1162
  %v1515 = vpack.c.b16 %v1167, %v1163
  %v1516 = vpack.c.b16 %v1172, %v1168
  %v1517 = vpack.c.b16 %v1173, %v1169
  %v1518 = vpack.c.b16 %v1174, %v1170
  %v1519 = vpack.c.b16 %v1175, %v1171
  %v1520 = vpack.c.b16 %v1180, %v1176
  %v1521 = vpack.c.b16 %v1181, %v1177
  %v1522 = vpack.c.b16 %v1182, %v1178
  %v1523 = vpack.c.b16 %v1183, %v1179
  %v1524 = vpack.c.b16 %v1188, %v1184
  %v1525 = vpack.c.b16 %v1189, %v1185
  %v1526 = vpack.c.b16 %v1190, %v1186
  %v1527 = vpack.c.b16 %v1191, %v1187
  %v1528 = vpack.c.b16 %v1196, %v1192
  %v1529 = vpack.c.b16 %v1197, %v1193
  %v1530 = vpack.c.b16 %v1198, %v1194
  %v1531 = vpack.c.b16 %v1199, %v1195
  %v1532 = vpack.c.b16 %v1204, %v1200
  %v1533 = vpack.c.b16 %v1205, %v1201
  %v1534 = vpack.c.b16 %v1206, %v1202
  %v1535 = vpack.c.b16 %v1207, %v1203
  %v1536 = vpack.c.b16 %v1212, %v1208
  %v1537 = vpack.c.b16 %v1213, %v1209
  %v1538 = vpack.c.b16 %v1214, %v1210
  %v1539 = vpack.c.b16 %v1215, %v1211
  %v1540 = vpack.c.b16 %v1220, %v1216
  %v1541 = vpack.c.b16 %v1221, %v1217
  %v1542 = vpack.c.b16 %v1222, %v1218
  %v1543 = vpack.c.b16 %v1223, %v1219
  %v1544 = vpack.c.b16 %v1228, %v1224
  %v1545 = vpack.c.b16 %v1229, %v1225
  %v1546 = vpack.c.b16 %v1230, %v1226
  %v1547 = vpack.c.b16 %v1231, %v1227
  %v1548 = vpack.c.b16 %v1236, %v1232
  %v1549 = vpack.c.b16 %v1237, %v1233
  %v1550 = vpack.c.b16 %v1238, %v1234
  %v1551 = vpack.c.b16 %v1239, %v1235
  %v1552 = vpack.c.b16 %v1244, %v1240
  %v1553 = vpack.c.b16 %v1245, %v1241
  %v1554 = vpack.c.b16 %v1246, %v1242
  %v1555 = vpack.c.b16 %v1247, %v1243
  %v1556 = vpack.c.b16 %v1252, %v1248
  %v1557 = vpack.c.b16 %v1253, %v1249
  %v1558 = vpack.c.b16 %v1254, %v1250
  %v1559 = vpack.c.b16 %v1255, %v1251
  %v1560 = vpack.c.b16 %v1260, %v1256
  %v1561 = vpack.c.b16 %v1261, %v1257
  %v1562 = vpack.c.b16 %v1262, %v1258
  %v1563 = vpack.c.b16 %v1263, %v1259
  %v1564 = vpack.c.b16 %v1268, %v1264
  %v1565 = vpack.c.b16 %v1269, %v1265
  %v1566 = vpack.c.b16 %v1270, %v1266
  %v1567 = vpack.c.b16 %v1271, %v1267
  %v1568 = vpack.c.b16 %v1276, %v1272
  %v1569 = vpack.c.b16 %v1277, %v1273
  %v1570 = vpack.c.b16 %v1278, %v1274
  %v1571 = vpack.c.b16 %v1279, %v1275
  %v1572 = vpack.c.b16 %v1284, %v1280
  %v1573 = vpack.c.b16 %v1285, %v1281
  %v1574 = vpack.c.b16 %v1286, %v1282
  %v1575 = vpack.c.b16 %v1287, %v1283
  %1864 = vmatpush.bf16.msra.mxu0 %v1316
  %1865 = vmatpush.bf16.msra.mxu0 %v1312
  %1866 = vmatpush.bf16.msra.mxu0 %v1308
  %1867 = vmatpush.bf16.msra.mxu0 %v1304
  %1868 = vmatpush.bf16.msra.mxu0 %v1300
  %1869 = vmatpush.bf16.msra.mxu0 %v1296
  %1870 = vmatpush.bf16.msra.mxu0 %v1292
  %1871 = vmatpush.bf16.msra.mxu0 %v1288
  %1872 = vmatmul.bf16.gmra.mxu0 %v388
  %v1873 = vpop.f32.mrf.mxu0
  %v1874 = vadd.f32 %v324, %v1873
  %v1875 = vpop.f32.mrf.mxu0
  %v1876 = vadd.f32 %v324, %v1875
  %1877 = vmatmul.bf16.gmra.mxu0 %v397
  %v1878 = vpop.f32.mrf.mxu0
  %v1879 = vadd.f32 %v324, %v1878
  %v1880 = vpop.f32.mrf.mxu0
  %v1881 = vadd.f32 %v324, %v1880
  %1882 = vdwg.mxu0
  %1883 = vmatpush.bf16.msra.mxu0 %v1348
  %1884 = vmatpush.bf16.msra.mxu0 %v1344
  %1885 = vmatpush.bf16.msra.mxu0 %v1340
  %1886 = vmatpush.bf16.msra.mxu0 %v1336
  %1887 = vmatpush.bf16.msra.mxu0 %v1332
  %1888 = vmatpush.bf16.msra.mxu0 %v1328
  %1889 = vmatpush.bf16.msra.mxu0 %v1324
  %1890 = vmatpush.bf16.msra.mxu0 %v1320
  %1891 = vmatmul.bf16.gmra.mxu0 %v389
  %v1892 = vpop.f32.mrf.mxu0
  %v1893 = vadd.f32 %v1874, %v1892
  %v1894 = vpop.f32.mrf.mxu0
  %v1895 = vadd.f32 %v1876, %v1894
  %1896 = vmatmul.bf16.gmra.mxu0 %v398
  %v1897 = vpop.f32.mrf.mxu0
  %v1898 = vadd.f32 %v1879, %v1897
  %v1899 = vpop.f32.mrf.mxu0
  %v1900 = vadd.f32 %v1881, %v1899
  %1901 = vdwg.mxu0
  %1902 = vmatpush.bf16.msra.mxu0 %v1380
  %1903 = vmatpush.bf16.msra.mxu0 %v1376
  %1904 = vmatpush.bf16.msra.mxu0 %v1372
  %1905 = vmatpush.bf16.msra.mxu0 %v1368
  %1906 = vmatpush.bf16.msra.mxu0 %v1364
  %1907 = vmatpush.bf16.msra.mxu0 %v1360
  %1908 = vmatpush.bf16.msra.mxu0 %v1356
  %1909 = vmatpush.bf16.msra.mxu0 %v1352
  %1910 = vmatmul.bf16.gmra.mxu0 %v390
  %v1911 = vpop.f32.mrf.mxu0
  %v1912 = vadd.f32 %v1893, %v1911
  %v1913 = vpop.f32.mrf.mxu0
  %v1914 = vadd.f32 %v1895, %v1913
  %1915 = vmatmul.bf16.gmra.mxu0 %v399
  %v1916 = vpop.f32.mrf.mxu0
  %v1917 = vadd.f32 %v1898, %v1916
  %v1918 = vpop.f32.mrf.mxu0
  %v1919 = vadd.f32 %v1900, %v1918
  %1920 = vdwg.mxu0
  %1921 = vmatpush.bf16.msra.mxu0 %v1412
  %1922 = vmatpush.bf16.msra.mxu0 %v1408
  %1923 = vmatpush.bf16.msra.mxu0 %v1404
  %1924 = vmatpush.bf16.msra.mxu0 %v1400
  %1925 = vmatpush.bf16.msra.mxu0 %v1396
  %1926 = vmatpush.bf16.msra.mxu0 %v1392
  %1927 = vmatpush.bf16.msra.mxu0 %v1388
  %1928 = vmatpush.bf16.msra.mxu0 %v1384
  %1929 = vmatmul.bf16.gmra.mxu0 %v391
  %v1930 = vpop.f32.mrf.mxu0
  %v1931 = vadd.f32 %v1912, %v1930
  %v1932 = vpop.f32.mrf.mxu0
  %v1933 = vadd.f32 %v1914, %v1932
  %1934 = vmatmul.bf16.gmra.mxu0 %v400
  %v1935 = vpop.f32.mrf.mxu0
  %v1936 = vadd.f32 %v1917, %v1935
  %v1937 = vpop.f32.mrf.mxu0
  %v1938 = vadd.f32 %v1919, %v1937
  %1939 = vdwg.mxu0
  %1940 = vmatpush.bf16.msra.mxu0 %v1444
  %1941 = vmatpush.bf16.msra.mxu0 %v1440
  %1942 = vmatpush.bf16.msra.mxu0 %v1436
  %1943 = vmatpush.bf16.msra.mxu0 %v1432
  %1944 = vmatpush.bf16.msra.mxu0 %v1428
  %1945 = vmatpush.bf16.msra.mxu0 %v1424
  %1946 = vmatpush.bf16.msra.mxu0 %v1420
  %1947 = vmatpush.bf16.msra.mxu0 %v1416
  %1948 = vmatmul.bf16.gmra.mxu0 %v392
  %v1949 = vpop.f32.mrf.mxu0
  %v1950 = vadd.f32 %v1931, %v1949
  %v1951 = vpop.f32.mrf.mxu0
  %v1952 = vadd.f32 %v1933, %v1951
  %1953 = vmatmul.bf16.gmra.mxu0 %v401
  %v1954 = vpop.f32.mrf.mxu0
  %v1955 = vadd.f32 %v1936, %v1954
  %v1956 = vpop.f32.mrf.mxu0
  %v1957 = vadd.f32 %v1938, %v1956
  %1958 = vdwg.mxu0
  %1959 = vmatpush.bf16.msra.mxu0 %v1476
  %1960 = vmatpush.bf16.msra.mxu0 %v1472
  %1961 = vmatpush.bf16.msra.mxu0 %v1468
  %1962 = vmatpush.bf16.msra.mxu0 %v1464
  %1963 = vmatpush.bf16.msra.mxu0 %v1460
  %1964 = vmatpush.bf16.msra.mxu0 %v1456
  %1965 = vmatpush.bf16.msra.mxu0 %v1452
  %1966 = vmatpush.bf16.msra.mxu0 %v1448
  %1967 = vmatmul.bf16.gmra.mxu0 %v393
  %v1968 = vpop.f32.mrf.mxu0
  %v1969 = vadd.f32 %v1950, %v1968
  %v1970 = vpop.f32.mrf.mxu0
  %v1971 = vadd.f32 %v1952, %v1970
  %1972 = vmatmul.bf16.gmra.mxu0 %v402
  %v1973 = vpop.f32.mrf.mxu0
  %v1974 = vadd.f32 %v1955, %v1973
  %v1975 = vpop.f32.mrf.mxu0
  %v1976 = vadd.f32 %v1957, %v1975
  %1977 = vdwg.mxu0
  %1978 = vmatpush.bf16.msra.mxu0 %v1508
  %1979 = vmatpush.bf16.msra.mxu0 %v1504
  %1980 = vmatpush.bf16.msra.mxu0 %v1500
  %1981 = vmatpush.bf16.msra.mxu0 %v1496
  %1982 = vmatpush.bf16.msra.mxu0 %v1492
  %1983 = vmatpush.bf16.msra.mxu0 %v1488
  %1984 = vmatpush.bf16.msra.mxu0 %v1484
  %1985 = vmatpush.bf16.msra.mxu0 %v1480
  %1986 = vmatmul.bf16.gmra.mxu0 %v394
  %v1987 = vpop.f32.mrf.mxu0
  %v1988 = vadd.f32 %v1969, %v1987
  %v1989 = vpop.f32.mrf.mxu0
  %v1990 = vadd.f32 %v1971, %v1989
  %1991 = vmatmul.bf16.gmra.mxu0 %v403
  %v1992 = vpop.f32.mrf.mxu0
  %v1993 = vadd.f32 %v1974, %v1992
  %v1994 = vpop.f32.mrf.mxu0
  %v1995 = vadd.f32 %v1976, %v1994
  %1996 = vdwg.mxu0
  %1997 = vmatpush.bf16.msra.mxu0 %v1540
  %1998 = vmatpush.bf16.msra.mxu0 %v1536
  %1999 = vmatpush.bf16.msra.mxu0 %v1532
  %2000 = vmatpush.bf16.msra.mxu0 %v1528
  %2001 = vmatpush.bf16.msra.mxu0 %v1524
  %2002 = vmatpush.bf16.msra.mxu0 %v1520
  %2003 = vmatpush.bf16.msra.mxu0 %v1516
  %2004 = vmatpush.bf16.msra.mxu0 %v1512
  %2005 = vmatmul.bf16.gmra.mxu0 %v395
  %v2006 = vpop.f32.mrf.mxu0
  %v2007 = vadd.f32 %v1988, %v2006
  %v2008 = vpop.f32.mrf.mxu0
  %v2009 = vadd.f32 %v1990, %v2008
  %2010 = vmatmul.bf16.gmra.mxu0 %v404
  %v2011 = vpop.f32.mrf.mxu0
  %v2012 = vadd.f32 %v1993, %v2011
  %v2013 = vpop.f32.mrf.mxu0
  %v2014 = vadd.f32 %v1995, %v2013
  %2015 = vdwg.mxu0
  %2016 = vmatpush.bf16.msra.mxu0 %v1572
  %2017 = vmatpush.bf16.msra.mxu0 %v1568
  %2018 = vmatpush.bf16.msra.mxu0 %v1564
  %2019 = vmatpush.bf16.msra.mxu0 %v1560
  %2020 = vmatpush.bf16.msra.mxu0 %v1556
  %2021 = vmatpush.bf16.msra.mxu0 %v1552
  %2022 = vmatpush.bf16.msra.mxu0 %v1548
  %2023 = vmatpush.bf16.msra.mxu0 %v1544
  %2024 = vmatmul.bf16.gmra.mxu0 %v396
  %v2025 = vpop.f32.mrf.mxu0
  %v2026 = vadd.f32 %v2007, %v2025
  %v2027 = vpop.f32.mrf.mxu0
  %v2028 = vadd.f32 %v2009, %v2027
  %2029 = vmatmul.bf16.gmra.mxu0 %v405
  %v2030 = vpop.f32.mrf.mxu0
  %v2031 = vadd.f32 %v2012, %v2030
  %v2032 = vpop.f32.mrf.mxu0
  %v2033 = vadd.f32 %v2014, %v2032
  %2034 = vdwg.mxu0
  %2035 = vmatpush.bf16.msra.mxu0 %v1317
  %2036 = vmatpush.bf16.msra.mxu0 %v1313
  %2037 = vmatpush.bf16.msra.mxu0 %v1309
  %2038 = vmatpush.bf16.msra.mxu0 %v1305
  %2039 = vmatpush.bf16.msra.mxu0 %v1301
  %2040 = vmatpush.bf16.msra.mxu0 %v1297
  %2041 = vmatpush.bf16.msra.mxu0 %v1293
  %2042 = vmatpush.bf16.msra.mxu0 %v1289
  %2043 = vmatmul.bf16.gmra.mxu0 %v388
  %v2044 = vpop.f32.mrf.mxu0
  %v2045 = vadd.f32 %v325, %v2044
  %v2046 = vpop.f32.mrf.mxu0
  %v2047 = vadd.f32 %v325, %v2046
  %2048 = vmatmul.bf16.gmra.mxu0 %v397
  %v2049 = vpop.f32.mrf.mxu0
  %v2050 = vadd.f32 %v325, %v2049
  %v2051 = vpop.f32.mrf.mxu0
  %v2052 = vadd.f32 %v325, %v2051
  %2053 = vdwg.mxu0
  %2054 = vmatpush.bf16.msra.mxu0 %v1349
  %2055 = vmatpush.bf16.msra.mxu0 %v1345
  %2056 = vmatpush.bf16.msra.mxu0 %v1341
  %2057 = vmatpush.bf16.msra.mxu0 %v1337
  %2058 = vmatpush.bf16.msra.mxu0 %v1333
  %2059 = vmatpush.bf16.msra.mxu0 %v1329
  %2060 = vmatpush.bf16.msra.mxu0 %v1325
  %2061 = vmatpush.bf16.msra.mxu0 %v1321
  %2062 = vmatmul.bf16.gmra.mxu0 %v389
  %v2063 = vpop.f32.mrf.mxu0
  %v2064 = vadd.f32 %v2045, %v2063
  %v2065 = vpop.f32.mrf.mxu0
  %v2066 = vadd.f32 %v2047, %v2065
  %2067 = vmatmul.bf16.gmra.mxu0 %v398
  %v2068 = vpop.f32.mrf.mxu0
  %v2069 = vadd.f32 %v2050, %v2068
  %v2070 = vpop.f32.mrf.mxu0
  %v2071 = vadd.f32 %v2052, %v2070
  %2072 = vdwg.mxu0
  %2073 = vmatpush.bf16.msra.mxu0 %v1381
  %2074 = vmatpush.bf16.msra.mxu0 %v1377
  %2075 = vmatpush.bf16.msra.mxu0 %v1373
  %2076 = vmatpush.bf16.msra.mxu0 %v1369
  %2077 = vmatpush.bf16.msra.mxu0 %v1365
  %2078 = vmatpush.bf16.msra.mxu0 %v1361
  %2079 = vmatpush.bf16.msra.mxu0 %v1357
  %2080 = vmatpush.bf16.msra.mxu0 %v1353
  %2081 = vmatmul.bf16.gmra.mxu0 %v390
  %v2082 = vpop.f32.mrf.mxu0
  %v2083 = vadd.f32 %v2064, %v2082
  %v2084 = vpop.f32.mrf.mxu0
  %v2085 = vadd.f32 %v2066, %v2084
  %2086 = vmatmul.bf16.gmra.mxu0 %v399
  %v2087 = vpop.f32.mrf.mxu0
  %v2088 = vadd.f32 %v2069, %v2087
  %v2089 = vpop.f32.mrf.mxu0
  %v2090 = vadd.f32 %v2071, %v2089
  %2091 = vdwg.mxu0
  %2092 = vmatpush.bf16.msra.mxu0 %v1413
  %2093 = vmatpush.bf16.msra.mxu0 %v1409
  %2094 = vmatpush.bf16.msra.mxu0 %v1405
  %2095 = vmatpush.bf16.msra.mxu0 %v1401
  %2096 = vmatpush.bf16.msra.mxu0 %v1397
  %2097 = vmatpush.bf16.msra.mxu0 %v1393
  %2098 = vmatpush.bf16.msra.mxu0 %v1389
  %2099 = vmatpush.bf16.msra.mxu0 %v1385
  %2100 = vmatmul.bf16.gmra.mxu0 %v391
  %v2101 = vpop.f32.mrf.mxu0
  %v2102 = vadd.f32 %v2083, %v2101
  %v2103 = vpop.f32.mrf.mxu0
  %v2104 = vadd.f32 %v2085, %v2103
  %2105 = vmatmul.bf16.gmra.mxu0 %v400
  %v2106 = vpop.f32.mrf.mxu0
  %v2107 = vadd.f32 %v2088, %v2106
  %v2108 = vpop.f32.mrf.mxu0
  %v2109 = vadd.f32 %v2090, %v2108
  %2110 = vdwg.mxu0
  %2111 = vmatpush.bf16.msra.mxu0 %v1445
  %2112 = vmatpush.bf16.msra.mxu0 %v1441
  %2113 = vmatpush.bf16.msra.mxu0 %v1437
  %2114 = vmatpush.bf16.msra.mxu0 %v1433
  %2115 = vmatpush.bf16.msra.mxu0 %v1429
  %2116 = vmatpush.bf16.msra.mxu0 %v1425
  %2117 = vmatpush.bf16.msra.mxu0 %v1421
  %2118 = vmatpush.bf16.msra.mxu0 %v1417
  %2119 = vmatmul.bf16.gmra.mxu0 %v392
  %v2120 = vpop.f32.mrf.mxu0
  %v2121 = vadd.f32 %v2102, %v2120
  %v2122 = vpop.f32.mrf.mxu0
  %v2123 = vadd.f32 %v2104, %v2122
  %2124 = vmatmul.bf16.gmra.mxu0 %v401
  %v2125 = vpop.f32.mrf.mxu0
  %v2126 = vadd.f32 %v2107, %v2125
  %v2127 = vpop.f32.mrf.mxu0
  %v2128 = vadd.f32 %v2109, %v2127
  %2129 = vdwg.mxu0
  %2130 = vmatpush.bf16.msra.mxu0 %v1477
  %2131 = vmatpush.bf16.msra.mxu0 %v1473
  %2132 = vmatpush.bf16.msra.mxu0 %v1469
  %2133 = vmatpush.bf16.msra.mxu0 %v1465
  %2134 = vmatpush.bf16.msra.mxu0 %v1461
  %2135 = vmatpush.bf16.msra.mxu0 %v1457
  %2136 = vmatpush.bf16.msra.mxu0 %v1453
  %2137 = vmatpush.bf16.msra.mxu0 %v1449
  %2138 = vmatmul.bf16.gmra.mxu0 %v393
  %v2139 = vpop.f32.mrf.mxu0
  %v2140 = vadd.f32 %v2121, %v2139
  %v2141 = vpop.f32.mrf.mxu0
  %v2142 = vadd.f32 %v2123, %v2141
  %2143 = vmatmul.bf16.gmra.mxu0 %v402
  %v2144 = vpop.f32.mrf.mxu0
  %v2145 = vadd.f32 %v2126, %v2144
  %v2146 = vpop.f32.mrf.mxu0
  %v2147 = vadd.f32 %v2128, %v2146
  %2148 = vdwg.mxu0
  %2149 = vmatpush.bf16.msra.mxu0 %v1509
  %2150 = vmatpush.bf16.msra.mxu0 %v1505
  %2151 = vmatpush.bf16.msra.mxu0 %v1501
  %2152 = vmatpush.bf16.msra.mxu0 %v1497
  %2153 = vmatpush.bf16.msra.mxu0 %v1493
  %2154 = vmatpush.bf16.msra.mxu0 %v1489
  %2155 = vmatpush.bf16.msra.mxu0 %v1485
  %2156 = vmatpush.bf16.msra.mxu0 %v1481
  %2157 = vmatmul.bf16.gmra.mxu0 %v394
  %v2158 = vpop.f32.mrf.mxu0
  %v2159 = vadd.f32 %v2140, %v2158
  %v2160 = vpop.f32.mrf.mxu0
  %v2161 = vadd.f32 %v2142, %v2160
  %2162 = vmatmul.bf16.gmra.mxu0 %v403
  %v2163 = vpop.f32.mrf.mxu0
  %v2164 = vadd.f32 %v2145, %v2163
  %v2165 = vpop.f32.mrf.mxu0
  %v2166 = vadd.f32 %v2147, %v2165
  %2167 = vdwg.mxu0
  %2168 = vmatpush.bf16.msra.mxu0 %v1541
  %2169 = vmatpush.bf16.msra.mxu0 %v1537
  %2170 = vmatpush.bf16.msra.mxu0 %v1533
  %2171 = vmatpush.bf16.msra.mxu0 %v1529
  %2172 = vmatpush.bf16.msra.mxu0 %v1525
  %2173 = vmatpush.bf16.msra.mxu0 %v1521
  %2174 = vmatpush.bf16.msra.mxu0 %v1517
  %2175 = vmatpush.bf16.msra.mxu0 %v1513
  %2176 = vmatmul.bf16.gmra.mxu0 %v395
  %v2177 = vpop.f32.mrf.mxu0
  %v2178 = vadd.f32 %v2159, %v2177
  %v2179 = vpop.f32.mrf.mxu0
  %v2180 = vadd.f32 %v2161, %v2179
  %2181 = vmatmul.bf16.gmra.mxu0 %v404
  %v2182 = vpop.f32.mrf.mxu0
  %v2183 = vadd.f32 %v2164, %v2182
  %v2184 = vpop.f32.mrf.mxu0
  %v2185 = vadd.f32 %v2166, %v2184
  %2186 = vdwg.mxu0
  %2187 = vmatpush.bf16.msra.mxu0 %v1573
  %2188 = vmatpush.bf16.msra.mxu0 %v1569
  %2189 = vmatpush.bf16.msra.mxu0 %v1565
  %2190 = vmatpush.bf16.msra.mxu0 %v1561
  %2191 = vmatpush.bf16.msra.mxu0 %v1557
  %2192 = vmatpush.bf16.msra.mxu0 %v1553
  %2193 = vmatpush.bf16.msra.mxu0 %v1549
  %2194 = vmatpush.bf16.msra.mxu0 %v1545
  %2195 = vmatmul.bf16.gmra.mxu0 %v396
  %v2196 = vpop.f32.mrf.mxu0
  %v2197 = vadd.f32 %v2178, %v2196
  %v2198 = vpop.f32.mrf.mxu0
  %v2199 = vadd.f32 %v2180, %v2198
  %2200 = vmatmul.bf16.gmra.mxu0 %v405
  %v2201 = vpop.f32.mrf.mxu0
  %v2202 = vadd.f32 %v2183, %v2201
  %v2203 = vpop.f32.mrf.mxu0
  %v2204 = vadd.f32 %v2185, %v2203
  %2205 = vdwg.mxu0
  %2206 = vmatpush.bf16.msra.mxu0 %v1318
  %2207 = vmatpush.bf16.msra.mxu0 %v1314
  %2208 = vmatpush.bf16.msra.mxu0 %v1310
  %2209 = vmatpush.bf16.msra.mxu0 %v1306
  %2210 = vmatpush.bf16.msra.mxu0 %v1302
  %2211 = vmatpush.bf16.msra.mxu0 %v1298
  %2212 = vmatpush.bf16.msra.mxu0 %v1294
  %2213 = vmatpush.bf16.msra.mxu0 %v1290
  %2214 = vmatmul.bf16.gmra.mxu0 %v388
  %v2215 = vpop.f32.mrf.mxu0
  %v2216 = vadd.f32 %v326, %v2215
  %v2217 = vpop.f32.mrf.mxu0
  %v2218 = vadd.f32 %v326, %v2217
  %2219 = vmatmul.bf16.gmra.mxu0 %v397
  %v2220 = vpop.f32.mrf.mxu0
  %v2221 = vadd.f32 %v326, %v2220
  %v2222 = vpop.f32.mrf.mxu0
  %v2223 = vadd.f32 %v326, %v2222
  %2224 = vdwg.mxu0
  %2225 = vmatpush.bf16.msra.mxu0 %v1350
  %2226 = vmatpush.bf16.msra.mxu0 %v1346
  %2227 = vmatpush.bf16.msra.mxu0 %v1342
  %2228 = vmatpush.bf16.msra.mxu0 %v1338
  %2229 = vmatpush.bf16.msra.mxu0 %v1334
  %2230 = vmatpush.bf16.msra.mxu0 %v1330
  %2231 = vmatpush.bf16.msra.mxu0 %v1326
  %2232 = vmatpush.bf16.msra.mxu0 %v1322
  %2233 = vmatmul.bf16.gmra.mxu0 %v389
  %v2234 = vpop.f32.mrf.mxu0
  %v2235 = vadd.f32 %v2216, %v2234
  %v2236 = vpop.f32.mrf.mxu0
  %v2237 = vadd.f32 %v2218, %v2236
  %2238 = vmatmul.bf16.gmra.mxu0 %v398
  %v2239 = vpop.f32.mrf.mxu0
  %v2240 = vadd.f32 %v2221, %v2239
  %v2241 = vpop.f32.mrf.mxu0
  %v2242 = vadd.f32 %v2223, %v2241
  %2243 = vdwg.mxu0
  %2244 = vmatpush.bf16.msra.mxu0 %v1382
  %2245 = vmatpush.bf16.msra.mxu0 %v1378
  %2246 = vmatpush.bf16.msra.mxu0 %v1374
  %2247 = vmatpush.bf16.msra.mxu0 %v1370
  %2248 = vmatpush.bf16.msra.mxu0 %v1366
  %2249 = vmatpush.bf16.msra.mxu0 %v1362
  %2250 = vmatpush.bf16.msra.mxu0 %v1358
  %2251 = vmatpush.bf16.msra.mxu0 %v1354
  %2252 = vmatmul.bf16.gmra.mxu0 %v390
  %v2253 = vpop.f32.mrf.mxu0
  %v2254 = vadd.f32 %v2235, %v2253
  %v2255 = vpop.f32.mrf.mxu0
  %v2256 = vadd.f32 %v2237, %v2255
  %2257 = vmatmul.bf16.gmra.mxu0 %v399
  %v2258 = vpop.f32.mrf.mxu0
  %v2259 = vadd.f32 %v2240, %v2258
  %v2260 = vpop.f32.mrf.mxu0
  %v2261 = vadd.f32 %v2242, %v2260
  %2262 = vdwg.mxu0
  %2263 = vmatpush.bf16.msra.mxu0 %v1414
  %2264 = vmatpush.bf16.msra.mxu0 %v1410
  %2265 = vmatpush.bf16.msra.mxu0 %v1406
  %2266 = vmatpush.bf16.msra.mxu0 %v1402
  %2267 = vmatpush.bf16.msra.mxu0 %v1398
  %2268 = vmatpush.bf16.msra.mxu0 %v1394
  %2269 = vmatpush.bf16.msra.mxu0 %v1390
  %2270 = vmatpush.bf16.msra.mxu0 %v1386
  %2271 = vmatmul.bf16.gmra.mxu0 %v391
  %v2272 = vpop.f32.mrf.mxu0
  %v2273 = vadd.f32 %v2254, %v2272
  %v2274 = vpop.f32.mrf.mxu0
  %v2275 = vadd.f32 %v2256, %v2274
  %2276 = vmatmul.bf16.gmra.mxu0 %v400
  %v2277 = vpop.f32.mrf.mxu0
  %v2278 = vadd.f32 %v2259, %v2277
  %v2279 = vpop.f32.mrf.mxu0
  %v2280 = vadd.f32 %v2261, %v2279
  %2281 = vdwg.mxu0
  %2282 = vmatpush.bf16.msra.mxu0 %v1446
  %2283 = vmatpush.bf16.msra.mxu0 %v1442
  %2284 = vmatpush.bf16.msra.mxu0 %v1438
  %2285 = vmatpush.bf16.msra.mxu0 %v1434
  %2286 = vmatpush.bf16.msra.mxu0 %v1430
  %2287 = vmatpush.bf16.msra.mxu0 %v1426
  %2288 = vmatpush.bf16.msra.mxu0 %v1422
  %2289 = vmatpush.bf16.msra.mxu0 %v1418
  %2290 = vmatmul.bf16.gmra.mxu0 %v392
  %v2291 = vpop.f32.mrf.mxu0
  %v2292 = vadd.f32 %v2273, %v2291
  %v2293 = vpop.f32.mrf.mxu0
  %v2294 = vadd.f32 %v2275, %v2293
  %2295 = vmatmul.bf16.gmra.mxu0 %v401
  %v2296 = vpop.f32.mrf.mxu0
  %v2297 = vadd.f32 %v2278, %v2296
  %v2298 = vpop.f32.mrf.mxu0
  %v2299 = vadd.f32 %v2280, %v2298
  %2300 = vdwg.mxu0
  %2301 = vmatpush.bf16.msra.mxu0 %v1478
  %2302 = vmatpush.bf16.msra.mxu0 %v1474
  %2303 = vmatpush.bf16.msra.mxu0 %v1470
  %2304 = vmatpush.bf16.msra.mxu0 %v1466
  %2305 = vmatpush.bf16.msra.mxu0 %v1462
  %2306 = vmatpush.bf16.msra.mxu0 %v1458
  %2307 = vmatpush.bf16.msra.mxu0 %v1454
  %2308 = vmatpush.bf16.msra.mxu0 %v1450
  %2309 = vmatmul.bf16.gmra.mxu0 %v393
  %v2310 = vpop.f32.mrf.mxu0
  %v2311 = vadd.f32 %v2292, %v2310
  %v2312 = vpop.f32.mrf.mxu0
  %v2313 = vadd.f32 %v2294, %v2312
  %2314 = vmatmul.bf16.gmra.mxu0 %v402
  %v2315 = vpop.f32.mrf.mxu0
  %v2316 = vadd.f32 %v2297, %v2315
  %v2317 = vpop.f32.mrf.mxu0
  %v2318 = vadd.f32 %v2299, %v2317
  %2319 = vdwg.mxu0
  %2320 = vmatpush.bf16.msra.mxu0 %v1510
  %2321 = vmatpush.bf16.msra.mxu0 %v1506
  %2322 = vmatpush.bf16.msra.mxu0 %v1502
  %2323 = vmatpush.bf16.msra.mxu0 %v1498
  %2324 = vmatpush.bf16.msra.mxu0 %v1494
  %2325 = vmatpush.bf16.msra.mxu0 %v1490
  %2326 = vmatpush.bf16.msra.mxu0 %v1486
  %2327 = vmatpush.bf16.msra.mxu0 %v1482
  %2328 = vmatmul.bf16.gmra.mxu0 %v394
  %v2329 = vpop.f32.mrf.mxu0
  %v2330 = vadd.f32 %v2311, %v2329
  %v2331 = vpop.f32.mrf.mxu0
  %v2332 = vadd.f32 %v2313, %v2331
  %2333 = vmatmul.bf16.gmra.mxu0 %v403
  %v2334 = vpop.f32.mrf.mxu0
  %v2335 = vadd.f32 %v2316, %v2334
  %v2336 = vpop.f32.mrf.mxu0
  %v2337 = vadd.f32 %v2318, %v2336
  %2338 = vdwg.mxu0
  %2339 = vmatpush.bf16.msra.mxu0 %v1542
  %2340 = vmatpush.bf16.msra.mxu0 %v1538
  %2341 = vmatpush.bf16.msra.mxu0 %v1534
  %2342 = vmatpush.bf16.msra.mxu0 %v1530
  %2343 = vmatpush.bf16.msra.mxu0 %v1526
  %2344 = vmatpush.bf16.msra.mxu0 %v1522
  %2345 = vmatpush.bf16.msra.mxu0 %v1518
  %2346 = vmatpush.bf16.msra.mxu0 %v1514
  %2347 = vmatmul.bf16.gmra.mxu0 %v395
  %v2348 = vpop.f32.mrf.mxu0
  %v2349 = vadd.f32 %v2330, %v2348
  %v2350 = vpop.f32.mrf.mxu0
  %v2351 = vadd.f32 %v2332, %v2350
  %2352 = vmatmul.bf16.gmra.mxu0 %v404
  %v2353 = vpop.f32.mrf.mxu0
  %v2354 = vadd.f32 %v2335, %v2353
  %v2355 = vpop.f32.mrf.mxu0
  %v2356 = vadd.f32 %v2337, %v2355
  %2357 = vdwg.mxu0
  %2358 = vmatpush.bf16.msra.mxu0 %v1574
  %2359 = vmatpush.bf16.msra.mxu0 %v1570
  %2360 = vmatpush.bf16.msra.mxu0 %v1566
  %2361 = vmatpush.bf16.msra.mxu0 %v1562
  %2362 = vmatpush.bf16.msra.mxu0 %v1558
  %2363 = vmatpush.bf16.msra.mxu0 %v1554
  %2364 = vmatpush.bf16.msra.mxu0 %v1550
  %2365 = vmatpush.bf16.msra.mxu0 %v1546
  %2366 = vmatmul.bf16.gmra.mxu0 %v396
  %v2367 = vpop.f32.mrf.mxu0
  %v2368 = vadd.f32 %v2349, %v2367
  %v2369 = vpop.f32.mrf.mxu0
  %v2370 = vadd.f32 %v2351, %v2369
  %2371 = vmatmul.bf16.gmra.mxu0 %v405
  %v2372 = vpop.f32.mrf.mxu0
  %v2373 = vadd.f32 %v2354, %v2372
  %v2374 = vpop.f32.mrf.mxu0
  %v2375 = vadd.f32 %v2356, %v2374
  %2376 = vdwg.mxu0
  %2377 = vmatpush.bf16.msra.mxu0 %v1319
  %2378 = vmatpush.bf16.msra.mxu0 %v1315
  %2379 = vmatpush.bf16.msra.mxu0 %v1311
  %2380 = vmatpush.bf16.msra.mxu0 %v1307
  %2381 = vmatpush.bf16.msra.mxu0 %v1303
  %2382 = vmatpush.bf16.msra.mxu0 %v1299
  %2383 = vmatpush.bf16.msra.mxu0 %v1295
  %2384 = vmatpush.bf16.msra.mxu0 %v1291
  %2385 = vmatmul.bf16.gmra.mxu0 %v388
  %v2386 = vpop.f32.mrf.mxu0
  %v2387 = vadd.f32 %v327, %v2386
  %v2388 = vpop.f32.mrf.mxu0
  %v2389 = vadd.f32 %v327, %v2388
  %2390 = vmatmul.bf16.gmra.mxu0 %v397
  %v2391 = vpop.f32.mrf.mxu0
  %v2392 = vadd.f32 %v327, %v2391
  %v2393 = vpop.f32.mrf.mxu0
  %v2394 = vadd.f32 %v327, %v2393
  %2395 = vdwg.mxu0
  %2396 = vmatpush.bf16.msra.mxu0 %v1351
  %2397 = vmatpush.bf16.msra.mxu0 %v1347
  %2398 = vmatpush.bf16.msra.mxu0 %v1343
  %2399 = vmatpush.bf16.msra.mxu0 %v1339
  %2400 = vmatpush.bf16.msra.mxu0 %v1335
  %2401 = vmatpush.bf16.msra.mxu0 %v1331
  %2402 = vmatpush.bf16.msra.mxu0 %v1327
  %2403 = vmatpush.bf16.msra.mxu0 %v1323
  %2404 = vmatmul.bf16.gmra.mxu0 %v389
  %v2405 = vpop.f32.mrf.mxu0
  %v2406 = vadd.f32 %v2387, %v2405
  %v2407 = vpop.f32.mrf.mxu0
  %v2408 = vadd.f32 %v2389, %v2407
  %2409 = vmatmul.bf16.gmra.mxu0 %v398
  %v2410 = vpop.f32.mrf.mxu0
  %v2411 = vadd.f32 %v2392, %v2410
  %v2412 = vpop.f32.mrf.mxu0
  %v2413 = vadd.f32 %v2394, %v2412
  %2414 = vdwg.mxu0
  %2415 = vmatpush.bf16.msra.mxu0 %v1383
  %2416 = vmatpush.bf16.msra.mxu0 %v1379
  %2417 = vmatpush.bf16.msra.mxu0 %v1375
  %2418 = vmatpush.bf16.msra.mxu0 %v1371
  %2419 = vmatpush.bf16.msra.mxu0 %v1367
  %2420 = vmatpush.bf16.msra.mxu0 %v1363
  %2421 = vmatpush.bf16.msra.mxu0 %v1359
  %2422 = vmatpush.bf16.msra.mxu0 %v1355
  %2423 = vmatmul.bf16.gmra.mxu0 %v390
  %v2424 = vpop.f32.mrf.mxu0
  %v2425 = vadd.f32 %v2406, %v2424
  %v2426 = vpop.f32.mrf.mxu0
  %v2427 = vadd.f32 %v2408, %v2426
  %2428 = vmatmul.bf16.gmra.mxu0 %v399
  %v2429 = vpop.f32.mrf.mxu0
  %v2430 = vadd.f32 %v2411, %v2429
  %v2431 = vpop.f32.mrf.mxu0
  %v2432 = vadd.f32 %v2413, %v2431
  %2433 = vdwg.mxu0
  %2434 = vmatpush.bf16.msra.mxu0 %v1415
  %2435 = vmatpush.bf16.msra.mxu0 %v1411
  %2436 = vmatpush.bf16.msra.mxu0 %v1407
  %2437 = vmatpush.bf16.msra.mxu0 %v1403
  %2438 = vmatpush.bf16.msra.mxu0 %v1399
  %2439 = vmatpush.bf16.msra.mxu0 %v1395
  %2440 = vmatpush.bf16.msra.mxu0 %v1391
  %2441 = vmatpush.bf16.msra.mxu0 %v1387
  %2442 = vmatmul.bf16.gmra.mxu0 %v391
  %v2443 = vpop.f32.mrf.mxu0
  %v2444 = vadd.f32 %v2425, %v2443
  %v2445 = vpop.f32.mrf.mxu0
  %v2446 = vadd.f32 %v2427, %v2445
  %2447 = vmatmul.bf16.gmra.mxu0 %v400
  %v2448 = vpop.f32.mrf.mxu0
  %v2449 = vadd.f32 %v2430, %v2448
  %v2450 = vpop.f32.mrf.mxu0
  %v2451 = vadd.f32 %v2432, %v2450
  %2452 = vdwg.mxu0
  %2453 = vmatpush.bf16.msra.mxu0 %v1447
  %2454 = vmatpush.bf16.msra.mxu0 %v1443
  %2455 = vmatpush.bf16.msra.mxu0 %v1439
  %2456 = vmatpush.bf16.msra.mxu0 %v1435
  %2457 = vmatpush.bf16.msra.mxu0 %v1431
  %2458 = vmatpush.bf16.msra.mxu0 %v1427
  %2459 = vmatpush.bf16.msra.mxu0 %v1423
  %2460 = vmatpush.bf16.msra.mxu0 %v1419
  %2461 = vmatmul.bf16.gmra.mxu0 %v392
  %v2462 = vpop.f32.mrf.mxu0
  %v2463 = vadd.f32 %v2444, %v2462
  %v2464 = vpop.f32.mrf.mxu0
  %v2465 = vadd.f32 %v2446, %v2464
  %2466 = vmatmul.bf16.gmra.mxu0 %v401
  %v2467 = vpop.f32.mrf.mxu0
  %v2468 = vadd.f32 %v2449, %v2467
  %v2469 = vpop.f32.mrf.mxu0
  %v2470 = vadd.f32 %v2451, %v2469
  %2471 = vdwg.mxu0
  %2472 = vmatpush.bf16.msra.mxu0 %v1479
  %2473 = vmatpush.bf16.msra.mxu0 %v1475
  %2474 = vmatpush.bf16.msra.mxu0 %v1471
  %2475 = vmatpush.bf16.msra.mxu0 %v1467
  %2476 = vmatpush.bf16.msra.mxu0 %v1463
  %2477 = vmatpush.bf16.msra.mxu0 %v1459
  %2478 = vmatpush.bf16.msra.mxu0 %v1455
  %2479 = vmatpush.bf16.msra.mxu0 %v1451
  %2480 = vmatmul.bf16.gmra.mxu0 %v393
  %v2481 = vpop.f32.mrf.mxu0
  %v2482 = vadd.f32 %v2463, %v2481
  %v2483 = vpop.f32.mrf.mxu0
  %v2484 = vadd.f32 %v2465, %v2483
  %2485 = vmatmul.bf16.gmra.mxu0 %v402
  %v2486 = vpop.f32.mrf.mxu0
  %v2487 = vadd.f32 %v2468, %v2486
  %v2488 = vpop.f32.mrf.mxu0
  %v2489 = vadd.f32 %v2470, %v2488
  %2490 = vdwg.mxu0
  %2491 = vmatpush.bf16.msra.mxu0 %v1511
  %2492 = vmatpush.bf16.msra.mxu0 %v1507
  %2493 = vmatpush.bf16.msra.mxu0 %v1503
  %2494 = vmatpush.bf16.msra.mxu0 %v1499
  %2495 = vmatpush.bf16.msra.mxu0 %v1495
  %2496 = vmatpush.bf16.msra.mxu0 %v1491
  %2497 = vmatpush.bf16.msra.mxu0 %v1487
  %2498 = vmatpush.bf16.msra.mxu0 %v1483
  %2499 = vmatmul.bf16.gmra.mxu0 %v394
  %v2500 = vpop.f32.mrf.mxu0
  %v2501 = vadd.f32 %v2482, %v2500
  %v2502 = vpop.f32.mrf.mxu0
  %v2503 = vadd.f32 %v2484, %v2502
  %2504 = vmatmul.bf16.gmra.mxu0 %v403
  %v2505 = vpop.f32.mrf.mxu0
  %v2506 = vadd.f32 %v2487, %v2505
  %v2507 = vpop.f32.mrf.mxu0
  %v2508 = vadd.f32 %v2489, %v2507
  %2509 = vdwg.mxu0
  %2510 = vmatpush.bf16.msra.mxu0 %v1543
  %2511 = vmatpush.bf16.msra.mxu0 %v1539
  %2512 = vmatpush.bf16.msra.mxu0 %v1535
  %2513 = vmatpush.bf16.msra.mxu0 %v1531
  %2514 = vmatpush.bf16.msra.mxu0 %v1527
  %2515 = vmatpush.bf16.msra.mxu0 %v1523
  %2516 = vmatpush.bf16.msra.mxu0 %v1519
  %2517 = vmatpush.bf16.msra.mxu0 %v1515
  %2518 = vmatmul.bf16.gmra.mxu0 %v395
  %v2519 = vpop.f32.mrf.mxu0
  %v2520 = vadd.f32 %v2501, %v2519
  %v2521 = vpop.f32.mrf.mxu0
  %v2522 = vadd.f32 %v2503, %v2521
  %2523 = vmatmul.bf16.gmra.mxu0 %v404
  %v2524 = vpop.f32.mrf.mxu0
  %v2525 = vadd.f32 %v2506, %v2524
  %v2526 = vpop.f32.mrf.mxu0
  %v2527 = vadd.f32 %v2508, %v2526
  %2528 = vdwg.mxu0
  %2529 = vmatpush.bf16.msra.mxu0 %v1575
  %2530 = vmatpush.bf16.msra.mxu0 %v1571
  %2531 = vmatpush.bf16.msra.mxu0 %v1567
  %2532 = vmatpush.bf16.msra.mxu0 %v1563
  %2533 = vmatpush.bf16.msra.mxu0 %v1559
  %2534 = vmatpush.bf16.msra.mxu0 %v1555
  %2535 = vmatpush.bf16.msra.mxu0 %v1551
  %2536 = vmatpush.bf16.msra.mxu0 %v1547
  %2537 = vmatmul.bf16.gmra.mxu0 %v396
  %v2538 = vpop.f32.mrf.mxu0
  %v2539 = vadd.f32 %v2520, %v2538
  %v2540 = vpop.f32.mrf.mxu0
  %v2541 = vadd.f32 %v2522, %v2540
  %2542 = vmatmul.bf16.gmra.mxu0 %v405
  %v2543 = vpop.f32.mrf.mxu0
  %v2544 = vadd.f32 %v2525, %v2543
  %v2545 = vpop.f32.mrf.mxu0
  %v2546 = vadd.f32 %v2527, %v2545
  %2547 = vdwg.mxu0
  %v2548 = vmax.f32 %v2026, 0.0
  %v2549 = vmax.f32 %v2197, 0.0
  %v2550 = vmax.f32 %v2368, 0.0
  %v2551 = vmax.f32 %v2539, 0.0
  %v2552 = vmax.f32 %v2028, 0.0
  %v2553 = vmax.f32 %v2199, 0.0
  %v2554 = vmax.f32 %v2370, 0.0
  %v2555 = vmax.f32 %v2541, 0.0
  %v2556 = vmax.f32 %v2031, 0.0
  %v2557 = vmax.f32 %v2202, 0.0
  %v2558 = vmax.f32 %v2373, 0.0
  %v2559 = vmax.f32 %v2544, 0.0
  %v2560 = vmax.f32 %v2033, 0.0
  %v2561 = vmax.f32 %v2204, 0.0
  %v2562 = vmax.f32 %v2375, 0.0
  %v2563 = vmax.f32 %v2546, 0.0
  %v2564 = vpack.c.bf16 %v2549, %v2548
  %v2565 = vpack.c.bf16 %v2551, %v2550
  %v2566 = vpack.c.bf16 %v2553, %v2552
  %v2567 = vpack.c.bf16 %v2555, %v2554
  %v2568 = vpack.c.bf16 %v2557, %v2556
  %v2569 = vpack.c.bf16 %v2559, %v2558
  %v2570 = vpack.c.bf16 %v2561, %v2560
  %v2571 = vpack.c.bf16 %v2563, %v2562
  %2572 = vst [vmem:[%s3] sm:$0xff] %v2564
  %2573 = vst [vmem:[%s3 + $0x8] sm:$0xff] %v2565
  %2574 = vst [vmem:[%s3 + $0x10] sm:$0xff] %v2566
  %2575 = vst [vmem:[%s3 + $0x18] sm:$0xff] %v2567
  %2576 = vst [vmem:[%s3 + $0x20] sm:$0xff] %v2568
  %2577 = vst [vmem:[%s3 + $0x28] sm:$0xff] %v2569
  %2578 = vst [vmem:[%s3 + $0x30] sm:$0xff] %v2570
  %2579 = vst [vmem:[%s3 + $0x38] sm:$0xff] %v2571
  // Predicated region
  $region14: #{vqvae_forward.22} parent=0 // pred_check
    _
  $region15: #{vqvae_forward.22} parent=0 // pred_check_branch
    %2581 = sbr.rel (0) target = $region17
  $region16: #{vqvae_forward.22} parent=0 // pred_region
    _
  $region17: #{vqvae_forward.22} parent=0 // pred_fallthru
    _
  // Predicated region
  $region18: #{vqvae_forward.22} parent=0 // pred_check
    _
  $region19: #{vqvae_forward.22} parent=0 // pred_check_branch
    %2583 = sbr.rel (0) target = $region21
  $region20: #{vqvae_forward.22} parent=0 // pred_region
    _
  $region21: #{vqvae_forward.22} parent=0 // pred_fallthru
    _

// kernel: vqvae_forward.23
$region0: #{vqvae_forward.23}
  #allocation0 [shape = 'u32[]', space=smem, size = 0x4, offset = 0x4, fixed_abs, tag = 'smem constant byte address 0x4 - core index']
  #allocation1 [shape = 'u32[72,128]{1,0:T(1,128)}', space=vmem, size = 0x9000, scoped, tag = 'internal scratch']
  %s0 = inlined_call_operand.vmem [shape: bf16[128,1152], index: 0, kind: input, shape index: {}]
  %s1 = inlined_call_operand.vmem [shape: bf16[1152,12], index: 1, kind: input, shape index: {}]
  %s2 = inlined_call_operand.vmem [shape: f32[1,12], index: 2, kind: input, shape index: {}]
  %s3 = inlined_call_operand.vmem [shape: f32[128,12], index: 3, kind: output, shape index: {}]
  %s4 = sld [smem:[#allocation0]]
  $region22: #{vqvae_forward.23} parent=0
    _
  %s6 = ssub.s32 1, %s4
  %s7 = scalar_select 0, %s6, %s4
  // Predicated region
  $region2: #{vqvae_forward.23} parent=0 // pred_check
    _
  $region3: #{vqvae_forward.23} parent=0 // pred_check_branch
    %9 = sbr.rel (0) target = $region5
  $region4: #{vqvae_forward.23} parent=0 // pred_region
    _
  $region5: #{vqvae_forward.23} parent=0 // pred_fallthru
    _
  // Predicated region
  $region6: #{vqvae_forward.23} parent=0 // pred_check
    _
  $region7: #{vqvae_forward.23} parent=0 // pred_check_branch
    %11 = sbr.rel (0) target = $region9
  $region8: #{vqvae_forward.23} parent=0 // pred_region
    _
  $region9: #{vqvae_forward.23} parent=0 // pred_fallthru
    _
  // Predicated region
  $region10: #{vqvae_forward.23} parent=0 // pred_check
    _
  $region11: #{vqvae_forward.23} parent=0 // pred_check_branch
    %13 = sbr.rel (0) target = $region13
  $region12: #{vqvae_forward.23} parent=0 // pred_region
    _
  $region13: #{vqvae_forward.23} parent=0 // pred_fallthru
    _
  %v14 = vld [vmem:[%s0] sm:$0xff]
  %v15 = vld [vmem:[%s0 + $0x8] sm:$0xff]
  %v16 = vld [vmem:[%s0 + $0x10] sm:$0xff]
  %v17 = vld [vmem:[%s0 + $0x18] sm:$0xff]
  %v18 = vld [vmem:[%s0 + $0x20] sm:$0xf]
  %v19 = vld [vmem:[%s0 + $0x24] sm:$0xff]
  %v20 = vld [vmem:[%s0 + $0x2c] sm:$0xff]
  %v21 = vld [vmem:[%s0 + $0x34] sm:$0xff]
  %v22 = vld [vmem:[%s0 + $0x3c] sm:$0xff]
  %v23 = vld [vmem:[%s0 + $0x44] sm:$0xf]
  %v24 = vld [vmem:[%s0 + $0x48] sm:$0xff]
  %v25 = vld [vmem:[%s0 + $0x50] sm:$0xff]
  %v26 = vld [vmem:[%s0 + $0x58] sm:$0xff]
  %v27 = vld [vmem:[%s0 + $0x60] sm:$0xff]
  %v28 = vld [vmem:[%s0 + $0x68] sm:$0xf]
  %v29 = vld [vmem:[%s0 + $0x6c] sm:$0xff]
  %v30 = vld [vmem:[%s0 + $0x74] sm:$0xff]
  %v31 = vld [vmem:[%s0 + $0x7c] sm:$0xff]
  %v32 = vld [vmem:[%s0 + $0x84] sm:$0xff]
  %v33 = vld [vmem:[%s0 + $0x8c] sm:$0xf]
  %v34 = vld [vmem:[%s0 + $0x90] sm:$0xff]
  %v35 = vld [vmem:[%s0 + $0x98] sm:$0xff]
  %v36 = vld [vmem:[%s0 + $0xa0] sm:$0xff]
  %v37 = vld [vmem:[%s0 + $0xa8] sm:$0xff]
  %v38 = vld [vmem:[%s0 + $0xb0] sm:$0xf]
  %v39 = vld [vmem:[%s0 + $0xb4] sm:$0xff]
  %v40 = vld [vmem:[%s0 + $0xbc] sm:$0xff]
  %v41 = vld [vmem:[%s0 + $0xc4] sm:$0xff]
  %v42 = vld [vmem:[%s0 + $0xcc] sm:$0xff]
  %v43 = vld [vmem:[%s0 + $0xd4] sm:$0xf]
  %v44 = vld [vmem:[%s0 + $0xd8] sm:$0xff]
  %v45 = vld [vmem:[%s0 + $0xe0] sm:$0xff]
  %v46 = vld [vmem:[%s0 + $0xe8] sm:$0xff]
  %v47 = vld [vmem:[%s0 + $0xf0] sm:$0xff]
  %v48 = vld [vmem:[%s0 + $0xf8] sm:$0xf]
  %v49 = vld [vmem:[%s0 + $0xfc] sm:$0xff]
  %v50 = vld [vmem:[%s0 + $0x104] sm:$0xff]
  %v51 = vld [vmem:[%s0 + $0x10c] sm:$0xff]
  %v52 = vld [vmem:[%s0 + $0x114] sm:$0xff]
  %v53 = vld [vmem:[%s0 + $0x11c] sm:$0xf]
  %v54 = vld [vmem:[%s0 + $0x120] sm:$0xff]
  %v55 = vld [vmem:[%s0 + $0x128] sm:$0xff]
  %v56 = vld [vmem:[%s0 + $0x130] sm:$0xff]
  %v57 = vld [vmem:[%s0 + $0x138] sm:$0xff]
  %v58 = vld [vmem:[%s0 + $0x140] sm:$0xf]
  %v59 = vld [vmem:[%s0 + $0x144] sm:$0xff]
  %v60 = vld [vmem:[%s0 + $0x14c] sm:$0xff]
  %v61 = vld [vmem:[%s0 + $0x154] sm:$0xff]
  %v62 = vld [vmem:[%s0 + $0x15c] sm:$0xff]
  %v63 = vld [vmem:[%s0 + $0x164] sm:$0xf]
  %v64 = vld [vmem:[%s0 + $0x168] sm:$0xff]
  %v65 = vld [vmem:[%s0 + $0x170] sm:$0xff]
  %v66 = vld [vmem:[%s0 + $0x178] sm:$0xff]
  %v67 = vld [vmem:[%s0 + $0x180] sm:$0xff]
  %v68 = vld [vmem:[%s0 + $0x188] sm:$0xf]
  %v69 = vld [vmem:[%s0 + $0x18c] sm:$0xff]
  %v70 = vld [vmem:[%s0 + $0x194] sm:$0xff]
  %v71 = vld [vmem:[%s0 + $0x19c] sm:$0xff]
  %v72 = vld [vmem:[%s0 + $0x1a4] sm:$0xff]
  %v73 = vld [vmem:[%s0 + $0x1ac] sm:$0xf]
  %v74 = vld [vmem:[%s0 + $0x1b0] sm:$0xff]
  %v75 = vld [vmem:[%s0 + $0x1b8] sm:$0xff]
  %v76 = vld [vmem:[%s0 + $0x1c0] sm:$0xff]
  %v77 = vld [vmem:[%s0 + $0x1c8] sm:$0xff]
  %v78 = vld [vmem:[%s0 + $0x1d0] sm:$0xf]
  %v79 = vld [vmem:[%s0 + $0x1d4] sm:$0xff]
  %v80 = vld [vmem:[%s0 + $0x1dc] sm:$0xff]
  %v81 = vld [vmem:[%s0 + $0x1e4] sm:$0xff]
  %v82 = vld [vmem:[%s0 + $0x1ec] sm:$0xff]
  %v83 = vld [vmem:[%s0 + $0x1f4] sm:$0xf]
  %v84 = vld [vmem:[%s0 + $0x1f8] sm:$0xff]
  %v85 = vld [vmem:[%s0 + $0x200] sm:$0xff]
  %v86 = vld [vmem:[%s0 + $0x208] sm:$0xff]
  %v87 = vld [vmem:[%s0 + $0x210] sm:$0xff]
  %v88 = vld [vmem:[%s0 + $0x218] sm:$0xf]
  %v89 = vld [vmem:[%s0 + $0x21c] sm:$0xff]
  %v90 = vld [vmem:[%s0 + $0x224] sm:$0xff]
  %v91 = vld [vmem:[%s0 + $0x22c] sm:$0xff]
  %v92 = vld [vmem:[%s0 + $0x234] sm:$0xff]
  %v93 = vld [vmem:[%s0 + $0x23c] sm:$0xf]
  %v94 = vld [vmem:[%s1] sm:$0xf]
  %v95 = vld [vmem:[%s1 + $0x4] sm:$0xf]
  %v96 = vld [vmem:[%s1 + $0x8] sm:$0xf]
  %v97 = vld [vmem:[%s1 + $0xc] sm:$0xf]
  %v98 = vld [vmem:[%s1 + $0x10] sm:$0xf]
  %v99 = vld [vmem:[%s1 + $0x14] sm:$0xf]
  %v100 = vld [vmem:[%s1 + $0x18] sm:$0xf]
  %v101 = vld [vmem:[%s1 + $0x1c] sm:$0xf]
  %v102 = vld [vmem:[%s1 + $0x20] sm:$0xf]
  %v103 = vld [vmem:[%s1 + $0x24] sm:$0xf]
  %v104 = vld [vmem:[%s1 + $0x28] sm:$0xf]
  %v105 = vld [vmem:[%s1 + $0x2c] sm:$0xf]
  %v106 = vld [vmem:[%s1 + $0x30] sm:$0xf]
  %v107 = vld [vmem:[%s1 + $0x34] sm:$0xf]
  %v108 = vld [vmem:[%s1 + $0x38] sm:$0xf]
  %v109 = vld [vmem:[%s1 + $0x3c] sm:$0xf]
  %v110 = vld [vmem:[%s1 + $0x40] sm:$0xf]
  %v111 = vld [vmem:[%s1 + $0x44] sm:$0xf]
  %v112 = vld [vmem:[%s1 + $0x48] sm:$0xf]
  %v113 = vld [vmem:[%s1 + $0x4c] sm:$0xf]
  %v114 = vld [vmem:[%s1 + $0x50] sm:$0xf]
  %v115 = vld [vmem:[%s1 + $0x54] sm:$0xf]
  %v116 = vld [vmem:[%s1 + $0x58] sm:$0xf]
  %v117 = vld [vmem:[%s1 + $0x5c] sm:$0xf]
  %v118 = vld [vmem:[%s1 + $0x60] sm:$0xf]
  %v119 = vld [vmem:[%s1 + $0x64] sm:$0xf]
  %v120 = vld [vmem:[%s1 + $0x68] sm:$0xf]
  %v121 = vld [vmem:[%s1 + $0x6c] sm:$0xf]
  %v122 = vld [vmem:[%s1 + $0x70] sm:$0xf]
  %v123 = vld [vmem:[%s1 + $0x74] sm:$0xf]
  %v124 = vld [vmem:[%s1 + $0x78] sm:$0xf]
  %v125 = vld [vmem:[%s1 + $0x7c] sm:$0xf]
  %v126 = vld [vmem:[%s1 + $0x80] sm:$0xf]
  %v127 = vld [vmem:[%s1 + $0x84] sm:$0xf]
  %v128 = vld [vmem:[%s1 + $0x88] sm:$0xf]
  %v129 = vld [vmem:[%s1 + $0x8c] sm:$0xf]
  %v130 = vld [vmem:[%s1 + $0x90] sm:$0xf]
  %v131 = vld [vmem:[%s1 + $0x94] sm:$0xf]
  %v132 = vld [vmem:[%s1 + $0x98] sm:$0xf]
  %v133 = vld [vmem:[%s1 + $0x9c] sm:$0xf]
  %v134 = vld [vmem:[%s1 + $0xa0] sm:$0xf]
  %v135 = vld [vmem:[%s1 + $0xa4] sm:$0xf]
  %v136 = vld [vmem:[%s1 + $0xa8] sm:$0xf]
  %v137 = vld [vmem:[%s1 + $0xac] sm:$0xf]
  %v138 = vld [vmem:[%s1 + $0xb0] sm:$0xf]
  %v139 = vld [vmem:[%s1 + $0xb4] sm:$0xf]
  %v140 = vld [vmem:[%s1 + $0xb8] sm:$0xf]
  %v141 = vld [vmem:[%s1 + $0xbc] sm:$0xf]
  %v142 = vld [vmem:[%s1 + $0xc0] sm:$0xf]
  %v143 = vld [vmem:[%s1 + $0xc4] sm:$0xf]
  %v144 = vld [vmem:[%s1 + $0xc8] sm:$0xf]
  %v145 = vld [vmem:[%s1 + $0xcc] sm:$0xf]
  %v146 = vld [vmem:[%s1 + $0xd0] sm:$0xf]
  %v147 = vld [vmem:[%s1 + $0xd4] sm:$0xf]
  %v148 = vld [vmem:[%s1 + $0xd8] sm:$0xf]
  %v149 = vld [vmem:[%s1 + $0xdc] sm:$0xf]
  %v150 = vld [vmem:[%s1 + $0xe0] sm:$0xf]
  %v151 = vld [vmem:[%s1 + $0xe4] sm:$0xf]
  %v152 = vld [vmem:[%s1 + $0xe8] sm:$0xf]
  %v153 = vld [vmem:[%s1 + $0xec] sm:$0xf]
  %v154 = vld [vmem:[%s1 + $0xf0] sm:$0xf]
  %v155 = vld [vmem:[%s1 + $0xf4] sm:$0xf]
  %v156 = vld [vmem:[%s1 + $0xf8] sm:$0xf]
  %v157 = vld [vmem:[%s1 + $0xfc] sm:$0xf]
  %v158 = vld [vmem:[%s1 + $0x100] sm:$0xf]
  %v159 = vld [vmem:[%s1 + $0x104] sm:$0xf]
  %v160 = vld [vmem:[%s1 + $0x108] sm:$0xf]
  %v161 = vld [vmem:[%s1 + $0x10c] sm:$0xf]
  %v162 = vld [vmem:[%s1 + $0x110] sm:$0xf]
  %v163 = vld [vmem:[%s1 + $0x114] sm:$0xf]
  %v164 = vld [vmem:[%s1 + $0x118] sm:$0xf]
  %v165 = vld [vmem:[%s1 + $0x11c] sm:$0xf]
  %v166 = vld [vmem:[%s1 + $0x120] sm:$0xf]
  %v167 = vld [vmem:[%s1 + $0x124] sm:$0xf]
  %v168 = vld [vmem:[%s1 + $0x128] sm:$0xf]
  %v169 = vld [vmem:[%s1 + $0x12c] sm:$0xf]
  %v170 = vld [vmem:[%s1 + $0x130] sm:$0xf]
  %v171 = vld [vmem:[%s1 + $0x134] sm:$0xf]
  %v172 = vld [vmem:[%s1 + $0x138] sm:$0xf]
  %v173 = vld [vmem:[%s1 + $0x13c] sm:$0xf]
  %v174 = vld [vmem:[%s1 + $0x140] sm:$0xf]
  %v175 = vld [vmem:[%s1 + $0x144] sm:$0xf]
  %v176 = vld [vmem:[%s1 + $0x148] sm:$0xf]
  %v177 = vld [vmem:[%s1 + $0x14c] sm:$0xf]
  %v178 = vld [vmem:[%s1 + $0x150] sm:$0xf]
  %v179 = vld [vmem:[%s1 + $0x154] sm:$0xf]
  %v180 = vld [vmem:[%s1 + $0x158] sm:$0xf]
  %v181 = vld [vmem:[%s1 + $0x15c] sm:$0xf]
  %v182 = vld [vmem:[%s1 + $0x160] sm:$0xf]
  %v183 = vld [vmem:[%s1 + $0x164] sm:$0xf]
  %v184 = vld [vmem:[%s1 + $0x168] sm:$0xf]
  %v185 = vld [vmem:[%s1 + $0x16c] sm:$0xf]
  %v186 = vld [vmem:[%s1 + $0x170] sm:$0xf]
  %v187 = vld [vmem:[%s1 + $0x174] sm:$0xf]
  %v188 = vld [vmem:[%s1 + $0x178] sm:$0xf]
  %v189 = vld [vmem:[%s1 + $0x17c] sm:$0xf]
  %v190 = vld [vmem:[%s1 + $0x180] sm:$0xf]
  %v191 = vld [vmem:[%s1 + $0x184] sm:$0xf]
  %v192 = vld [vmem:[%s1 + $0x188] sm:$0xf]
  %v193 = vld [vmem:[%s1 + $0x18c] sm:$0xf]
  %v194 = vld [vmem:[%s1 + $0x190] sm:$0xf]
  %v195 = vld [vmem:[%s1 + $0x194] sm:$0xf]
  %v196 = vld [vmem:[%s1 + $0x198] sm:$0xf]
  %v197 = vld [vmem:[%s1 + $0x19c] sm:$0xf]
  %v198 = vld [vmem:[%s1 + $0x1a0] sm:$0xf]
  %v199 = vld [vmem:[%s1 + $0x1a4] sm:$0xf]
  %v200 = vld [vmem:[%s1 + $0x1a8] sm:$0xf]
  %v201 = vld [vmem:[%s1 + $0x1ac] sm:$0xf]
  %v202 = vld [vmem:[%s1 + $0x1b0] sm:$0xf]
  %v203 = vld [vmem:[%s1 + $0x1b4] sm:$0xf]
  %v204 = vld [vmem:[%s1 + $0x1b8] sm:$0xf]
  %v205 = vld [vmem:[%s1 + $0x1bc] sm:$0xf]
  %v206 = vld [vmem:[%s1 + $0x1c0] sm:$0xf]
  %v207 = vld [vmem:[%s1 + $0x1c4] sm:$0xf]
  %v208 = vld [vmem:[%s1 + $0x1c8] sm:$0xf]
  %v209 = vld [vmem:[%s1 + $0x1cc] sm:$0xf]
  %v210 = vld [vmem:[%s1 + $0x1d0] sm:$0xf]
  %v211 = vld [vmem:[%s1 + $0x1d4] sm:$0xf]
  %v212 = vld [vmem:[%s1 + $0x1d8] sm:$0xf]
  %v213 = vld [vmem:[%s1 + $0x1dc] sm:$0xf]
  %v214 = vld [vmem:[%s1 + $0x1e0] sm:$0xf]
  %v215 = vld [vmem:[%s1 + $0x1e4] sm:$0xf]
  %v216 = vld [vmem:[%s1 + $0x1e8] sm:$0xf]
  %v217 = vld [vmem:[%s1 + $0x1ec] sm:$0xf]
  %v218 = vld [vmem:[%s1 + $0x1f0] sm:$0xf]
  %v219 = vld [vmem:[%s1 + $0x1f4] sm:$0xf]
  %v220 = vld [vmem:[%s1 + $0x1f8] sm:$0xf]
  %v221 = vld [vmem:[%s1 + $0x1fc] sm:$0xf]
  %v222 = vld [vmem:[%s1 + $0x200] sm:$0xf]
  %v223 = vld [vmem:[%s1 + $0x204] sm:$0xf]
  %v224 = vld [vmem:[%s1 + $0x208] sm:$0xf]
  %v225 = vld [vmem:[%s1 + $0x20c] sm:$0xf]
  %v226 = vld [vmem:[%s1 + $0x210] sm:$0xf]
  %v227 = vld [vmem:[%s1 + $0x214] sm:$0xf]
  %v228 = vld [vmem:[%s1 + $0x218] sm:$0xf]
  %v229 = vld [vmem:[%s1 + $0x21c] sm:$0xf]
  %v230 = vld [vmem:[%s1 + $0x220] sm:$0xf]
  %v231 = vld [vmem:[%s1 + $0x224] sm:$0xf]
  %v232 = vld [vmem:[%s1 + $0x228] sm:$0xf]
  %v233 = vld [vmem:[%s1 + $0x22c] sm:$0xf]
  %v234 = vld [vmem:[%s1 + $0x230] sm:$0xf]
  %v235 = vld [vmem:[%s1 + $0x234] sm:$0xf]
  %v236 = vld [vmem:[%s1 + $0x238] sm:$0xf]
  %v237 = vld [vmem:[%s1 + $0x23c] sm:$0xf]
  %v238 = vld [vmem:[%s2] sm:$0x1]
  %v240 = vperm.slane %v238, 0
  %v322 = vunpack.c.l.b16 %v14
  %v323 = vunpack.c.h.b16 %v14
  %v324 = vunpack.c.l.b16 %v15
  %v325 = vunpack.c.h.b16 %v15
  %v326 = vunpack.c.l.b16 %v16
  %v327 = vunpack.c.h.b16 %v16
  %v328 = vunpack.c.l.b16 %v17
  %v329 = vunpack.c.h.b16 %v17
  %v330 = vunpack.c.l.b16 %v18
  %v331 = vunpack.c.l.b16 %v19
  %v332 = vunpack.c.h.b16 %v19
  %v333 = vunpack.c.l.b16 %v20
  %v334 = vunpack.c.h.b16 %v20
  %v335 = vunpack.c.l.b16 %v21
  %v336 = vunpack.c.h.b16 %v21
  %v337 = vunpack.c.l.b16 %v22
  %v338 = vunpack.c.h.b16 %v22
  %v339 = vunpack.c.l.b16 %v23
  %v340 = vunpack.c.l.b16 %v24
  %v341 = vunpack.c.h.b16 %v24
  %v342 = vunpack.c.l.b16 %v25
  %v343 = vunpack.c.h.b16 %v25
  %v344 = vunpack.c.l.b16 %v26
  %v345 = vunpack.c.h.b16 %v26
  %v346 = vunpack.c.l.b16 %v27
  %v347 = vunpack.c.h.b16 %v27
  %v348 = vunpack.c.l.b16 %v28
  %v349 = vunpack.c.l.b16 %v29
  %v350 = vunpack.c.h.b16 %v29
  %v351 = vunpack.c.l.b16 %v30
  %v352 = vunpack.c.h.b16 %v30
  %v353 = vunpack.c.l.b16 %v31
  %v354 = vunpack.c.h.b16 %v31
  %v355 = vunpack.c.l.b16 %v32
  %v356 = vunpack.c.h.b16 %v32
  %v357 = vunpack.c.l.b16 %v33
  %v358 = vunpack.c.l.b16 %v34
  %v359 = vunpack.c.h.b16 %v34
  %v360 = vunpack.c.l.b16 %v35
  %v361 = vunpack.c.h.b16 %v35
  %v362 = vunpack.c.l.b16 %v36
  %v363 = vunpack.c.h.b16 %v36
  %v364 = vunpack.c.l.b16 %v37
  %v365 = vunpack.c.h.b16 %v37
  %v366 = vunpack.c.l.b16 %v38
  %v367 = vunpack.c.l.b16 %v39
  %v368 = vunpack.c.h.b16 %v39
  %v369 = vunpack.c.l.b16 %v40
  %v370 = vunpack.c.h.b16 %v40
  %v371 = vunpack.c.l.b16 %v41
  %v372 = vunpack.c.h.b16 %v41
  %v373 = vunpack.c.l.b16 %v42
  %v374 = vunpack.c.h.b16 %v42
  %v375 = vunpack.c.l.b16 %v43
  %v376 = vunpack.c.l.b16 %v44
  %v377 = vunpack.c.h.b16 %v44
  %v378 = vunpack.c.l.b16 %v45
  %v379 = vunpack.c.h.b16 %v45
  %v380 = vunpack.c.l.b16 %v46
  %v381 = vunpack.c.h.b16 %v46
  %v382 = vunpack.c.l.b16 %v47
  %v383 = vunpack.c.h.b16 %v47
  %v384 = vunpack.c.l.b16 %v48
  %v385 = vunpack.c.l.b16 %v49
  %v386 = vunpack.c.h.b16 %v49
  %v387 = vunpack.c.l.b16 %v50
  %v388 = vunpack.c.h.b16 %v50
  %v389 = vunpack.c.l.b16 %v51
  %v390 = vunpack.c.h.b16 %v51
  %v391 = vunpack.c.l.b16 %v52
  %v392 = vunpack.c.h.b16 %v52
  %v393 = vunpack.c.l.b16 %v53
  %v394 = vunpack.c.l.b16 %v54
  %v395 = vunpack.c.h.b16 %v54
  %v396 = vunpack.c.l.b16 %v55
  %v397 = vunpack.c.h.b16 %v55
  %v398 = vunpack.c.l.b16 %v56
  %v399 = vunpack.c.h.b16 %v56
  %v400 = vunpack.c.l.b16 %v57
  %v401 = vunpack.c.h.b16 %v57
  %v402 = vunpack.c.l.b16 %v58
  %v403 = vunpack.c.l.b16 %v59
  %v404 = vunpack.c.h.b16 %v59
  %v405 = vunpack.c.l.b16 %v60
  %v406 = vunpack.c.h.b16 %v60
  %v407 = vunpack.c.l.b16 %v61
  %v408 = vunpack.c.h.b16 %v61
  %v409 = vunpack.c.l.b16 %v62
  %v410 = vunpack.c.h.b16 %v62
  %v411 = vunpack.c.l.b16 %v63
  %v412 = vunpack.c.l.b16 %v64
  %v413 = vunpack.c.h.b16 %v64
  %v414 = vunpack.c.l.b16 %v65
  %v415 = vunpack.c.h.b16 %v65
  %v416 = vunpack.c.l.b16 %v66
  %v417 = vunpack.c.h.b16 %v66
  %v418 = vunpack.c.l.b16 %v67
  %v419 = vunpack.c.h.b16 %v67
  %v420 = vunpack.c.l.b16 %v68
  %v421 = vunpack.c.l.b16 %v69
  %v422 = vunpack.c.h.b16 %v69
  %v423 = vunpack.c.l.b16 %v70
  %v424 = vunpack.c.h.b16 %v70
  %v425 = vunpack.c.l.b16 %v71
  %v426 = vunpack.c.h.b16 %v71
  %v427 = vunpack.c.l.b16 %v72
  %v428 = vunpack.c.h.b16 %v72
  %v429 = vunpack.c.l.b16 %v73
  %v430 = vunpack.c.l.b16 %v74
  %v431 = vunpack.c.h.b16 %v74
  %v432 = vunpack.c.l.b16 %v75
  %v433 = vunpack.c.h.b16 %v75
  %v434 = vunpack.c.l.b16 %v76
  %v435 = vunpack.c.h.b16 %v76
  %v436 = vunpack.c.l.b16 %v77
  %v437 = vunpack.c.h.b16 %v77
  %v438 = vunpack.c.l.b16 %v78
  %v439 = vunpack.c.l.b16 %v79
  %v440 = vunpack.c.h.b16 %v79
  %v441 = vunpack.c.l.b16 %v80
  %v442 = vunpack.c.h.b16 %v80
  %v443 = vunpack.c.l.b16 %v81
  %v444 = vunpack.c.h.b16 %v81
  %v445 = vunpack.c.l.b16 %v82
  %v446 = vunpack.c.h.b16 %v82
  %v447 = vunpack.c.l.b16 %v83
  %v448 = vunpack.c.l.b16 %v84
  %v449 = vunpack.c.h.b16 %v84
  %v450 = vunpack.c.l.b16 %v85
  %v451 = vunpack.c.h.b16 %v85
  %v452 = vunpack.c.l.b16 %v86
  %v453 = vunpack.c.h.b16 %v86
  %v454 = vunpack.c.l.b16 %v87
  %v455 = vunpack.c.h.b16 %v87
  %v456 = vunpack.c.l.b16 %v88
  %v457 = vunpack.c.l.b16 %v89
  %v458 = vunpack.c.h.b16 %v89
  %v459 = vunpack.c.l.b16 %v90
  %v460 = vunpack.c.h.b16 %v90
  %v461 = vunpack.c.l.b16 %v91
  %v462 = vunpack.c.h.b16 %v91
  %v463 = vunpack.c.l.b16 %v92
  %v464 = vunpack.c.h.b16 %v92
  %v465 = vunpack.c.l.b16 %v93
  %v466 = vpack.c.b16 %v331, %v322
  %v467 = vpack.c.b16 %v332, %v323
  %v468 = vpack.c.b16 %v333, %v324
  %v469 = vpack.c.b16 %v334, %v325
  %v470 = vpack.c.b16 %v335, %v326
  %v471 = vpack.c.b16 %v336, %v327
  %v472 = vpack.c.b16 %v337, %v328
  %v473 = vpack.c.b16 %v338, %v329
  %v474 = vpack.c.b16 %v339, %v330
  %v475 = vpack.c.b16 %v349, %v340
  %v476 = vpack.c.b16 %v350, %v341
  %v477 = vpack.c.b16 %v351, %v342
  %v478 = vpack.c.b16 %v352, %v343
  %v479 = vpack.c.b16 %v353, %v344
  %v480 = vpack.c.b16 %v354, %v345
  %v481 = vpack.c.b16 %v355, %v346
  %v482 = vpack.c.b16 %v356, %v347
  %v483 = vpack.c.b16 %v357, %v348
  %v484 = vpack.c.b16 %v367, %v358
  %v485 = vpack.c.b16 %v368, %v359
  %v486 = vpack.c.b16 %v369, %v360
  %v487 = vpack.c.b16 %v370, %v361
  %v488 = vpack.c.b16 %v371, %v362
  %v489 = vpack.c.b16 %v372, %v363
  %v490 = vpack.c.b16 %v373, %v364
  %v491 = vpack.c.b16 %v374, %v365
  %v492 = vpack.c.b16 %v375, %v366
  %v493 = vpack.c.b16 %v385, %v376
  %v494 = vpack.c.b16 %v386, %v377
  %v495 = vpack.c.b16 %v387, %v378
  %v496 = vpack.c.b16 %v388, %v379
  %v497 = vpack.c.b16 %v389, %v380
  %v498 = vpack.c.b16 %v390, %v381
  %v499 = vpack.c.b16 %v391, %v382
  %v500 = vpack.c.b16 %v392, %v383
  %v501 = vpack.c.b16 %v393, %v384
  %v502 = vpack.c.b16 %v403, %v394
  %v503 = vpack.c.b16 %v404, %v395
  %v504 = vpack.c.b16 %v405, %v396
  %v505 = vpack.c.b16 %v406, %v397
  %v506 = vpack.c.b16 %v407, %v398
  %v507 = vpack.c.b16 %v408, %v399
  %v508 = vpack.c.b16 %v409, %v400
  %v509 = vpack.c.b16 %v410, %v401
  %v510 = vpack.c.b16 %v411, %v402
  %v511 = vpack.c.b16 %v421, %v412
  %v512 = vpack.c.b16 %v422, %v413
  %v513 = vpack.c.b16 %v423, %v414
  %v514 = vpack.c.b16 %v424, %v415
  %v515 = vpack.c.b16 %v425, %v416
  %v516 = vpack.c.b16 %v426, %v417
  %v517 = vpack.c.b16 %v427, %v418
  %v518 = vpack.c.b16 %v428, %v419
  %v519 = vpack.c.b16 %v429, %v420
  %v520 = vpack.c.b16 %v439, %v430
  %v521 = vpack.c.b16 %v440, %v431
  %v522 = vpack.c.b16 %v441, %v432
  %v523 = vpack.c.b16 %v442, %v433
  %v524 = vpack.c.b16 %v443, %v434
  %v525 = vpack.c.b16 %v444, %v435
  %v526 = vpack.c.b16 %v445, %v436
  %v527 = vpack.c.b16 %v446, %v437
  %v528 = vpack.c.b16 %v447, %v438
  %v529 = vpack.c.b16 %v457, %v448
  %v530 = vpack.c.b16 %v458, %v449
  %v531 = vpack.c.b16 %v459, %v450
  %v532 = vpack.c.b16 %v460, %v451
  %v533 = vpack.c.b16 %v461, %v452
  %v534 = vpack.c.b16 %v462, %v453
  %v535 = vpack.c.b16 %v463, %v454
  %v536 = vpack.c.b16 %v464, %v455
  %v537 = vpack.c.b16 %v465, %v456
  %v754 = vunpack.c.l.b16 %v94
  %v755 = vunpack.c.l.b16 %v95
  %v756 = vunpack.c.l.b16 %v96
  %v757 = vunpack.c.l.b16 %v97
  %v758 = vunpack.c.l.b16 %v98
  %v759 = vunpack.c.l.b16 %v99
  %v760 = vunpack.c.l.b16 %v100
  %v761 = vunpack.c.l.b16 %v101
  %v762 = vunpack.c.l.b16 %v102
  %v763 = vunpack.c.l.b16 %v103
  %v764 = vunpack.c.l.b16 %v104
  %v765 = vunpack.c.l.b16 %v105
  %v766 = vunpack.c.l.b16 %v106
  %v767 = vunpack.c.l.b16 %v107
  %v768 = vunpack.c.l.b16 %v108
  %v769 = vunpack.c.l.b16 %v109
  %v770 = vunpack.c.l.b16 %v110
  %v771 = vunpack.c.l.b16 %v111
  %v772 = vunpack.c.l.b16 %v112
  %v773 = vunpack.c.l.b16 %v113
  %v774 = vunpack.c.l.b16 %v114
  %v775 = vunpack.c.l.b16 %v115
  %v776 = vunpack.c.l.b16 %v116
  %v777 = vunpack.c.l.b16 %v117
  %v778 = vunpack.c.l.b16 %v118
  %v779 = vunpack.c.l.b16 %v119
  %v780 = vunpack.c.l.b16 %v120
  %v781 = vunpack.c.l.b16 %v121
  %v782 = vunpack.c.l.b16 %v122
  %v783 = vunpack.c.l.b16 %v123
  %v784 = vunpack.c.l.b16 %v124
  %v785 = vunpack.c.l.b16 %v125
  %v786 = vunpack.c.l.b16 %v126
  %v787 = vunpack.c.l.b16 %v127
  %v788 = vunpack.c.l.b16 %v128
  %v789 = vunpack.c.l.b16 %v129
  %v790 = vunpack.c.l.b16 %v130
  %v791 = vunpack.c.l.b16 %v131
  %v792 = vunpack.c.l.b16 %v132
  %v793 = vunpack.c.l.b16 %v133
  %v794 = vunpack.c.l.b16 %v134
  %v795 = vunpack.c.l.b16 %v135
  %v796 = vunpack.c.l.b16 %v136
  %v797 = vunpack.c.l.b16 %v137
  %v798 = vunpack.c.l.b16 %v138
  %v799 = vunpack.c.l.b16 %v139
  %v800 = vunpack.c.l.b16 %v140
  %v801 = vunpack.c.l.b16 %v141
  %v802 = vunpack.c.l.b16 %v142
  %v803 = vunpack.c.l.b16 %v143
  %v804 = vunpack.c.l.b16 %v144
  %v805 = vunpack.c.l.b16 %v145
  %v806 = vunpack.c.l.b16 %v146
  %v807 = vunpack.c.l.b16 %v147
  %v808 = vunpack.c.l.b16 %v148
  %v809 = vunpack.c.l.b16 %v149
  %v810 = vunpack.c.l.b16 %v150
  %v811 = vunpack.c.l.b16 %v151
  %v812 = vunpack.c.l.b16 %v152
  %v813 = vunpack.c.l.b16 %v153
  %v814 = vunpack.c.l.b16 %v154
  %v815 = vunpack.c.l.b16 %v155
  %v816 = vunpack.c.l.b16 %v156
  %v817 = vunpack.c.l.b16 %v157
  %v818 = vunpack.c.l.b16 %v158
  %v819 = vunpack.c.l.b16 %v159
  %v820 = vunpack.c.l.b16 %v160
  %v821 = vunpack.c.l.b16 %v161
  %v822 = vunpack.c.l.b16 %v162
  %v823 = vunpack.c.l.b16 %v163
  %v824 = vunpack.c.l.b16 %v164
  %v825 = vunpack.c.l.b16 %v165
  %v826 = vunpack.c.l.b16 %v166
  %v827 = vunpack.c.l.b16 %v167
  %v828 = vunpack.c.l.b16 %v168
  %v829 = vunpack.c.l.b16 %v169
  %v830 = vunpack.c.l.b16 %v170
  %v831 = vunpack.c.l.b16 %v171
  %v832 = vunpack.c.l.b16 %v172
  %v833 = vunpack.c.l.b16 %v173
  %v834 = vunpack.c.l.b16 %v174
  %v835 = vunpack.c.l.b16 %v175
  %v836 = vunpack.c.l.b16 %v176
  %v837 = vunpack.c.l.b16 %v177
  %v838 = vunpack.c.l.b16 %v178
  %v839 = vunpack.c.l.b16 %v179
  %v840 = vunpack.c.l.b16 %v180
  %v841 = vunpack.c.l.b16 %v181
  %v842 = vunpack.c.l.b16 %v182
  %v843 = vunpack.c.l.b16 %v183
  %v844 = vunpack.c.l.b16 %v184
  %v845 = vunpack.c.l.b16 %v185
  %v846 = vunpack.c.l.b16 %v186
  %v847 = vunpack.c.l.b16 %v187
  %v848 = vunpack.c.l.b16 %v188
  %v849 = vunpack.c.l.b16 %v189
  %v850 = vunpack.c.l.b16 %v190
  %v851 = vunpack.c.l.b16 %v191
  %v852 = vunpack.c.l.b16 %v192
  %v853 = vunpack.c.l.b16 %v193
  %v854 = vunpack.c.l.b16 %v194
  %v855 = vunpack.c.l.b16 %v195
  %v856 = vunpack.c.l.b16 %v196
  %v857 = vunpack.c.l.b16 %v197
  %v858 = vunpack.c.l.b16 %v198
  %v859 = vunpack.c.l.b16 %v199
  %v860 = vunpack.c.l.b16 %v200
  %v861 = vunpack.c.l.b16 %v201
  %v862 = vunpack.c.l.b16 %v202
  %v863 = vunpack.c.l.b16 %v203
  %v864 = vunpack.c.l.b16 %v204
  %v865 = vunpack.c.l.b16 %v205
  %v866 = vunpack.c.l.b16 %v206
  %v867 = vunpack.c.l.b16 %v207
  %v868 = vunpack.c.l.b16 %v208
  %v869 = vunpack.c.l.b16 %v209
  %v870 = vunpack.c.l.b16 %v210
  %v871 = vunpack.c.l.b16 %v211
  %v872 = vunpack.c.l.b16 %v212
  %v873 = vunpack.c.l.b16 %v213
  %v874 = vunpack.c.l.b16 %v214
  %v875 = vunpack.c.l.b16 %v215
  %v876 = vunpack.c.l.b16 %v216
  %v877 = vunpack.c.l.b16 %v217
  %v878 = vunpack.c.l.b16 %v218
  %v879 = vunpack.c.l.b16 %v219
  %v880 = vunpack.c.l.b16 %v220
  %v881 = vunpack.c.l.b16 %v221
  %v882 = vunpack.c.l.b16 %v222
  %v883 = vunpack.c.l.b16 %v223
  %v884 = vunpack.c.l.b16 %v224
  %v885 = vunpack.c.l.b16 %v225
  %v886 = vunpack.c.l.b16 %v226
  %v887 = vunpack.c.l.b16 %v227
  %v888 = vunpack.c.l.b16 %v228
  %v889 = vunpack.c.l.b16 %v229
  %v890 = vunpack.c.l.b16 %v230
  %v891 = vunpack.c.l.b16 %v231
  %v892 = vunpack.c.l.b16 %v232
  %v893 = vunpack.c.l.b16 %v233
  %v894 = vunpack.c.l.b16 %v234
  %v895 = vunpack.c.l.b16 %v235
  %v896 = vunpack.c.l.b16 %v236
  %v897 = vunpack.c.l.b16 %v237
  %v898 = vpack.c.b16 %v755, %v754
  %v899 = vpack.c.b16 %v757, %v756
  %v900 = vpack.c.b16 %v759, %v758
  %v901 = vpack.c.b16 %v761, %v760
  %v902 = vpack.c.b16 %v763, %v762
  %v903 = vpack.c.b16 %v765, %v764
  %v904 = vpack.c.b16 %v767, %v766
  %v905 = vpack.c.b16 %v769, %v768
  %v906 = vpack.c.b16 %v771, %v770
  %v907 = vpack.c.b16 %v773, %v772
  %v908 = vpack.c.b16 %v775, %v774
  %v909 = vpack.c.b16 %v777, %v776
  %v910 = vpack.c.b16 %v779, %v778
  %v911 = vpack.c.b16 %v781, %v780
  %v912 = vpack.c.b16 %v783, %v782
  %v913 = vpack.c.b16 %v785, %v784
  %v914 = vpack.c.b16 %v787, %v786
  %v915 = vpack.c.b16 %v789, %v788
  %v916 = vpack.c.b16 %v791, %v790
  %v917 = vpack.c.b16 %v793, %v792
  %v918 = vpack.c.b16 %v795, %v794
  %v919 = vpack.c.b16 %v797, %v796
  %v920 = vpack.c.b16 %v799, %v798
  %v921 = vpack.c.b16 %v801, %v800
  %v922 = vpack.c.b16 %v803, %v802
  %v923 = vpack.c.b16 %v805, %v804
  %v924 = vpack.c.b16 %v807, %v806
  %v925 = vpack.c.b16 %v809, %v808
  %v926 = vpack.c.b16 %v811, %v810
  %v927 = vpack.c.b16 %v813, %v812
  %v928 = vpack.c.b16 %v815, %v814
  %v929 = vpack.c.b16 %v817, %v816
  %v930 = vpack.c.b16 %v819, %v818
  %v931 = vpack.c.b16 %v821, %v820
  %v932 = vpack.c.b16 %v823, %v822
  %v933 = vpack.c.b16 %v825, %v824
  %v934 = vpack.c.b16 %v827, %v826
  %v935 = vpack.c.b16 %v829, %v828
  %v936 = vpack.c.b16 %v831, %v830
  %v937 = vpack.c.b16 %v833, %v832
  %v938 = vpack.c.b16 %v835, %v834
  %v939 = vpack.c.b16 %v837, %v836
  %v940 = vpack.c.b16 %v839, %v838
  %v941 = vpack.c.b16 %v841, %v840
  %v942 = vpack.c.b16 %v843, %v842
  %v943 = vpack.c.b16 %v845, %v844
  %v944 = vpack.c.b16 %v847, %v846
  %v945 = vpack.c.b16 %v849, %v848
  %v946 = vpack.c.b16 %v851, %v850
  %v947 = vpack.c.b16 %v853, %v852
  %v948 = vpack.c.b16 %v855, %v854
  %v949 = vpack.c.b16 %v857, %v856
  %v950 = vpack.c.b16 %v859, %v858
  %v951 = vpack.c.b16 %v861, %v860
  %v952 = vpack.c.b16 %v863, %v862
  %v953 = vpack.c.b16 %v865, %v864
  %v954 = vpack.c.b16 %v867, %v866
  %v955 = vpack.c.b16 %v869, %v868
  %v956 = vpack.c.b16 %v871, %v870
  %v957 = vpack.c.b16 %v873, %v872
  %v958 = vpack.c.b16 %v875, %v874
  %v959 = vpack.c.b16 %v877, %v876
  %v960 = vpack.c.b16 %v879, %v878
  %v961 = vpack.c.b16 %v881, %v880
  %v962 = vpack.c.b16 %v883, %v882
  %v963 = vpack.c.b16 %v885, %v884
  %v964 = vpack.c.b16 %v887, %v886
  %v965 = vpack.c.b16 %v889, %v888
  %v966 = vpack.c.b16 %v891, %v890
  %v967 = vpack.c.b16 %v893, %v892
  %v968 = vpack.c.b16 %v895, %v894
  %v969 = vpack.c.b16 %v897, %v896
  %1042 = vmatpush.bf16.msra.mxu0 %v905
  %1043 = vmatpush.bf16.msra.mxu0 %v904
  %1044 = vmatpush.bf16.msra.mxu0 %v903
  %1045 = vmatpush.bf16.msra.mxu0 %v902
  %1046 = vmatpush.bf16.msra.mxu0 %v901
  %1047 = vmatpush.bf16.msra.mxu0 %v900
  %1048 = vmatpush.bf16.msra.mxu0 %v899
  %1049 = vmatpush.bf16.msra.mxu0 %v898
  %1050 = vmatmul.bf16.gmra.mxu0 %v466
  %v1051 = vpop.f32.mrf.mxu0
  %v1052 = vadd.f32 %v240, %v1051
  %v1053 = vpop.f32.mrf.mxu0
  %v1054 = vadd.f32 %v240, %v1053
  %1055 = vmatmul.bf16.gmra.mxu0 %v475
  %v1056 = vpop.f32.mrf.mxu0
  %v1057 = vadd.f32 %v240, %v1056
  %v1058 = vpop.f32.mrf.mxu0
  %v1059 = vadd.f32 %v240, %v1058
  %1060 = vmatmul.bf16.gmra.mxu0 %v484
  %v1061 = vpop.f32.mrf.mxu0
  %v1062 = vadd.f32 %v240, %v1061
  %v1063 = vpop.f32.mrf.mxu0
  %v1064 = vadd.f32 %v240, %v1063
  %1065 = vmatmul.bf16.gmra.mxu0 %v493
  %v1066 = vpop.f32.mrf.mxu0
  %v1067 = vadd.f32 %v240, %v1066
  %v1068 = vpop.f32.mrf.mxu0
  %v1069 = vadd.f32 %v240, %v1068
  %1070 = vmatmul.bf16.gmra.mxu0 %v502
  %v1071 = vpop.f32.mrf.mxu0
  %v1072 = vadd.f32 %v240, %v1071
  %v1073 = vpop.f32.mrf.mxu0
  %v1074 = vadd.f32 %v240, %v1073
  %1075 = vmatmul.bf16.gmra.mxu0 %v511
  %v1076 = vpop.f32.mrf.mxu0
  %v1077 = vadd.f32 %v240, %v1076
  %v1078 = vpop.f32.mrf.mxu0
  %v1079 = vadd.f32 %v240, %v1078
  %1080 = vmatmul.bf16.gmra.mxu0 %v520
  %v1081 = vpop.f32.mrf.mxu0
  %v1082 = vadd.f32 %v240, %v1081
  %v1083 = vpop.f32.mrf.mxu0
  %v1084 = vadd.f32 %v240, %v1083
  %1085 = vmatmul.bf16.gmra.mxu0 %v529
  %v1086 = vpop.f32.mrf.mxu0
  %v1087 = vadd.f32 %v240, %v1086
  %v1088 = vpop.f32.mrf.mxu0
  %v1089 = vadd.f32 %v240, %v1088
  %1090 = vdwg.mxu0
  %1091 = vmatpush.bf16.msra.mxu0 %v913
  %1092 = vmatpush.bf16.msra.mxu0 %v912
  %1093 = vmatpush.bf16.msra.mxu0 %v911
  %1094 = vmatpush.bf16.msra.mxu0 %v910
  %1095 = vmatpush.bf16.msra.mxu0 %v909
  %1096 = vmatpush.bf16.msra.mxu0 %v908
  %1097 = vmatpush.bf16.msra.mxu0 %v907
  %1098 = vmatpush.bf16.msra.mxu0 %v906
  %1099 = vmatmul.bf16.gmra.mxu0 %v467
  %v1100 = vpop.f32.mrf.mxu0
  %v1101 = vadd.f32 %v1052, %v1100
  %v1102 = vpop.f32.mrf.mxu0
  %v1103 = vadd.f32 %v1054, %v1102
  %1104 = vmatmul.bf16.gmra.mxu0 %v476
  %v1105 = vpop.f32.mrf.mxu0
  %v1106 = vadd.f32 %v1057, %v1105
  %v1107 = vpop.f32.mrf.mxu0
  %v1108 = vadd.f32 %v1059, %v1107
  %1109 = vmatmul.bf16.gmra.mxu0 %v485
  %v1110 = vpop.f32.mrf.mxu0
  %v1111 = vadd.f32 %v1062, %v1110
  %v1112 = vpop.f32.mrf.mxu0
  %v1113 = vadd.f32 %v1064, %v1112
  %1114 = vmatmul.bf16.gmra.mxu0 %v494
  %v1115 = vpop.f32.mrf.mxu0
  %v1116 = vadd.f32 %v1067, %v1115
  %v1117 = vpop.f32.mrf.mxu0
  %v1118 = vadd.f32 %v1069, %v1117
  %1119 = vmatmul.bf16.gmra.mxu0 %v503
  %v1120 = vpop.f32.mrf.mxu0
  %v1121 = vadd.f32 %v1072, %v1120
  %v1122 = vpop.f32.mrf.mxu0
  %v1123 = vadd.f32 %v1074, %v1122
  %1124 = vmatmul.bf16.gmra.mxu0 %v512
  %v1125 = vpop.f32.mrf.mxu0
  %v1126 = vadd.f32 %v1077, %v1125
  %v1127 = vpop.f32.mrf.mxu0
  %v1128 = vadd.f32 %v1079, %v1127
  %1129 = vmatmul.bf16.gmra.mxu0 %v521
  %v1130 = vpop.f32.mrf.mxu0
  %v1131 = vadd.f32 %v1082, %v1130
  %v1132 = vpop.f32.mrf.mxu0
  %v1133 = vadd.f32 %v1084, %v1132
  %1134 = vmatmul.bf16.gmra.mxu0 %v530
  %v1135 = vpop.f32.mrf.mxu0
  %v1136 = vadd.f32 %v1087, %v1135
  %v1137 = vpop.f32.mrf.mxu0
  %v1138 = vadd.f32 %v1089, %v1137
  %1139 = vdwg.mxu0
  %1140 = vmatpush.bf16.msra.mxu0 %v921
  %1141 = vmatpush.bf16.msra.mxu0 %v920
  %1142 = vmatpush.bf16.msra.mxu0 %v919
  %1143 = vmatpush.bf16.msra.mxu0 %v918
  %1144 = vmatpush.bf16.msra.mxu0 %v917
  %1145 = vmatpush.bf16.msra.mxu0 %v916
  %1146 = vmatpush.bf16.msra.mxu0 %v915
  %1147 = vmatpush.bf16.msra.mxu0 %v914
  %1148 = vmatmul.bf16.gmra.mxu0 %v468
  %v1149 = vpop.f32.mrf.mxu0
  %v1150 = vadd.f32 %v1101, %v1149
  %v1151 = vpop.f32.mrf.mxu0
  %v1152 = vadd.f32 %v1103, %v1151
  %1153 = vmatmul.bf16.gmra.mxu0 %v477
  %v1154 = vpop.f32.mrf.mxu0
  %v1155 = vadd.f32 %v1106, %v1154
  %v1156 = vpop.f32.mrf.mxu0
  %v1157 = vadd.f32 %v1108, %v1156
  %1158 = vmatmul.bf16.gmra.mxu0 %v486
  %v1159 = vpop.f32.mrf.mxu0
  %v1160 = vadd.f32 %v1111, %v1159
  %v1161 = vpop.f32.mrf.mxu0
  %v1162 = vadd.f32 %v1113, %v1161
  %1163 = vmatmul.bf16.gmra.mxu0 %v495
  %v1164 = vpop.f32.mrf.mxu0
  %v1165 = vadd.f32 %v1116, %v1164
  %v1166 = vpop.f32.mrf.mxu0
  %v1167 = vadd.f32 %v1118, %v1166
  %1168 = vmatmul.bf16.gmra.mxu0 %v504
  %v1169 = vpop.f32.mrf.mxu0
  %v1170 = vadd.f32 %v1121, %v1169
  %v1171 = vpop.f32.mrf.mxu0
  %v1172 = vadd.f32 %v1123, %v1171
  %1173 = vmatmul.bf16.gmra.mxu0 %v513
  %v1174 = vpop.f32.mrf.mxu0
  %v1175 = vadd.f32 %v1126, %v1174
  %v1176 = vpop.f32.mrf.mxu0
  %v1177 = vadd.f32 %v1128, %v1176
  %1178 = vmatmul.bf16.gmra.mxu0 %v522
  %v1179 = vpop.f32.mrf.mxu0
  %v1180 = vadd.f32 %v1131, %v1179
  %v1181 = vpop.f32.mrf.mxu0
  %v1182 = vadd.f32 %v1133, %v1181
  %1183 = vmatmul.bf16.gmra.mxu0 %v531
  %v1184 = vpop.f32.mrf.mxu0
  %v1185 = vadd.f32 %v1136, %v1184
  %v1186 = vpop.f32.mrf.mxu0
  %v1187 = vadd.f32 %v1138, %v1186
  %1188 = vdwg.mxu0
  %1189 = vmatpush.bf16.msra.mxu0 %v929
  %1190 = vmatpush.bf16.msra.mxu0 %v928
  %1191 = vmatpush.bf16.msra.mxu0 %v927
  %1192 = vmatpush.bf16.msra.mxu0 %v926
  %1193 = vmatpush.bf16.msra.mxu0 %v925
  %1194 = vmatpush.bf16.msra.mxu0 %v924
  %1195 = vmatpush.bf16.msra.mxu0 %v923
  %1196 = vmatpush.bf16.msra.mxu0 %v922
  %1197 = vmatmul.bf16.gmra.mxu0 %v469
  %v1198 = vpop.f32.mrf.mxu0
  %v1199 = vadd.f32 %v1150, %v1198
  %v1200 = vpop.f32.mrf.mxu0
  %v1201 = vadd.f32 %v1152, %v1200
  %1202 = vmatmul.bf16.gmra.mxu0 %v478
  %v1203 = vpop.f32.mrf.mxu0
  %v1204 = vadd.f32 %v1155, %v1203
  %v1205 = vpop.f32.mrf.mxu0
  %v1206 = vadd.f32 %v1157, %v1205
  %1207 = vmatmul.bf16.gmra.mxu0 %v487
  %v1208 = vpop.f32.mrf.mxu0
  %v1209 = vadd.f32 %v1160, %v1208
  %v1210 = vpop.f32.mrf.mxu0
  %v1211 = vadd.f32 %v1162, %v1210
  %1212 = vmatmul.bf16.gmra.mxu0 %v496
  %v1213 = vpop.f32.mrf.mxu0
  %v1214 = vadd.f32 %v1165, %v1213
  %v1215 = vpop.f32.mrf.mxu0
  %v1216 = vadd.f32 %v1167, %v1215
  %1217 = vmatmul.bf16.gmra.mxu0 %v505
  %v1218 = vpop.f32.mrf.mxu0
  %v1219 = vadd.f32 %v1170, %v1218
  %v1220 = vpop.f32.mrf.mxu0
  %v1221 = vadd.f32 %v1172, %v1220
  %1222 = vmatmul.bf16.gmra.mxu0 %v514
  %v1223 = vpop.f32.mrf.mxu0
  %v1224 = vadd.f32 %v1175, %v1223
  %v1225 = vpop.f32.mrf.mxu0
  %v1226 = vadd.f32 %v1177, %v1225
  %1227 = vmatmul.bf16.gmra.mxu0 %v523
  %v1228 = vpop.f32.mrf.mxu0
  %v1229 = vadd.f32 %v1180, %v1228
  %v1230 = vpop.f32.mrf.mxu0
  %v1231 = vadd.f32 %v1182, %v1230
  %1232 = vmatmul.bf16.gmra.mxu0 %v532
  %v1233 = vpop.f32.mrf.mxu0
  %v1234 = vadd.f32 %v1185, %v1233
  %v1235 = vpop.f32.mrf.mxu0
  %v1236 = vadd.f32 %v1187, %v1235
  %1237 = vdwg.mxu0
  %1238 = vmatpush.bf16.msra.mxu0 %v937
  %1239 = vmatpush.bf16.msra.mxu0 %v936
  %1240 = vmatpush.bf16.msra.mxu0 %v935
  %1241 = vmatpush.bf16.msra.mxu0 %v934
  %1242 = vmatpush.bf16.msra.mxu0 %v933
  %1243 = vmatpush.bf16.msra.mxu0 %v932
  %1244 = vmatpush.bf16.msra.mxu0 %v931
  %1245 = vmatpush.bf16.msra.mxu0 %v930
  %1246 = vmatmul.bf16.gmra.mxu0 %v470
  %v1247 = vpop.f32.mrf.mxu0
  %v1248 = vadd.f32 %v1199, %v1247
  %v1249 = vpop.f32.mrf.mxu0
  %v1250 = vadd.f32 %v1201, %v1249
  %1251 = vmatmul.bf16.gmra.mxu0 %v479
  %v1252 = vpop.f32.mrf.mxu0
  %v1253 = vadd.f32 %v1204, %v1252
  %v1254 = vpop.f32.mrf.mxu0
  %v1255 = vadd.f32 %v1206, %v1254
  %1256 = vmatmul.bf16.gmra.mxu0 %v488
  %v1257 = vpop.f32.mrf.mxu0
  %v1258 = vadd.f32 %v1209, %v1257
  %v1259 = vpop.f32.mrf.mxu0
  %v1260 = vadd.f32 %v1211, %v1259
  %1261 = vmatmul.bf16.gmra.mxu0 %v497
  %v1262 = vpop.f32.mrf.mxu0
  %v1263 = vadd.f32 %v1214, %v1262
  %v1264 = vpop.f32.mrf.mxu0
  %v1265 = vadd.f32 %v1216, %v1264
  %1266 = vmatmul.bf16.gmra.mxu0 %v506
  %v1267 = vpop.f32.mrf.mxu0
  %v1268 = vadd.f32 %v1219, %v1267
  %v1269 = vpop.f32.mrf.mxu0
  %v1270 = vadd.f32 %v1221, %v1269
  %1271 = vmatmul.bf16.gmra.mxu0 %v515
  %v1272 = vpop.f32.mrf.mxu0
  %v1273 = vadd.f32 %v1224, %v1272
  %v1274 = vpop.f32.mrf.mxu0
  %v1275 = vadd.f32 %v1226, %v1274
  %1276 = vmatmul.bf16.gmra.mxu0 %v524
  %v1277 = vpop.f32.mrf.mxu0
  %v1278 = vadd.f32 %v1229, %v1277
  %v1279 = vpop.f32.mrf.mxu0
  %v1280 = vadd.f32 %v1231, %v1279
  %1281 = vmatmul.bf16.gmra.mxu0 %v533
  %v1282 = vpop.f32.mrf.mxu0
  %v1283 = vadd.f32 %v1234, %v1282
  %v1284 = vpop.f32.mrf.mxu0
  %v1285 = vadd.f32 %v1236, %v1284
  %1286 = vdwg.mxu0
  %1287 = vmatpush.bf16.msra.mxu0 %v945
  %1288 = vmatpush.bf16.msra.mxu0 %v944
  %1289 = vmatpush.bf16.msra.mxu0 %v943
  %1290 = vmatpush.bf16.msra.mxu0 %v942
  %1291 = vmatpush.bf16.msra.mxu0 %v941
  %1292 = vmatpush.bf16.msra.mxu0 %v940
  %1293 = vmatpush.bf16.msra.mxu0 %v939
  %1294 = vmatpush.bf16.msra.mxu0 %v938
  %1295 = vmatmul.bf16.gmra.mxu0 %v471
  %v1296 = vpop.f32.mrf.mxu0
  %v1297 = vadd.f32 %v1248, %v1296
  %v1298 = vpop.f32.mrf.mxu0
  %v1299 = vadd.f32 %v1250, %v1298
  %1300 = vmatmul.bf16.gmra.mxu0 %v480
  %v1301 = vpop.f32.mrf.mxu0
  %v1302 = vadd.f32 %v1253, %v1301
  %v1303 = vpop.f32.mrf.mxu0
  %v1304 = vadd.f32 %v1255, %v1303
  %1305 = vmatmul.bf16.gmra.mxu0 %v489
  %v1306 = vpop.f32.mrf.mxu0
  %v1307 = vadd.f32 %v1258, %v1306
  %v1308 = vpop.f32.mrf.mxu0
  %v1309 = vadd.f32 %v1260, %v1308
  %1310 = vmatmul.bf16.gmra.mxu0 %v498
  %v1311 = vpop.f32.mrf.mxu0
  %v1312 = vadd.f32 %v1263, %v1311
  %v1313 = vpop.f32.mrf.mxu0
  %v1314 = vadd.f32 %v1265, %v1313
  %1315 = vmatmul.bf16.gmra.mxu0 %v507
  %v1316 = vpop.f32.mrf.mxu0
  %v1317 = vadd.f32 %v1268, %v1316
  %v1318 = vpop.f32.mrf.mxu0
  %v1319 = vadd.f32 %v1270, %v1318
  %1320 = vmatmul.bf16.gmra.mxu0 %v516
  %v1321 = vpop.f32.mrf.mxu0
  %v1322 = vadd.f32 %v1273, %v1321
  %v1323 = vpop.f32.mrf.mxu0
  %v1324 = vadd.f32 %v1275, %v1323
  %1325 = vmatmul.bf16.gmra.mxu0 %v525
  %v1326 = vpop.f32.mrf.mxu0
  %v1327 = vadd.f32 %v1278, %v1326
  %v1328 = vpop.f32.mrf.mxu0
  %v1329 = vadd.f32 %v1280, %v1328
  %1330 = vmatmul.bf16.gmra.mxu0 %v534
  %v1331 = vpop.f32.mrf.mxu0
  %v1332 = vadd.f32 %v1283, %v1331
  %v1333 = vpop.f32.mrf.mxu0
  %v1334 = vadd.f32 %v1285, %v1333
  %1335 = vdwg.mxu0
  %1336 = vmatpush.bf16.msra.mxu0 %v953
  %1337 = vmatpush.bf16.msra.mxu0 %v952
  %1338 = vmatpush.bf16.msra.mxu0 %v951
  %1339 = vmatpush.bf16.msra.mxu0 %v950
  %1340 = vmatpush.bf16.msra.mxu0 %v949
  %1341 = vmatpush.bf16.msra.mxu0 %v948
  %1342 = vmatpush.bf16.msra.mxu0 %v947
  %1343 = vmatpush.bf16.msra.mxu0 %v946
  %1344 = vmatmul.bf16.gmra.mxu0 %v472
  %v1345 = vpop.f32.mrf.mxu0
  %v1346 = vadd.f32 %v1297, %v1345
  %v1347 = vpop.f32.mrf.mxu0
  %v1348 = vadd.f32 %v1299, %v1347
  %1349 = vmatmul.bf16.gmra.mxu0 %v481
  %v1350 = vpop.f32.mrf.mxu0
  %v1351 = vadd.f32 %v1302, %v1350
  %v1352 = vpop.f32.mrf.mxu0
  %v1353 = vadd.f32 %v1304, %v1352
  %1354 = vmatmul.bf16.gmra.mxu0 %v490
  %v1355 = vpop.f32.mrf.mxu0
  %v1356 = vadd.f32 %v1307, %v1355
  %v1357 = vpop.f32.mrf.mxu0
  %v1358 = vadd.f32 %v1309, %v1357
  %1359 = vmatmul.bf16.gmra.mxu0 %v499
  %v1360 = vpop.f32.mrf.mxu0
  %v1361 = vadd.f32 %v1312, %v1360
  %v1362 = vpop.f32.mrf.mxu0
  %v1363 = vadd.f32 %v1314, %v1362
  %1364 = vmatmul.bf16.gmra.mxu0 %v508
  %v1365 = vpop.f32.mrf.mxu0
  %v1366 = vadd.f32 %v1317, %v1365
  %v1367 = vpop.f32.mrf.mxu0
  %v1368 = vadd.f32 %v1319, %v1367
  %1369 = vmatmul.bf16.gmra.mxu0 %v517
  %v1370 = vpop.f32.mrf.mxu0
  %v1371 = vadd.f32 %v1322, %v1370
  %v1372 = vpop.f32.mrf.mxu0
  %v1373 = vadd.f32 %v1324, %v1372
  %1374 = vmatmul.bf16.gmra.mxu0 %v526
  %v1375 = vpop.f32.mrf.mxu0
  %v1376 = vadd.f32 %v1327, %v1375
  %v1377 = vpop.f32.mrf.mxu0
  %v1378 = vadd.f32 %v1329, %v1377
  %1379 = vmatmul.bf16.gmra.mxu0 %v535
  %v1380 = vpop.f32.mrf.mxu0
  %v1381 = vadd.f32 %v1332, %v1380
  %v1382 = vpop.f32.mrf.mxu0
  %v1383 = vadd.f32 %v1334, %v1382
  %1384 = vdwg.mxu0
  %1385 = vmatpush.bf16.msra.mxu0 %v961
  %1386 = vmatpush.bf16.msra.mxu0 %v960
  %1387 = vmatpush.bf16.msra.mxu0 %v959
  %1388 = vmatpush.bf16.msra.mxu0 %v958
  %1389 = vmatpush.bf16.msra.mxu0 %v957
  %1390 = vmatpush.bf16.msra.mxu0 %v956
  %1391 = vmatpush.bf16.msra.mxu0 %v955
  %1392 = vmatpush.bf16.msra.mxu0 %v954
  %1393 = vmatmul.bf16.gmra.mxu0 %v473
  %v1394 = vpop.f32.mrf.mxu0
  %v1395 = vadd.f32 %v1346, %v1394
  %v1396 = vpop.f32.mrf.mxu0
  %v1397 = vadd.f32 %v1348, %v1396
  %1398 = vmatmul.bf16.gmra.mxu0 %v482
  %v1399 = vpop.f32.mrf.mxu0
  %v1400 = vadd.f32 %v1351, %v1399
  %v1401 = vpop.f32.mrf.mxu0
  %v1402 = vadd.f32 %v1353, %v1401
  %1403 = vmatmul.bf16.gmra.mxu0 %v491
  %v1404 = vpop.f32.mrf.mxu0
  %v1405 = vadd.f32 %v1356, %v1404
  %v1406 = vpop.f32.mrf.mxu0
  %v1407 = vadd.f32 %v1358, %v1406
  %1408 = vmatmul.bf16.gmra.mxu0 %v500
  %v1409 = vpop.f32.mrf.mxu0
  %v1410 = vadd.f32 %v1361, %v1409
  %v1411 = vpop.f32.mrf.mxu0
  %v1412 = vadd.f32 %v1363, %v1411
  %1413 = vmatmul.bf16.gmra.mxu0 %v509
  %v1414 = vpop.f32.mrf.mxu0
  %v1415 = vadd.f32 %v1366, %v1414
  %v1416 = vpop.f32.mrf.mxu0
  %v1417 = vadd.f32 %v1368, %v1416
  %1418 = vmatmul.bf16.gmra.mxu0 %v518
  %v1419 = vpop.f32.mrf.mxu0
  %v1420 = vadd.f32 %v1371, %v1419
  %v1421 = vpop.f32.mrf.mxu0
  %v1422 = vadd.f32 %v1373, %v1421
  %1423 = vmatmul.bf16.gmra.mxu0 %v527
  %v1424 = vpop.f32.mrf.mxu0
  %v1425 = vadd.f32 %v1376, %v1424
  %v1426 = vpop.f32.mrf.mxu0
  %v1427 = vadd.f32 %v1378, %v1426
  %1428 = vmatmul.bf16.gmra.mxu0 %v536
  %v1429 = vpop.f32.mrf.mxu0
  %v1430 = vadd.f32 %v1381, %v1429
  %v1431 = vpop.f32.mrf.mxu0
  %v1432 = vadd.f32 %v1383, %v1431
  %1433 = vdwg.mxu0
  %1434 = vmatpush.bf16.msra.mxu0 %v969
  %1435 = vmatpush.bf16.msra.mxu0 %v968
  %1436 = vmatpush.bf16.msra.mxu0 %v967
  %1437 = vmatpush.bf16.msra.mxu0 %v966
  %1438 = vmatpush.bf16.msra.mxu0 %v965
  %1439 = vmatpush.bf16.msra.mxu0 %v964
  %1440 = vmatpush.bf16.msra.mxu0 %v963
  %1441 = vmatpush.bf16.msra.mxu0 %v962
  %1442 = vmatmul.bf16.gmra.mxu0 %v474
  %v1443 = vpop.f32.mrf.mxu0
  %v1444 = vadd.f32 %v1395, %v1443
  %v1445 = vpop.f32.mrf.mxu0
  %v1446 = vadd.f32 %v1397, %v1445
  %1447 = vmatmul.bf16.gmra.mxu0 %v483
  %v1448 = vpop.f32.mrf.mxu0
  %v1449 = vadd.f32 %v1400, %v1448
  %v1450 = vpop.f32.mrf.mxu0
  %v1451 = vadd.f32 %v1402, %v1450
  %1452 = vmatmul.bf16.gmra.mxu0 %v492
  %v1453 = vpop.f32.mrf.mxu0
  %v1454 = vadd.f32 %v1405, %v1453
  %v1455 = vpop.f32.mrf.mxu0
  %v1456 = vadd.f32 %v1407, %v1455
  %1457 = vmatmul.bf16.gmra.mxu0 %v501
  %v1458 = vpop.f32.mrf.mxu0
  %v1459 = vadd.f32 %v1410, %v1458
  %v1460 = vpop.f32.mrf.mxu0
  %v1461 = vadd.f32 %v1412, %v1460
  %1462 = vmatmul.bf16.gmra.mxu0 %v510
  %v1463 = vpop.f32.mrf.mxu0
  %v1464 = vadd.f32 %v1415, %v1463
  %v1465 = vpop.f32.mrf.mxu0
  %v1466 = vadd.f32 %v1417, %v1465
  %1467 = vmatmul.bf16.gmra.mxu0 %v519
  %v1468 = vpop.f32.mrf.mxu0
  %v1469 = vadd.f32 %v1420, %v1468
  %v1470 = vpop.f32.mrf.mxu0
  %v1471 = vadd.f32 %v1422, %v1470
  %1472 = vmatmul.bf16.gmra.mxu0 %v528
  %v1473 = vpop.f32.mrf.mxu0
  %v1474 = vadd.f32 %v1425, %v1473
  %v1475 = vpop.f32.mrf.mxu0
  %v1476 = vadd.f32 %v1427, %v1475
  %1477 = vmatmul.bf16.gmra.mxu0 %v537
  %v1478 = vpop.f32.mrf.mxu0
  %v1479 = vadd.f32 %v1430, %v1478
  %v1480 = vpop.f32.mrf.mxu0
  %v1481 = vadd.f32 %v1432, %v1480
  %1482 = vdwg.mxu0
  %vm1483 = vcmask 97280
  %1484 = vst.msk [vmem:[%s3] sm:$0xff] %vm1483, %v1444
  %1485 = vst.msk [vmem:[%s3 + $0x8] sm:$0xff] %vm1483, %v1446
  %1486 = vst.msk [vmem:[%s3 + $0x10] sm:$0xff] %vm1483, %v1449
  %1487 = vst.msk [vmem:[%s3 + $0x18] sm:$0xff] %vm1483, %v1451
  %1488 = vst.msk [vmem:[%s3 + $0x20] sm:$0xff] %vm1483, %v1454
  %1489 = vst.msk [vmem:[%s3 + $0x28] sm:$0xff] %vm1483, %v1456
  %1490 = vst.msk [vmem:[%s3 + $0x30] sm:$0xff] %vm1483, %v1459
  %1491 = vst.msk [vmem:[%s3 + $0x38] sm:$0xff] %vm1483, %v1461
  %1492 = vst.msk [vmem:[%s3 + $0x40] sm:$0xff] %vm1483, %v1464
  %1493 = vst.msk [vmem:[%s3 + $0x48] sm:$0xff] %vm1483, %v1466
  %1494 = vst.msk [vmem:[%s3 + $0x50] sm:$0xff] %vm1483, %v1469
  %1495 = vst.msk [vmem:[%s3 + $0x58] sm:$0xff] %vm1483, %v1471
  %1496 = vst.msk [vmem:[%s3 + $0x60] sm:$0xff] %vm1483, %v1474
  %1497 = vst.msk [vmem:[%s3 + $0x68] sm:$0xff] %vm1483, %v1476
  %1498 = vst.msk [vmem:[%s3 + $0x70] sm:$0xff] %vm1483, %v1479
  %1499 = vst.msk [vmem:[%s3 + $0x78] sm:$0xff] %vm1483, %v1481
  // Predicated region
  $region14: #{vqvae_forward.23} parent=0 // pred_check
    _
  $region15: #{vqvae_forward.23} parent=0 // pred_check_branch
    %1501 = sbr.rel (0) target = $region17
  $region16: #{vqvae_forward.23} parent=0 // pred_region
    _
  $region17: #{vqvae_forward.23} parent=0 // pred_fallthru
    _
  // Predicated region
  $region18: #{vqvae_forward.23} parent=0 // pred_check
    _
  $region19: #{vqvae_forward.23} parent=0 // pred_check_branch
    %1503 = sbr.rel (0) target = $region21
  $region20: #{vqvae_forward.23} parent=0 // pred_region
    _
  $region21: #{vqvae_forward.23} parent=0 // pred_fallthru
    _

</llo_original>
